<compile_context>
chip_gen: v5e
topology: v5e:2x2
jax: 0.10.0
libtpu: 0.0.40
codegen_flags: <defaults>
</compile_context>

<pallas_src>
import jax
import jax.numpy as jnp
from jax import lax
from jax.experimental import pallas as pl
from jax.experimental.pallas import tpu as pltpu


def _full_block_map(rank):
    def index_map(i):
        return (0,) * rank
    return index_map


def _make_transition_kernel(descs, n_act):
    """Build the fused kernel. `descs` is a tuple of static per-conv dicts."""
    n_conv = len(descs)

    def kernel(*refs):
        act_refs = refs[:n_act]
        wb_refs = refs[n_act:n_act + 2 * n_conv]
        out_refs = refs[n_act + 2 * n_conv:]

        # Hoisted bf16 cast: each activation tile used by a stride-1 conv is
        # cast ONCE (Hp*Wp*C elements) instead of once per assembled patch.
        act_bf16 = {}
        for d in descs:
            if d["stride"] == 1 and d["act_idx"] not in act_bf16:
                act_bf16[d["act_idx"]] = (
                    act_refs[d["act_idx"]][...].astype(jnp.bfloat16))

        for ci, d in enumerate(descs):
            w_ref = wb_refs[2 * ci]          # (9, Cout, Cin) bf16
            b_ref = wb_refs[2 * ci + 1]      # (Cout, 1) f32
            o_ref = out_refs[ci]
            n, ho, wo = d["n"], d["ho"], d["wo"]
            cin, s = d["cin"], d["stride"]
            m = n * ho * wo                  # batch folded into M

            # 9 accumulated per-tap matmuls (no im2col concatenate, so no
            # non-128-aligned lane assembly).  Each tap is a shifted window of
            # the VMEM-resident padded tile; f32 accumulation on the MXU.
            acc = None
            for ky in range(3):
                for kx in range(3):
                    t = ky * 3 + kx
                    if s == 1:
                        tap = act_bf16[d["act_idx"]][:, ky:ky + ho,
                                                     kx:kx + wo, :]
                    else:
                        # stride-2 taps straight from the SHARED padded tile
                        # via strided slices (no phase-split operand).
                        tap = act_refs[d["act_idx"]][
                            :, pl.ds(ky, ho, stride=s),
                            pl.ds(kx, wo, stride=s), :].astype(jnp.bfloat16)
                    tap = tap.reshape(m, cin)
                    part = lax.dot_general(
                        w_ref[t], tap,
                        dimension_numbers=(((1,), (1,)), ((), ())),
                        preferred_element_type=jnp.float32)   # (Cout, M)
                    acc = part if acc is None else acc + part

            y = (acc + b_ref[...]).astype(o_ref.dtype)        # (Cout, N*Ho*Wo)

            if d["flat_out"]:
                # Lane-dense (Cout, N*Ho*Wo) slab (e.g. (128, 128) for conv2).
                o_ref[...] = y
            else:
                # NCHW-native (N, Cout, Ho*Wo) output: per-image columns are
                # 128-aligned lane slices -> unmasked full-width stores.
                mi = ho * wo
                for ni in range(n):
                    o_ref[ni] = y[:, ni * mi:(ni + 1) * mi]

    return kernel


def init_transition_params(key, out_branch):
    """Deterministic synthetic parameters matching nn.Conv2d shapes."""
    if out_branch != 2:
        encode = [32, 64, 128, 256]
        encode_out = [32, 64, 128, 256]
    else:
        encode = [256, 256]
        encode_out = [32, 64, 128, 256]
    params = []
    for branch in range(out_branch - 1):                      # stride-1 convs
        key, k1, k2 = jax.random.split(key, 3)
        cin, cout = encode[branch], encode_out[branch]
        w = jax.random.normal(k1, (cout, cin, 3, 3), jnp.float32) * 0.02
        bb = jax.random.normal(k2, (cout,), jnp.float32) * 0.02
        params.append((w, bb, 1))
    key, k1, k2 = jax.random.split(key, 3)                    # final stride-2 conv
    cin, cout = encode[out_branch - 2], encode_out[out_branch - 1]
    w = jax.random.normal(k1, (cout, cin, 3, 3), jnp.float32) * 0.02
    bb = jax.random.normal(k2, (cout,), jnp.float32) * 0.02
    params.append((w, bb, 2))
    return params


def transition_forward(params, inports):
    """params: list of (w_oihw, bias, stride); inports: list of NCHW arrays."""
    # TODO(synk): PyTorch forward's debug print(len(inports), out_branch-1) omitted.
    out_branch = len(params)
    assert len(inports) == out_branch - 1
    n = inports[0].shape[0]
    out_dtype = inports[0].dtype

    # Which inport feeds each conv (the last conv re-uses the last inport).
    conv_inport = list(range(out_branch - 1)) + [out_branch - 2]

    # One padded NHWC operand per DISTINCT inport (x1 is passed once, shared
    # by the stride-1 and the stride-2 conv).  transpose+pad should fuse into
    # a single XLA fusion in front of the pallas_call.
    acts = []
    for x in inports:
        xh = jnp.transpose(x, (0, 2, 3, 1))                   # NHWC
        acts.append(jnp.pad(xh, ((0, 0), (1, 1), (1, 1), (0, 0))))

    wbs, descs = [], []
    for ci, (w_oihw, bias, stride) in enumerate(params):
        ai = conv_inport[ci]
        _, cin, h, w = inports[ai].shape
        cout = w_oihw.shape[0]
        ho, wo = h // stride, w // stride
        mi = ho * wo
        descs.append(dict(n=n, cin=cin, cout=cout, ho=ho, wo=wo,
                          stride=stride, act_idx=ai,
                          flat_out=(mi % 128 != 0)))
        # (Cout, Cin, 3, 3) -> (9, Cout, Cin): per-tap weight slabs, bf16.
        w9 = jnp.transpose(w_oihw, (2, 3, 0, 1)).reshape(9, cout, cin)
        wbs.append(w9.astype(jnp.bfloat16))
        wbs.append(bias.reshape(cout, 1).astype(jnp.float32))

    kernel = _make_transition_kernel(tuple(descs), len(acts))

    # Single grid step, all blocks = full arrays (< 2 MiB total VMEM).
    in_specs = []
    for op in acts:
        in_specs.append(pl.BlockSpec(op.shape, _full_block_map(op.ndim)))
    for wb in wbs:
        in_specs.append(pl.BlockSpec(wb.shape, _full_block_map(wb.ndim)))

    out_shapes, out_specs = [], []
    for d in descs:
        mi = d["ho"] * d["wo"]
        if d["flat_out"]:
            shp = (d["cout"], n * mi)          # lane-dense slab (e.g. 128x128)
        else:
            shp = (n, d["cout"], mi)           # NCHW-native, free reshape later
        out_shapes.append(jax.ShapeDtypeStruct(shp, out_dtype))
        out_specs.append(pl.BlockSpec(shp, _full_block_map(len(shp))))

    outs = pl.pallas_call(
        kernel,
        out_shape=tuple(out_shapes),
        grid_spec=pltpu.PrefetchScalarGridSpec(
            num_scalar_prefetch=0,
            grid=(1,),
            in_specs=in_specs,
            out_specs=tuple(out_specs)),
        compiler_params=pltpu.CompilerParams(
            dimension_semantics=("arbitrary",)),
    )(*acts, *wbs)

    res = []
    for o, d in zip(outs, descs):
        if d["flat_out"]:
            o = o.reshape(d["cout"], n, d["ho"], d["wo"]).transpose(1, 0, 2, 3)
        else:
            o = o.reshape(n, d["cout"], d["ho"], d["wo"])
        res.append(o)
    return res


def _conv_ref(x, w, bb, stride):
    y = lax.conv_general_dilated(
        x, w, window_strides=(stride, stride), padding=((1, 1), (1, 1)),
        dimension_numbers=("NCHW", "OIHW", "NCHW"))
    return y + bb[None, :, None, None]


if __name__ == "__main__":
    out_branch = 3
    key = jax.random.PRNGKey(0)
    key, kx0, kx1 = jax.random.split(key, 3)
    # inports channel counts dictated by the module: [32, 64] for out_branch=3
    x0 = jax.random.normal(kx0, (2, 32, 16, 16), jnp.float32)
    x1 = jax.random.normal(kx1, (2, 64, 16, 16), jnp.float32)

    params = init_transition_params(jax.random.PRNGKey(1), out_branch)

    fwd = jax.jit(lambda a, b: transition_forward(params, [a, b]))
    outs = fwd(x0, x1)
    outs = [jax.block_until_ready(o) for o in outs]

    # sanity check against XLA's conv
    refs = [
        _conv_ref(x0, params[0][0], params[0][1], params[0][2]),
        _conv_ref(x1, params[1][0], params[1][1], params[1][2]),
        _conv_ref(x1, params[2][0], params[2][1], params[2][2]),
    ]
    expected_shapes = [(2, 32, 16, 16), (2, 64, 16, 16), (2, 128, 8, 8)]
    for o, r, es in zip(outs, refs, expected_shapes):
        assert o.shape == es, (o.shape, es)
        err = float(jnp.max(jnp.abs(o - r)))
        assert err < 5e-2, f"mismatch: {err}"

    print("KERNEL_OK")
</pallas_src>

<mosaic_0001>
module attributes {stable_mosaic.version = 11 : i64} {
  func.func @kernel(%arg0: i32, %arg1: memref<2x18x18x32xf32, #tpu.memory_space<vmem>>, %arg2: memref<2x18x18x64xf32, #tpu.memory_space<vmem>>, %arg3: memref<9x32x32xbf16, #tpu.memory_space<vmem>>, %arg4: memref<32x1xf32, #tpu.memory_space<vmem>>, %arg5: memref<9x64x64xbf16, #tpu.memory_space<vmem>>, %arg6: memref<64x1xf32, #tpu.memory_space<vmem>>, %arg7: memref<9x128x64xbf16, #tpu.memory_space<vmem>>, %arg8: memref<128x1xf32, #tpu.memory_space<vmem>>, %arg9: memref<2x32x256xf32, #tpu.memory_space<vmem>>, %arg10: memref<2x64x256xf32, #tpu.memory_space<vmem>>, %arg11: memref<128x128xf32, #tpu.memory_space<vmem>>) attributes {dimension_semantics = [#tpu.dimension_semantics<arbitrary>], iteration_bounds = array<i64: 1>, scalar_prefetch = 0 : i64, scratch_operands = 0 : i64, tpu.core_type = #tpu.core_type<tc>, window_params = [{pipeline_mode = #tpu.pipeline_mode<synchronous>, transform_indices = @transform_0, window_bounds = array<i64: 2, 18, 18, 32>}, {pipeline_mode = #tpu.pipeline_mode<synchronous>, transform_indices = @transform_1, window_bounds = array<i64: 2, 18, 18, 64>}, {pipeline_mode = #tpu.pipeline_mode<synchronous>, transform_indices = @transform_2, window_bounds = array<i64: 9, 32, 32>}, {pipeline_mode = #tpu.pipeline_mode<synchronous>, transform_indices = @transform_3, window_bounds = array<i64: 32, 1>}, {pipeline_mode = #tpu.pipeline_mode<synchronous>, transform_indices = @transform_4, window_bounds = array<i64: 9, 64, 64>}, {pipeline_mode = #tpu.pipeline_mode<synchronous>, transform_indices = @transform_5, window_bounds = array<i64: 64, 1>}, {pipeline_mode = #tpu.pipeline_mode<synchronous>, transform_indices = @transform_6, window_bounds = array<i64: 9, 128, 64>}, {pipeline_mode = #tpu.pipeline_mode<synchronous>, transform_indices = @transform_7, window_bounds = array<i64: 128, 1>}, {pipeline_mode = #tpu.pipeline_mode<synchronous>, transform_indices = @transform_8, window_bounds = array<i64: 2, 32, 256>}, {pipeline_mode = #tpu.pipeline_mode<synchronous>, transform_indices = @transform_9, window_bounds = array<i64: 2, 64, 256>}, {pipeline_mode = #tpu.pipeline_mode<synchronous>, transform_indices = @transform_10, window_bounds = array<i64: 128, 128>}]} {
    %c0 = arith.constant 0 : index
    %c0_0 = arith.constant 0 : index
    %c0_1 = arith.constant 0 : index
    %c0_2 = arith.constant 0 : index
    %0 = vector.load %arg1[%c0, %c0_0, %c0_1, %c0_2] : memref<2x18x18x32xf32, #tpu.memory_space<vmem>>, vector<2x18x18x32xf32>
    %1 = arith.truncf %0 : vector<2x18x18x32xf32> to vector<2x18x18x32xbf16>
    %c0_3 = arith.constant 0 : index
    %c0_4 = arith.constant 0 : index
    %c0_5 = arith.constant 0 : index
    %c0_6 = arith.constant 0 : index
    %2 = vector.load %arg2[%c0_3, %c0_4, %c0_5, %c0_6] : memref<2x18x18x64xf32, #tpu.memory_space<vmem>>, vector<2x18x18x64xf32>
    %3 = arith.truncf %2 : vector<2x18x18x64xf32> to vector<2x18x18x64xbf16>
    %4 = vector.extract_strided_slice %1 {offsets = [0, 0, 0, 0], sizes = [2, 16, 16, 32], strides = [1, 1, 1, 1]} : vector<2x18x18x32xbf16> to vector<2x16x16x32xbf16>
    %5 = vector.shape_cast %4 : vector<2x16x16x32xbf16> to vector<512x32xbf16>
    %c0_7 = arith.constant 0 : index
    %c0_8 = arith.constant 0 : index
    %c0_9 = arith.constant 0 : index
    %6 = vector.load %arg3[%c0_7, %c0_8, %c0_9] : memref<9x32x32xbf16, #tpu.memory_space<vmem>>, vector<1x32x32xbf16>
    %7 = vector.shape_cast %6 : vector<1x32x32xbf16> to vector<32x32xbf16>
    %cst = arith.constant dense<0.000000e+00> : vector<32x512xf32>
    %8 = tpu.matmul %7, %5, %cst {dimension_numbers = #tpu.dot_dimension_numbers<[1], [1], [0], [0], [0, 0, 1, 0], [], []>} : vector<32x32xbf16>, vector<512x32xbf16>, vector<32x512xf32> -> vector<32x512xf32>
    %9 = vector.extract_strided_slice %1 {offsets = [0, 0, 1, 0], sizes = [2, 16, 16, 32], strides = [1, 1, 1, 1]} : vector<2x18x18x32xbf16> to vector<2x16x16x32xbf16>
    %10 = vector.shape_cast %9 : vector<2x16x16x32xbf16> to vector<512x32xbf16>
    %c1 = arith.constant 1 : index
    %c0_10 = arith.constant 0 : index
    %c0_11 = arith.constant 0 : index
    %11 = vector.load %arg3[%c1, %c0_10, %c0_11] : memref<9x32x32xbf16, #tpu.memory_space<vmem>>, vector<1x32x32xbf16>
    %12 = vector.shape_cast %11 : vector<1x32x32xbf16> to vector<32x32xbf16>
    %cst_12 = arith.constant dense<0.000000e+00> : vector<32x512xf32>
    %13 = tpu.matmul %12, %10, %cst_12 {dimension_numbers = #tpu.dot_dimension_numbers<[1], [1], [0], [0], [0, 0, 1, 0], [], []>} : vector<32x32xbf16>, vector<512x32xbf16>, vector<32x512xf32> -> vector<32x512xf32>
    %14 = arith.addf %8, %13 : vector<32x512xf32>
    %15 = vector.extract_strided_slice %1 {offsets = [0, 0, 2, 0], sizes = [2, 16, 16, 32], strides = [1, 1, 1, 1]} : vector<2x18x18x32xbf16> to vector<2x16x16x32xbf16>
    %16 = vector.shape_cast %15 : vector<2x16x16x32xbf16> to vector<512x32xbf16>
    %c2 = arith.constant 2 : index
    %c0_13 = arith.constant 0 : index
    %c0_14 = arith.constant 0 : index
    %17 = vector.load %arg3[%c2, %c0_13, %c0_14] : memref<9x32x32xbf16, #tpu.memory_space<vmem>>, vector<1x32x32xbf16>
    %18 = vector.shape_cast %17 : vector<1x32x32xbf16> to vector<32x32xbf16>
    %cst_15 = arith.constant dense<0.000000e+00> : vector<32x512xf32>
    %19 = tpu.matmul %18, %16, %cst_15 {dimension_numbers = #tpu.dot_dimension_numbers<[1], [1], [0], [0], [0, 0, 1, 0], [], []>} : vector<32x32xbf16>, vector<512x32xbf16>, vector<32x512xf32> -> vector<32x512xf32>
    %20 = arith.addf %14, %19 : vector<32x512xf32>
    %21 = vector.extract_strided_slice %1 {offsets = [0, 1, 0, 0], sizes = [2, 16, 16, 32], strides = [1, 1, 1, 1]} : vector<2x18x18x32xbf16> to vector<2x16x16x32xbf16>
    %22 = vector.shape_cast %21 : vector<2x16x16x32xbf16> to vector<512x32xbf16>
    %c3 = arith.constant 3 : index
    %c0_16 = arith.constant 0 : index
    %c0_17 = arith.constant 0 : index
    %23 = vector.load %arg3[%c3, %c0_16, %c0_17] : memref<9x32x32xbf16, #tpu.memory_space<vmem>>, vector<1x32x32xbf16>
    %24 = vector.shape_cast %23 : vector<1x32x32xbf16> to vector<32x32xbf16>
    %cst_18 = arith.constant dense<0.000000e+00> : vector<32x512xf32>
    %25 = tpu.matmul %24, %22, %cst_18 {dimension_numbers = #tpu.dot_dimension_numbers<[1], [1], [0], [0], [0, 0, 1, 0], [], []>} : vector<32x32xbf16>, vector<512x32xbf16>, vector<32x512xf32> -> vector<32x512xf32>
    %26 = arith.addf %20, %25 : vector<32x512xf32>
    %27 = vector.extract_strided_slice %1 {offsets = [0, 1, 1, 0], sizes = [2, 16, 16, 32], strides = [1, 1, 1, 1]} : vector<2x18x18x32xbf16> to vector<2x16x16x32xbf16>
    %28 = vector.shape_cast %27 : vector<2x16x16x32xbf16> to vector<512x32xbf16>
    %c4 = arith.constant 4 : index
    %c0_19 = arith.constant 0 : index
    %c0_20 = arith.constant 0 : index
    %29 = vector.load %arg3[%c4, %c0_19, %c0_20] : memref<9x32x32xbf16, #tpu.memory_space<vmem>>, vector<1x32x32xbf16>
    %30 = vector.shape_cast %29 : vector<1x32x32xbf16> to vector<32x32xbf16>
    %cst_21 = arith.constant dense<0.000000e+00> : vector<32x512xf32>
    %31 = tpu.matmul %30, %28, %cst_21 {dimension_numbers = #tpu.dot_dimension_numbers<[1], [1], [0], [0], [0, 0, 1, 0], [], []>} : vector<32x32xbf16>, vector<512x32xbf16>, vector<32x512xf32> -> vector<32x512xf32>
    %32 = arith.addf %26, %31 : vector<32x512xf32>
    %33 = vector.extract_strided_slice %1 {offsets = [0, 1, 2, 0], sizes = [2, 16, 16, 32], strides = [1, 1, 1, 1]} : vector<2x18x18x32xbf16> to vector<2x16x16x32xbf16>
    %34 = vector.shape_cast %33 : vector<2x16x16x32xbf16> to vector<512x32xbf16>
    %c5 = arith.constant 5 : index
    %c0_22 = arith.constant 0 : index
    %c0_23 = arith.constant 0 : index
    %35 = vector.load %arg3[%c5, %c0_22, %c0_23] : memref<9x32x32xbf16, #tpu.memory_space<vmem>>, vector<1x32x32xbf16>
    %36 = vector.shape_cast %35 : vector<1x32x32xbf16> to vector<32x32xbf16>
    %cst_24 = arith.constant dense<0.000000e+00> : vector<32x512xf32>
    %37 = tpu.matmul %36, %34, %cst_24 {dimension_numbers = #tpu.dot_dimension_numbers<[1], [1], [0], [0], [0, 0, 1, 0], [], []>} : vector<32x32xbf16>, vector<512x32xbf16>, vector<32x512xf32> -> vector<32x512xf32>
    %38 = arith.addf %32, %37 : vector<32x512xf32>
    %39 = vector.extract_strided_slice %1 {offsets = [0, 2, 0, 0], sizes = [2, 16, 16, 32], strides = [1, 1, 1, 1]} : vector<2x18x18x32xbf16> to vector<2x16x16x32xbf16>
    %40 = vector.shape_cast %39 : vector<2x16x16x32xbf16> to vector<512x32xbf16>
    %c6 = arith.constant 6 : index
    %c0_25 = arith.constant 0 : index
    %c0_26 = arith.constant 0 : index
    %41 = vector.load %arg3[%c6, %c0_25, %c0_26] : memref<9x32x32xbf16, #tpu.memory_space<vmem>>, vector<1x32x32xbf16>
    %42 = vector.shape_cast %41 : vector<1x32x32xbf16> to vector<32x32xbf16>
    %cst_27 = arith.constant dense<0.000000e+00> : vector<32x512xf32>
    %43 = tpu.matmul %42, %40, %cst_27 {dimension_numbers = #tpu.dot_dimension_numbers<[1], [1], [0], [0], [0, 0, 1, 0], [], []>} : vector<32x32xbf16>, vector<512x32xbf16>, vector<32x512xf32> -> vector<32x512xf32>
    %44 = arith.addf %38, %43 : vector<32x512xf32>
    %45 = vector.extract_strided_slice %1 {offsets = [0, 2, 1, 0], sizes = [2, 16, 16, 32], strides = [1, 1, 1, 1]} : vector<2x18x18x32xbf16> to vector<2x16x16x32xbf16>
    %46 = vector.shape_cast %45 : vector<2x16x16x32xbf16> to vector<512x32xbf16>
    %c7 = arith.constant 7 : index
    %c0_28 = arith.constant 0 : index
    %c0_29 = arith.constant 0 : index
    %47 = vector.load %arg3[%c7, %c0_28, %c0_29] : memref<9x32x32xbf16, #tpu.memory_space<vmem>>, vector<1x32x32xbf16>
    %48 = vector.shape_cast %47 : vector<1x32x32xbf16> to vector<32x32xbf16>
    %cst_30 = arith.constant dense<0.000000e+00> : vector<32x512xf32>
    %49 = tpu.matmul %48, %46, %cst_30 {dimension_numbers = #tpu.dot_dimension_numbers<[1], [1], [0], [0], [0, 0, 1, 0], [], []>} : vector<32x32xbf16>, vector<512x32xbf16>, vector<32x512xf32> -> vector<32x512xf32>
    %50 = arith.addf %44, %49 : vector<32x512xf32>
    %51 = vector.extract_strided_slice %1 {offsets = [0, 2, 2, 0], sizes = [2, 16, 16, 32], strides = [1, 1, 1, 1]} : vector<2x18x18x32xbf16> to vector<2x16x16x32xbf16>
    %52 = vector.shape_cast %51 : vector<2x16x16x32xbf16> to vector<512x32xbf16>
    %c8 = arith.constant 8 : index
    %c0_31 = arith.constant 0 : index
    %c0_32 = arith.constant 0 : index
    %53 = vector.load %arg3[%c8, %c0_31, %c0_32] : memref<9x32x32xbf16, #tpu.memory_space<vmem>>, vector<1x32x32xbf16>
    %54 = vector.shape_cast %53 : vector<1x32x32xbf16> to vector<32x32xbf16>
    %cst_33 = arith.constant dense<0.000000e+00> : vector<32x512xf32>
    %55 = tpu.matmul %54, %52, %cst_33 {dimension_numbers = #tpu.dot_dimension_numbers<[1], [1], [0], [0], [0, 0, 1, 0], [], []>} : vector<32x32xbf16>, vector<512x32xbf16>, vector<32x512xf32> -> vector<32x512xf32>
    %56 = arith.addf %50, %55 : vector<32x512xf32>
    %c0_34 = arith.constant 0 : index
    %c0_35 = arith.constant 0 : index
    %57 = vector.load %arg4[%c0_34, %c0_35] : memref<32x1xf32, #tpu.memory_space<vmem>>, vector<32x1xf32>
    %58 = vector.broadcast %57 : vector<32x1xf32> to vector<32x512xf32>
    %59 = arith.addf %56, %58 : vector<32x512xf32>
    %60 = vector.extract_strided_slice %59 {offsets = [0, 0], sizes = [32, 256], strides = [1, 1]} : vector<32x512xf32> to vector<32x256xf32>
    %c0_36 = arith.constant 0 : index
    %c0_37 = arith.constant 0 : index
    %c0_38 = arith.constant 0 : index
    %61 = vector.load %arg9[%c0_36, %c0_37, %c0_38] : memref<2x32x256xf32, #tpu.memory_space<vmem>>, vector<1x32x256xf32>
    %62 = vector.shape_cast %61 : vector<1x32x256xf32> to vector<32x256xf32>
    %63 = vector.shape_cast %60 : vector<32x256xf32> to vector<1x32x256xf32>
    tpu.vector_store %arg9[%c0_36, %c0_37, %c0_38], %63 {strides = array<i32>} : memref<2x32x256xf32, #tpu.memory_space<vmem>>, vector<1x32x256xf32>,
    %64 = vector.extract_strided_slice %59 {offsets = [0, 256], sizes = [32, 256], strides = [1, 1]} : vector<32x512xf32> to vector<32x256xf32>
    %c1_39 = arith.constant 1 : index
    %c0_40 = arith.constant 0 : index
    %c0_41 = arith.constant 0 : index
    %65 = vector.load %arg9[%c1_39, %c0_40, %c0_41] : memref<2x32x256xf32, #tpu.memory_space<vmem>>, vector<1x32x256xf32>
    %66 = vector.shape_cast %65 : vector<1x32x256xf32> to vector<32x256xf32>
    %67 = vector.shape_cast %64 : vector<32x256xf32> to vector<1x32x256xf32>
    tpu.vector_store %arg9[%c1_39, %c0_40, %c0_41], %67 {strides = array<i32>} : memref<2x32x256xf32, #tpu.memory_space<vmem>>, vector<1x32x256xf32>,
    %68 = vector.extract_strided_slice %3 {offsets = [0, 0, 0, 0], sizes = [2, 16, 16, 64], strides = [1, 1, 1, 1]} : vector<2x18x18x64xbf16> to vector<2x16x16x64xbf16>
    %69 = vector.shape_cast %68 : vector<2x16x16x64xbf16> to vector<512x64xbf16>
    %c0_42 = arith.constant 0 : index
    %c0_43 = arith.constant 0 : index
    %c0_44 = arith.constant 0 : index
    %70 = vector.load %arg5[%c0_42, %c0_43, %c0_44] : memref<9x64x64xbf16, #tpu.memory_space<vmem>>, vector<1x64x64xbf16>
    %71 = vector.shape_cast %70 : vector<1x64x64xbf16> to vector<64x64xbf16>
    %cst_45 = arith.constant dense<0.000000e+00> : vector<64x512xf32>
    %72 = tpu.matmul %71, %69, %cst_45 {dimension_numbers = #tpu.dot_dimension_numbers<[1], [1], [0], [0], [0, 0, 1, 0], [], []>} : vector<64x64xbf16>, vector<512x64xbf16>, vector<64x512xf32> -> vector<64x512xf32>
    %73 = vector.extract_strided_slice %3 {offsets = [0, 0, 1, 0], sizes = [2, 16, 16, 64], strides = [1, 1, 1, 1]} : vector<2x18x18x64xbf16> to vector<2x16x16x64xbf16>
    %74 = vector.shape_cast %73 : vector<2x16x16x64xbf16> to vector<512x64xbf16>
    %c1_46 = arith.constant 1 : index
    %c0_47 = arith.constant 0 : index
    %c0_48 = arith.constant 0 : index
    %75 = vector.load %arg5[%c1_46, %c0_47, %c0_48] : memref<9x64x64xbf16, #tpu.memory_space<vmem>>, vector<1x64x64xbf16>
    %76 = vector.shape_cast %75 : vector<1x64x64xbf16> to vector<64x64xbf16>
    %cst_49 = arith.constant dense<0.000000e+00> : vector<64x512xf32>
    %77 = tpu.matmul %76, %74, %cst_49 {dimension_numbers = #tpu.dot_dimension_numbers<[1], [1], [0], [0], [0, 0, 1, 0], [], []>} : vector<64x64xbf16>, vector<512x64xbf16>, vector<64x512xf32> -> vector<64x512xf32>
    %78 = arith.addf %72, %77 : vector<64x512xf32>
    %79 = vector.extract_strided_slice %3 {offsets = [0, 0, 2, 0], sizes = [2, 16, 16, 64], strides = [1, 1, 1, 1]} : vector<2x18x18x64xbf16> to vector<2x16x16x64xbf16>
    %80 = vector.shape_cast %79 : vector<2x16x16x64xbf16> to vector<512x64xbf16>
    %c2_50 = arith.constant 2 : index
    %c0_51 = arith.constant 0 : index
    %c0_52 = arith.constant 0 : index
    %81 = vector.load %arg5[%c2_50, %c0_51, %c0_52] : memref<9x64x64xbf16, #tpu.memory_space<vmem>>, vector<1x64x64xbf16>
    %82 = vector.shape_cast %81 : vector<1x64x64xbf16> to vector<64x64xbf16>
    %cst_53 = arith.constant dense<0.000000e+00> : vector<64x512xf32>
    %83 = tpu.matmul %82, %80, %cst_53 {dimension_numbers = #tpu.dot_dimension_numbers<[1], [1], [0], [0], [0, 0, 1, 0], [], []>} : vector<64x64xbf16>, vector<512x64xbf16>, vector<64x512xf32> -> vector<64x512xf32>
    %84 = arith.addf %78, %83 : vector<64x512xf32>
    %85 = vector.extract_strided_slice %3 {offsets = [0, 1, 0, 0], sizes = [2, 16, 16, 64], strides = [1, 1, 1, 1]} : vector<2x18x18x64xbf16> to vector<2x16x16x64xbf16>
    %86 = vector.shape_cast %85 : vector<2x16x16x64xbf16> to vector<512x64xbf16>
    %c3_54 = arith.constant 3 : index
    %c0_55 = arith.constant 0 : index
    %c0_56 = arith.constant 0 : index
    %87 = vector.load %arg5[%c3_54, %c0_55, %c0_56] : memref<9x64x64xbf16, #tpu.memory_space<vmem>>, vector<1x64x64xbf16>
    %88 = vector.shape_cast %87 : vector<1x64x64xbf16> to vector<64x64xbf16>
    %cst_57 = arith.constant dense<0.000000e+00> : vector<64x512xf32>
    %89 = tpu.matmul %88, %86, %cst_57 {dimension_numbers = #tpu.dot_dimension_numbers<[1], [1], [0], [0], [0, 0, 1, 0], [], []>} : vector<64x64xbf16>, vector<512x64xbf16>, vector<64x512xf32> -> vector<64x512xf32>
    %90 = arith.addf %84, %89 : vector<64x512xf32>
    %91 = vector.extract_strided_slice %3 {offsets = [0, 1, 1, 0], sizes = [2, 16, 16, 64], strides = [1, 1, 1, 1]} : vector<2x18x18x64xbf16> to vector<2x16x16x64xbf16>
    %92 = vector.shape_cast %91 : vector<2x16x16x64xbf16> to vector<512x64xbf16>
    %c4_58 = arith.constant 4 : index
    %c0_59 = arith.constant 0 : index
    %c0_60 = arith.constant 0 : index
    %93 = vector.load %arg5[%c4_58, %c0_59, %c0_60] : memref<9x64x64xbf16, #tpu.memory_space<vmem>>, vector<1x64x64xbf16>
    %94 = vector.shape_cast %93 : vector<1x64x64xbf16> to vector<64x64xbf16>
    %cst_61 = arith.constant dense<0.000000e+00> : vector<64x512xf32>
    %95 = tpu.matmul %94, %92, %cst_61 {dimension_numbers = #tpu.dot_dimension_numbers<[1], [1], [0], [0], [0, 0, 1, 0], [], []>} : vector<64x64xbf16>, vector<512x64xbf16>, vector<64x512xf32> -> vector<64x512xf32>
    %96 = arith.addf %90, %95 : vector<64x512xf32>
    %97 = vector.extract_strided_slice %3 {offsets = [0, 1, 2, 0], sizes = [2, 16, 16, 64], strides = [1, 1, 1, 1]} : vector<2x18x18x64xbf16> to vector<2x16x16x64xbf16>
    %98 = vector.shape_cast %97 : vector<2x16x16x64xbf16> to vector<512x64xbf16>
    %c5_62 = arith.constant 5 : index
    %c0_63 = arith.constant 0 : index
    %c0_64 = arith.constant 0 : index
    %99 = vector.load %arg5[%c5_62, %c0_63, %c0_64] : memref<9x64x64xbf16, #tpu.memory_space<vmem>>, vector<1x64x64xbf16>
    %100 = vector.shape_cast %99 : vector<1x64x64xbf16> to vector<64x64xbf16>
    %cst_65 = arith.constant dense<0.000000e+00> : vector<64x512xf32>
    %101 = tpu.matmul %100, %98, %cst_65 {dimension_numbers = #tpu.dot_dimension_numbers<[1], [1], [0], [0], [0, 0, 1, 0], [], []>} : vector<64x64xbf16>, vector<512x64xbf16>, vector<64x512xf32> -> vector<64x512xf32>
    %102 = arith.addf %96, %101 : vector<64x512xf32>
    %103 = vector.extract_strided_slice %3 {offsets = [0, 2, 0, 0], sizes = [2, 16, 16, 64], strides = [1, 1, 1, 1]} : vector<2x18x18x64xbf16> to vector<2x16x16x64xbf16>
    %104 = vector.shape_cast %103 : vector<2x16x16x64xbf16> to vector<512x64xbf16>
    %c6_66 = arith.constant 6 : index
    %c0_67 = arith.constant 0 : index
    %c0_68 = arith.constant 0 : index
    %105 = vector.load %arg5[%c6_66, %c0_67, %c0_68] : memref<9x64x64xbf16, #tpu.memory_space<vmem>>, vector<1x64x64xbf16>
    %106 = vector.shape_cast %105 : vector<1x64x64xbf16> to vector<64x64xbf16>
    %cst_69 = arith.constant dense<0.000000e+00> : vector<64x512xf32>
    %107 = tpu.matmul %106, %104, %cst_69 {dimension_numbers = #tpu.dot_dimension_numbers<[1], [1], [0], [0], [0, 0, 1, 0], [], []>} : vector<64x64xbf16>, vector<512x64xbf16>, vector<64x512xf32> -> vector<64x512xf32>
    %108 = arith.addf %102, %107 : vector<64x512xf32>
    %109 = vector.extract_strided_slice %3 {offsets = [0, 2, 1, 0], sizes = [2, 16, 16, 64], strides = [1, 1, 1, 1]} : vector<2x18x18x64xbf16> to vector<2x16x16x64xbf16>
    %110 = vector.shape_cast %109 : vector<2x16x16x64xbf16> to vector<512x64xbf16>
    %c7_70 = arith.constant 7 : index
    %c0_71 = arith.constant 0 : index
    %c0_72 = arith.constant 0 : index
    %111 = vector.load %arg5[%c7_70, %c0_71, %c0_72] : memref<9x64x64xbf16, #tpu.memory_space<vmem>>, vector<1x64x64xbf16>
    %112 = vector.shape_cast %111 : vector<1x64x64xbf16> to vector<64x64xbf16>
    %cst_73 = arith.constant dense<0.000000e+00> : vector<64x512xf32>
    %113 = tpu.matmul %112, %110, %cst_73 {dimension_numbers = #tpu.dot_dimension_numbers<[1], [1], [0], [0], [0, 0, 1, 0], [], []>} : vector<64x64xbf16>, vector<512x64xbf16>, vector<64x512xf32> -> vector<64x512xf32>
    %114 = arith.addf %108, %113 : vector<64x512xf32>
    %115 = vector.extract_strided_slice %3 {offsets = [0, 2, 2, 0], sizes = [2, 16, 16, 64], strides = [1, 1, 1, 1]} : vector<2x18x18x64xbf16> to vector<2x16x16x64xbf16>
    %116 = vector.shape_cast %115 : vector<2x16x16x64xbf16> to vector<512x64xbf16>
    %c8_74 = arith.constant 8 : index
    %c0_75 = arith.constant 0 : index
    %c0_76 = arith.constant 0 : index
    %117 = vector.load %arg5[%c8_74, %c0_75, %c0_76] : memref<9x64x64xbf16, #tpu.memory_space<vmem>>, vector<1x64x64xbf16>
    %118 = vector.shape_cast %117 : vector<1x64x64xbf16> to vector<64x64xbf16>
    %cst_77 = arith.constant dense<0.000000e+00> : vector<64x512xf32>
    %119 = tpu.matmul %118, %116, %cst_77 {dimension_numbers = #tpu.dot_dimension_numbers<[1], [1], [0], [0], [0, 0, 1, 0], [], []>} : vector<64x64xbf16>, vector<512x64xbf16>, vector<64x512xf32> -> vector<64x512xf32>
    %120 = arith.addf %114, %119 : vector<64x512xf32>
    %c0_78 = arith.constant 0 : index
    %c0_79 = arith.constant 0 : index
    %121 = vector.load %arg6[%c0_78, %c0_79] : memref<64x1xf32, #tpu.memory_space<vmem>>, vector<64x1xf32>
    %122 = vector.broadcast %121 : vector<64x1xf32> to vector<64x512xf32>
    %123 = arith.addf %120, %122 : vector<64x512xf32>
    %124 = vector.extract_strided_slice %123 {offsets = [0, 0], sizes = [64, 256], strides = [1, 1]} : vector<64x512xf32> to vector<64x256xf32>
    %c0_80 = arith.constant 0 : index
    %c0_81 = arith.constant 0 : index
    %c0_82 = arith.constant 0 : index
    %125 = vector.load %arg10[%c0_80, %c0_81, %c0_82] : memref<2x64x256xf32, #tpu.memory_space<vmem>>, vector<1x64x256xf32>
    %126 = vector.shape_cast %125 : vector<1x64x256xf32> to vector<64x256xf32>
    %127 = vector.shape_cast %124 : vector<64x256xf32> to vector<1x64x256xf32>
    tpu.vector_store %arg10[%c0_80, %c0_81, %c0_82], %127 {strides = array<i32>} : memref<2x64x256xf32, #tpu.memory_space<vmem>>, vector<1x64x256xf32>,
    %128 = vector.extract_strided_slice %123 {offsets = [0, 256], sizes = [64, 256], strides = [1, 1]} : vector<64x512xf32> to vector<64x256xf32>
    %c1_83 = arith.constant 1 : index
    %c0_84 = arith.constant 0 : index
    %c0_85 = arith.constant 0 : index
    %129 = vector.load %arg10[%c1_83, %c0_84, %c0_85] : memref<2x64x256xf32, #tpu.memory_space<vmem>>, vector<1x64x256xf32>
    %130 = vector.shape_cast %129 : vector<1x64x256xf32> to vector<64x256xf32>
    %131 = vector.shape_cast %128 : vector<64x256xf32> to vector<1x64x256xf32>
    tpu.vector_store %arg10[%c1_83, %c0_84, %c0_85], %131 {strides = array<i32>} : memref<2x64x256xf32, #tpu.memory_space<vmem>>, vector<1x64x256xf32>,
    %c0_86 = arith.constant 0 : index
    %c0_87 = arith.constant 0 : index
    %c0_88 = arith.constant 0 : index
    %c0_89 = arith.constant 0 : index
    %132 = tpu.strided_load %arg2[%c0_86, %c0_87, %c0_88, %c0_89] {strides = array<i32: 1, 2, 2, 1>} : memref<2x18x18x64xf32, #tpu.memory_space<vmem>>, vector<2x8x8x64xf32>
    %133 = arith.truncf %132 : vector<2x8x8x64xf32> to vector<2x8x8x64xbf16>
    %134 = vector.shape_cast %133 : vector<2x8x8x64xbf16> to vector<128x64xbf16>
    %c0_90 = arith.constant 0 : index
    %c0_91 = arith.constant 0 : index
    %c0_92 = arith.constant 0 : index
    %135 = vector.load %arg7[%c0_90, %c0_91, %c0_92] : memref<9x128x64xbf16, #tpu.memory_space<vmem>>, vector<1x128x64xbf16>
    %136 = vector.shape_cast %135 : vector<1x128x64xbf16> to vector<128x64xbf16>
    %cst_93 = arith.constant dense<0.000000e+00> : vector<128x128xf32>
    %137 = tpu.matmul %136, %134, %cst_93 {dimension_numbers = #tpu.dot_dimension_numbers<[1], [1], [0], [0], [0, 0, 1, 0], [], []>} : vector<128x64xbf16>, vector<128x64xbf16>, vector<128x128xf32> -> vector<128x128xf32>
    %c0_94 = arith.constant 0 : index
    %c0_95 = arith.constant 0 : index
    %c1_96 = arith.constant 1 : index
    %c0_97 = arith.constant 0 : index
    %138 = tpu.strided_load %arg2[%c0_94, %c0_95, %c1_96, %c0_97] {strides = array<i32: 1, 2, 2, 1>} : memref<2x18x18x64xf32, #tpu.memory_space<vmem>>, vector<2x8x8x64xf32>
    %139 = arith.truncf %138 : vector<2x8x8x64xf32> to vector<2x8x8x64xbf16>
    %140 = vector.shape_cast %139 : vector<2x8x8x64xbf16> to vector<128x64xbf16>
    %c1_98 = arith.constant 1 : index
    %c0_99 = arith.constant 0 : index
    %c0_100 = arith.constant 0 : index
    %141 = vector.load %arg7[%c1_98, %c0_99, %c0_100] : memref<9x128x64xbf16, #tpu.memory_space<vmem>>, vector<1x128x64xbf16>
    %142 = vector.shape_cast %141 : vector<1x128x64xbf16> to vector<128x64xbf16>
    %cst_101 = arith.constant dense<0.000000e+00> : vector<128x128xf32>
    %143 = tpu.matmul %142, %140, %cst_101 {dimension_numbers = #tpu.dot_dimension_numbers<[1], [1], [0], [0], [0, 0, 1, 0], [], []>} : vector<128x64xbf16>, vector<128x64xbf16>, vector<128x128xf32> -> vector<128x128xf32>
    %144 = arith.addf %137, %143 : vector<128x128xf32>
    %c0_102 = arith.constant 0 : index
    %c0_103 = arith.constant 0 : index
    %c2_104 = arith.constant 2 : index
    %c0_105 = arith.constant 0 : index
    %145 = tpu.strided_load %arg2[%c0_102, %c0_103, %c2_104, %c0_105] {strides = array<i32: 1, 2, 2, 1>} : memref<2x18x18x64xf32, #tpu.memory_space<vmem>>, vector<2x8x8x64xf32>
    %146 = arith.truncf %145 : vector<2x8x8x64xf32> to vector<2x8x8x64xbf16>
    %147 = vector.shape_cast %146 : vector<2x8x8x64xbf16> to vector<128x64xbf16>
    %c2_106 = arith.constant 2 : index
    %c0_107 = arith.constant 0 : index
    %c0_108 = arith.constant 0 : index
    %148 = vector.load %arg7[%c2_106, %c0_107, %c0_108] : memref<9x128x64xbf16, #tpu.memory_space<vmem>>, vector<1x128x64xbf16>
    %149 = vector.shape_cast %148 : vector<1x128x64xbf16> to vector<128x64xbf16>
    %cst_109 = arith.constant dense<0.000000e+00> : vector<128x128xf32>
    %150 = tpu.matmul %149, %147, %cst_109 {dimension_numbers = #tpu.dot_dimension_numbers<[1], [1], [0], [0], [0, 0, 1, 0], [], []>} : vector<128x64xbf16>, vector<128x64xbf16>, vector<128x128xf32> -> vector<128x128xf32>
    %151 = arith.addf %144, %150 : vector<128x128xf32>
    %c0_110 = arith.constant 0 : index
    %c1_111 = arith.constant 1 : index
    %c0_112 = arith.constant 0 : index
    %c0_113 = arith.constant 0 : index
    %152 = tpu.strided_load %arg2[%c0_110, %c1_111, %c0_112, %c0_113] {strides = array<i32: 1, 2, 2, 1>} : memref<2x18x18x64xf32, #tpu.memory_space<vmem>>, vector<2x8x8x64xf32>
    %153 = arith.truncf %152 : vector<2x8x8x64xf32> to vector<2x8x8x64xbf16>
    %154 = vector.shape_cast %153 : vector<2x8x8x64xbf16> to vector<128x64xbf16>
    %c3_114 = arith.constant 3 : index
    %c0_115 = arith.constant 0 : index
    %c0_116 = arith.constant 0 : index
    %155 = vector.load %arg7[%c3_114, %c0_115, %c0_116] : memref<9x128x64xbf16, #tpu.memory_space<vmem>>, vector<1x128x64xbf16>
    %156 = vector.shape_cast %155 : vector<1x128x64xbf16> to vector<128x64xbf16>
    %cst_117 = arith.constant dense<0.000000e+00> : vector<128x128xf32>
    %157 = tpu.matmul %156, %154, %cst_117 {dimension_numbers = #tpu.dot_dimension_numbers<[1], [1], [0], [0], [0, 0, 1, 0], [], []>} : vector<128x64xbf16>, vector<128x64xbf16>, vector<128x128xf32> -> vector<128x128xf32>
    %158 = arith.addf %151, %157 : vector<128x128xf32>
    %c0_118 = arith.constant 0 : index
    %c1_119 = arith.constant 1 : index
    %c1_120 = arith.constant 1 : index
    %c0_121 = arith.constant 0 : index
    %159 = tpu.strided_load %arg2[%c0_118, %c1_119, %c1_120, %c0_121] {strides = array<i32: 1, 2, 2, 1>} : memref<2x18x18x64xf32, #tpu.memory_space<vmem>>, vector<2x8x8x64xf32>
    %160 = arith.truncf %159 : vector<2x8x8x64xf32> to vector<2x8x8x64xbf16>
    %161 = vector.shape_cast %160 : vector<2x8x8x64xbf16> to vector<128x64xbf16>
    %c4_122 = arith.constant 4 : index
    %c0_123 = arith.constant 0 : index
    %c0_124 = arith.constant 0 : index
    %162 = vector.load %arg7[%c4_122, %c0_123, %c0_124] : memref<9x128x64xbf16, #tpu.memory_space<vmem>>, vector<1x128x64xbf16>
    %163 = vector.shape_cast %162 : vector<1x128x64xbf16> to vector<128x64xbf16>
    %cst_125 = arith.constant dense<0.000000e+00> : vector<128x128xf32>
    %164 = tpu.matmul %163, %161, %cst_125 {dimension_numbers = #tpu.dot_dimension_numbers<[1], [1], [0], [0], [0, 0, 1, 0], [], []>} : vector<128x64xbf16>, vector<128x64xbf16>, vector<128x128xf32> -> vector<128x128xf32>
    %165 = arith.addf %158, %164 : vector<128x128xf32>
    %c0_126 = arith.constant 0 : index
    %c1_127 = arith.constant 1 : index
    %c2_128 = arith.constant 2 : index
    %c0_129 = arith.constant 0 : index
    %166 = tpu.strided_load %arg2[%c0_126, %c1_127, %c2_128, %c0_129] {strides = array<i32: 1, 2, 2, 1>} : memref<2x18x18x64xf32, #tpu.memory_space<vmem>>, vector<2x8x8x64xf32>
    %167 = arith.truncf %166 : vector<2x8x8x64xf32> to vector<2x8x8x64xbf16>
    %168 = vector.shape_cast %167 : vector<2x8x8x64xbf16> to vector<128x64xbf16>
    %c5_130 = arith.constant 5 : index
    %c0_131 = arith.constant 0 : index
    %c0_132 = arith.constant 0 : index
    %169 = vector.load %arg7[%c5_130, %c0_131, %c0_132] : memref<9x128x64xbf16, #tpu.memory_space<vmem>>, vector<1x128x64xbf16>
    %170 = vector.shape_cast %169 : vector<1x128x64xbf16> to vector<128x64xbf16>
    %cst_133 = arith.constant dense<0.000000e+00> : vector<128x128xf32>
    %171 = tpu.matmul %170, %168, %cst_133 {dimension_numbers = #tpu.dot_dimension_numbers<[1], [1], [0], [0], [0, 0, 1, 0], [], []>} : vector<128x64xbf16>, vector<128x64xbf16>, vector<128x128xf32> -> vector<128x128xf32>
    %172 = arith.addf %165, %171 : vector<128x128xf32>
    %c0_134 = arith.constant 0 : index
    %c2_135 = arith.constant 2 : index
    %c0_136 = arith.constant 0 : index
    %c0_137 = arith.constant 0 : index
    %173 = tpu.strided_load %arg2[%c0_134, %c2_135, %c0_136, %c0_137] {strides = array<i32: 1, 2, 2, 1>} : memref<2x18x18x64xf32, #tpu.memory_space<vmem>>, vector<2x8x8x64xf32>
    %174 = arith.truncf %173 : vector<2x8x8x64xf32> to vector<2x8x8x64xbf16>
    %175 = vector.shape_cast %174 : vector<2x8x8x64xbf16> to vector<128x64xbf16>
    %c6_138 = arith.constant 6 : index
    %c0_139 = arith.constant 0 : index
    %c0_140 = arith.constant 0 : index
    %176 = vector.load %arg7[%c6_138, %c0_139, %c0_140] : memref<9x128x64xbf16, #tpu.memory_space<vmem>>, vector<1x128x64xbf16>
    %177 = vector.shape_cast %176 : vector<1x128x64xbf16> to vector<128x64xbf16>
    %cst_141 = arith.constant dense<0.000000e+00> : vector<128x128xf32>
    %178 = tpu.matmul %177, %175, %cst_141 {dimension_numbers = #tpu.dot_dimension_numbers<[1], [1], [0], [0], [0, 0, 1, 0], [], []>} : vector<128x64xbf16>, vector<128x64xbf16>, vector<128x128xf32> -> vector<128x128xf32>
    %179 = arith.addf %172, %178 : vector<128x128xf32>
    %c0_142 = arith.constant 0 : index
    %c2_143 = arith.constant 2 : index
    %c1_144 = arith.constant 1 : index
    %c0_145 = arith.constant 0 : index
    %180 = tpu.strided_load %arg2[%c0_142, %c2_143, %c1_144, %c0_145] {strides = array<i32: 1, 2, 2, 1>} : memref<2x18x18x64xf32, #tpu.memory_space<vmem>>, vector<2x8x8x64xf32>
    %181 = arith.truncf %180 : vector<2x8x8x64xf32> to vector<2x8x8x64xbf16>
    %182 = vector.shape_cast %181 : vector<2x8x8x64xbf16> to vector<128x64xbf16>
    %c7_146 = arith.constant 7 : index
    %c0_147 = arith.constant 0 : index
    %c0_148 = arith.constant 0 : index
    %183 = vector.load %arg7[%c7_146, %c0_147, %c0_148] : memref<9x128x64xbf16, #tpu.memory_space<vmem>>, vector<1x128x64xbf16>
    %184 = vector.shape_cast %183 : vector<1x128x64xbf16> to vector<128x64xbf16>
    %cst_149 = arith.constant dense<0.000000e+00> : vector<128x128xf32>
    %185 = tpu.matmul %184, %182, %cst_149 {dimension_numbers = #tpu.dot_dimension_numbers<[1], [1], [0], [0], [0, 0, 1, 0], [], []>} : vector<128x64xbf16>, vector<128x64xbf16>, vector<128x128xf32> -> vector<128x128xf32>
    %186 = arith.addf %179, %185 : vector<128x128xf32>
    %c0_150 = arith.constant 0 : index
    %c2_151 = arith.constant 2 : index
    %c2_152 = arith.constant 2 : index
    %c0_153 = arith.constant 0 : index
    %187 = tpu.strided_load %arg2[%c0_150, %c2_151, %c2_152, %c0_153] {strides = array<i32: 1, 2, 2, 1>} : memref<2x18x18x64xf32, #tpu.memory_space<vmem>>, vector<2x8x8x64xf32>
    %188 = arith.truncf %187 : vector<2x8x8x64xf32> to vector<2x8x8x64xbf16>
    %189 = vector.shape_cast %188 : vector<2x8x8x64xbf16> to vector<128x64xbf16>
    %c8_154 = arith.constant 8 : index
    %c0_155 = arith.constant 0 : index
    %c0_156 = arith.constant 0 : index
    %190 = vector.load %arg7[%c8_154, %c0_155, %c0_156] : memref<9x128x64xbf16, #tpu.memory_space<vmem>>, vector<1x128x64xbf16>
    %191 = vector.shape_cast %190 : vector<1x128x64xbf16> to vector<128x64xbf16>
    %cst_157 = arith.constant dense<0.000000e+00> : vector<128x128xf32>
    %192 = tpu.matmul %191, %189, %cst_157 {dimension_numbers = #tpu.dot_dimension_numbers<[1], [1], [0], [0], [0, 0, 1, 0], [], []>} : vector<128x64xbf16>, vector<128x64xbf16>, vector<128x128xf32> -> vector<128x128xf32>
    %193 = arith.addf %186, %192 : vector<128x128xf32>
    %c0_158 = arith.constant 0 : index
    %c0_159 = arith.constant 0 : index
    %194 = vector.load %arg8[%c0_158, %c0_159] : memref<128x1xf32, #tpu.memory_space<vmem>>, vector<128x1xf32>
    %195 = vector.broadcast %194 : vector<128x1xf32> to vector<128x128xf32>
    %196 = arith.addf %193, %195 : vector<128x128xf32>
    %c0_160 = arith.constant 0 : index
    %c0_161 = arith.constant 0 : index
    %197 = vector.load %arg11[%c0_160, %c0_161] : memref<128x128xf32, #tpu.memory_space<vmem>>, vector<128x128xf32>
    tpu.vector_store %arg11[%c0_160, %c0_161], %196 {strides = array<i32>} : memref<128x128xf32, #tpu.memory_space<vmem>>, vector<128x128xf32>,
    return
  }
  func.func @transform_0(%arg0: i32) -> (i32, i32, i32, i32) {
    %c0_i32 = arith.constant 0 : i32
    %c0_i32_0 = arith.constant 0 : i32
    %c0_i32_1 = arith.constant 0 : i32
    %c0_i32_2 = arith.constant 0 : i32
    %c0_i32_3 = arith.constant 0 : i32
    return %c0_i32, %c0_i32_0, %c0_i32_1, %c0_i32_2 : i32, i32, i32, i32
  }
  func.func @transform_1(%arg0: i32) -> (i32, i32, i32, i32) {
    %c0_i32 = arith.constant 0 : i32
    %c0_i32_0 = arith.constant 0 : i32
    %c0_i32_1 = arith.constant 0 : i32
    %c0_i32_2 = arith.constant 0 : i32
    %c0_i32_3 = arith.constant 0 : i32
    return %c0_i32, %c0_i32_0, %c0_i32_1, %c0_i32_2 : i32, i32, i32, i32
  }
  func.func @transform_2(%arg0: i32) -> (i32, i32, i32) {
    %c0_i32 = arith.constant 0 : i32
    %c0_i32_0 = arith.constant 0 : i32
    %c0_i32_1 = arith.constant 0 : i32
    %c0_i32_2 = arith.constant 0 : i32
    return %c0_i32, %c0_i32_0, %c0_i32_1 : i32, i32, i32
  }
  func.func @transform_3(%arg0: i32) -> (i32, i32) {
    %c0_i32 = arith.constant 0 : i32
    %c0_i32_0 = arith.constant 0 : i32
    %c0_i32_1 = arith.constant 0 : i32
    return %c0_i32, %c0_i32_0 : i32, i32
  }
  func.func @transform_4(%arg0: i32) -> (i32, i32, i32) {
    %c0_i32 = arith.constant 0 : i32
    %c0_i32_0 = arith.constant 0 : i32
    %c0_i32_1 = arith.constant 0 : i32
    %c0_i32_2 = arith.constant 0 : i32
    return %c0_i32, %c0_i32_0, %c0_i32_1 : i32, i32, i32
  }
  func.func @transform_5(%arg0: i32) -> (i32, i32) {
    %c0_i32 = arith.constant 0 : i32
    %c0_i32_0 = arith.constant 0 : i32
    %c0_i32_1 = arith.constant 0 : i32
    return %c0_i32, %c0_i32_0 : i32, i32
  }
  func.func @transform_6(%arg0: i32) -> (i32, i32, i32) {
    %c0_i32 = arith.constant 0 : i32
    %c0_i32_0 = arith.constant 0 : i32
    %c0_i32_1 = arith.constant 0 : i32
    %c0_i32_2 = arith.constant 0 : i32
    return %c0_i32, %c0_i32_0, %c0_i32_1 : i32, i32, i32
  }
  func.func @transform_7(%arg0: i32) -> (i32, i32) {
    %c0_i32 = arith.constant 0 : i32
    %c0_i32_0 = arith.constant 0 : i32
    %c0_i32_1 = arith.constant 0 : i32
    return %c0_i32, %c0_i32_0 : i32, i32
  }
  func.func @transform_8(%arg0: i32) -> (i32, i32, i32) {
    %c0_i32 = arith.constant 0 : i32
    %c0_i32_0 = arith.constant 0 : i32
    %c0_i32_1 = arith.constant 0 : i32
    %c0_i32_2 = arith.constant 0 : i32
    return %c0_i32, %c0_i32_0, %c0_i32_1 : i32, i32, i32
  }
  func.func @transform_9(%arg0: i32) -> (i32, i32, i32) {
    %c0_i32 = arith.constant 0 : i32
    %c0_i32_0 = arith.constant 0 : i32
    %c0_i32_1 = arith.constant 0 : i32
    %c0_i32_2 = arith.constant 0 : i32
    return %c0_i32, %c0_i32_0, %c0_i32_1 : i32, i32, i32
  }
  func.func @transform_10(%arg0: i32) -> (i32, i32) {
    %c0_i32 = arith.constant 0 : i32
    %c0_i32_0 = arith.constant 0 : i32
    %c0_i32_1 = arith.constant 0 : i32
    return %c0_i32, %c0_i32_0 : i32, i32
  }
}

</mosaic_0001>

<llo_original>
// kernel: _lambda_.1
$region0: #{_lambda_.1}
  #allocation0 [shape = 'u32[]', space=smem, size = 0x4, offset = 0x4, fixed_abs, tag = 'smem constant byte address 0x4 - core index']
  #allocation1 [shape = 'u32[72,128]{1,0:T(1,128)}', space=vmem, size = 0x9000, scoped, tag = 'internal scratch']
  %s0 = inlined_call_operand.vmem [shape: f32[2,18,18,32], index: 0, kind: input, shape index: {}]
  %s1 = inlined_call_operand.vmem [shape: f32[2,18,18,64], index: 1, kind: input, shape index: {}]
  %s2 = inlined_call_operand.vmem [shape: bf16[9,32,32], index: 2, kind: input, shape index: {}]
  %s3 = inlined_call_operand.vmem [shape: f32[32,1], index: 3, kind: input, shape index: {}]
  %s4 = inlined_call_operand.vmem [shape: bf16[9,64,64], index: 4, kind: input, shape index: {}]
  %s5 = inlined_call_operand.vmem [shape: f32[64,1], index: 5, kind: input, shape index: {}]
  %s6 = inlined_call_operand.vmem [shape: bf16[9,128,64], index: 6, kind: input, shape index: {}]
  %s7 = inlined_call_operand.vmem [shape: f32[128,1], index: 7, kind: input, shape index: {}]
  %s8 = inlined_call_operand.vmem [shape: f32[2,32,256], index: 8, kind: output, shape index: {0}]
  %s9 = inlined_call_operand.vmem [shape: f32[2,64,256], index: 9, kind: output, shape index: {1}]
  %s10 = inlined_call_operand.vmem [shape: f32[128,128], index: 10, kind: output, shape index: {2}]
  %11 = xla_tuple %s8, %s9, %s10
  %s12 = sld [smem:[#allocation0]]
  $region58: #{_lambda_.1} parent=0
    _
  %s14 = ssub.s32 1, %s12
  %s15 = scalar_select 0, %s14, %s12
  // Predicated region
  $region2: #{_lambda_.1} parent=0 // pred_check
    _
  $region3: #{_lambda_.1} parent=0 // pred_check_branch
    %17 = sbr.rel (0) target = $region5
  $region4: #{_lambda_.1} parent=0 // pred_region
    _
  $region5: #{_lambda_.1} parent=0 // pred_fallthru
    _
  // Predicated region
  $region6: #{_lambda_.1} parent=0 // pred_check
    _
  $region7: #{_lambda_.1} parent=0 // pred_check_branch
    %19 = sbr.rel (0) target = $region9
  $region8: #{_lambda_.1} parent=0 // pred_region
    _
  $region9: #{_lambda_.1} parent=0 // pred_fallthru
    _
  // Predicated region
  $region10: #{_lambda_.1} parent=0 // pred_check
    _
  $region11: #{_lambda_.1} parent=0 // pred_check_branch
    %21 = sbr.rel (0) target = $region13
  $region12: #{_lambda_.1} parent=0 // pred_region
    _
  $region13: #{_lambda_.1} parent=0 // pred_fallthru
    _
  // Predicated region
  $region14: #{_lambda_.1} parent=0 // pred_check
    _
  $region15: #{_lambda_.1} parent=0 // pred_check_branch
    %23 = sbr.rel (0) target = $region17
  $region16: #{_lambda_.1} parent=0 // pred_region
    _
  $region17: #{_lambda_.1} parent=0 // pred_fallthru
    _
  // Predicated region
  $region18: #{_lambda_.1} parent=0 // pred_check
    _
  $region19: #{_lambda_.1} parent=0 // pred_check_branch
    %25 = sbr.rel (0) target = $region21
  $region20: #{_lambda_.1} parent=0 // pred_region
    _
  $region21: #{_lambda_.1} parent=0 // pred_fallthru
    _
  // Predicated region
  $region22: #{_lambda_.1} parent=0 // pred_check
    _
  $region23: #{_lambda_.1} parent=0 // pred_check_branch
    %27 = sbr.rel (0) target = $region25
  $region24: #{_lambda_.1} parent=0 // pred_region
    _
  $region25: #{_lambda_.1} parent=0 // pred_fallthru
    _
  // Predicated region
  $region26: #{_lambda_.1} parent=0 // pred_check
    _
  $region27: #{_lambda_.1} parent=0 // pred_check_branch
    %29 = sbr.rel (0) target = $region29
  $region28: #{_lambda_.1} parent=0 // pred_region
    _
  $region29: #{_lambda_.1} parent=0 // pred_fallthru
    _
  // Predicated region
  $region30: #{_lambda_.1} parent=0 // pred_check
    _
  $region31: #{_lambda_.1} parent=0 // pred_check_branch
    %31 = sbr.rel (0) target = $region33
  $region32: #{_lambda_.1} parent=0 // pred_region
    _
  $region33: #{_lambda_.1} parent=0 // pred_fallthru
    _
  %v32 = vld [vmem:[%s0] sm:$0xff]
  %v33 = vld [vmem:[%s0 + $0x8] sm:$0xff]
  %v34 = vld [vmem:[%s0 + $0x10] sm:$0x3]
  %v35 = vld [vmem:[%s0 + $0x18] sm:$0xff]
  %v36 = vld [vmem:[%s0 + $0x20] sm:$0xff]
  %v37 = vld [vmem:[%s0 + $0x28] sm:$0x3]
  %v38 = vld [vmem:[%s0 + $0x30] sm:$0xff]
  %v39 = vld [vmem:[%s0 + $0x38] sm:$0xff]
  %v40 = vld [vmem:[%s0 + $0x40] sm:$0x3]
  %v41 = vld [vmem:[%s0 + $0x48] sm:$0xff]
  %v42 = vld [vmem:[%s0 + $0x50] sm:$0xff]
  %v43 = vld [vmem:[%s0 + $0x58] sm:$0x3]
  %v44 = vld [vmem:[%s0 + $0x60] sm:$0xff]
  %v45 = vld [vmem:[%s0 + $0x68] sm:$0xff]
  %v46 = vld [vmem:[%s0 + $0x70] sm:$0x3]
  %v47 = vld [vmem:[%s0 + $0x78] sm:$0xff]
  %v48 = vld [vmem:[%s0 + $0x80] sm:$0xff]
  %v49 = vld [vmem:[%s0 + $0x88] sm:$0x3]
  %v50 = vld [vmem:[%s0 + $0x90] sm:$0xff]
  %v51 = vld [vmem:[%s0 + $0x98] sm:$0xff]
  %v52 = vld [vmem:[%s0 + $0xa0] sm:$0x3]
  %v53 = vld [vmem:[%s0 + $0xa8] sm:$0xff]
  %v54 = vld [vmem:[%s0 + $0xb0] sm:$0xff]
  %v55 = vld [vmem:[%s0 + $0xb8] sm:$0x3]
  %v56 = vld [vmem:[%s0 + $0xc0] sm:$0xff]
  %v57 = vld [vmem:[%s0 + $0xc8] sm:$0xff]
  %v58 = vld [vmem:[%s0 + $0xd0] sm:$0x3]
  %v59 = vld [vmem:[%s0 + $0xd8] sm:$0xff]
  %v60 = vld [vmem:[%s0 + $0xe0] sm:$0xff]
  %v61 = vld [vmem:[%s0 + $0xe8] sm:$0x3]
  %v62 = vld [vmem:[%s0 + $0xf0] sm:$0xff]
  %v63 = vld [vmem:[%s0 + $0xf8] sm:$0xff]
  %v64 = vld [vmem:[%s0 + $0x100] sm:$0x3]
  %v65 = vld [vmem:[%s0 + $0x108] sm:$0xff]
  %v66 = vld [vmem:[%s0 + $0x110] sm:$0xff]
  %v67 = vld [vmem:[%s0 + $0x118] sm:$0x3]
  %v68 = vld [vmem:[%s0 + $0x120] sm:$0xff]
  %v69 = vld [vmem:[%s0 + $0x128] sm:$0xff]
  %v70 = vld [vmem:[%s0 + $0x130] sm:$0x3]
  %v71 = vld [vmem:[%s0 + $0x138] sm:$0xff]
  %v72 = vld [vmem:[%s0 + $0x140] sm:$0xff]
  %v73 = vld [vmem:[%s0 + $0x148] sm:$0x3]
  %v74 = vld [vmem:[%s0 + $0x150] sm:$0xff]
  %v75 = vld [vmem:[%s0 + $0x158] sm:$0xff]
  %v76 = vld [vmem:[%s0 + $0x160] sm:$0x3]
  %v77 = vld [vmem:[%s0 + $0x168] sm:$0xff]
  %v78 = vld [vmem:[%s0 + $0x170] sm:$0xff]
  %v79 = vld [vmem:[%s0 + $0x178] sm:$0x3]
  %v80 = vld [vmem:[%s0 + $0x180] sm:$0xff]
  %v81 = vld [vmem:[%s0 + $0x188] sm:$0xff]
  %v82 = vld [vmem:[%s0 + $0x190] sm:$0x3]
  %v83 = vld [vmem:[%s0 + $0x198] sm:$0xff]
  %v84 = vld [vmem:[%s0 + $0x1a0] sm:$0xff]
  %v85 = vld [vmem:[%s0 + $0x1a8] sm:$0x3]
  %v86 = vld [vmem:[%s0 + $0x1b0] sm:$0xff]
  %v87 = vld [vmem:[%s0 + $0x1b8] sm:$0xff]
  %v88 = vld [vmem:[%s0 + $0x1c0] sm:$0x3]
  %v89 = vld [vmem:[%s0 + $0x1c8] sm:$0xff]
  %v90 = vld [vmem:[%s0 + $0x1d0] sm:$0xff]
  %v91 = vld [vmem:[%s0 + $0x1d8] sm:$0x3]
  %v92 = vld [vmem:[%s0 + $0x1e0] sm:$0xff]
  %v93 = vld [vmem:[%s0 + $0x1e8] sm:$0xff]
  %v94 = vld [vmem:[%s0 + $0x1f0] sm:$0x3]
  %v95 = vld [vmem:[%s0 + $0x1f8] sm:$0xff]
  %v96 = vld [vmem:[%s0 + $0x200] sm:$0xff]
  %v97 = vld [vmem:[%s0 + $0x208] sm:$0x3]
  %v98 = vld [vmem:[%s0 + $0x210] sm:$0xff]
  %v99 = vld [vmem:[%s0 + $0x218] sm:$0xff]
  %v100 = vld [vmem:[%s0 + $0x220] sm:$0x3]
  %v101 = vld [vmem:[%s0 + $0x228] sm:$0xff]
  %v102 = vld [vmem:[%s0 + $0x230] sm:$0xff]
  %v103 = vld [vmem:[%s0 + $0x238] sm:$0x3]
  %v104 = vld [vmem:[%s0 + $0x240] sm:$0xff]
  %v105 = vld [vmem:[%s0 + $0x248] sm:$0xff]
  %v106 = vld [vmem:[%s0 + $0x250] sm:$0x3]
  %v107 = vld [vmem:[%s0 + $0x258] sm:$0xff]
  %v108 = vld [vmem:[%s0 + $0x260] sm:$0xff]
  %v109 = vld [vmem:[%s0 + $0x268] sm:$0x3]
  %v110 = vld [vmem:[%s0 + $0x270] sm:$0xff]
  %v111 = vld [vmem:[%s0 + $0x278] sm:$0xff]
  %v112 = vld [vmem:[%s0 + $0x280] sm:$0x3]
  %v113 = vld [vmem:[%s0 + $0x288] sm:$0xff]
  %v114 = vld [vmem:[%s0 + $0x290] sm:$0xff]
  %v115 = vld [vmem:[%s0 + $0x298] sm:$0x3]
  %v116 = vld [vmem:[%s0 + $0x2a0] sm:$0xff]
  %v117 = vld [vmem:[%s0 + $0x2a8] sm:$0xff]
  %v118 = vld [vmem:[%s0 + $0x2b0] sm:$0x3]
  %v119 = vld [vmem:[%s0 + $0x2b8] sm:$0xff]
  %v120 = vld [vmem:[%s0 + $0x2c0] sm:$0xff]
  %v121 = vld [vmem:[%s0 + $0x2c8] sm:$0x3]
  %v122 = vld [vmem:[%s0 + $0x2d0] sm:$0xff]
  %v123 = vld [vmem:[%s0 + $0x2d8] sm:$0xff]
  %v124 = vld [vmem:[%s0 + $0x2e0] sm:$0x3]
  %v125 = vld [vmem:[%s0 + $0x2e8] sm:$0xff]
  %v126 = vld [vmem:[%s0 + $0x2f0] sm:$0xff]
  %v127 = vld [vmem:[%s0 + $0x2f8] sm:$0x3]
  %v128 = vld [vmem:[%s0 + $0x300] sm:$0xff]
  %v129 = vld [vmem:[%s0 + $0x308] sm:$0xff]
  %v130 = vld [vmem:[%s0 + $0x310] sm:$0x3]
  %v131 = vld [vmem:[%s0 + $0x318] sm:$0xff]
  %v132 = vld [vmem:[%s0 + $0x320] sm:$0xff]
  %v133 = vld [vmem:[%s0 + $0x328] sm:$0x3]
  %v134 = vld [vmem:[%s0 + $0x330] sm:$0xff]
  %v135 = vld [vmem:[%s0 + $0x338] sm:$0xff]
  %v136 = vld [vmem:[%s0 + $0x340] sm:$0x3]
  %v137 = vld [vmem:[%s0 + $0x348] sm:$0xff]
  %v138 = vld [vmem:[%s0 + $0x350] sm:$0xff]
  %v139 = vld [vmem:[%s0 + $0x358] sm:$0x3]
  %v140 = vpack.c.bf16 %v32, %v32
  %v141 = vpack.c.bf16 %v33, %v33
  %v142 = vpack.c.bf16 %v34, %v34
  %v143 = vpack.c.bf16 %v35, %v35
  %v144 = vpack.c.bf16 %v36, %v36
  %v145 = vpack.c.bf16 %v37, %v37
  %v146 = vpack.c.bf16 %v38, %v38
  %v147 = vpack.c.bf16 %v39, %v39
  %v148 = vpack.c.bf16 %v40, %v40
  %v149 = vpack.c.bf16 %v41, %v41
  %v150 = vpack.c.bf16 %v42, %v42
  %v151 = vpack.c.bf16 %v43, %v43
  %v152 = vpack.c.bf16 %v44, %v44
  %v153 = vpack.c.bf16 %v45, %v45
  %v154 = vpack.c.bf16 %v46, %v46
  %v155 = vpack.c.bf16 %v47, %v47
  %v156 = vpack.c.bf16 %v48, %v48
  %v157 = vpack.c.bf16 %v49, %v49
  %v158 = vpack.c.bf16 %v50, %v50
  %v159 = vpack.c.bf16 %v51, %v51
  %v160 = vpack.c.bf16 %v52, %v52
  %v161 = vpack.c.bf16 %v53, %v53
  %v162 = vpack.c.bf16 %v54, %v54
  %v163 = vpack.c.bf16 %v55, %v55
  %v164 = vpack.c.bf16 %v56, %v56
  %v165 = vpack.c.bf16 %v57, %v57
  %v166 = vpack.c.bf16 %v58, %v58
  %v167 = vpack.c.bf16 %v59, %v59
  %v168 = vpack.c.bf16 %v60, %v60
  %v169 = vpack.c.bf16 %v61, %v61
  %v170 = vpack.c.bf16 %v62, %v62
  %v171 = vpack.c.bf16 %v63, %v63
  %v172 = vpack.c.bf16 %v64, %v64
  %v173 = vpack.c.bf16 %v65, %v65
  %v174 = vpack.c.bf16 %v66, %v66
  %v175 = vpack.c.bf16 %v67, %v67
  %v176 = vpack.c.bf16 %v68, %v68
  %v177 = vpack.c.bf16 %v69, %v69
  %v178 = vpack.c.bf16 %v70, %v70
  %v179 = vpack.c.bf16 %v71, %v71
  %v180 = vpack.c.bf16 %v72, %v72
  %v181 = vpack.c.bf16 %v73, %v73
  %v182 = vpack.c.bf16 %v74, %v74
  %v183 = vpack.c.bf16 %v75, %v75
  %v184 = vpack.c.bf16 %v76, %v76
  %v185 = vpack.c.bf16 %v77, %v77
  %v186 = vpack.c.bf16 %v78, %v78
  %v187 = vpack.c.bf16 %v79, %v79
  %v188 = vpack.c.bf16 %v80, %v80
  %v189 = vpack.c.bf16 %v81, %v81
  %v190 = vpack.c.bf16 %v82, %v82
  %v191 = vpack.c.bf16 %v83, %v83
  %v192 = vpack.c.bf16 %v84, %v84
  %v193 = vpack.c.bf16 %v85, %v85
  %v194 = vpack.c.bf16 %v86, %v86
  %v195 = vpack.c.bf16 %v87, %v87
  %v196 = vpack.c.bf16 %v88, %v88
  %v197 = vpack.c.bf16 %v89, %v89
  %v198 = vpack.c.bf16 %v90, %v90
  %v199 = vpack.c.bf16 %v91, %v91
  %v200 = vpack.c.bf16 %v92, %v92
  %v201 = vpack.c.bf16 %v93, %v93
  %v202 = vpack.c.bf16 %v94, %v94
  %v203 = vpack.c.bf16 %v95, %v95
  %v204 = vpack.c.bf16 %v96, %v96
  %v205 = vpack.c.bf16 %v97, %v97
  %v206 = vpack.c.bf16 %v98, %v98
  %v207 = vpack.c.bf16 %v99, %v99
  %v208 = vpack.c.bf16 %v100, %v100
  %v209 = vpack.c.bf16 %v101, %v101
  %v210 = vpack.c.bf16 %v102, %v102
  %v211 = vpack.c.bf16 %v103, %v103
  %v212 = vpack.c.bf16 %v104, %v104
  %v213 = vpack.c.bf16 %v105, %v105
  %v214 = vpack.c.bf16 %v106, %v106
  %v215 = vpack.c.bf16 %v107, %v107
  %v216 = vpack.c.bf16 %v108, %v108
  %v217 = vpack.c.bf16 %v109, %v109
  %v218 = vpack.c.bf16 %v110, %v110
  %v219 = vpack.c.bf16 %v111, %v111
  %v220 = vpack.c.bf16 %v112, %v112
  %v221 = vpack.c.bf16 %v113, %v113
  %v222 = vpack.c.bf16 %v114, %v114
  %v223 = vpack.c.bf16 %v115, %v115
  %v224 = vpack.c.bf16 %v116, %v116
  %v225 = vpack.c.bf16 %v117, %v117
  %v226 = vpack.c.bf16 %v118, %v118
  %v227 = vpack.c.bf16 %v119, %v119
  %v228 = vpack.c.bf16 %v120, %v120
  %v229 = vpack.c.bf16 %v121, %v121
  %v230 = vpack.c.bf16 %v122, %v122
  %v231 = vpack.c.bf16 %v123, %v123
  %v232 = vpack.c.bf16 %v124, %v124
  %v233 = vpack.c.bf16 %v125, %v125
  %v234 = vpack.c.bf16 %v126, %v126
  %v235 = vpack.c.bf16 %v127, %v127
  %v236 = vpack.c.bf16 %v128, %v128
  %v237 = vpack.c.bf16 %v129, %v129
  %v238 = vpack.c.bf16 %v130, %v130
  %v239 = vpack.c.bf16 %v131, %v131
  %v240 = vpack.c.bf16 %v132, %v132
  %v241 = vpack.c.bf16 %v133, %v133
  %v242 = vpack.c.bf16 %v134, %v134
  %v243 = vpack.c.bf16 %v135, %v135
  %v244 = vpack.c.bf16 %v136, %v136
  %v245 = vpack.c.bf16 %v137, %v137
  %v246 = vpack.c.bf16 %v138, %v138
  %v247 = vpack.c.bf16 %v139, %v139
  %v248 = vld [vmem:[%s1] sm:$0xff]
  %v249 = vld [vmem:[%s1 + $0x8] sm:$0xff]
  %v250 = vld [vmem:[%s1 + $0x10] sm:$0x3]
  %v251 = vld [vmem:[%s1 + $0x18] sm:$0xff]
  %v252 = vld [vmem:[%s1 + $0x20] sm:$0xff]
  %v253 = vld [vmem:[%s1 + $0x28] sm:$0x3]
  %v254 = vld [vmem:[%s1 + $0x30] sm:$0xff]
  %v255 = vld [vmem:[%s1 + $0x38] sm:$0xff]
  %v256 = vld [vmem:[%s1 + $0x40] sm:$0x3]
  %v257 = vld [vmem:[%s1 + $0x48] sm:$0xff]
  %v258 = vld [vmem:[%s1 + $0x50] sm:$0xff]
  %v259 = vld [vmem:[%s1 + $0x58] sm:$0x3]
  %v260 = vld [vmem:[%s1 + $0x60] sm:$0xff]
  %v261 = vld [vmem:[%s1 + $0x68] sm:$0xff]
  %v262 = vld [vmem:[%s1 + $0x70] sm:$0x3]
  %v263 = vld [vmem:[%s1 + $0x78] sm:$0xff]
  %v264 = vld [vmem:[%s1 + $0x80] sm:$0xff]
  %v265 = vld [vmem:[%s1 + $0x88] sm:$0x3]
  %v266 = vld [vmem:[%s1 + $0x90] sm:$0xff]
  %v267 = vld [vmem:[%s1 + $0x98] sm:$0xff]
  %v268 = vld [vmem:[%s1 + $0xa0] sm:$0x3]
  %v269 = vld [vmem:[%s1 + $0xa8] sm:$0xff]
  %v270 = vld [vmem:[%s1 + $0xb0] sm:$0xff]
  %v271 = vld [vmem:[%s1 + $0xb8] sm:$0x3]
  %v272 = vld [vmem:[%s1 + $0xc0] sm:$0xff]
  %v273 = vld [vmem:[%s1 + $0xc8] sm:$0xff]
  %v274 = vld [vmem:[%s1 + $0xd0] sm:$0x3]
  %v275 = vld [vmem:[%s1 + $0xd8] sm:$0xff]
  %v276 = vld [vmem:[%s1 + $0xe0] sm:$0xff]
  %v277 = vld [vmem:[%s1 + $0xe8] sm:$0x3]
  %v278 = vld [vmem:[%s1 + $0xf0] sm:$0xff]
  %v279 = vld [vmem:[%s1 + $0xf8] sm:$0xff]
  %v280 = vld [vmem:[%s1 + $0x100] sm:$0x3]
  %v281 = vld [vmem:[%s1 + $0x108] sm:$0xff]
  %v282 = vld [vmem:[%s1 + $0x110] sm:$0xff]
  %v283 = vld [vmem:[%s1 + $0x118] sm:$0x3]
  %v284 = vld [vmem:[%s1 + $0x120] sm:$0xff]
  %v285 = vld [vmem:[%s1 + $0x128] sm:$0xff]
  %v286 = vld [vmem:[%s1 + $0x130] sm:$0x3]
  %v287 = vld [vmem:[%s1 + $0x138] sm:$0xff]
  %v288 = vld [vmem:[%s1 + $0x140] sm:$0xff]
  %v289 = vld [vmem:[%s1 + $0x148] sm:$0x3]
  %v290 = vld [vmem:[%s1 + $0x150] sm:$0xff]
  %v291 = vld [vmem:[%s1 + $0x158] sm:$0xff]
  %v292 = vld [vmem:[%s1 + $0x160] sm:$0x3]
  %v293 = vld [vmem:[%s1 + $0x168] sm:$0xff]
  %v294 = vld [vmem:[%s1 + $0x170] sm:$0xff]
  %v295 = vld [vmem:[%s1 + $0x178] sm:$0x3]
  %v296 = vld [vmem:[%s1 + $0x180] sm:$0xff]
  %v297 = vld [vmem:[%s1 + $0x188] sm:$0xff]
  %v298 = vld [vmem:[%s1 + $0x190] sm:$0x3]
  %v299 = vld [vmem:[%s1 + $0x198] sm:$0xff]
  %v300 = vld [vmem:[%s1 + $0x1a0] sm:$0xff]
  %v301 = vld [vmem:[%s1 + $0x1a8] sm:$0x3]
  %v302 = vld [vmem:[%s1 + $0x1b0] sm:$0xff]
  %v303 = vld [vmem:[%s1 + $0x1b8] sm:$0xff]
  %v304 = vld [vmem:[%s1 + $0x1c0] sm:$0x3]
  %v305 = vld [vmem:[%s1 + $0x1c8] sm:$0xff]
  %v306 = vld [vmem:[%s1 + $0x1d0] sm:$0xff]
  %v307 = vld [vmem:[%s1 + $0x1d8] sm:$0x3]
  %v308 = vld [vmem:[%s1 + $0x1e0] sm:$0xff]
  %v309 = vld [vmem:[%s1 + $0x1e8] sm:$0xff]
  %v310 = vld [vmem:[%s1 + $0x1f0] sm:$0x3]
  %v311 = vld [vmem:[%s1 + $0x1f8] sm:$0xff]
  %v312 = vld [vmem:[%s1 + $0x200] sm:$0xff]
  %v313 = vld [vmem:[%s1 + $0x208] sm:$0x3]
  %v314 = vld [vmem:[%s1 + $0x210] sm:$0xff]
  %v315 = vld [vmem:[%s1 + $0x218] sm:$0xff]
  %v316 = vld [vmem:[%s1 + $0x220] sm:$0x3]
  %v317 = vld [vmem:[%s1 + $0x228] sm:$0xff]
  %v318 = vld [vmem:[%s1 + $0x230] sm:$0xff]
  %v319 = vld [vmem:[%s1 + $0x238] sm:$0x3]
  %v320 = vld [vmem:[%s1 + $0x240] sm:$0xff]
  %v321 = vld [vmem:[%s1 + $0x248] sm:$0xff]
  %v322 = vld [vmem:[%s1 + $0x250] sm:$0x3]
  %v323 = vld [vmem:[%s1 + $0x258] sm:$0xff]
  %v324 = vld [vmem:[%s1 + $0x260] sm:$0xff]
  %v325 = vld [vmem:[%s1 + $0x268] sm:$0x3]
  %v326 = vld [vmem:[%s1 + $0x270] sm:$0xff]
  %v327 = vld [vmem:[%s1 + $0x278] sm:$0xff]
  %v328 = vld [vmem:[%s1 + $0x280] sm:$0x3]
  %v329 = vld [vmem:[%s1 + $0x288] sm:$0xff]
  %v330 = vld [vmem:[%s1 + $0x290] sm:$0xff]
  %v331 = vld [vmem:[%s1 + $0x298] sm:$0x3]
  %v332 = vld [vmem:[%s1 + $0x2a0] sm:$0xff]
  %v333 = vld [vmem:[%s1 + $0x2a8] sm:$0xff]
  %v334 = vld [vmem:[%s1 + $0x2b0] sm:$0x3]
  %v335 = vld [vmem:[%s1 + $0x2b8] sm:$0xff]
  %v336 = vld [vmem:[%s1 + $0x2c0] sm:$0xff]
  %v337 = vld [vmem:[%s1 + $0x2c8] sm:$0x3]
  %v338 = vld [vmem:[%s1 + $0x2d0] sm:$0xff]
  %v339 = vld [vmem:[%s1 + $0x2d8] sm:$0xff]
  %v340 = vld [vmem:[%s1 + $0x2e0] sm:$0x3]
  %v341 = vld [vmem:[%s1 + $0x2e8] sm:$0xff]
  %v342 = vld [vmem:[%s1 + $0x2f0] sm:$0xff]
  %v343 = vld [vmem:[%s1 + $0x2f8] sm:$0x3]
  %v344 = vld [vmem:[%s1 + $0x300] sm:$0xff]
  %v345 = vld [vmem:[%s1 + $0x308] sm:$0xff]
  %v346 = vld [vmem:[%s1 + $0x310] sm:$0x3]
  %v347 = vld [vmem:[%s1 + $0x318] sm:$0xff]
  %v348 = vld [vmem:[%s1 + $0x320] sm:$0xff]
  %v349 = vld [vmem:[%s1 + $0x328] sm:$0x3]
  %v350 = vld [vmem:[%s1 + $0x330] sm:$0xff]
  %v351 = vld [vmem:[%s1 + $0x338] sm:$0xff]
  %v352 = vld [vmem:[%s1 + $0x340] sm:$0x3]
  %v353 = vld [vmem:[%s1 + $0x348] sm:$0xff]
  %v354 = vld [vmem:[%s1 + $0x350] sm:$0xff]
  %v355 = vld [vmem:[%s1 + $0x358] sm:$0x3]
  %v356 = vpack.c.bf16 %v248, %v248
  %v357 = vpack.c.bf16 %v249, %v249
  %v358 = vpack.c.bf16 %v250, %v250
  %v359 = vpack.c.bf16 %v251, %v251
  %v360 = vpack.c.bf16 %v252, %v252
  %v361 = vpack.c.bf16 %v253, %v253
  %v362 = vpack.c.bf16 %v254, %v254
  %v363 = vpack.c.bf16 %v255, %v255
  %v364 = vpack.c.bf16 %v256, %v256
  %v365 = vpack.c.bf16 %v257, %v257
  %v366 = vpack.c.bf16 %v258, %v258
  %v367 = vpack.c.bf16 %v259, %v259
  %v368 = vpack.c.bf16 %v260, %v260
  %v369 = vpack.c.bf16 %v261, %v261
  %v370 = vpack.c.bf16 %v262, %v262
  %v371 = vpack.c.bf16 %v263, %v263
  %v372 = vpack.c.bf16 %v264, %v264
  %v373 = vpack.c.bf16 %v265, %v265
  %v374 = vpack.c.bf16 %v266, %v266
  %v375 = vpack.c.bf16 %v267, %v267
  %v376 = vpack.c.bf16 %v268, %v268
  %v377 = vpack.c.bf16 %v269, %v269
  %v378 = vpack.c.bf16 %v270, %v270
  %v379 = vpack.c.bf16 %v271, %v271
  %v380 = vpack.c.bf16 %v272, %v272
  %v381 = vpack.c.bf16 %v273, %v273
  %v382 = vpack.c.bf16 %v274, %v274
  %v383 = vpack.c.bf16 %v275, %v275
  %v384 = vpack.c.bf16 %v276, %v276
  %v385 = vpack.c.bf16 %v277, %v277
  %v386 = vpack.c.bf16 %v278, %v278
  %v387 = vpack.c.bf16 %v279, %v279
  %v388 = vpack.c.bf16 %v280, %v280
  %v389 = vpack.c.bf16 %v281, %v281
  %v390 = vpack.c.bf16 %v282, %v282
  %v391 = vpack.c.bf16 %v283, %v283
  %v392 = vpack.c.bf16 %v284, %v284
  %v393 = vpack.c.bf16 %v285, %v285
  %v394 = vpack.c.bf16 %v286, %v286
  %v395 = vpack.c.bf16 %v287, %v287
  %v396 = vpack.c.bf16 %v288, %v288
  %v397 = vpack.c.bf16 %v289, %v289
  %v398 = vpack.c.bf16 %v290, %v290
  %v399 = vpack.c.bf16 %v291, %v291
  %v400 = vpack.c.bf16 %v292, %v292
  %v401 = vpack.c.bf16 %v293, %v293
  %v402 = vpack.c.bf16 %v294, %v294
  %v403 = vpack.c.bf16 %v295, %v295
  %v404 = vpack.c.bf16 %v296, %v296
  %v405 = vpack.c.bf16 %v297, %v297
  %v406 = vpack.c.bf16 %v298, %v298
  %v407 = vpack.c.bf16 %v299, %v299
  %v408 = vpack.c.bf16 %v300, %v300
  %v409 = vpack.c.bf16 %v301, %v301
  %v410 = vpack.c.bf16 %v302, %v302
  %v411 = vpack.c.bf16 %v303, %v303
  %v412 = vpack.c.bf16 %v304, %v304
  %v413 = vpack.c.bf16 %v305, %v305
  %v414 = vpack.c.bf16 %v306, %v306
  %v415 = vpack.c.bf16 %v307, %v307
  %v416 = vpack.c.bf16 %v308, %v308
  %v417 = vpack.c.bf16 %v309, %v309
  %v418 = vpack.c.bf16 %v310, %v310
  %v419 = vpack.c.bf16 %v311, %v311
  %v420 = vpack.c.bf16 %v312, %v312
  %v421 = vpack.c.bf16 %v313, %v313
  %v422 = vpack.c.bf16 %v314, %v314
  %v423 = vpack.c.bf16 %v315, %v315
  %v424 = vpack.c.bf16 %v316, %v316
  %v425 = vpack.c.bf16 %v317, %v317
  %v426 = vpack.c.bf16 %v318, %v318
  %v427 = vpack.c.bf16 %v319, %v319
  %v428 = vpack.c.bf16 %v320, %v320
  %v429 = vpack.c.bf16 %v321, %v321
  %v430 = vpack.c.bf16 %v322, %v322
  %v431 = vpack.c.bf16 %v323, %v323
  %v432 = vpack.c.bf16 %v324, %v324
  %v433 = vpack.c.bf16 %v325, %v325
  %v434 = vpack.c.bf16 %v326, %v326
  %v435 = vpack.c.bf16 %v327, %v327
  %v436 = vpack.c.bf16 %v328, %v328
  %v437 = vpack.c.bf16 %v329, %v329
  %v438 = vpack.c.bf16 %v330, %v330
  %v439 = vpack.c.bf16 %v331, %v331
  %v440 = vpack.c.bf16 %v332, %v332
  %v441 = vpack.c.bf16 %v333, %v333
  %v442 = vpack.c.bf16 %v334, %v334
  %v443 = vpack.c.bf16 %v335, %v335
  %v444 = vpack.c.bf16 %v336, %v336
  %v445 = vpack.c.bf16 %v337, %v337
  %v446 = vpack.c.bf16 %v338, %v338
  %v447 = vpack.c.bf16 %v339, %v339
  %v448 = vpack.c.bf16 %v340, %v340
  %v449 = vpack.c.bf16 %v341, %v341
  %v450 = vpack.c.bf16 %v342, %v342
  %v451 = vpack.c.bf16 %v343, %v343
  %v452 = vpack.c.bf16 %v344, %v344
  %v453 = vpack.c.bf16 %v345, %v345
  %v454 = vpack.c.bf16 %v346, %v346
  %v455 = vpack.c.bf16 %v347, %v347
  %v456 = vpack.c.bf16 %v348, %v348
  %v457 = vpack.c.bf16 %v349, %v349
  %v458 = vpack.c.bf16 %v350, %v350
  %v459 = vpack.c.bf16 %v351, %v351
  %v460 = vpack.c.bf16 %v352, %v352
  %v461 = vpack.c.bf16 %v353, %v353
  %v462 = vpack.c.bf16 %v354, %v354
  %v463 = vpack.c.bf16 %v355, %v355
  %v464 = vld [vmem:[%s2] sm:$0xf]
  %v465 = vld [vmem:[%s2 + $0x4] sm:$0xf]
  %v466 = vld [vmem:[%s2 + $0x8] sm:$0xf]
  %v467 = vld [vmem:[%s2 + $0xc] sm:$0xf]
  %vm468 = vsmask.f32 3328
  %vm469 = vsmask.f32 7440
  %vm470 = vmor %vm468, %vm469
  %v472 = vshrl.u32 %v140, 16
  %v474 = vrot.slane %v472, 4
  %v475 = vshll.u32 %v140, 16
  %v477 = vrot.slane %v475, 5
  %v478 = vor.u32 %v474, %v477
  %v479 = vrot.slane %v478, 4
  %v481 = vshll.u32 %v141, 16
  %v483 = vrot.slane %v481, 5
  %v484 = vsel %vm470, %v479, %v483
  %v485 = vshrl.u32 %v141, 16
  %v487 = vrot.slane %v485, 4
  %v488 = vor.u32 %v487, %v483
  %v489 = vrot.slane %v488, 4
  %v491 = vshll.u32 %v142, 16
  %v493 = vrot.slane %v491, 5
  %v494 = vsel %vm470, %v489, %v493
  %v496 = vshrl.u32 %v143, 16
  %v498 = vrot.slane %v496, 4
  %v499 = vshll.u32 %v143, 16
  %v501 = vrot.slane %v499, 5
  %v502 = vor.u32 %v498, %v501
  %v503 = vrot.slane %v502, 4
  %v505 = vshll.u32 %v144, 16
  %v507 = vrot.slane %v505, 5
  %v508 = vsel %vm470, %v503, %v507
  %v509 = vshrl.u32 %v144, 16
  %v511 = vrot.slane %v509, 4
  %v512 = vor.u32 %v511, %v507
  %v513 = vrot.slane %v512, 4
  %v515 = vshll.u32 %v145, 16
  %v517 = vrot.slane %v515, 5
  %v518 = vsel %vm470, %v513, %v517
  %v520 = vshrl.u32 %v146, 16
  %v522 = vrot.slane %v520, 4
  %v523 = vshll.u32 %v146, 16
  %v525 = vrot.slane %v523, 5
  %v526 = vor.u32 %v522, %v525
  %v527 = vrot.slane %v526, 4
  %v529 = vshll.u32 %v147, 16
  %v531 = vrot.slane %v529, 5
  %v532 = vsel %vm470, %v527, %v531
  %v533 = vshrl.u32 %v147, 16
  %v535 = vrot.slane %v533, 4
  %v536 = vor.u32 %v535, %v531
  %v537 = vrot.slane %v536, 4
  %v539 = vshll.u32 %v148, 16
  %v541 = vrot.slane %v539, 5
  %v542 = vsel %vm470, %v537, %v541
  %v544 = vshrl.u32 %v149, 16
  %v546 = vrot.slane %v544, 4
  %v547 = vshll.u32 %v149, 16
  %v549 = vrot.slane %v547, 5
  %v550 = vor.u32 %v546, %v549
  %v551 = vrot.slane %v550, 4
  %v553 = vshll.u32 %v150, 16
  %v555 = vrot.slane %v553, 5
  %v556 = vsel %vm470, %v551, %v555
  %v557 = vshrl.u32 %v150, 16
  %v559 = vrot.slane %v557, 4
  %v560 = vor.u32 %v559, %v555
  %v561 = vrot.slane %v560, 4
  %v563 = vshll.u32 %v151, 16
  %v565 = vrot.slane %v563, 5
  %v566 = vsel %vm470, %v561, %v565
  %v568 = vshrl.u32 %v152, 16
  %v570 = vrot.slane %v568, 4
  %v571 = vshll.u32 %v152, 16
  %v573 = vrot.slane %v571, 5
  %v574 = vor.u32 %v570, %v573
  %v575 = vrot.slane %v574, 4
  %v577 = vshll.u32 %v153, 16
  %v579 = vrot.slane %v577, 5
  %v580 = vsel %vm470, %v575, %v579
  %v581 = vshrl.u32 %v153, 16
  %v583 = vrot.slane %v581, 4
  %v584 = vor.u32 %v583, %v579
  %v585 = vrot.slane %v584, 4
  %v587 = vshll.u32 %v154, 16
  %v589 = vrot.slane %v587, 5
  %v590 = vsel %vm470, %v585, %v589
  %v592 = vshrl.u32 %v155, 16
  %v594 = vrot.slane %v592, 4
  %v595 = vshll.u32 %v155, 16
  %v597 = vrot.slane %v595, 5
  %v598 = vor.u32 %v594, %v597
  %v599 = vrot.slane %v598, 4
  %v601 = vshll.u32 %v156, 16
  %v603 = vrot.slane %v601, 5
  %v604 = vsel %vm470, %v599, %v603
  %v605 = vshrl.u32 %v156, 16
  %v607 = vrot.slane %v605, 4
  %v608 = vor.u32 %v607, %v603
  %v609 = vrot.slane %v608, 4
  %v611 = vshll.u32 %v157, 16
  %v613 = vrot.slane %v611, 5
  %v614 = vsel %vm470, %v609, %v613
  %v616 = vshrl.u32 %v158, 16
  %v618 = vrot.slane %v616, 4
  %v619 = vshll.u32 %v158, 16
  %v621 = vrot.slane %v619, 5
  %v622 = vor.u32 %v618, %v621
  %v623 = vrot.slane %v622, 4
  %v625 = vshll.u32 %v159, 16
  %v627 = vrot.slane %v625, 5
  %v628 = vsel %vm470, %v623, %v627
  %v629 = vshrl.u32 %v159, 16
  %v631 = vrot.slane %v629, 4
  %v632 = vor.u32 %v631, %v627
  %v633 = vrot.slane %v632, 4
  %v635 = vshll.u32 %v160, 16
  %v637 = vrot.slane %v635, 5
  %v638 = vsel %vm470, %v633, %v637
  %v640 = vshrl.u32 %v161, 16
  %v642 = vrot.slane %v640, 4
  %v643 = vshll.u32 %v161, 16
  %v645 = vrot.slane %v643, 5
  %v646 = vor.u32 %v642, %v645
  %v647 = vrot.slane %v646, 4
  %v649 = vshll.u32 %v162, 16
  %v651 = vrot.slane %v649, 5
  %v652 = vsel %vm470, %v647, %v651
  %v653 = vshrl.u32 %v162, 16
  %v655 = vrot.slane %v653, 4
  %v656 = vor.u32 %v655, %v651
  %v657 = vrot.slane %v656, 4
  %v659 = vshll.u32 %v163, 16
  %v661 = vrot.slane %v659, 5
  %v662 = vsel %vm470, %v657, %v661
  %v664 = vshrl.u32 %v164, 16
  %v666 = vrot.slane %v664, 4
  %v667 = vshll.u32 %v164, 16
  %v669 = vrot.slane %v667, 5
  %v670 = vor.u32 %v666, %v669
  %v671 = vrot.slane %v670, 4
  %v673 = vshll.u32 %v165, 16
  %v675 = vrot.slane %v673, 5
  %v676 = vsel %vm470, %v671, %v675
  %v677 = vshrl.u32 %v165, 16
  %v679 = vrot.slane %v677, 4
  %v680 = vor.u32 %v679, %v675
  %v681 = vrot.slane %v680, 4
  %v683 = vshll.u32 %v166, 16
  %v685 = vrot.slane %v683, 5
  %v686 = vsel %vm470, %v681, %v685
  %v688 = vshrl.u32 %v167, 16
  %v690 = vrot.slane %v688, 4
  %v691 = vshll.u32 %v167, 16
  %v693 = vrot.slane %v691, 5
  %v694 = vor.u32 %v690, %v693
  %v695 = vrot.slane %v694, 4
  %v697 = vshll.u32 %v168, 16
  %v699 = vrot.slane %v697, 5
  %v700 = vsel %vm470, %v695, %v699
  %v701 = vshrl.u32 %v168, 16
  %v703 = vrot.slane %v701, 4
  %v704 = vor.u32 %v703, %v699
  %v705 = vrot.slane %v704, 4
  %v707 = vshll.u32 %v169, 16
  %v709 = vrot.slane %v707, 5
  %v710 = vsel %vm470, %v705, %v709
  %v712 = vshrl.u32 %v170, 16
  %v714 = vrot.slane %v712, 4
  %v715 = vshll.u32 %v170, 16
  %v717 = vrot.slane %v715, 5
  %v718 = vor.u32 %v714, %v717
  %v719 = vrot.slane %v718, 4
  %v721 = vshll.u32 %v171, 16
  %v723 = vrot.slane %v721, 5
  %v724 = vsel %vm470, %v719, %v723
  %v725 = vshrl.u32 %v171, 16
  %v727 = vrot.slane %v725, 4
  %v728 = vor.u32 %v727, %v723
  %v729 = vrot.slane %v728, 4
  %v731 = vshll.u32 %v172, 16
  %v733 = vrot.slane %v731, 5
  %v734 = vsel %vm470, %v729, %v733
  %v736 = vshrl.u32 %v173, 16
  %v738 = vrot.slane %v736, 4
  %v739 = vshll.u32 %v173, 16
  %v741 = vrot.slane %v739, 5
  %v742 = vor.u32 %v738, %v741
  %v743 = vrot.slane %v742, 4
  %v745 = vshll.u32 %v174, 16
  %v747 = vrot.slane %v745, 5
  %v748 = vsel %vm470, %v743, %v747
  %v749 = vshrl.u32 %v174, 16
  %v751 = vrot.slane %v749, 4
  %v752 = vor.u32 %v751, %v747
  %v753 = vrot.slane %v752, 4
  %v755 = vshll.u32 %v175, 16
  %v757 = vrot.slane %v755, 5
  %v758 = vsel %vm470, %v753, %v757
  %v760 = vshrl.u32 %v176, 16
  %v762 = vrot.slane %v760, 4
  %v763 = vshll.u32 %v176, 16
  %v765 = vrot.slane %v763, 5
  %v766 = vor.u32 %v762, %v765
  %v767 = vrot.slane %v766, 4
  %v769 = vshll.u32 %v177, 16
  %v771 = vrot.slane %v769, 5
  %v772 = vsel %vm470, %v767, %v771
  %v773 = vshrl.u32 %v177, 16
  %v775 = vrot.slane %v773, 4
  %v776 = vor.u32 %v775, %v771
  %v777 = vrot.slane %v776, 4
  %v779 = vshll.u32 %v178, 16
  %v781 = vrot.slane %v779, 5
  %v782 = vsel %vm470, %v777, %v781
  %v784 = vshrl.u32 %v179, 16
  %v786 = vrot.slane %v784, 4
  %v787 = vshll.u32 %v179, 16
  %v789 = vrot.slane %v787, 5
  %v790 = vor.u32 %v786, %v789
  %v791 = vrot.slane %v790, 4
  %v793 = vshll.u32 %v180, 16
  %v795 = vrot.slane %v793, 5
  %v796 = vsel %vm470, %v791, %v795
  %v797 = vshrl.u32 %v180, 16
  %v799 = vrot.slane %v797, 4
  %v800 = vor.u32 %v799, %v795
  %v801 = vrot.slane %v800, 4
  %v803 = vshll.u32 %v181, 16
  %v805 = vrot.slane %v803, 5
  %v806 = vsel %vm470, %v801, %v805
  %v808 = vshrl.u32 %v182, 16
  %v810 = vrot.slane %v808, 4
  %v811 = vshll.u32 %v182, 16
  %v813 = vrot.slane %v811, 5
  %v814 = vor.u32 %v810, %v813
  %v815 = vrot.slane %v814, 4
  %v817 = vshll.u32 %v183, 16
  %v819 = vrot.slane %v817, 5
  %v820 = vsel %vm470, %v815, %v819
  %v821 = vshrl.u32 %v183, 16
  %v823 = vrot.slane %v821, 4
  %v824 = vor.u32 %v823, %v819
  %v825 = vrot.slane %v824, 4
  %v827 = vshll.u32 %v184, 16
  %v829 = vrot.slane %v827, 5
  %v830 = vsel %vm470, %v825, %v829
  %v832 = vshrl.u32 %v185, 16
  %v834 = vrot.slane %v832, 4
  %v835 = vshll.u32 %v185, 16
  %v837 = vrot.slane %v835, 5
  %v838 = vor.u32 %v834, %v837
  %v839 = vrot.slane %v838, 4
  %v841 = vshll.u32 %v186, 16
  %v843 = vrot.slane %v841, 5
  %v844 = vsel %vm470, %v839, %v843
  %v845 = vshrl.u32 %v186, 16
  %v847 = vrot.slane %v845, 4
  %v848 = vor.u32 %v847, %v843
  %v849 = vrot.slane %v848, 4
  %v851 = vshll.u32 %v187, 16
  %v853 = vrot.slane %v851, 5
  %v854 = vsel %vm470, %v849, %v853
  %v856 = vshrl.u32 %v194, 16
  %v858 = vrot.slane %v856, 4
  %v859 = vshll.u32 %v194, 16
  %v861 = vrot.slane %v859, 5
  %v862 = vor.u32 %v858, %v861
  %v863 = vrot.slane %v862, 4
  %v865 = vshll.u32 %v195, 16
  %v867 = vrot.slane %v865, 5
  %v868 = vsel %vm470, %v863, %v867
  %v869 = vshrl.u32 %v195, 16
  %v871 = vrot.slane %v869, 4
  %v872 = vor.u32 %v871, %v867
  %v873 = vrot.slane %v872, 4
  %v875 = vshll.u32 %v196, 16
  %v877 = vrot.slane %v875, 5
  %v878 = vsel %vm470, %v873, %v877
  %v880 = vshrl.u32 %v197, 16
  %v882 = vrot.slane %v880, 4
  %v883 = vshll.u32 %v197, 16
  %v885 = vrot.slane %v883, 5
  %v886 = vor.u32 %v882, %v885
  %v887 = vrot.slane %v886, 4
  %v889 = vshll.u32 %v198, 16
  %v891 = vrot.slane %v889, 5
  %v892 = vsel %vm470, %v887, %v891
  %v893 = vshrl.u32 %v198, 16
  %v895 = vrot.slane %v893, 4
  %v896 = vor.u32 %v895, %v891
  %v897 = vrot.slane %v896, 4
  %v899 = vshll.u32 %v199, 16
  %v901 = vrot.slane %v899, 5
  %v902 = vsel %vm470, %v897, %v901
  %v904 = vshrl.u32 %v200, 16
  %v906 = vrot.slane %v904, 4
  %v907 = vshll.u32 %v200, 16
  %v909 = vrot.slane %v907, 5
  %v910 = vor.u32 %v906, %v909
  %v911 = vrot.slane %v910, 4
  %v913 = vshll.u32 %v201, 16
  %v915 = vrot.slane %v913, 5
  %v916 = vsel %vm470, %v911, %v915
  %v917 = vshrl.u32 %v201, 16
  %v919 = vrot.slane %v917, 4
  %v920 = vor.u32 %v919, %v915
  %v921 = vrot.slane %v920, 4
  %v923 = vshll.u32 %v202, 16
  %v925 = vrot.slane %v923, 5
  %v926 = vsel %vm470, %v921, %v925
  %v928 = vshrl.u32 %v203, 16
  %v930 = vrot.slane %v928, 4
  %v931 = vshll.u32 %v203, 16
  %v933 = vrot.slane %v931, 5
  %v934 = vor.u32 %v930, %v933
  %v935 = vrot.slane %v934, 4
  %v937 = vshll.u32 %v204, 16
  %v939 = vrot.slane %v937, 5
  %v940 = vsel %vm470, %v935, %v939
  %v941 = vshrl.u32 %v204, 16
  %v943 = vrot.slane %v941, 4
  %v944 = vor.u32 %v943, %v939
  %v945 = vrot.slane %v944, 4
  %v947 = vshll.u32 %v205, 16
  %v949 = vrot.slane %v947, 5
  %v950 = vsel %vm470, %v945, %v949
  %v952 = vshrl.u32 %v206, 16
  %v954 = vrot.slane %v952, 4
  %v955 = vshll.u32 %v206, 16
  %v957 = vrot.slane %v955, 5
  %v958 = vor.u32 %v954, %v957
  %v959 = vrot.slane %v958, 4
  %v961 = vshll.u32 %v207, 16
  %v963 = vrot.slane %v961, 5
  %v964 = vsel %vm470, %v959, %v963
  %v965 = vshrl.u32 %v207, 16
  %v967 = vrot.slane %v965, 4
  %v968 = vor.u32 %v967, %v963
  %v969 = vrot.slane %v968, 4
  %v971 = vshll.u32 %v208, 16
  %v973 = vrot.slane %v971, 5
  %v974 = vsel %vm470, %v969, %v973
  %v976 = vshrl.u32 %v209, 16
  %v978 = vrot.slane %v976, 4
  %v979 = vshll.u32 %v209, 16
  %v981 = vrot.slane %v979, 5
  %v982 = vor.u32 %v978, %v981
  %v983 = vrot.slane %v982, 4
  %v985 = vshll.u32 %v210, 16
  %v987 = vrot.slane %v985, 5
  %v988 = vsel %vm470, %v983, %v987
  %v989 = vshrl.u32 %v210, 16
  %v991 = vrot.slane %v989, 4
  %v992 = vor.u32 %v991, %v987
  %v993 = vrot.slane %v992, 4
  %v995 = vshll.u32 %v211, 16
  %v997 = vrot.slane %v995, 5
  %v998 = vsel %vm470, %v993, %v997
  %v1000 = vshrl.u32 %v212, 16
  %v1002 = vrot.slane %v1000, 4
  %v1003 = vshll.u32 %v212, 16
  %v1005 = vrot.slane %v1003, 5
  %v1006 = vor.u32 %v1002, %v1005
  %v1007 = vrot.slane %v1006, 4
  %v1009 = vshll.u32 %v213, 16
  %v1011 = vrot.slane %v1009, 5
  %v1012 = vsel %vm470, %v1007, %v1011
  %v1013 = vshrl.u32 %v213, 16
  %v1015 = vrot.slane %v1013, 4
  %v1016 = vor.u32 %v1015, %v1011
  %v1017 = vrot.slane %v1016, 4
  %v1019 = vshll.u32 %v214, 16
  %v1021 = vrot.slane %v1019, 5
  %v1022 = vsel %vm470, %v1017, %v1021
  %v1024 = vshrl.u32 %v215, 16
  %v1026 = vrot.slane %v1024, 4
  %v1027 = vshll.u32 %v215, 16
  %v1029 = vrot.slane %v1027, 5
  %v1030 = vor.u32 %v1026, %v1029
  %v1031 = vrot.slane %v1030, 4
  %v1033 = vshll.u32 %v216, 16
  %v1035 = vrot.slane %v1033, 5
  %v1036 = vsel %vm470, %v1031, %v1035
  %v1037 = vshrl.u32 %v216, 16
  %v1039 = vrot.slane %v1037, 4
  %v1040 = vor.u32 %v1039, %v1035
  %v1041 = vrot.slane %v1040, 4
  %v1043 = vshll.u32 %v217, 16
  %v1045 = vrot.slane %v1043, 5
  %v1046 = vsel %vm470, %v1041, %v1045
  %v1048 = vshrl.u32 %v218, 16
  %v1050 = vrot.slane %v1048, 4
  %v1051 = vshll.u32 %v218, 16
  %v1053 = vrot.slane %v1051, 5
  %v1054 = vor.u32 %v1050, %v1053
  %v1055 = vrot.slane %v1054, 4
  %v1057 = vshll.u32 %v219, 16
  %v1059 = vrot.slane %v1057, 5
  %v1060 = vsel %vm470, %v1055, %v1059
  %v1061 = vshrl.u32 %v219, 16
  %v1063 = vrot.slane %v1061, 4
  %v1064 = vor.u32 %v1063, %v1059
  %v1065 = vrot.slane %v1064, 4
  %v1067 = vshll.u32 %v220, 16
  %v1069 = vrot.slane %v1067, 5
  %v1070 = vsel %vm470, %v1065, %v1069
  %v1072 = vshrl.u32 %v221, 16
  %v1074 = vrot.slane %v1072, 4
  %v1075 = vshll.u32 %v221, 16
  %v1077 = vrot.slane %v1075, 5
  %v1078 = vor.u32 %v1074, %v1077
  %v1079 = vrot.slane %v1078, 4
  %v1081 = vshll.u32 %v222, 16
  %v1083 = vrot.slane %v1081, 5
  %v1084 = vsel %vm470, %v1079, %v1083
  %v1085 = vshrl.u32 %v222, 16
  %v1087 = vrot.slane %v1085, 4
  %v1088 = vor.u32 %v1087, %v1083
  %v1089 = vrot.slane %v1088, 4
  %v1091 = vshll.u32 %v223, 16
  %v1093 = vrot.slane %v1091, 5
  %v1094 = vsel %vm470, %v1089, %v1093
  %v1096 = vshrl.u32 %v224, 16
  %v1098 = vrot.slane %v1096, 4
  %v1099 = vshll.u32 %v224, 16
  %v1101 = vrot.slane %v1099, 5
  %v1102 = vor.u32 %v1098, %v1101
  %v1103 = vrot.slane %v1102, 4
  %v1105 = vshll.u32 %v225, 16
  %v1107 = vrot.slane %v1105, 5
  %v1108 = vsel %vm470, %v1103, %v1107
  %v1109 = vshrl.u32 %v225, 16
  %v1111 = vrot.slane %v1109, 4
  %v1112 = vor.u32 %v1111, %v1107
  %v1113 = vrot.slane %v1112, 4
  %v1115 = vshll.u32 %v226, 16
  %v1117 = vrot.slane %v1115, 5
  %v1118 = vsel %vm470, %v1113, %v1117
  %v1120 = vshrl.u32 %v227, 16
  %v1122 = vrot.slane %v1120, 4
  %v1123 = vshll.u32 %v227, 16
  %v1125 = vrot.slane %v1123, 5
  %v1126 = vor.u32 %v1122, %v1125
  %v1127 = vrot.slane %v1126, 4
  %v1129 = vshll.u32 %v228, 16
  %v1131 = vrot.slane %v1129, 5
  %v1132 = vsel %vm470, %v1127, %v1131
  %v1133 = vshrl.u32 %v228, 16
  %v1135 = vrot.slane %v1133, 4
  %v1136 = vor.u32 %v1135, %v1131
  %v1137 = vrot.slane %v1136, 4
  %v1139 = vshll.u32 %v229, 16
  %v1141 = vrot.slane %v1139, 5
  %v1142 = vsel %vm470, %v1137, %v1141
  %v1144 = vshrl.u32 %v230, 16
  %v1146 = vrot.slane %v1144, 4
  %v1147 = vshll.u32 %v230, 16
  %v1149 = vrot.slane %v1147, 5
  %v1150 = vor.u32 %v1146, %v1149
  %v1151 = vrot.slane %v1150, 4
  %v1153 = vshll.u32 %v231, 16
  %v1155 = vrot.slane %v1153, 5
  %v1156 = vsel %vm470, %v1151, %v1155
  %v1157 = vshrl.u32 %v231, 16
  %v1159 = vrot.slane %v1157, 4
  %v1160 = vor.u32 %v1159, %v1155
  %v1161 = vrot.slane %v1160, 4
  %v1163 = vshll.u32 %v232, 16
  %v1165 = vrot.slane %v1163, 5
  %v1166 = vsel %vm470, %v1161, %v1165
  %v1168 = vshrl.u32 %v233, 16
  %v1170 = vrot.slane %v1168, 4
  %v1171 = vshll.u32 %v233, 16
  %v1173 = vrot.slane %v1171, 5
  %v1174 = vor.u32 %v1170, %v1173
  %v1175 = vrot.slane %v1174, 4
  %v1177 = vshll.u32 %v234, 16
  %v1179 = vrot.slane %v1177, 5
  %v1180 = vsel %vm470, %v1175, %v1179
  %v1181 = vshrl.u32 %v234, 16
  %v1183 = vrot.slane %v1181, 4
  %v1184 = vor.u32 %v1183, %v1179
  %v1185 = vrot.slane %v1184, 4
  %v1187 = vshll.u32 %v235, 16
  %v1189 = vrot.slane %v1187, 5
  %v1190 = vsel %vm470, %v1185, %v1189
  %v1192 = vshrl.u32 %v236, 16
  %v1194 = vrot.slane %v1192, 4
  %v1195 = vshll.u32 %v236, 16
  %v1197 = vrot.slane %v1195, 5
  %v1198 = vor.u32 %v1194, %v1197
  %v1199 = vrot.slane %v1198, 4
  %v1201 = vshll.u32 %v237, 16
  %v1203 = vrot.slane %v1201, 5
  %v1204 = vsel %vm470, %v1199, %v1203
  %v1205 = vshrl.u32 %v237, 16
  %v1207 = vrot.slane %v1205, 4
  %v1208 = vor.u32 %v1207, %v1203
  %v1209 = vrot.slane %v1208, 4
  %v1211 = vshll.u32 %v238, 16
  %v1213 = vrot.slane %v1211, 5
  %v1214 = vsel %vm470, %v1209, %v1213
  %v1216 = vshrl.u32 %v239, 16
  %v1218 = vrot.slane %v1216, 4
  %v1219 = vshll.u32 %v239, 16
  %v1221 = vrot.slane %v1219, 5
  %v1222 = vor.u32 %v1218, %v1221
  %v1223 = vrot.slane %v1222, 4
  %v1225 = vshll.u32 %v240, 16
  %v1227 = vrot.slane %v1225, 5
  %v1228 = vsel %vm470, %v1223, %v1227
  %v1229 = vshrl.u32 %v240, 16
  %v1231 = vrot.slane %v1229, 4
  %v1232 = vor.u32 %v1231, %v1227
  %v1233 = vrot.slane %v1232, 4
  %v1235 = vshll.u32 %v241, 16
  %v1237 = vrot.slane %v1235, 5
  %v1238 = vsel %vm470, %v1233, %v1237
  %s1239 = scalar_lea.vmem %s2, 16
  %v1240 = vld [vmem:[%s1239] sm:$0xf]
  %v1241 = vld [vmem:[%s1239 + $0x4] sm:$0xf]
  %v1242 = vld [vmem:[%s1239 + $0x8] sm:$0xf]
  %v1243 = vld [vmem:[%s1239 + $0xc] sm:$0xf]
  %v1248 = vunpack.c.l.b16 %v1240
  %v1249 = vunpack.c.l.b16 %v1241
  %v1250 = vunpack.c.l.b16 %v1242
  %v1251 = vunpack.c.l.b16 %v1243
  %v1252 = vpack.c.b16 %v1249, %v1248
  %v1253 = vpack.c.b16 %v1251, %v1250
  %v1254 = vunpack.c.l.b16 %v484
  %v1255 = vunpack.c.l.b16 %v494
  %v1256 = vunpack.c.l.b16 %v508
  %v1257 = vunpack.c.l.b16 %v518
  %v1258 = vunpack.c.l.b16 %v532
  %v1259 = vunpack.c.l.b16 %v542
  %v1260 = vunpack.c.l.b16 %v556
  %v1261 = vunpack.c.l.b16 %v566
  %v1262 = vunpack.c.l.b16 %v580
  %v1263 = vunpack.c.l.b16 %v590
  %v1264 = vunpack.c.l.b16 %v604
  %v1265 = vunpack.c.l.b16 %v614
  %v1266 = vunpack.c.l.b16 %v628
  %v1267 = vunpack.c.l.b16 %v638
  %v1268 = vunpack.c.l.b16 %v652
  %v1269 = vunpack.c.l.b16 %v662
  %v1270 = vunpack.c.l.b16 %v676
  %v1271 = vunpack.c.l.b16 %v686
  %v1272 = vunpack.c.l.b16 %v700
  %v1273 = vunpack.c.l.b16 %v710
  %v1274 = vunpack.c.l.b16 %v724
  %v1275 = vunpack.c.l.b16 %v734
  %v1276 = vunpack.c.l.b16 %v748
  %v1277 = vunpack.c.l.b16 %v758
  %v1278 = vunpack.c.l.b16 %v772
  %v1279 = vunpack.c.l.b16 %v782
  %v1280 = vunpack.c.l.b16 %v796
  %v1281 = vunpack.c.l.b16 %v806
  %v1282 = vunpack.c.l.b16 %v820
  %v1283 = vunpack.c.l.b16 %v830
  %v1284 = vunpack.c.l.b16 %v844
  %v1285 = vunpack.c.l.b16 %v854
  %v1286 = vunpack.c.l.b16 %v868
  %v1287 = vunpack.c.l.b16 %v878
  %v1288 = vunpack.c.l.b16 %v892
  %v1289 = vunpack.c.l.b16 %v902
  %v1290 = vunpack.c.l.b16 %v916
  %v1291 = vunpack.c.l.b16 %v926
  %v1292 = vunpack.c.l.b16 %v940
  %v1293 = vunpack.c.l.b16 %v950
  %v1294 = vunpack.c.l.b16 %v964
  %v1295 = vunpack.c.l.b16 %v974
  %v1296 = vunpack.c.l.b16 %v988
  %v1297 = vunpack.c.l.b16 %v998
  %v1298 = vunpack.c.l.b16 %v1012
  %v1299 = vunpack.c.l.b16 %v1022
  %v1300 = vunpack.c.l.b16 %v1036
  %v1301 = vunpack.c.l.b16 %v1046
  %v1302 = vunpack.c.l.b16 %v1060
  %v1303 = vunpack.c.l.b16 %v1070
  %v1304 = vunpack.c.l.b16 %v1084
  %v1305 = vunpack.c.l.b16 %v1094
  %v1306 = vunpack.c.l.b16 %v1108
  %v1307 = vunpack.c.l.b16 %v1118
  %v1308 = vunpack.c.l.b16 %v1132
  %v1309 = vunpack.c.l.b16 %v1142
  %v1310 = vunpack.c.l.b16 %v1156
  %v1311 = vunpack.c.l.b16 %v1166
  %v1312 = vunpack.c.l.b16 %v1180
  %v1313 = vunpack.c.l.b16 %v1190
  %v1314 = vunpack.c.l.b16 %v1204
  %v1315 = vunpack.c.l.b16 %v1214
  %v1316 = vunpack.c.l.b16 %v1228
  %v1317 = vunpack.c.l.b16 %v1238
  %v1318 = vpack.c.b16 %v1255, %v1254
  %v1319 = vpack.c.b16 %v1257, %v1256
  %v1320 = vpack.c.b16 %v1259, %v1258
  %v1321 = vpack.c.b16 %v1261, %v1260
  %v1322 = vpack.c.b16 %v1263, %v1262
  %v1323 = vpack.c.b16 %v1265, %v1264
  %v1324 = vpack.c.b16 %v1267, %v1266
  %v1325 = vpack.c.b16 %v1269, %v1268
  %v1326 = vpack.c.b16 %v1271, %v1270
  %v1327 = vpack.c.b16 %v1273, %v1272
  %v1328 = vpack.c.b16 %v1275, %v1274
  %v1329 = vpack.c.b16 %v1277, %v1276
  %v1330 = vpack.c.b16 %v1279, %v1278
  %v1331 = vpack.c.b16 %v1281, %v1280
  %v1332 = vpack.c.b16 %v1283, %v1282
  %v1333 = vpack.c.b16 %v1285, %v1284
  %v1334 = vpack.c.b16 %v1287, %v1286
  %v1335 = vpack.c.b16 %v1289, %v1288
  %v1336 = vpack.c.b16 %v1291, %v1290
  %v1337 = vpack.c.b16 %v1293, %v1292
  %v1338 = vpack.c.b16 %v1295, %v1294
  %v1339 = vpack.c.b16 %v1297, %v1296
  %v1340 = vpack.c.b16 %v1299, %v1298
  %v1341 = vpack.c.b16 %v1301, %v1300
  %v1342 = vpack.c.b16 %v1303, %v1302
  %v1343 = vpack.c.b16 %v1305, %v1304
  %v1344 = vpack.c.b16 %v1307, %v1306
  %v1345 = vpack.c.b16 %v1309, %v1308
  %v1346 = vpack.c.b16 %v1311, %v1310
  %v1347 = vpack.c.b16 %v1313, %v1312
  %v1348 = vpack.c.b16 %v1315, %v1314
  %v1349 = vpack.c.b16 %v1317, %v1316
  %vm1350 = vcmask 261120
  %v1352 = vsel %vm1350, %v1252, 0
  %v1355 = vsel %vm1350, %v1253, 0
  %v1358 = vsel %vm1350, %v1318, 0
  %v1361 = vsel %vm1350, %v1319, 0
  %v1364 = vsel %vm1350, %v1320, 0
  %v1367 = vsel %vm1350, %v1321, 0
  %v1370 = vsel %vm1350, %v1322, 0
  %v1373 = vsel %vm1350, %v1323, 0
  %v1376 = vsel %vm1350, %v1324, 0
  %v1379 = vsel %vm1350, %v1325, 0
  %v1382 = vsel %vm1350, %v1326, 0
  %v1385 = vsel %vm1350, %v1327, 0
  %v1388 = vsel %vm1350, %v1328, 0
  %v1391 = vsel %vm1350, %v1329, 0
  %v1394 = vsel %vm1350, %v1330, 0
  %v1397 = vsel %vm1350, %v1331, 0
  %v1400 = vsel %vm1350, %v1332, 0
  %v1403 = vsel %vm1350, %v1333, 0
  %v1406 = vsel %vm1350, %v1334, 0
  %v1409 = vsel %vm1350, %v1335, 0
  %v1412 = vsel %vm1350, %v1336, 0
  %v1415 = vsel %vm1350, %v1337, 0
  %v1418 = vsel %vm1350, %v1338, 0
  %v1421 = vsel %vm1350, %v1339, 0
  %v1424 = vsel %vm1350, %v1340, 0
  %v1427 = vsel %vm1350, %v1341, 0
  %v1430 = vsel %vm1350, %v1342, 0
  %v1433 = vsel %vm1350, %v1343, 0
  %v1436 = vsel %vm1350, %v1344, 0
  %v1439 = vsel %vm1350, %v1345, 0
  %v1442 = vsel %vm1350, %v1346, 0
  %v1445 = vsel %vm1350, %v1347, 0
  %v1448 = vsel %vm1350, %v1348, 0
  %v1451 = vsel %vm1350, %v1349, 0
  %1453 = vmatpush.bf16.xpose.msra.mxu0 %v1379
  %1454 = vmatpush.bf16.xpose.msra.mxu0 %v1376
  %1455 = vmatpush.bf16.xpose.msra.mxu0 %v1373
  %1456 = vmatpush.bf16.xpose.msra.mxu0 %v1370
  %1457 = vmatpush.bf16.xpose.msra.mxu0 %v1367
  %1458 = vmatpush.bf16.xpose.msra.mxu0 %v1364
  %1459 = vmatpush.bf16.xpose.msra.mxu0 %v1361
  %1460 = vmatpush.bf16.xpose.msra.mxu0 %v1358
  %1461 = vmatmul.bf16.gmra.mxu0 %v1352
  %v1462 = vpop.f32.mrf.mxu0
  %v1463 = vadd.f32 0.0, %v1462
  %v1464 = vpop.f32.mrf.mxu0
  %v1465 = vadd.f32 0.0, %v1464
  %1466 = vmatmul.bf16.gmra.mxu0 %v1355
  %v1467 = vpop.f32.mrf.mxu0
  %v1468 = vadd.f32 0.0, %v1467
  %v1469 = vpop.f32.mrf.mxu0
  %v1470 = vadd.f32 0.0, %v1469
  %1471 = vdwg.mxu0
  %1472 = vmatpush.bf16.xpose.msra.mxu0 %v1403
  %1473 = vmatpush.bf16.xpose.msra.mxu0 %v1400
  %1474 = vmatpush.bf16.xpose.msra.mxu0 %v1397
  %1475 = vmatpush.bf16.xpose.msra.mxu0 %v1394
  %1476 = vmatpush.bf16.xpose.msra.mxu0 %v1391
  %1477 = vmatpush.bf16.xpose.msra.mxu0 %v1388
  %1478 = vmatpush.bf16.xpose.msra.mxu0 %v1385
  %1479 = vmatpush.bf16.xpose.msra.mxu0 %v1382
  %1480 = vmatmul.bf16.gmra.mxu0 %v1352
  %v1481 = vpop.f32.mrf.mxu0
  %v1482 = vadd.f32 0.0, %v1481
  %v1483 = vpop.f32.mrf.mxu0
  %v1484 = vadd.f32 0.0, %v1483
  %1485 = vmatmul.bf16.gmra.mxu0 %v1355
  %v1486 = vpop.f32.mrf.mxu0
  %v1487 = vadd.f32 0.0, %v1486
  %v1488 = vpop.f32.mrf.mxu0
  %v1489 = vadd.f32 0.0, %v1488
  %1490 = vdwg.mxu0
  %1491 = vmatpush.bf16.xpose.msra.mxu0 %v1427
  %1492 = vmatpush.bf16.xpose.msra.mxu0 %v1424
  %1493 = vmatpush.bf16.xpose.msra.mxu0 %v1421
  %1494 = vmatpush.bf16.xpose.msra.mxu0 %v1418
  %1495 = vmatpush.bf16.xpose.msra.mxu0 %v1415
  %1496 = vmatpush.bf16.xpose.msra.mxu0 %v1412
  %1497 = vmatpush.bf16.xpose.msra.mxu0 %v1409
  %1498 = vmatpush.bf16.xpose.msra.mxu0 %v1406
  %1499 = vmatmul.bf16.gmra.mxu0 %v1352
  %v1500 = vpop.f32.mrf.mxu0
  %v1501 = vadd.f32 0.0, %v1500
  %v1502 = vpop.f32.mrf.mxu0
  %v1503 = vadd.f32 0.0, %v1502
  %1504 = vmatmul.bf16.gmra.mxu0 %v1355
  %v1505 = vpop.f32.mrf.mxu0
  %v1506 = vadd.f32 0.0, %v1505
  %v1507 = vpop.f32.mrf.mxu0
  %v1508 = vadd.f32 0.0, %v1507
  %1509 = vdwg.mxu0
  %1510 = vmatpush.bf16.xpose.msra.mxu0 %v1451
  %1511 = vmatpush.bf16.xpose.msra.mxu0 %v1448
  %1512 = vmatpush.bf16.xpose.msra.mxu0 %v1445
  %1513 = vmatpush.bf16.xpose.msra.mxu0 %v1442
  %1514 = vmatpush.bf16.xpose.msra.mxu0 %v1439
  %1515 = vmatpush.bf16.xpose.msra.mxu0 %v1436
  %1516 = vmatpush.bf16.xpose.msra.mxu0 %v1433
  %1517 = vmatpush.bf16.xpose.msra.mxu0 %v1430
  %1518 = vmatmul.bf16.gmra.mxu0 %v1352
  %v1519 = vpop.f32.mrf.mxu0
  %v1520 = vadd.f32 0.0, %v1519
  %v1521 = vpop.f32.mrf.mxu0
  %v1522 = vadd.f32 0.0, %v1521
  %1523 = vmatmul.bf16.gmra.mxu0 %v1355
  %v1524 = vpop.f32.mrf.mxu0
  %v1525 = vadd.f32 0.0, %v1524
  %v1526 = vpop.f32.mrf.mxu0
  %v1527 = vadd.f32 0.0, %v1526
  %1528 = vdwg.mxu0
  %v1533 = vunpack.c.l.b16 %v464
  %v1534 = vunpack.c.l.b16 %v465
  %v1535 = vunpack.c.l.b16 %v466
  %v1536 = vunpack.c.l.b16 %v467
  %v1537 = vpack.c.b16 %v1534, %v1533
  %v1538 = vpack.c.b16 %v1536, %v1535
  %v1603 = vunpack.c.l.b16 %v140
  %v1604 = vunpack.c.l.b16 %v141
  %v1605 = vunpack.c.l.b16 %v143
  %v1606 = vunpack.c.l.b16 %v144
  %v1607 = vunpack.c.l.b16 %v146
  %v1608 = vunpack.c.l.b16 %v147
  %v1609 = vunpack.c.l.b16 %v149
  %v1610 = vunpack.c.l.b16 %v150
  %v1611 = vunpack.c.l.b16 %v152
  %v1612 = vunpack.c.l.b16 %v153
  %v1613 = vunpack.c.l.b16 %v155
  %v1614 = vunpack.c.l.b16 %v156
  %v1615 = vunpack.c.l.b16 %v158
  %v1616 = vunpack.c.l.b16 %v159
  %v1617 = vunpack.c.l.b16 %v161
  %v1618 = vunpack.c.l.b16 %v162
  %v1619 = vunpack.c.l.b16 %v164
  %v1620 = vunpack.c.l.b16 %v165
  %v1621 = vunpack.c.l.b16 %v167
  %v1622 = vunpack.c.l.b16 %v168
  %v1623 = vunpack.c.l.b16 %v170
  %v1624 = vunpack.c.l.b16 %v171
  %v1625 = vunpack.c.l.b16 %v173
  %v1626 = vunpack.c.l.b16 %v174
  %v1627 = vunpack.c.l.b16 %v176
  %v1628 = vunpack.c.l.b16 %v177
  %v1629 = vunpack.c.l.b16 %v179
  %v1630 = vunpack.c.l.b16 %v180
  %v1631 = vunpack.c.l.b16 %v182
  %v1632 = vunpack.c.l.b16 %v183
  %v1633 = vunpack.c.l.b16 %v185
  %v1634 = vunpack.c.l.b16 %v186
  %v1635 = vunpack.c.l.b16 %v194
  %v1636 = vunpack.c.l.b16 %v195
  %v1637 = vunpack.c.l.b16 %v197
  %v1638 = vunpack.c.l.b16 %v198
  %v1639 = vunpack.c.l.b16 %v200
  %v1640 = vunpack.c.l.b16 %v201
  %v1641 = vunpack.c.l.b16 %v203
  %v1642 = vunpack.c.l.b16 %v204
  %v1643 = vunpack.c.l.b16 %v206
  %v1644 = vunpack.c.l.b16 %v207
  %v1645 = vunpack.c.l.b16 %v209
  %v1646 = vunpack.c.l.b16 %v210
  %v1647 = vunpack.c.l.b16 %v212
  %v1648 = vunpack.c.l.b16 %v213
  %v1649 = vunpack.c.l.b16 %v215
  %v1650 = vunpack.c.l.b16 %v216
  %v1651 = vunpack.c.l.b16 %v218
  %v1652 = vunpack.c.l.b16 %v219
  %v1653 = vunpack.c.l.b16 %v221
  %v1654 = vunpack.c.l.b16 %v222
  %v1655 = vunpack.c.l.b16 %v224
  %v1656 = vunpack.c.l.b16 %v225
  %v1657 = vunpack.c.l.b16 %v227
  %v1658 = vunpack.c.l.b16 %v228
  %v1659 = vunpack.c.l.b16 %v230
  %v1660 = vunpack.c.l.b16 %v231
  %v1661 = vunpack.c.l.b16 %v233
  %v1662 = vunpack.c.l.b16 %v234
  %v1663 = vunpack.c.l.b16 %v236
  %v1664 = vunpack.c.l.b16 %v237
  %v1665 = vunpack.c.l.b16 %v239
  %v1666 = vunpack.c.l.b16 %v240
  %v1667 = vpack.c.b16 %v1604, %v1603
  %v1668 = vpack.c.b16 %v1606, %v1605
  %v1669 = vpack.c.b16 %v1608, %v1607
  %v1670 = vpack.c.b16 %v1610, %v1609
  %v1671 = vpack.c.b16 %v1612, %v1611
  %v1672 = vpack.c.b16 %v1614, %v1613
  %v1673 = vpack.c.b16 %v1616, %v1615
  %v1674 = vpack.c.b16 %v1618, %v1617
  %v1675 = vpack.c.b16 %v1620, %v1619
  %v1676 = vpack.c.b16 %v1622, %v1621
  %v1677 = vpack.c.b16 %v1624, %v1623
  %v1678 = vpack.c.b16 %v1626, %v1625
  %v1679 = vpack.c.b16 %v1628, %v1627
  %v1680 = vpack.c.b16 %v1630, %v1629
  %v1681 = vpack.c.b16 %v1632, %v1631
  %v1682 = vpack.c.b16 %v1634, %v1633
  %v1683 = vpack.c.b16 %v1636, %v1635
  %v1684 = vpack.c.b16 %v1638, %v1637
  %v1685 = vpack.c.b16 %v1640, %v1639
  %v1686 = vpack.c.b16 %v1642, %v1641
  %v1687 = vpack.c.b16 %v1644, %v1643
  %v1688 = vpack.c.b16 %v1646, %v1645
  %v1689 = vpack.c.b16 %v1648, %v1647
  %v1690 = vpack.c.b16 %v1650, %v1649
  %v1691 = vpack.c.b16 %v1652, %v1651
  %v1692 = vpack.c.b16 %v1654, %v1653
  %v1693 = vpack.c.b16 %v1656, %v1655
  %v1694 = vpack.c.b16 %v1658, %v1657
  %v1695 = vpack.c.b16 %v1660, %v1659
  %v1696 = vpack.c.b16 %v1662, %v1661
  %v1697 = vpack.c.b16 %v1664, %v1663
  %v1698 = vpack.c.b16 %v1666, %v1665
  %v1700 = vsel %vm1350, %v1537, 0
  %v1703 = vsel %vm1350, %v1538, 0
  %v1706 = vsel %vm1350, %v1667, 0
  %v1709 = vsel %vm1350, %v1668, 0
  %v1712 = vsel %vm1350, %v1669, 0
  %v1715 = vsel %vm1350, %v1670, 0
  %v1718 = vsel %vm1350, %v1671, 0
  %v1721 = vsel %vm1350, %v1672, 0
  %v1724 = vsel %vm1350, %v1673, 0
  %v1727 = vsel %vm1350, %v1674, 0
  %v1730 = vsel %vm1350, %v1675, 0
  %v1733 = vsel %vm1350, %v1676, 0
  %v1736 = vsel %vm1350, %v1677, 0
  %v1739 = vsel %vm1350, %v1678, 0
  %v1742 = vsel %vm1350, %v1679, 0
  %v1745 = vsel %vm1350, %v1680, 0
  %v1748 = vsel %vm1350, %v1681, 0
  %v1751 = vsel %vm1350, %v1682, 0
  %v1754 = vsel %vm1350, %v1683, 0
  %v1757 = vsel %vm1350, %v1684, 0
  %v1760 = vsel %vm1350, %v1685, 0
  %v1763 = vsel %vm1350, %v1686, 0
  %v1766 = vsel %vm1350, %v1687, 0
  %v1769 = vsel %vm1350, %v1688, 0
  %v1772 = vsel %vm1350, %v1689, 0
  %v1775 = vsel %vm1350, %v1690, 0
  %v1778 = vsel %vm1350, %v1691, 0
  %v1781 = vsel %vm1350, %v1692, 0
  %v1784 = vsel %vm1350, %v1693, 0
  %v1787 = vsel %vm1350, %v1694, 0
  %v1790 = vsel %vm1350, %v1695, 0
  %v1793 = vsel %vm1350, %v1696, 0
  %v1796 = vsel %vm1350, %v1697, 0
  %v1799 = vsel %vm1350, %v1698, 0
  %1801 = vmatpush.bf16.xpose.msra.mxu0 %v1727
  %1802 = vmatpush.bf16.xpose.msra.mxu0 %v1724
  %1803 = vmatpush.bf16.xpose.msra.mxu0 %v1721
  %1804 = vmatpush.bf16.xpose.msra.mxu0 %v1718
  %1805 = vmatpush.bf16.xpose.msra.mxu0 %v1715
  %1806 = vmatpush.bf16.xpose.msra.mxu0 %v1712
  %1807 = vmatpush.bf16.xpose.msra.mxu0 %v1709
  %1808 = vmatpush.bf16.xpose.msra.mxu0 %v1706
  %1809 = vmatmul.bf16.gmra.mxu0 %v1700
  %v1810 = vpop.f32.mrf.mxu0
  %v1811 = vadd.f32 %v1463, %v1810
  %v1812 = vpop.f32.mrf.mxu0
  %v1813 = vadd.f32 %v1465, %v1812
  %1814 = vmatmul.bf16.gmra.mxu0 %v1703
  %v1815 = vpop.f32.mrf.mxu0
  %v1816 = vadd.f32 %v1468, %v1815
  %v1817 = vpop.f32.mrf.mxu0
  %v1818 = vadd.f32 %v1470, %v1817
  %1819 = vdwg.mxu0
  %1820 = vmatpush.bf16.xpose.msra.mxu0 %v1751
  %1821 = vmatpush.bf16.xpose.msra.mxu0 %v1748
  %1822 = vmatpush.bf16.xpose.msra.mxu0 %v1745
  %1823 = vmatpush.bf16.xpose.msra.mxu0 %v1742
  %1824 = vmatpush.bf16.xpose.msra.mxu0 %v1739
  %1825 = vmatpush.bf16.xpose.msra.mxu0 %v1736
  %1826 = vmatpush.bf16.xpose.msra.mxu0 %v1733
  %1827 = vmatpush.bf16.xpose.msra.mxu0 %v1730
  %1828 = vmatmul.bf16.gmra.mxu0 %v1700
  %v1829 = vpop.f32.mrf.mxu0
  %v1830 = vadd.f32 %v1482, %v1829
  %v1831 = vpop.f32.mrf.mxu0
  %v1832 = vadd.f32 %v1484, %v1831
  %1833 = vmatmul.bf16.gmra.mxu0 %v1703
  %v1834 = vpop.f32.mrf.mxu0
  %v1835 = vadd.f32 %v1487, %v1834
  %v1836 = vpop.f32.mrf.mxu0
  %v1837 = vadd.f32 %v1489, %v1836
  %1838 = vdwg.mxu0
  %1839 = vmatpush.bf16.xpose.msra.mxu0 %v1775
  %1840 = vmatpush.bf16.xpose.msra.mxu0 %v1772
  %1841 = vmatpush.bf16.xpose.msra.mxu0 %v1769
  %1842 = vmatpush.bf16.xpose.msra.mxu0 %v1766
  %1843 = vmatpush.bf16.xpose.msra.mxu0 %v1763
  %1844 = vmatpush.bf16.xpose.msra.mxu0 %v1760
  %1845 = vmatpush.bf16.xpose.msra.mxu0 %v1757
  %1846 = vmatpush.bf16.xpose.msra.mxu0 %v1754
  %1847 = vmatmul.bf16.gmra.mxu0 %v1700
  %v1848 = vpop.f32.mrf.mxu0
  %v1849 = vadd.f32 %v1501, %v1848
  %v1850 = vpop.f32.mrf.mxu0
  %v1851 = vadd.f32 %v1503, %v1850
  %1852 = vmatmul.bf16.gmra.mxu0 %v1703
  %v1853 = vpop.f32.mrf.mxu0
  %v1854 = vadd.f32 %v1506, %v1853
  %v1855 = vpop.f32.mrf.mxu0
  %v1856 = vadd.f32 %v1508, %v1855
  %1857 = vdwg.mxu0
  %1858 = vmatpush.bf16.xpose.msra.mxu0 %v1799
  %1859 = vmatpush.bf16.xpose.msra.mxu0 %v1796
  %1860 = vmatpush.bf16.xpose.msra.mxu0 %v1793
  %1861 = vmatpush.bf16.xpose.msra.mxu0 %v1790
  %1862 = vmatpush.bf16.xpose.msra.mxu0 %v1787
  %1863 = vmatpush.bf16.xpose.msra.mxu0 %v1784
  %1864 = vmatpush.bf16.xpose.msra.mxu0 %v1781
  %1865 = vmatpush.bf16.xpose.msra.mxu0 %v1778
  %1866 = vmatmul.bf16.gmra.mxu0 %v1700
  %v1867 = vpop.f32.mrf.mxu0
  %v1868 = vadd.f32 %v1520, %v1867
  %v1869 = vpop.f32.mrf.mxu0
  %v1870 = vadd.f32 %v1522, %v1869
  %1871 = vmatmul.bf16.gmra.mxu0 %v1703
  %v1872 = vpop.f32.mrf.mxu0
  %v1873 = vadd.f32 %v1525, %v1872
  %v1874 = vpop.f32.mrf.mxu0
  %v1875 = vadd.f32 %v1527, %v1874
  %1876 = vdwg.mxu0
  %vm1909 = vcmask 1042432
  %vm1910 = vcmask 1046532
  %vm1911 = vmor %vm1909, %vm1910
  %v1912 = vrot.slane %v140, 5
  %v1913 = vrot.slane %v1912, 4
  %v1914 = vrot.slane %v141, 5
  %v1915 = vsel %vm1911, %v1913, %v1914
  %v1916 = vrot.slane %v1914, 4
  %v1917 = vrot.slane %v142, 5
  %v1918 = vsel %vm1911, %v1916, %v1917
  %v1919 = vrot.slane %v143, 5
  %v1920 = vrot.slane %v1919, 4
  %v1921 = vrot.slane %v144, 5
  %v1922 = vsel %vm1911, %v1920, %v1921
  %v1923 = vrot.slane %v1921, 4
  %v1924 = vrot.slane %v145, 5
  %v1925 = vsel %vm1911, %v1923, %v1924
  %v1926 = vrot.slane %v146, 5
  %v1927 = vrot.slane %v1926, 4
  %v1928 = vrot.slane %v147, 5
  %v1929 = vsel %vm1911, %v1927, %v1928
  %v1930 = vrot.slane %v1928, 4
  %v1931 = vrot.slane %v148, 5
  %v1932 = vsel %vm1911, %v1930, %v1931
  %v1933 = vrot.slane %v149, 5
  %v1934 = vrot.slane %v1933, 4
  %v1935 = vrot.slane %v150, 5
  %v1936 = vsel %vm1911, %v1934, %v1935
  %v1937 = vrot.slane %v1935, 4
  %v1938 = vrot.slane %v151, 5
  %v1939 = vsel %vm1911, %v1937, %v1938
  %v1940 = vrot.slane %v152, 5
  %v1941 = vrot.slane %v1940, 4
  %v1942 = vrot.slane %v153, 5
  %v1943 = vsel %vm1911, %v1941, %v1942
  %v1944 = vrot.slane %v1942, 4
  %v1945 = vrot.slane %v154, 5
  %v1946 = vsel %vm1911, %v1944, %v1945
  %v1947 = vrot.slane %v155, 5
  %v1948 = vrot.slane %v1947, 4
  %v1949 = vrot.slane %v156, 5
  %v1950 = vsel %vm1911, %v1948, %v1949
  %v1951 = vrot.slane %v1949, 4
  %v1952 = vrot.slane %v157, 5
  %v1953 = vsel %vm1911, %v1951, %v1952
  %v1954 = vrot.slane %v158, 5
  %v1955 = vrot.slane %v1954, 4
  %v1956 = vrot.slane %v159, 5
  %v1957 = vsel %vm1911, %v1955, %v1956
  %v1958 = vrot.slane %v1956, 4
  %v1959 = vrot.slane %v160, 5
  %v1960 = vsel %vm1911, %v1958, %v1959
  %v1961 = vrot.slane %v161, 5
  %v1962 = vrot.slane %v1961, 4
  %v1963 = vrot.slane %v162, 5
  %v1964 = vsel %vm1911, %v1962, %v1963
  %v1965 = vrot.slane %v1963, 4
  %v1966 = vrot.slane %v163, 5
  %v1967 = vsel %vm1911, %v1965, %v1966
  %v1968 = vrot.slane %v164, 5
  %v1969 = vrot.slane %v1968, 4
  %v1970 = vrot.slane %v165, 5
  %v1971 = vsel %vm1911, %v1969, %v1970
  %v1972 = vrot.slane %v1970, 4
  %v1973 = vrot.slane %v166, 5
  %v1974 = vsel %vm1911, %v1972, %v1973
  %v1975 = vrot.slane %v167, 5
  %v1976 = vrot.slane %v1975, 4
  %v1977 = vrot.slane %v168, 5
  %v1978 = vsel %vm1911, %v1976, %v1977
  %v1979 = vrot.slane %v1977, 4
  %v1980 = vrot.slane %v169, 5
  %v1981 = vsel %vm1911, %v1979, %v1980
  %v1982 = vrot.slane %v170, 5
  %v1983 = vrot.slane %v1982, 4
  %v1984 = vrot.slane %v171, 5
  %v1985 = vsel %vm1911, %v1983, %v1984
  %v1986 = vrot.slane %v1984, 4
  %v1987 = vrot.slane %v172, 5
  %v1988 = vsel %vm1911, %v1986, %v1987
  %v1989 = vrot.slane %v173, 5
  %v1990 = vrot.slane %v1989, 4
  %v1991 = vrot.slane %v174, 5
  %v1992 = vsel %vm1911, %v1990, %v1991
  %v1993 = vrot.slane %v1991, 4
  %v1994 = vrot.slane %v175, 5
  %v1995 = vsel %vm1911, %v1993, %v1994
  %v1996 = vrot.slane %v176, 5
  %v1997 = vrot.slane %v1996, 4
  %v1998 = vrot.slane %v177, 5
  %v1999 = vsel %vm1911, %v1997, %v1998
  %v2000 = vrot.slane %v1998, 4
  %v2001 = vrot.slane %v178, 5
  %v2002 = vsel %vm1911, %v2000, %v2001
  %v2003 = vrot.slane %v179, 5
  %v2004 = vrot.slane %v2003, 4
  %v2005 = vrot.slane %v180, 5
  %v2006 = vsel %vm1911, %v2004, %v2005
  %v2007 = vrot.slane %v2005, 4
  %v2008 = vrot.slane %v181, 5
  %v2009 = vsel %vm1911, %v2007, %v2008
  %v2010 = vrot.slane %v182, 5
  %v2011 = vrot.slane %v2010, 4
  %v2012 = vrot.slane %v183, 5
  %v2013 = vsel %vm1911, %v2011, %v2012
  %v2014 = vrot.slane %v2012, 4
  %v2015 = vrot.slane %v184, 5
  %v2016 = vsel %vm1911, %v2014, %v2015
  %v2017 = vrot.slane %v185, 5
  %v2018 = vrot.slane %v2017, 4
  %v2019 = vrot.slane %v186, 5
  %v2020 = vsel %vm1911, %v2018, %v2019
  %v2021 = vrot.slane %v2019, 4
  %v2022 = vrot.slane %v187, 5
  %v2023 = vsel %vm1911, %v2021, %v2022
  %v2024 = vrot.slane %v194, 5
  %v2025 = vrot.slane %v2024, 4
  %v2026 = vrot.slane %v195, 5
  %v2027 = vsel %vm1911, %v2025, %v2026
  %v2028 = vrot.slane %v2026, 4
  %v2029 = vrot.slane %v196, 5
  %v2030 = vsel %vm1911, %v2028, %v2029
  %v2031 = vrot.slane %v197, 5
  %v2032 = vrot.slane %v2031, 4
  %v2033 = vrot.slane %v198, 5
  %v2034 = vsel %vm1911, %v2032, %v2033
  %v2035 = vrot.slane %v2033, 4
  %v2036 = vrot.slane %v199, 5
  %v2037 = vsel %vm1911, %v2035, %v2036
  %v2038 = vrot.slane %v200, 5
  %v2039 = vrot.slane %v2038, 4
  %v2040 = vrot.slane %v201, 5
  %v2041 = vsel %vm1911, %v2039, %v2040
  %v2042 = vrot.slane %v2040, 4
  %v2043 = vrot.slane %v202, 5
  %v2044 = vsel %vm1911, %v2042, %v2043
  %v2045 = vrot.slane %v203, 5
  %v2046 = vrot.slane %v2045, 4
  %v2047 = vrot.slane %v204, 5
  %v2048 = vsel %vm1911, %v2046, %v2047
  %v2049 = vrot.slane %v2047, 4
  %v2050 = vrot.slane %v205, 5
  %v2051 = vsel %vm1911, %v2049, %v2050
  %v2052 = vrot.slane %v206, 5
  %v2053 = vrot.slane %v2052, 4
  %v2054 = vrot.slane %v207, 5
  %v2055 = vsel %vm1911, %v2053, %v2054
  %v2056 = vrot.slane %v2054, 4
  %v2057 = vrot.slane %v208, 5
  %v2058 = vsel %vm1911, %v2056, %v2057
  %v2059 = vrot.slane %v209, 5
  %v2060 = vrot.slane %v2059, 4
  %v2061 = vrot.slane %v210, 5
  %v2062 = vsel %vm1911, %v2060, %v2061
  %v2063 = vrot.slane %v2061, 4
  %v2064 = vrot.slane %v211, 5
  %v2065 = vsel %vm1911, %v2063, %v2064
  %v2066 = vrot.slane %v212, 5
  %v2067 = vrot.slane %v2066, 4
  %v2068 = vrot.slane %v213, 5
  %v2069 = vsel %vm1911, %v2067, %v2068
  %v2070 = vrot.slane %v2068, 4
  %v2071 = vrot.slane %v214, 5
  %v2072 = vsel %vm1911, %v2070, %v2071
  %v2073 = vrot.slane %v215, 5
  %v2074 = vrot.slane %v2073, 4
  %v2075 = vrot.slane %v216, 5
  %v2076 = vsel %vm1911, %v2074, %v2075
  %v2077 = vrot.slane %v2075, 4
  %v2078 = vrot.slane %v217, 5
  %v2079 = vsel %vm1911, %v2077, %v2078
  %v2080 = vrot.slane %v218, 5
  %v2081 = vrot.slane %v2080, 4
  %v2082 = vrot.slane %v219, 5
  %v2083 = vsel %vm1911, %v2081, %v2082
  %v2084 = vrot.slane %v2082, 4
  %v2085 = vrot.slane %v220, 5
  %v2086 = vsel %vm1911, %v2084, %v2085
  %v2087 = vrot.slane %v221, 5
  %v2088 = vrot.slane %v2087, 4
  %v2089 = vrot.slane %v222, 5
  %v2090 = vsel %vm1911, %v2088, %v2089
  %v2091 = vrot.slane %v2089, 4
  %v2092 = vrot.slane %v223, 5
  %v2093 = vsel %vm1911, %v2091, %v2092
  %v2094 = vrot.slane %v224, 5
  %v2095 = vrot.slane %v2094, 4
  %v2096 = vrot.slane %v225, 5
  %v2097 = vsel %vm1911, %v2095, %v2096
  %v2098 = vrot.slane %v2096, 4
  %v2099 = vrot.slane %v226, 5
  %v2100 = vsel %vm1911, %v2098, %v2099
  %v2101 = vrot.slane %v227, 5
  %v2102 = vrot.slane %v2101, 4
  %v2103 = vrot.slane %v228, 5
  %v2104 = vsel %vm1911, %v2102, %v2103
  %v2105 = vrot.slane %v2103, 4
  %v2106 = vrot.slane %v229, 5
  %v2107 = vsel %vm1911, %v2105, %v2106
  %v2108 = vrot.slane %v230, 5
  %v2109 = vrot.slane %v2108, 4
  %v2110 = vrot.slane %v231, 5
  %v2111 = vsel %vm1911, %v2109, %v2110
  %v2112 = vrot.slane %v2110, 4
  %v2113 = vrot.slane %v232, 5
  %v2114 = vsel %vm1911, %v2112, %v2113
  %v2115 = vrot.slane %v233, 5
  %v2116 = vrot.slane %v2115, 4
  %v2117 = vrot.slane %v234, 5
  %v2118 = vsel %vm1911, %v2116, %v2117
  %v2119 = vrot.slane %v2117, 4
  %v2120 = vrot.slane %v235, 5
  %v2121 = vsel %vm1911, %v2119, %v2120
  %v2122 = vrot.slane %v236, 5
  %v2123 = vrot.slane %v2122, 4
  %v2124 = vrot.slane %v237, 5
  %v2125 = vsel %vm1911, %v2123, %v2124
  %v2126 = vrot.slane %v2124, 4
  %v2127 = vrot.slane %v238, 5
  %v2128 = vsel %vm1911, %v2126, %v2127
  %v2129 = vrot.slane %v239, 5
  %v2130 = vrot.slane %v2129, 4
  %v2131 = vrot.slane %v240, 5
  %v2132 = vsel %vm1911, %v2130, %v2131
  %v2133 = vrot.slane %v2131, 4
  %v2134 = vrot.slane %v241, 5
  %v2135 = vsel %vm1911, %v2133, %v2134
  %s2136 = scalar_lea.vmem %s2, 32
  %v2137 = vld [vmem:[%s2136] sm:$0xf]
  %v2138 = vld [vmem:[%s2136 + $0x4] sm:$0xf]
  %v2139 = vld [vmem:[%s2136 + $0x8] sm:$0xf]
  %v2140 = vld [vmem:[%s2136 + $0xc] sm:$0xf]
  %v2145 = vunpack.c.l.b16 %v2137
  %v2146 = vunpack.c.l.b16 %v2138
  %v2147 = vunpack.c.l.b16 %v2139
  %v2148 = vunpack.c.l.b16 %v2140
  %v2149 = vpack.c.b16 %v2146, %v2145
  %v2150 = vpack.c.b16 %v2148, %v2147
  %v2151 = vunpack.c.l.b16 %v1915
  %v2152 = vunpack.c.l.b16 %v1918
  %v2153 = vunpack.c.l.b16 %v1922
  %v2154 = vunpack.c.l.b16 %v1925
  %v2155 = vunpack.c.l.b16 %v1929
  %v2156 = vunpack.c.l.b16 %v1932
  %v2157 = vunpack.c.l.b16 %v1936
  %v2158 = vunpack.c.l.b16 %v1939
  %v2159 = vunpack.c.l.b16 %v1943
  %v2160 = vunpack.c.l.b16 %v1946
  %v2161 = vunpack.c.l.b16 %v1950
  %v2162 = vunpack.c.l.b16 %v1953
  %v2163 = vunpack.c.l.b16 %v1957
  %v2164 = vunpack.c.l.b16 %v1960
  %v2165 = vunpack.c.l.b16 %v1964
  %v2166 = vunpack.c.l.b16 %v1967
  %v2167 = vunpack.c.l.b16 %v1971
  %v2168 = vunpack.c.l.b16 %v1974
  %v2169 = vunpack.c.l.b16 %v1978
  %v2170 = vunpack.c.l.b16 %v1981
  %v2171 = vunpack.c.l.b16 %v1985
  %v2172 = vunpack.c.l.b16 %v1988
  %v2173 = vunpack.c.l.b16 %v1992
  %v2174 = vunpack.c.l.b16 %v1995
  %v2175 = vunpack.c.l.b16 %v1999
  %v2176 = vunpack.c.l.b16 %v2002
  %v2177 = vunpack.c.l.b16 %v2006
  %v2178 = vunpack.c.l.b16 %v2009
  %v2179 = vunpack.c.l.b16 %v2013
  %v2180 = vunpack.c.l.b16 %v2016
  %v2181 = vunpack.c.l.b16 %v2020
  %v2182 = vunpack.c.l.b16 %v2023
  %v2183 = vunpack.c.l.b16 %v2027
  %v2184 = vunpack.c.l.b16 %v2030
  %v2185 = vunpack.c.l.b16 %v2034
  %v2186 = vunpack.c.l.b16 %v2037
  %v2187 = vunpack.c.l.b16 %v2041
  %v2188 = vunpack.c.l.b16 %v2044
  %v2189 = vunpack.c.l.b16 %v2048
  %v2190 = vunpack.c.l.b16 %v2051
  %v2191 = vunpack.c.l.b16 %v2055
  %v2192 = vunpack.c.l.b16 %v2058
  %v2193 = vunpack.c.l.b16 %v2062
  %v2194 = vunpack.c.l.b16 %v2065
  %v2195 = vunpack.c.l.b16 %v2069
  %v2196 = vunpack.c.l.b16 %v2072
  %v2197 = vunpack.c.l.b16 %v2076
  %v2198 = vunpack.c.l.b16 %v2079
  %v2199 = vunpack.c.l.b16 %v2083
  %v2200 = vunpack.c.l.b16 %v2086
  %v2201 = vunpack.c.l.b16 %v2090
  %v2202 = vunpack.c.l.b16 %v2093
  %v2203 = vunpack.c.l.b16 %v2097
  %v2204 = vunpack.c.l.b16 %v2100
  %v2205 = vunpack.c.l.b16 %v2104
  %v2206 = vunpack.c.l.b16 %v2107
  %v2207 = vunpack.c.l.b16 %v2111
  %v2208 = vunpack.c.l.b16 %v2114
  %v2209 = vunpack.c.l.b16 %v2118
  %v2210 = vunpack.c.l.b16 %v2121
  %v2211 = vunpack.c.l.b16 %v2125
  %v2212 = vunpack.c.l.b16 %v2128
  %v2213 = vunpack.c.l.b16 %v2132
  %v2214 = vunpack.c.l.b16 %v2135
  %v2215 = vpack.c.b16 %v2152, %v2151
  %v2216 = vpack.c.b16 %v2154, %v2153
  %v2217 = vpack.c.b16 %v2156, %v2155
  %v2218 = vpack.c.b16 %v2158, %v2157
  %v2219 = vpack.c.b16 %v2160, %v2159
  %v2220 = vpack.c.b16 %v2162, %v2161
  %v2221 = vpack.c.b16 %v2164, %v2163
  %v2222 = vpack.c.b16 %v2166, %v2165
  %v2223 = vpack.c.b16 %v2168, %v2167
  %v2224 = vpack.c.b16 %v2170, %v2169
  %v2225 = vpack.c.b16 %v2172, %v2171
  %v2226 = vpack.c.b16 %v2174, %v2173
  %v2227 = vpack.c.b16 %v2176, %v2175
  %v2228 = vpack.c.b16 %v2178, %v2177
  %v2229 = vpack.c.b16 %v2180, %v2179
  %v2230 = vpack.c.b16 %v2182, %v2181
  %v2231 = vpack.c.b16 %v2184, %v2183
  %v2232 = vpack.c.b16 %v2186, %v2185
  %v2233 = vpack.c.b16 %v2188, %v2187
  %v2234 = vpack.c.b16 %v2190, %v2189
  %v2235 = vpack.c.b16 %v2192, %v2191
  %v2236 = vpack.c.b16 %v2194, %v2193
  %v2237 = vpack.c.b16 %v2196, %v2195
  %v2238 = vpack.c.b16 %v2198, %v2197
  %v2239 = vpack.c.b16 %v2200, %v2199
  %v2240 = vpack.c.b16 %v2202, %v2201
  %v2241 = vpack.c.b16 %v2204, %v2203
  %v2242 = vpack.c.b16 %v2206, %v2205
  %v2243 = vpack.c.b16 %v2208, %v2207
  %v2244 = vpack.c.b16 %v2210, %v2209
  %v2245 = vpack.c.b16 %v2212, %v2211
  %v2246 = vpack.c.b16 %v2214, %v2213
  %v2248 = vsel %vm1350, %v2149, 0
  %v2251 = vsel %vm1350, %v2150, 0
  %v2254 = vsel %vm1350, %v2215, 0
  %v2257 = vsel %vm1350, %v2216, 0
  %v2260 = vsel %vm1350, %v2217, 0
  %v2263 = vsel %vm1350, %v2218, 0
  %v2266 = vsel %vm1350, %v2219, 0
  %v2269 = vsel %vm1350, %v2220, 0
  %v2272 = vsel %vm1350, %v2221, 0
  %v2275 = vsel %vm1350, %v2222, 0
  %v2278 = vsel %vm1350, %v2223, 0
  %v2281 = vsel %vm1350, %v2224, 0
  %v2284 = vsel %vm1350, %v2225, 0
  %v2287 = vsel %vm1350, %v2226, 0
  %v2290 = vsel %vm1350, %v2227, 0
  %v2293 = vsel %vm1350, %v2228, 0
  %v2296 = vsel %vm1350, %v2229, 0
  %v2299 = vsel %vm1350, %v2230, 0
  %v2302 = vsel %vm1350, %v2231, 0
  %v2305 = vsel %vm1350, %v2232, 0
  %v2308 = vsel %vm1350, %v2233, 0
  %v2311 = vsel %vm1350, %v2234, 0
  %v2314 = vsel %vm1350, %v2235, 0
  %v2317 = vsel %vm1350, %v2236, 0
  %v2320 = vsel %vm1350, %v2237, 0
  %v2323 = vsel %vm1350, %v2238, 0
  %v2326 = vsel %vm1350, %v2239, 0
  %v2329 = vsel %vm1350, %v2240, 0
  %v2332 = vsel %vm1350, %v2241, 0
  %v2335 = vsel %vm1350, %v2242, 0
  %v2338 = vsel %vm1350, %v2243, 0
  %v2341 = vsel %vm1350, %v2244, 0
  %v2344 = vsel %vm1350, %v2245, 0
  %v2347 = vsel %vm1350, %v2246, 0
  %2349 = vmatpush.bf16.xpose.msra.mxu0 %v2275
  %2350 = vmatpush.bf16.xpose.msra.mxu0 %v2272
  %2351 = vmatpush.bf16.xpose.msra.mxu0 %v2269
  %2352 = vmatpush.bf16.xpose.msra.mxu0 %v2266
  %2353 = vmatpush.bf16.xpose.msra.mxu0 %v2263
  %2354 = vmatpush.bf16.xpose.msra.mxu0 %v2260
  %2355 = vmatpush.bf16.xpose.msra.mxu0 %v2257
  %2356 = vmatpush.bf16.xpose.msra.mxu0 %v2254
  %2357 = vmatmul.bf16.gmra.mxu0 %v2248
  %v2358 = vpop.f32.mrf.mxu0
  %v2359 = vadd.f32 0.0, %v2358
  %v2360 = vpop.f32.mrf.mxu0
  %v2361 = vadd.f32 0.0, %v2360
  %2362 = vmatmul.bf16.gmra.mxu0 %v2251
  %v2363 = vpop.f32.mrf.mxu0
  %v2364 = vadd.f32 0.0, %v2363
  %v2365 = vpop.f32.mrf.mxu0
  %v2366 = vadd.f32 0.0, %v2365
  %2367 = vdwg.mxu0
  %2368 = vmatpush.bf16.xpose.msra.mxu0 %v2299
  %2369 = vmatpush.bf16.xpose.msra.mxu0 %v2296
  %2370 = vmatpush.bf16.xpose.msra.mxu0 %v2293
  %2371 = vmatpush.bf16.xpose.msra.mxu0 %v2290
  %2372 = vmatpush.bf16.xpose.msra.mxu0 %v2287
  %2373 = vmatpush.bf16.xpose.msra.mxu0 %v2284
  %2374 = vmatpush.bf16.xpose.msra.mxu0 %v2281
  %2375 = vmatpush.bf16.xpose.msra.mxu0 %v2278
  %2376 = vmatmul.bf16.gmra.mxu0 %v2248
  %v2377 = vpop.f32.mrf.mxu0
  %v2378 = vadd.f32 0.0, %v2377
  %v2379 = vpop.f32.mrf.mxu0
  %v2380 = vadd.f32 0.0, %v2379
  %2381 = vmatmul.bf16.gmra.mxu0 %v2251
  %v2382 = vpop.f32.mrf.mxu0
  %v2383 = vadd.f32 0.0, %v2382
  %v2384 = vpop.f32.mrf.mxu0
  %v2385 = vadd.f32 0.0, %v2384
  %2386 = vdwg.mxu0
  %2387 = vmatpush.bf16.xpose.msra.mxu0 %v2323
  %2388 = vmatpush.bf16.xpose.msra.mxu0 %v2320
  %2389 = vmatpush.bf16.xpose.msra.mxu0 %v2317
  %2390 = vmatpush.bf16.xpose.msra.mxu0 %v2314
  %2391 = vmatpush.bf16.xpose.msra.mxu0 %v2311
  %2392 = vmatpush.bf16.xpose.msra.mxu0 %v2308
  %2393 = vmatpush.bf16.xpose.msra.mxu0 %v2305
  %2394 = vmatpush.bf16.xpose.msra.mxu0 %v2302
  %2395 = vmatmul.bf16.gmra.mxu0 %v2248
  %v2396 = vpop.f32.mrf.mxu0
  %v2397 = vadd.f32 0.0, %v2396
  %v2398 = vpop.f32.mrf.mxu0
  %v2399 = vadd.f32 0.0, %v2398
  %2400 = vmatmul.bf16.gmra.mxu0 %v2251
  %v2401 = vpop.f32.mrf.mxu0
  %v2402 = vadd.f32 0.0, %v2401
  %v2403 = vpop.f32.mrf.mxu0
  %v2404 = vadd.f32 0.0, %v2403
  %2405 = vdwg.mxu0
  %2406 = vmatpush.bf16.xpose.msra.mxu0 %v2347
  %2407 = vmatpush.bf16.xpose.msra.mxu0 %v2344
  %2408 = vmatpush.bf16.xpose.msra.mxu0 %v2341
  %2409 = vmatpush.bf16.xpose.msra.mxu0 %v2338
  %2410 = vmatpush.bf16.xpose.msra.mxu0 %v2335
  %2411 = vmatpush.bf16.xpose.msra.mxu0 %v2332
  %2412 = vmatpush.bf16.xpose.msra.mxu0 %v2329
  %2413 = vmatpush.bf16.xpose.msra.mxu0 %v2326
  %2414 = vmatmul.bf16.gmra.mxu0 %v2248
  %v2415 = vpop.f32.mrf.mxu0
  %v2416 = vadd.f32 0.0, %v2415
  %v2417 = vpop.f32.mrf.mxu0
  %v2418 = vadd.f32 0.0, %v2417
  %2419 = vmatmul.bf16.gmra.mxu0 %v2251
  %v2420 = vpop.f32.mrf.mxu0
  %v2421 = vadd.f32 0.0, %v2420
  %v2422 = vpop.f32.mrf.mxu0
  %v2423 = vadd.f32 0.0, %v2422
  %2424 = vdwg.mxu0
  %v2425 = vadd.f32 %v1811, %v2359
  %v2426 = vadd.f32 %v1830, %v2378
  %v2427 = vadd.f32 %v1849, %v2397
  %v2428 = vadd.f32 %v1868, %v2416
  %v2429 = vadd.f32 %v1813, %v2361
  %v2430 = vadd.f32 %v1832, %v2380
  %v2431 = vadd.f32 %v1851, %v2399
  %v2432 = vadd.f32 %v1870, %v2418
  %v2433 = vadd.f32 %v1816, %v2364
  %v2434 = vadd.f32 %v1835, %v2383
  %v2435 = vadd.f32 %v1854, %v2402
  %v2436 = vadd.f32 %v1873, %v2421
  %v2437 = vadd.f32 %v1818, %v2366
  %v2438 = vadd.f32 %v1837, %v2385
  %v2439 = vadd.f32 %v1856, %v2404
  %v2440 = vadd.f32 %v1875, %v2423
  %s2441 = scalar_lea.vmem %s2, 48
  %v2442 = vld [vmem:[%s2441] sm:$0xf]
  %v2443 = vld [vmem:[%s2441 + $0x4] sm:$0xf]
  %v2444 = vld [vmem:[%s2441 + $0x8] sm:$0xf]
  %v2445 = vld [vmem:[%s2441 + $0xc] sm:$0xf]
  %v2450 = vunpack.c.l.b16 %v2442
  %v2451 = vunpack.c.l.b16 %v2443
  %v2452 = vunpack.c.l.b16 %v2444
  %v2453 = vunpack.c.l.b16 %v2445
  %v2454 = vpack.c.b16 %v2451, %v2450
  %v2455 = vpack.c.b16 %v2453, %v2452
  %v2460 = vunpack.c.l.b16 %v188
  %v2461 = vunpack.c.l.b16 %v189
  %v2462 = vunpack.c.l.b16 %v242
  %v2463 = vunpack.c.l.b16 %v243
  %v2464 = vpack.c.b16 %v2461, %v2460
  %v2465 = vpack.c.b16 %v2463, %v2462
  %v2467 = vsel %vm1350, %v2454, 0
  %v2470 = vsel %vm1350, %v2455, 0
  %v2473 = vsel %vm1350, %v2464, 0
  %v2476 = vsel %vm1350, %v2465, 0
  %2478 = vmatpush.bf16.xpose.msra.mxu0 %v1730
  %2479 = vmatpush.bf16.xpose.msra.mxu0 %v1727
  %2480 = vmatpush.bf16.xpose.msra.mxu0 %v1724
  %2481 = vmatpush.bf16.xpose.msra.mxu0 %v1721
  %2482 = vmatpush.bf16.xpose.msra.mxu0 %v1718
  %2483 = vmatpush.bf16.xpose.msra.mxu0 %v1715
  %2484 = vmatpush.bf16.xpose.msra.mxu0 %v1712
  %2485 = vmatpush.bf16.xpose.msra.mxu0 %v1709
  %2486 = vmatmul.bf16.gmra.mxu0 %v2467
  %v2487 = vpop.f32.mrf.mxu0
  %v2488 = vadd.f32 0.0, %v2487
  %v2489 = vpop.f32.mrf.mxu0
  %v2490 = vadd.f32 0.0, %v2489
  %2491 = vmatmul.bf16.gmra.mxu0 %v2470
  %v2492 = vpop.f32.mrf.mxu0
  %v2493 = vadd.f32 0.0, %v2492
  %v2494 = vpop.f32.mrf.mxu0
  %v2495 = vadd.f32 0.0, %v2494
  %2496 = vdwg.mxu0
  %2497 = vmatpush.bf16.xpose.msra.mxu0 %v2473
  %2498 = vmatpush.bf16.xpose.msra.mxu0 %v1751
  %2499 = vmatpush.bf16.xpose.msra.mxu0 %v1748
  %2500 = vmatpush.bf16.xpose.msra.mxu0 %v1745
  %2501 = vmatpush.bf16.xpose.msra.mxu0 %v1742
  %2502 = vmatpush.bf16.xpose.msra.mxu0 %v1739
  %2503 = vmatpush.bf16.xpose.msra.mxu0 %v1736
  %2504 = vmatpush.bf16.xpose.msra.mxu0 %v1733
  %2505 = vmatmul.bf16.gmra.mxu0 %v2467
  %v2506 = vpop.f32.mrf.mxu0
  %v2507 = vadd.f32 0.0, %v2506
  %v2508 = vpop.f32.mrf.mxu0
  %v2509 = vadd.f32 0.0, %v2508
  %2510 = vmatmul.bf16.gmra.mxu0 %v2470
  %v2511 = vpop.f32.mrf.mxu0
  %v2512 = vadd.f32 0.0, %v2511
  %v2513 = vpop.f32.mrf.mxu0
  %v2514 = vadd.f32 0.0, %v2513
  %2515 = vdwg.mxu0
  %2516 = vmatpush.bf16.xpose.msra.mxu0 %v1778
  %2517 = vmatpush.bf16.xpose.msra.mxu0 %v1775
  %2518 = vmatpush.bf16.xpose.msra.mxu0 %v1772
  %2519 = vmatpush.bf16.xpose.msra.mxu0 %v1769
  %2520 = vmatpush.bf16.xpose.msra.mxu0 %v1766
  %2521 = vmatpush.bf16.xpose.msra.mxu0 %v1763
  %2522 = vmatpush.bf16.xpose.msra.mxu0 %v1760
  %2523 = vmatpush.bf16.xpose.msra.mxu0 %v1757
  %2524 = vmatmul.bf16.gmra.mxu0 %v2467
  %v2525 = vpop.f32.mrf.mxu0
  %v2526 = vadd.f32 0.0, %v2525
  %v2527 = vpop.f32.mrf.mxu0
  %v2528 = vadd.f32 0.0, %v2527
  %2529 = vmatmul.bf16.gmra.mxu0 %v2470
  %v2530 = vpop.f32.mrf.mxu0
  %v2531 = vadd.f32 0.0, %v2530
  %v2532 = vpop.f32.mrf.mxu0
  %v2533 = vadd.f32 0.0, %v2532
  %2534 = vdwg.mxu0
  %2535 = vmatpush.bf16.xpose.msra.mxu0 %v2476
  %2536 = vmatpush.bf16.xpose.msra.mxu0 %v1799
  %2537 = vmatpush.bf16.xpose.msra.mxu0 %v1796
  %2538 = vmatpush.bf16.xpose.msra.mxu0 %v1793
  %2539 = vmatpush.bf16.xpose.msra.mxu0 %v1790
  %2540 = vmatpush.bf16.xpose.msra.mxu0 %v1787
  %2541 = vmatpush.bf16.xpose.msra.mxu0 %v1784
  %2542 = vmatpush.bf16.xpose.msra.mxu0 %v1781
  %2543 = vmatmul.bf16.gmra.mxu0 %v2467
  %v2544 = vpop.f32.mrf.mxu0
  %v2545 = vadd.f32 0.0, %v2544
  %v2546 = vpop.f32.mrf.mxu0
  %v2547 = vadd.f32 0.0, %v2546
  %2548 = vmatmul.bf16.gmra.mxu0 %v2470
  %v2549 = vpop.f32.mrf.mxu0
  %v2550 = vadd.f32 0.0, %v2549
  %v2551 = vpop.f32.mrf.mxu0
  %v2552 = vadd.f32 0.0, %v2551
  %2553 = vdwg.mxu0
  %v2554 = vadd.f32 %v2425, %v2488
  %v2555 = vadd.f32 %v2426, %v2507
  %v2556 = vadd.f32 %v2427, %v2526
  %v2557 = vadd.f32 %v2428, %v2545
  %v2558 = vadd.f32 %v2429, %v2490
  %v2559 = vadd.f32 %v2430, %v2509
  %v2560 = vadd.f32 %v2431, %v2528
  %v2561 = vadd.f32 %v2432, %v2547
  %v2562 = vadd.f32 %v2433, %v2493
  %v2563 = vadd.f32 %v2434, %v2512
  %v2564 = vadd.f32 %v2435, %v2531
  %v2565 = vadd.f32 %v2436, %v2550
  %v2566 = vadd.f32 %v2437, %v2495
  %v2567 = vadd.f32 %v2438, %v2514
  %v2568 = vadd.f32 %v2439, %v2533
  %v2569 = vadd.f32 %v2440, %v2552
  %v2571 = vshrl.u32 %v188, 16
  %v2573 = vrot.slane %v2571, 4
  %v2574 = vshll.u32 %v188, 16
  %v2576 = vrot.slane %v2574, 5
  %v2577 = vor.u32 %v2573, %v2576
  %v2578 = vrot.slane %v2577, 4
  %v2580 = vshll.u32 %v189, 16
  %v2582 = vrot.slane %v2580, 5
  %v2583 = vsel %vm470, %v2578, %v2582
  %v2584 = vshrl.u32 %v189, 16
  %v2586 = vrot.slane %v2584, 4
  %v2587 = vor.u32 %v2586, %v2582
  %v2588 = vrot.slane %v2587, 4
  %v2590 = vshll.u32 %v190, 16
  %v2592 = vrot.slane %v2590, 5
  %v2593 = vsel %vm470, %v2588, %v2592
  %v2595 = vshrl.u32 %v242, 16
  %v2597 = vrot.slane %v2595, 4
  %v2598 = vshll.u32 %v242, 16
  %v2600 = vrot.slane %v2598, 5
  %v2601 = vor.u32 %v2597, %v2600
  %v2602 = vrot.slane %v2601, 4
  %v2604 = vshll.u32 %v243, 16
  %v2606 = vrot.slane %v2604, 5
  %v2607 = vsel %vm470, %v2602, %v2606
  %v2608 = vshrl.u32 %v243, 16
  %v2610 = vrot.slane %v2608, 4
  %v2611 = vor.u32 %v2610, %v2606
  %v2612 = vrot.slane %v2611, 4
  %v2614 = vshll.u32 %v244, 16
  %v2616 = vrot.slane %v2614, 5
  %v2617 = vsel %vm470, %v2612, %v2616
  %s2618 = scalar_lea.vmem %s2, 64
  %v2619 = vld [vmem:[%s2618] sm:$0xf]
  %v2620 = vld [vmem:[%s2618 + $0x4] sm:$0xf]
  %v2621 = vld [vmem:[%s2618 + $0x8] sm:$0xf]
  %v2622 = vld [vmem:[%s2618 + $0xc] sm:$0xf]
  %v2627 = vunpack.c.l.b16 %v2619
  %v2628 = vunpack.c.l.b16 %v2620
  %v2629 = vunpack.c.l.b16 %v2621
  %v2630 = vunpack.c.l.b16 %v2622
  %v2631 = vpack.c.b16 %v2628, %v2627
  %v2632 = vpack.c.b16 %v2630, %v2629
  %v2633 = vunpack.c.l.b16 %v2583
  %v2634 = vunpack.c.l.b16 %v2593
  %v2635 = vunpack.c.l.b16 %v2607
  %v2636 = vunpack.c.l.b16 %v2617
  %v2637 = vpack.c.b16 %v2634, %v2633
  %v2638 = vpack.c.b16 %v2636, %v2635
  %v2640 = vsel %vm1350, %v2631, 0
  %v2643 = vsel %vm1350, %v2632, 0
  %v2646 = vsel %vm1350, %v2637, 0
  %v2649 = vsel %vm1350, %v2638, 0
  %2651 = vmatpush.bf16.xpose.msra.mxu0 %v1382
  %2652 = vmatpush.bf16.xpose.msra.mxu0 %v1379
  %2653 = vmatpush.bf16.xpose.msra.mxu0 %v1376
  %2654 = vmatpush.bf16.xpose.msra.mxu0 %v1373
  %2655 = vmatpush.bf16.xpose.msra.mxu0 %v1370
  %2656 = vmatpush.bf16.xpose.msra.mxu0 %v1367
  %2657 = vmatpush.bf16.xpose.msra.mxu0 %v1364
  %2658 = vmatpush.bf16.xpose.msra.mxu0 %v1361
  %2659 = vmatmul.bf16.gmra.mxu0 %v2640
  %v2660 = vpop.f32.mrf.mxu0
  %v2661 = vadd.f32 0.0, %v2660
  %v2662 = vpop.f32.mrf.mxu0
  %v2663 = vadd.f32 0.0, %v2662
  %2664 = vmatmul.bf16.gmra.mxu0 %v2643
  %v2665 = vpop.f32.mrf.mxu0
  %v2666 = vadd.f32 0.0, %v2665
  %v2667 = vpop.f32.mrf.mxu0
  %v2668 = vadd.f32 0.0, %v2667
  %2669 = vdwg.mxu0
  %2670 = vmatpush.bf16.xpose.msra.mxu0 %v2646
  %2671 = vmatpush.bf16.xpose.msra.mxu0 %v1403
  %2672 = vmatpush.bf16.xpose.msra.mxu0 %v1400
  %2673 = vmatpush.bf16.xpose.msra.mxu0 %v1397
  %2674 = vmatpush.bf16.xpose.msra.mxu0 %v1394
  %2675 = vmatpush.bf16.xpose.msra.mxu0 %v1391
  %2676 = vmatpush.bf16.xpose.msra.mxu0 %v1388
  %2677 = vmatpush.bf16.xpose.msra.mxu0 %v1385
  %2678 = vmatmul.bf16.gmra.mxu0 %v2640
  %v2679 = vpop.f32.mrf.mxu0
  %v2680 = vadd.f32 0.0, %v2679
  %v2681 = vpop.f32.mrf.mxu0
  %v2682 = vadd.f32 0.0, %v2681
  %2683 = vmatmul.bf16.gmra.mxu0 %v2643
  %v2684 = vpop.f32.mrf.mxu0
  %v2685 = vadd.f32 0.0, %v2684
  %v2686 = vpop.f32.mrf.mxu0
  %v2687 = vadd.f32 0.0, %v2686
  %2688 = vdwg.mxu0
  %2689 = vmatpush.bf16.xpose.msra.mxu0 %v1430
  %2690 = vmatpush.bf16.xpose.msra.mxu0 %v1427
  %2691 = vmatpush.bf16.xpose.msra.mxu0 %v1424
  %2692 = vmatpush.bf16.xpose.msra.mxu0 %v1421
  %2693 = vmatpush.bf16.xpose.msra.mxu0 %v1418
  %2694 = vmatpush.bf16.xpose.msra.mxu0 %v1415
  %2695 = vmatpush.bf16.xpose.msra.mxu0 %v1412
  %2696 = vmatpush.bf16.xpose.msra.mxu0 %v1409
  %2697 = vmatmul.bf16.gmra.mxu0 %v2640
  %v2698 = vpop.f32.mrf.mxu0
  %v2699 = vadd.f32 0.0, %v2698
  %v2700 = vpop.f32.mrf.mxu0
  %v2701 = vadd.f32 0.0, %v2700
  %2702 = vmatmul.bf16.gmra.mxu0 %v2643
  %v2703 = vpop.f32.mrf.mxu0
  %v2704 = vadd.f32 0.0, %v2703
  %v2705 = vpop.f32.mrf.mxu0
  %v2706 = vadd.f32 0.0, %v2705
  %2707 = vdwg.mxu0
  %2708 = vmatpush.bf16.xpose.msra.mxu0 %v2649
  %2709 = vmatpush.bf16.xpose.msra.mxu0 %v1451
  %2710 = vmatpush.bf16.xpose.msra.mxu0 %v1448
  %2711 = vmatpush.bf16.xpose.msra.mxu0 %v1445
  %2712 = vmatpush.bf16.xpose.msra.mxu0 %v1442
  %2713 = vmatpush.bf16.xpose.msra.mxu0 %v1439
  %2714 = vmatpush.bf16.xpose.msra.mxu0 %v1436
  %2715 = vmatpush.bf16.xpose.msra.mxu0 %v1433
  %2716 = vmatmul.bf16.gmra.mxu0 %v2640
  %v2717 = vpop.f32.mrf.mxu0
  %v2718 = vadd.f32 0.0, %v2717
  %v2719 = vpop.f32.mrf.mxu0
  %v2720 = vadd.f32 0.0, %v2719
  %2721 = vmatmul.bf16.gmra.mxu0 %v2643
  %v2722 = vpop.f32.mrf.mxu0
  %v2723 = vadd.f32 0.0, %v2722
  %v2724 = vpop.f32.mrf.mxu0
  %v2725 = vadd.f32 0.0, %v2724
  %2726 = vdwg.mxu0
  %v2727 = vadd.f32 %v2554, %v2661
  %v2728 = vadd.f32 %v2555, %v2680
  %v2729 = vadd.f32 %v2556, %v2699
  %v2730 = vadd.f32 %v2557, %v2718
  %v2731 = vadd.f32 %v2558, %v2663
  %v2732 = vadd.f32 %v2559, %v2682
  %v2733 = vadd.f32 %v2560, %v2701
  %v2734 = vadd.f32 %v2561, %v2720
  %v2735 = vadd.f32 %v2562, %v2666
  %v2736 = vadd.f32 %v2563, %v2685
  %v2737 = vadd.f32 %v2564, %v2704
  %v2738 = vadd.f32 %v2565, %v2723
  %v2739 = vadd.f32 %v2566, %v2668
  %v2740 = vadd.f32 %v2567, %v2687
  %v2741 = vadd.f32 %v2568, %v2706
  %v2742 = vadd.f32 %v2569, %v2725
  %v2745 = vrot.slane %v188, 5
  %v2746 = vrot.slane %v2745, 4
  %v2747 = vrot.slane %v189, 5
  %v2748 = vsel %vm1911, %v2746, %v2747
  %v2749 = vrot.slane %v2747, 4
  %v2750 = vrot.slane %v190, 5
  %v2751 = vsel %vm1911, %v2749, %v2750
  %v2752 = vrot.slane %v242, 5
  %v2753 = vrot.slane %v2752, 4
  %v2754 = vrot.slane %v243, 5
  %v2755 = vsel %vm1911, %v2753, %v2754
  %v2756 = vrot.slane %v2754, 4
  %v2757 = vrot.slane %v244, 5
  %v2758 = vsel %vm1911, %v2756, %v2757
  %s2759 = scalar_lea.vmem %s2, 80
  %v2760 = vld [vmem:[%s2759] sm:$0xf]
  %v2761 = vld [vmem:[%s2759 + $0x4] sm:$0xf]
  %v2762 = vld [vmem:[%s2759 + $0x8] sm:$0xf]
  %v2763 = vld [vmem:[%s2759 + $0xc] sm:$0xf]
  %v2768 = vunpack.c.l.b16 %v2760
  %v2769 = vunpack.c.l.b16 %v2761
  %v2770 = vunpack.c.l.b16 %v2762
  %v2771 = vunpack.c.l.b16 %v2763
  %v2772 = vpack.c.b16 %v2769, %v2768
  %v2773 = vpack.c.b16 %v2771, %v2770
  %v2774 = vunpack.c.l.b16 %v2748
  %v2775 = vunpack.c.l.b16 %v2751
  %v2776 = vunpack.c.l.b16 %v2755
  %v2777 = vunpack.c.l.b16 %v2758
  %v2778 = vpack.c.b16 %v2775, %v2774
  %v2779 = vpack.c.b16 %v2777, %v2776
  %v2781 = vsel %vm1350, %v2772, 0
  %v2784 = vsel %vm1350, %v2773, 0
  %v2787 = vsel %vm1350, %v2778, 0
  %v2790 = vsel %vm1350, %v2779, 0
  %2792 = vmatpush.bf16.xpose.msra.mxu0 %v2278
  %2793 = vmatpush.bf16.xpose.msra.mxu0 %v2275
  %2794 = vmatpush.bf16.xpose.msra.mxu0 %v2272
  %2795 = vmatpush.bf16.xpose.msra.mxu0 %v2269
  %2796 = vmatpush.bf16.xpose.msra.mxu0 %v2266
  %2797 = vmatpush.bf16.xpose.msra.mxu0 %v2263
  %2798 = vmatpush.bf16.xpose.msra.mxu0 %v2260
  %2799 = vmatpush.bf16.xpose.msra.mxu0 %v2257
  %2800 = vmatmul.bf16.gmra.mxu0 %v2781
  %v2801 = vpop.f32.mrf.mxu0
  %v2802 = vadd.f32 0.0, %v2801
  %v2803 = vpop.f32.mrf.mxu0
  %v2804 = vadd.f32 0.0, %v2803
  %2805 = vmatmul.bf16.gmra.mxu0 %v2784
  %v2806 = vpop.f32.mrf.mxu0
  %v2807 = vadd.f32 0.0, %v2806
  %v2808 = vpop.f32.mrf.mxu0
  %v2809 = vadd.f32 0.0, %v2808
  %2810 = vdwg.mxu0
  %2811 = vmatpush.bf16.xpose.msra.mxu0 %v2787
  %2812 = vmatpush.bf16.xpose.msra.mxu0 %v2299
  %2813 = vmatpush.bf16.xpose.msra.mxu0 %v2296
  %2814 = vmatpush.bf16.xpose.msra.mxu0 %v2293
  %2815 = vmatpush.bf16.xpose.msra.mxu0 %v2290
  %2816 = vmatpush.bf16.xpose.msra.mxu0 %v2287
  %2817 = vmatpush.bf16.xpose.msra.mxu0 %v2284
  %2818 = vmatpush.bf16.xpose.msra.mxu0 %v2281
  %2819 = vmatmul.bf16.gmra.mxu0 %v2781
  %v2820 = vpop.f32.mrf.mxu0
  %v2821 = vadd.f32 0.0, %v2820
  %v2822 = vpop.f32.mrf.mxu0
  %v2823 = vadd.f32 0.0, %v2822
  %2824 = vmatmul.bf16.gmra.mxu0 %v2784
  %v2825 = vpop.f32.mrf.mxu0
  %v2826 = vadd.f32 0.0, %v2825
  %v2827 = vpop.f32.mrf.mxu0
  %v2828 = vadd.f32 0.0, %v2827
  %2829 = vdwg.mxu0
  %2830 = vmatpush.bf16.xpose.msra.mxu0 %v2326
  %2831 = vmatpush.bf16.xpose.msra.mxu0 %v2323
  %2832 = vmatpush.bf16.xpose.msra.mxu0 %v2320
  %2833 = vmatpush.bf16.xpose.msra.mxu0 %v2317
  %2834 = vmatpush.bf16.xpose.msra.mxu0 %v2314
  %2835 = vmatpush.bf16.xpose.msra.mxu0 %v2311
  %2836 = vmatpush.bf16.xpose.msra.mxu0 %v2308
  %2837 = vmatpush.bf16.xpose.msra.mxu0 %v2305
  %2838 = vmatmul.bf16.gmra.mxu0 %v2781
  %v2839 = vpop.f32.mrf.mxu0
  %v2840 = vadd.f32 0.0, %v2839
  %v2841 = vpop.f32.mrf.mxu0
  %v2842 = vadd.f32 0.0, %v2841
  %2843 = vmatmul.bf16.gmra.mxu0 %v2784
  %v2844 = vpop.f32.mrf.mxu0
  %v2845 = vadd.f32 0.0, %v2844
  %v2846 = vpop.f32.mrf.mxu0
  %v2847 = vadd.f32 0.0, %v2846
  %2848 = vdwg.mxu0
  %2849 = vmatpush.bf16.xpose.msra.mxu0 %v2790
  %2850 = vmatpush.bf16.xpose.msra.mxu0 %v2347
  %2851 = vmatpush.bf16.xpose.msra.mxu0 %v2344
  %2852 = vmatpush.bf16.xpose.msra.mxu0 %v2341
  %2853 = vmatpush.bf16.xpose.msra.mxu0 %v2338
  %2854 = vmatpush.bf16.xpose.msra.mxu0 %v2335
  %2855 = vmatpush.bf16.xpose.msra.mxu0 %v2332
  %2856 = vmatpush.bf16.xpose.msra.mxu0 %v2329
  %2857 = vmatmul.bf16.gmra.mxu0 %v2781
  %v2858 = vpop.f32.mrf.mxu0
  %v2859 = vadd.f32 0.0, %v2858
  %v2860 = vpop.f32.mrf.mxu0
  %v2861 = vadd.f32 0.0, %v2860
  %2862 = vmatmul.bf16.gmra.mxu0 %v2784
  %v2863 = vpop.f32.mrf.mxu0
  %v2864 = vadd.f32 0.0, %v2863
  %v2865 = vpop.f32.mrf.mxu0
  %v2866 = vadd.f32 0.0, %v2865
  %2867 = vdwg.mxu0
  %v2868 = vadd.f32 %v2727, %v2802
  %v2869 = vadd.f32 %v2728, %v2821
  %v2870 = vadd.f32 %v2729, %v2840
  %v2871 = vadd.f32 %v2730, %v2859
  %v2872 = vadd.f32 %v2731, %v2804
  %v2873 = vadd.f32 %v2732, %v2823
  %v2874 = vadd.f32 %v2733, %v2842
  %v2875 = vadd.f32 %v2734, %v2861
  %v2876 = vadd.f32 %v2735, %v2807
  %v2877 = vadd.f32 %v2736, %v2826
  %v2878 = vadd.f32 %v2737, %v2845
  %v2879 = vadd.f32 %v2738, %v2864
  %v2880 = vadd.f32 %v2739, %v2809
  %v2881 = vadd.f32 %v2740, %v2828
  %v2882 = vadd.f32 %v2741, %v2847
  %v2883 = vadd.f32 %v2742, %v2866
  %s2884 = scalar_lea.vmem %s2, 96
  %v2885 = vld [vmem:[%s2884] sm:$0xf]
  %v2886 = vld [vmem:[%s2884 + $0x4] sm:$0xf]
  %v2887 = vld [vmem:[%s2884 + $0x8] sm:$0xf]
  %v2888 = vld [vmem:[%s2884 + $0xc] sm:$0xf]
  %v2893 = vunpack.c.l.b16 %v2885
  %v2894 = vunpack.c.l.b16 %v2886
  %v2895 = vunpack.c.l.b16 %v2887
  %v2896 = vunpack.c.l.b16 %v2888
  %v2897 = vpack.c.b16 %v2894, %v2893
  %v2898 = vpack.c.b16 %v2896, %v2895
  %v2903 = vunpack.c.l.b16 %v191
  %v2904 = vunpack.c.l.b16 %v192
  %v2905 = vunpack.c.l.b16 %v245
  %v2906 = vunpack.c.l.b16 %v246
  %v2907 = vpack.c.b16 %v2904, %v2903
  %v2908 = vpack.c.b16 %v2906, %v2905
  %v2910 = vsel %vm1350, %v2897, 0
  %v2913 = vsel %vm1350, %v2898, 0
  %v2916 = vsel %vm1350, %v2907, 0
  %v2919 = vsel %vm1350, %v2908, 0
  %2921 = vmatpush.bf16.xpose.msra.mxu0 %v1733
  %2922 = vmatpush.bf16.xpose.msra.mxu0 %v1730
  %2923 = vmatpush.bf16.xpose.msra.mxu0 %v1727
  %2924 = vmatpush.bf16.xpose.msra.mxu0 %v1724
  %2925 = vmatpush.bf16.xpose.msra.mxu0 %v1721
  %2926 = vmatpush.bf16.xpose.msra.mxu0 %v1718
  %2927 = vmatpush.bf16.xpose.msra.mxu0 %v1715
  %2928 = vmatpush.bf16.xpose.msra.mxu0 %v1712
  %2929 = vmatmul.bf16.gmra.mxu0 %v2910
  %v2930 = vpop.f32.mrf.mxu0
  %v2931 = vadd.f32 0.0, %v2930
  %v2932 = vpop.f32.mrf.mxu0
  %v2933 = vadd.f32 0.0, %v2932
  %2934 = vmatmul.bf16.gmra.mxu0 %v2913
  %v2935 = vpop.f32.mrf.mxu0
  %v2936 = vadd.f32 0.0, %v2935
  %v2937 = vpop.f32.mrf.mxu0
  %v2938 = vadd.f32 0.0, %v2937
  %2939 = vdwg.mxu0
  %2940 = vmatpush.bf16.xpose.msra.mxu0 %v2916
  %2941 = vmatpush.bf16.xpose.msra.mxu0 %v2473
  %2942 = vmatpush.bf16.xpose.msra.mxu0 %v1751
  %2943 = vmatpush.bf16.xpose.msra.mxu0 %v1748
  %2944 = vmatpush.bf16.xpose.msra.mxu0 %v1745
  %2945 = vmatpush.bf16.xpose.msra.mxu0 %v1742
  %2946 = vmatpush.bf16.xpose.msra.mxu0 %v1739
  %2947 = vmatpush.bf16.xpose.msra.mxu0 %v1736
  %2948 = vmatmul.bf16.gmra.mxu0 %v2910
  %v2949 = vpop.f32.mrf.mxu0
  %v2950 = vadd.f32 0.0, %v2949
  %v2951 = vpop.f32.mrf.mxu0
  %v2952 = vadd.f32 0.0, %v2951
  %2953 = vmatmul.bf16.gmra.mxu0 %v2913
  %v2954 = vpop.f32.mrf.mxu0
  %v2955 = vadd.f32 0.0, %v2954
  %v2956 = vpop.f32.mrf.mxu0
  %v2957 = vadd.f32 0.0, %v2956
  %2958 = vdwg.mxu0
  %2959 = vmatpush.bf16.xpose.msra.mxu0 %v1781
  %2960 = vmatpush.bf16.xpose.msra.mxu0 %v1778
  %2961 = vmatpush.bf16.xpose.msra.mxu0 %v1775
  %2962 = vmatpush.bf16.xpose.msra.mxu0 %v1772
  %2963 = vmatpush.bf16.xpose.msra.mxu0 %v1769
  %2964 = vmatpush.bf16.xpose.msra.mxu0 %v1766
  %2965 = vmatpush.bf16.xpose.msra.mxu0 %v1763
  %2966 = vmatpush.bf16.xpose.msra.mxu0 %v1760
  %2967 = vmatmul.bf16.gmra.mxu0 %v2910
  %v2968 = vpop.f32.mrf.mxu0
  %v2969 = vadd.f32 0.0, %v2968
  %v2970 = vpop.f32.mrf.mxu0
  %v2971 = vadd.f32 0.0, %v2970
  %2972 = vmatmul.bf16.gmra.mxu0 %v2913
  %v2973 = vpop.f32.mrf.mxu0
  %v2974 = vadd.f32 0.0, %v2973
  %v2975 = vpop.f32.mrf.mxu0
  %v2976 = vadd.f32 0.0, %v2975
  %2977 = vdwg.mxu0
  %2978 = vmatpush.bf16.xpose.msra.mxu0 %v2919
  %2979 = vmatpush.bf16.xpose.msra.mxu0 %v2476
  %2980 = vmatpush.bf16.xpose.msra.mxu0 %v1799
  %2981 = vmatpush.bf16.xpose.msra.mxu0 %v1796
  %2982 = vmatpush.bf16.xpose.msra.mxu0 %v1793
  %2983 = vmatpush.bf16.xpose.msra.mxu0 %v1790
  %2984 = vmatpush.bf16.xpose.msra.mxu0 %v1787
  %2985 = vmatpush.bf16.xpose.msra.mxu0 %v1784
  %2986 = vmatmul.bf16.gmra.mxu0 %v2910
  %v2987 = vpop.f32.mrf.mxu0
  %v2988 = vadd.f32 0.0, %v2987
  %v2989 = vpop.f32.mrf.mxu0
  %v2990 = vadd.f32 0.0, %v2989
  %2991 = vmatmul.bf16.gmra.mxu0 %v2913
  %v2992 = vpop.f32.mrf.mxu0
  %v2993 = vadd.f32 0.0, %v2992
  %v2994 = vpop.f32.mrf.mxu0
  %v2995 = vadd.f32 0.0, %v2994
  %2996 = vdwg.mxu0
  %v2997 = vadd.f32 %v2868, %v2931
  %v2998 = vadd.f32 %v2869, %v2950
  %v2999 = vadd.f32 %v2870, %v2969
  %v3000 = vadd.f32 %v2871, %v2988
  %v3001 = vadd.f32 %v2872, %v2933
  %v3002 = vadd.f32 %v2873, %v2952
  %v3003 = vadd.f32 %v2874, %v2971
  %v3004 = vadd.f32 %v2875, %v2990
  %v3005 = vadd.f32 %v2876, %v2936
  %v3006 = vadd.f32 %v2877, %v2955
  %v3007 = vadd.f32 %v2878, %v2974
  %v3008 = vadd.f32 %v2879, %v2993
  %v3009 = vadd.f32 %v2880, %v2938
  %v3010 = vadd.f32 %v2881, %v2957
  %v3011 = vadd.f32 %v2882, %v2976
  %v3012 = vadd.f32 %v2883, %v2995
  %v3014 = vshrl.u32 %v191, 16
  %v3016 = vrot.slane %v3014, 4
  %v3017 = vshll.u32 %v191, 16
  %v3019 = vrot.slane %v3017, 5
  %v3020 = vor.u32 %v3016, %v3019
  %v3021 = vrot.slane %v3020, 4
  %v3023 = vshll.u32 %v192, 16
  %v3025 = vrot.slane %v3023, 5
  %v3026 = vsel %vm470, %v3021, %v3025
  %v3027 = vshrl.u32 %v192, 16
  %v3029 = vrot.slane %v3027, 4
  %v3030 = vor.u32 %v3029, %v3025
  %v3031 = vrot.slane %v3030, 4
  %v3033 = vshll.u32 %v193, 16
  %v3035 = vrot.slane %v3033, 5
  %v3036 = vsel %vm470, %v3031, %v3035
  %v3038 = vshrl.u32 %v245, 16
  %v3040 = vrot.slane %v3038, 4
  %v3041 = vshll.u32 %v245, 16
  %v3043 = vrot.slane %v3041, 5
  %v3044 = vor.u32 %v3040, %v3043
  %v3045 = vrot.slane %v3044, 4
  %v3047 = vshll.u32 %v246, 16
  %v3049 = vrot.slane %v3047, 5
  %v3050 = vsel %vm470, %v3045, %v3049
  %v3051 = vshrl.u32 %v246, 16
  %v3053 = vrot.slane %v3051, 4
  %v3054 = vor.u32 %v3053, %v3049
  %v3055 = vrot.slane %v3054, 4
  %v3057 = vshll.u32 %v247, 16
  %v3059 = vrot.slane %v3057, 5
  %v3060 = vsel %vm470, %v3055, %v3059
  %s3061 = scalar_lea.vmem %s2, 112
  %v3062 = vld [vmem:[%s3061] sm:$0xf]
  %v3063 = vld [vmem:[%s3061 + $0x4] sm:$0xf]
  %v3064 = vld [vmem:[%s3061 + $0x8] sm:$0xf]
  %v3065 = vld [vmem:[%s3061 + $0xc] sm:$0xf]
  %v3070 = vunpack.c.l.b16 %v3062
  %v3071 = vunpack.c.l.b16 %v3063
  %v3072 = vunpack.c.l.b16 %v3064
  %v3073 = vunpack.c.l.b16 %v3065
  %v3074 = vpack.c.b16 %v3071, %v3070
  %v3075 = vpack.c.b16 %v3073, %v3072
  %v3076 = vunpack.c.l.b16 %v3026
  %v3077 = vunpack.c.l.b16 %v3036
  %v3078 = vunpack.c.l.b16 %v3050
  %v3079 = vunpack.c.l.b16 %v3060
  %v3080 = vpack.c.b16 %v3077, %v3076
  %v3081 = vpack.c.b16 %v3079, %v3078
  %v3083 = vsel %vm1350, %v3074, 0
  %v3086 = vsel %vm1350, %v3075, 0
  %v3089 = vsel %vm1350, %v3080, 0
  %v3092 = vsel %vm1350, %v3081, 0
  %3094 = vmatpush.bf16.xpose.msra.mxu0 %v1385
  %3095 = vmatpush.bf16.xpose.msra.mxu0 %v1382
  %3096 = vmatpush.bf16.xpose.msra.mxu0 %v1379
  %3097 = vmatpush.bf16.xpose.msra.mxu0 %v1376
  %3098 = vmatpush.bf16.xpose.msra.mxu0 %v1373
  %3099 = vmatpush.bf16.xpose.msra.mxu0 %v1370
  %3100 = vmatpush.bf16.xpose.msra.mxu0 %v1367
  %3101 = vmatpush.bf16.xpose.msra.mxu0 %v1364
  %3102 = vmatmul.bf16.gmra.mxu0 %v3083
  %v3103 = vpop.f32.mrf.mxu0
  %v3104 = vadd.f32 0.0, %v3103
  %v3105 = vpop.f32.mrf.mxu0
  %v3106 = vadd.f32 0.0, %v3105
  %3107 = vmatmul.bf16.gmra.mxu0 %v3086
  %v3108 = vpop.f32.mrf.mxu0
  %v3109 = vadd.f32 0.0, %v3108
  %v3110 = vpop.f32.mrf.mxu0
  %v3111 = vadd.f32 0.0, %v3110
  %3112 = vdwg.mxu0
  %3113 = vmatpush.bf16.xpose.msra.mxu0 %v3089
  %3114 = vmatpush.bf16.xpose.msra.mxu0 %v2646
  %3115 = vmatpush.bf16.xpose.msra.mxu0 %v1403
  %3116 = vmatpush.bf16.xpose.msra.mxu0 %v1400
  %3117 = vmatpush.bf16.xpose.msra.mxu0 %v1397
  %3118 = vmatpush.bf16.xpose.msra.mxu0 %v1394
  %3119 = vmatpush.bf16.xpose.msra.mxu0 %v1391
  %3120 = vmatpush.bf16.xpose.msra.mxu0 %v1388
  %3121 = vmatmul.bf16.gmra.mxu0 %v3083
  %v3122 = vpop.f32.mrf.mxu0
  %v3123 = vadd.f32 0.0, %v3122
  %v3124 = vpop.f32.mrf.mxu0
  %v3125 = vadd.f32 0.0, %v3124
  %3126 = vmatmul.bf16.gmra.mxu0 %v3086
  %v3127 = vpop.f32.mrf.mxu0
  %v3128 = vadd.f32 0.0, %v3127
  %v3129 = vpop.f32.mrf.mxu0
  %v3130 = vadd.f32 0.0, %v3129
  %3131 = vdwg.mxu0
  %3132 = vmatpush.bf16.xpose.msra.mxu0 %v1433
  %3133 = vmatpush.bf16.xpose.msra.mxu0 %v1430
  %3134 = vmatpush.bf16.xpose.msra.mxu0 %v1427
  %3135 = vmatpush.bf16.xpose.msra.mxu0 %v1424
  %3136 = vmatpush.bf16.xpose.msra.mxu0 %v1421
  %3137 = vmatpush.bf16.xpose.msra.mxu0 %v1418
  %3138 = vmatpush.bf16.xpose.msra.mxu0 %v1415
  %3139 = vmatpush.bf16.xpose.msra.mxu0 %v1412
  %3140 = vmatmul.bf16.gmra.mxu0 %v3083
  %v3141 = vpop.f32.mrf.mxu0
  %v3142 = vadd.f32 0.0, %v3141
  %v3143 = vpop.f32.mrf.mxu0
  %v3144 = vadd.f32 0.0, %v3143
  %3145 = vmatmul.bf16.gmra.mxu0 %v3086
  %v3146 = vpop.f32.mrf.mxu0
  %v3147 = vadd.f32 0.0, %v3146
  %v3148 = vpop.f32.mrf.mxu0
  %v3149 = vadd.f32 0.0, %v3148
  %3150 = vdwg.mxu0
  %3151 = vmatpush.bf16.xpose.msra.mxu0 %v3092
  %3152 = vmatpush.bf16.xpose.msra.mxu0 %v2649
  %3153 = vmatpush.bf16.xpose.msra.mxu0 %v1451
  %3154 = vmatpush.bf16.xpose.msra.mxu0 %v1448
  %3155 = vmatpush.bf16.xpose.msra.mxu0 %v1445
  %3156 = vmatpush.bf16.xpose.msra.mxu0 %v1442
  %3157 = vmatpush.bf16.xpose.msra.mxu0 %v1439
  %3158 = vmatpush.bf16.xpose.msra.mxu0 %v1436
  %3159 = vmatmul.bf16.gmra.mxu0 %v3083
  %v3160 = vpop.f32.mrf.mxu0
  %v3161 = vadd.f32 0.0, %v3160
  %v3162 = vpop.f32.mrf.mxu0
  %v3163 = vadd.f32 0.0, %v3162
  %3164 = vmatmul.bf16.gmra.mxu0 %v3086
  %v3165 = vpop.f32.mrf.mxu0
  %v3166 = vadd.f32 0.0, %v3165
  %v3167 = vpop.f32.mrf.mxu0
  %v3168 = vadd.f32 0.0, %v3167
  %3169 = vdwg.mxu0
  %v3170 = vadd.f32 %v2997, %v3104
  %v3171 = vadd.f32 %v2998, %v3123
  %v3172 = vadd.f32 %v2999, %v3142
  %v3173 = vadd.f32 %v3000, %v3161
  %v3174 = vadd.f32 %v3001, %v3106
  %v3175 = vadd.f32 %v3002, %v3125
  %v3176 = vadd.f32 %v3003, %v3144
  %v3177 = vadd.f32 %v3004, %v3163
  %v3178 = vadd.f32 %v3005, %v3109
  %v3179 = vadd.f32 %v3006, %v3128
  %v3180 = vadd.f32 %v3007, %v3147
  %v3181 = vadd.f32 %v3008, %v3166
  %v3182 = vadd.f32 %v3009, %v3111
  %v3183 = vadd.f32 %v3010, %v3130
  %v3184 = vadd.f32 %v3011, %v3149
  %v3185 = vadd.f32 %v3012, %v3168
  %v3188 = vrot.slane %v191, 5
  %v3189 = vrot.slane %v3188, 4
  %v3190 = vrot.slane %v192, 5
  %v3191 = vsel %vm1911, %v3189, %v3190
  %v3192 = vrot.slane %v3190, 4
  %v3193 = vrot.slane %v193, 5
  %v3194 = vsel %vm1911, %v3192, %v3193
  %v3195 = vrot.slane %v245, 5
  %v3196 = vrot.slane %v3195, 4
  %v3197 = vrot.slane %v246, 5
  %v3198 = vsel %vm1911, %v3196, %v3197
  %v3199 = vrot.slane %v3197, 4
  %v3200 = vrot.slane %v247, 5
  %v3201 = vsel %vm1911, %v3199, %v3200
  %s3202 = scalar_lea.vmem %s2, 128
  %v3203 = vld [vmem:[%s3202] sm:$0xf]
  %v3204 = vld [vmem:[%s3202 + $0x4] sm:$0xf]
  %v3205 = vld [vmem:[%s3202 + $0x8] sm:$0xf]
  %v3206 = vld [vmem:[%s3202 + $0xc] sm:$0xf]
  %v3211 = vunpack.c.l.b16 %v3203
  %v3212 = vunpack.c.l.b16 %v3204
  %v3213 = vunpack.c.l.b16 %v3205
  %v3214 = vunpack.c.l.b16 %v3206
  %v3215 = vpack.c.b16 %v3212, %v3211
  %v3216 = vpack.c.b16 %v3214, %v3213
  %v3217 = vunpack.c.l.b16 %v3191
  %v3218 = vunpack.c.l.b16 %v3194
  %v3219 = vunpack.c.l.b16 %v3198
  %v3220 = vunpack.c.l.b16 %v3201
  %v3221 = vpack.c.b16 %v3218, %v3217
  %v3222 = vpack.c.b16 %v3220, %v3219
  %v3224 = vsel %vm1350, %v3215, 0
  %v3227 = vsel %vm1350, %v3216, 0
  %v3230 = vsel %vm1350, %v3221, 0
  %v3233 = vsel %vm1350, %v3222, 0
  %3235 = vmatpush.bf16.xpose.msra.mxu0 %v2281
  %3236 = vmatpush.bf16.xpose.msra.mxu0 %v2278
  %3237 = vmatpush.bf16.xpose.msra.mxu0 %v2275
  %3238 = vmatpush.bf16.xpose.msra.mxu0 %v2272
  %3239 = vmatpush.bf16.xpose.msra.mxu0 %v2269
  %3240 = vmatpush.bf16.xpose.msra.mxu0 %v2266
  %3241 = vmatpush.bf16.xpose.msra.mxu0 %v2263
  %3242 = vmatpush.bf16.xpose.msra.mxu0 %v2260
  %3243 = vmatmul.bf16.gmra.mxu0 %v3224
  %v3244 = vpop.f32.mrf.mxu0
  %v3245 = vadd.f32 0.0, %v3244
  %v3246 = vpop.f32.mrf.mxu0
  %v3247 = vadd.f32 0.0, %v3246
  %3248 = vmatmul.bf16.gmra.mxu0 %v3227
  %v3249 = vpop.f32.mrf.mxu0
  %v3250 = vadd.f32 0.0, %v3249
  %v3251 = vpop.f32.mrf.mxu0
  %v3252 = vadd.f32 0.0, %v3251
  %3253 = vdwg.mxu0
  %3254 = vmatpush.bf16.xpose.msra.mxu0 %v3230
  %3255 = vmatpush.bf16.xpose.msra.mxu0 %v2787
  %3256 = vmatpush.bf16.xpose.msra.mxu0 %v2299
  %3257 = vmatpush.bf16.xpose.msra.mxu0 %v2296
  %3258 = vmatpush.bf16.xpose.msra.mxu0 %v2293
  %3259 = vmatpush.bf16.xpose.msra.mxu0 %v2290
  %3260 = vmatpush.bf16.xpose.msra.mxu0 %v2287
  %3261 = vmatpush.bf16.xpose.msra.mxu0 %v2284
  %3262 = vmatmul.bf16.gmra.mxu0 %v3224
  %v3263 = vpop.f32.mrf.mxu0
  %v3264 = vadd.f32 0.0, %v3263
  %v3265 = vpop.f32.mrf.mxu0
  %v3266 = vadd.f32 0.0, %v3265
  %3267 = vmatmul.bf16.gmra.mxu0 %v3227
  %v3268 = vpop.f32.mrf.mxu0
  %v3269 = vadd.f32 0.0, %v3268
  %v3270 = vpop.f32.mrf.mxu0
  %v3271 = vadd.f32 0.0, %v3270
  %3272 = vdwg.mxu0
  %3273 = vmatpush.bf16.xpose.msra.mxu0 %v2329
  %3274 = vmatpush.bf16.xpose.msra.mxu0 %v2326
  %3275 = vmatpush.bf16.xpose.msra.mxu0 %v2323
  %3276 = vmatpush.bf16.xpose.msra.mxu0 %v2320
  %3277 = vmatpush.bf16.xpose.msra.mxu0 %v2317
  %3278 = vmatpush.bf16.xpose.msra.mxu0 %v2314
  %3279 = vmatpush.bf16.xpose.msra.mxu0 %v2311
  %3280 = vmatpush.bf16.xpose.msra.mxu0 %v2308
  %3281 = vmatmul.bf16.gmra.mxu0 %v3224
  %v3282 = vpop.f32.mrf.mxu0
  %v3283 = vadd.f32 0.0, %v3282
  %v3284 = vpop.f32.mrf.mxu0
  %v3285 = vadd.f32 0.0, %v3284
  %3286 = vmatmul.bf16.gmra.mxu0 %v3227
  %v3287 = vpop.f32.mrf.mxu0
  %v3288 = vadd.f32 0.0, %v3287
  %v3289 = vpop.f32.mrf.mxu0
  %v3290 = vadd.f32 0.0, %v3289
  %3291 = vdwg.mxu0
  %3292 = vmatpush.bf16.xpose.msra.mxu0 %v3233
  %3293 = vmatpush.bf16.xpose.msra.mxu0 %v2790
  %3294 = vmatpush.bf16.xpose.msra.mxu0 %v2347
  %3295 = vmatpush.bf16.xpose.msra.mxu0 %v2344
  %3296 = vmatpush.bf16.xpose.msra.mxu0 %v2341
  %3297 = vmatpush.bf16.xpose.msra.mxu0 %v2338
  %3298 = vmatpush.bf16.xpose.msra.mxu0 %v2335
  %3299 = vmatpush.bf16.xpose.msra.mxu0 %v2332
  %3300 = vmatmul.bf16.gmra.mxu0 %v3224
  %v3301 = vpop.f32.mrf.mxu0
  %v3302 = vadd.f32 0.0, %v3301
  %v3303 = vpop.f32.mrf.mxu0
  %v3304 = vadd.f32 0.0, %v3303
  %3305 = vmatmul.bf16.gmra.mxu0 %v3227
  %v3306 = vpop.f32.mrf.mxu0
  %v3307 = vadd.f32 0.0, %v3306
  %v3308 = vpop.f32.mrf.mxu0
  %v3309 = vadd.f32 0.0, %v3308
  %3310 = vdwg.mxu0
  %v3311 = vadd.f32 %v3170, %v3245
  %v3312 = vadd.f32 %v3171, %v3264
  %v3313 = vadd.f32 %v3172, %v3283
  %v3314 = vadd.f32 %v3173, %v3302
  %v3315 = vadd.f32 %v3174, %v3247
  %v3316 = vadd.f32 %v3175, %v3266
  %v3317 = vadd.f32 %v3176, %v3285
  %v3318 = vadd.f32 %v3177, %v3304
  %v3319 = vadd.f32 %v3178, %v3250
  %v3320 = vadd.f32 %v3179, %v3269
  %v3321 = vadd.f32 %v3180, %v3288
  %v3322 = vadd.f32 %v3181, %v3307
  %v3323 = vadd.f32 %v3182, %v3252
  %v3324 = vadd.f32 %v3183, %v3271
  %v3325 = vadd.f32 %v3184, %v3290
  %v3326 = vadd.f32 %v3185, %v3309
  %v3327 = vld [vmem:[%s3] sm:$0xff]
  %v3328 = vld [vmem:[%s3 + $0x8] sm:$0xff]
  %v3329 = vld [vmem:[%s3 + $0x10] sm:$0xff]
  %v3330 = vld [vmem:[%s3 + $0x18] sm:$0xff]
  %3332 = vset.pattern.permute.xlu0 0
  %3333 = vperm.xlu0 %3332, %v3327
  %v3334 = vpop.permute.xlu0 %3333
  %3337 = vset.pattern.permute.xlu0 0
  %3338 = vperm.xlu0 %3337, %v3328
  %v3339 = vpop.permute.xlu0 %3338
  %3342 = vset.pattern.permute.xlu0 0
  %3343 = vperm.xlu0 %3342, %v3329
  %v3344 = vpop.permute.xlu0 %3343
  %3347 = vset.pattern.permute.xlu0 0
  %3348 = vperm.xlu0 %3347, %v3330
  %v3349 = vpop.permute.xlu0 %3348
  %v3351 = vadd.f32 %v3311, %v3334
  %v3352 = vadd.f32 %v3312, %v3334
  %v3353 = vadd.f32 %v3313, %v3334
  %v3354 = vadd.f32 %v3314, %v3334
  %v3355 = vadd.f32 %v3315, %v3339
  %v3356 = vadd.f32 %v3316, %v3339
  %v3357 = vadd.f32 %v3317, %v3339
  %v3358 = vadd.f32 %v3318, %v3339
  %v3359 = vadd.f32 %v3319, %v3344
  %v3360 = vadd.f32 %v3320, %v3344
  %v3361 = vadd.f32 %v3321, %v3344
  %v3362 = vadd.f32 %v3322, %v3344
  %v3363 = vadd.f32 %v3323, %v3349
  %v3364 = vadd.f32 %v3324, %v3349
  %v3365 = vadd.f32 %v3325, %v3349
  %v3366 = vadd.f32 %v3326, %v3349
  %3367 = vst [vmem:[%s8] sm:$0xff] %v3351
  %3368 = vst [vmem:[%s8 + $0x8] sm:$0xff] %v3352
  %3369 = vst [vmem:[%s8 + $0x10] sm:$0xff] %v3355
  %3370 = vst [vmem:[%s8 + $0x18] sm:$0xff] %v3356
  %3371 = vst [vmem:[%s8 + $0x20] sm:$0xff] %v3359
  %3372 = vst [vmem:[%s8 + $0x28] sm:$0xff] %v3360
  %3373 = vst [vmem:[%s8 + $0x30] sm:$0xff] %v3363
  %3374 = vst [vmem:[%s8 + $0x38] sm:$0xff] %v3364
  %s3375 = scalar_lea.vmem %s8, 64
  %3376 = vst [vmem:[%s3375] sm:$0xff] %v3353
  %3377 = vst [vmem:[%s3375 + $0x8] sm:$0xff] %v3354
  %3378 = vst [vmem:[%s3375 + $0x10] sm:$0xff] %v3357
  %3379 = vst [vmem:[%s3375 + $0x18] sm:$0xff] %v3358
  %3380 = vst [vmem:[%s3375 + $0x20] sm:$0xff] %v3361
  %3381 = vst [vmem:[%s3375 + $0x28] sm:$0xff] %v3362
  %3382 = vst [vmem:[%s3375 + $0x30] sm:$0xff] %v3365
  %3383 = vst [vmem:[%s3375 + $0x38] sm:$0xff] %v3366
  %v3384 = vld [vmem:[%s4] sm:$0xf]
  %v3385 = vld [vmem:[%s4 + $0x4] sm:$0xf]
  %v3386 = vld [vmem:[%s4 + $0x8] sm:$0xf]
  %v3387 = vld [vmem:[%s4 + $0xc] sm:$0xf]
  %v3388 = vld [vmem:[%s4 + $0x10] sm:$0xf]
  %v3389 = vld [vmem:[%s4 + $0x14] sm:$0xf]
  %v3390 = vld [vmem:[%s4 + $0x18] sm:$0xf]
  %v3391 = vld [vmem:[%s4 + $0x1c] sm:$0xf]
  %v3393 = vshrl.u32 %v356, 16
  %v3395 = vrot.slane %v3393, 4
  %v3396 = vshll.u32 %v356, 16
  %v3398 = vrot.slane %v3396, 5
  %v3399 = vor.u32 %v3395, %v3398
  %v3400 = vrot.slane %v3399, 4
  %v3402 = vshll.u32 %v357, 16
  %v3404 = vrot.slane %v3402, 5
  %v3405 = vsel %vm470, %v3400, %v3404
  %v3406 = vshrl.u32 %v357, 16
  %v3408 = vrot.slane %v3406, 4
  %v3409 = vor.u32 %v3408, %v3404
  %v3410 = vrot.slane %v3409, 4
  %v3412 = vshll.u32 %v358, 16
  %v3414 = vrot.slane %v3412, 5
  %v3415 = vsel %vm470, %v3410, %v3414
  %v3417 = vshrl.u32 %v359, 16
  %v3419 = vrot.slane %v3417, 4
  %v3420 = vshll.u32 %v359, 16
  %v3422 = vrot.slane %v3420, 5
  %v3423 = vor.u32 %v3419, %v3422
  %v3424 = vrot.slane %v3423, 4
  %v3426 = vshll.u32 %v360, 16
  %v3428 = vrot.slane %v3426, 5
  %v3429 = vsel %vm470, %v3424, %v3428
  %v3430 = vshrl.u32 %v360, 16
  %v3432 = vrot.slane %v3430, 4
  %v3433 = vor.u32 %v3432, %v3428
  %v3434 = vrot.slane %v3433, 4
  %v3436 = vshll.u32 %v361, 16
  %v3438 = vrot.slane %v3436, 5
  %v3439 = vsel %vm470, %v3434, %v3438
  %v3441 = vshrl.u32 %v362, 16
  %v3443 = vrot.slane %v3441, 4
  %v3444 = vshll.u32 %v362, 16
  %v3446 = vrot.slane %v3444, 5
  %v3447 = vor.u32 %v3443, %v3446
  %v3448 = vrot.slane %v3447, 4
  %v3450 = vshll.u32 %v363, 16
  %v3452 = vrot.slane %v3450, 5
  %v3453 = vsel %vm470, %v3448, %v3452
  %v3454 = vshrl.u32 %v363, 16
  %v3456 = vrot.slane %v3454, 4
  %v3457 = vor.u32 %v3456, %v3452
  %v3458 = vrot.slane %v3457, 4
  %v3460 = vshll.u32 %v364, 16
  %v3462 = vrot.slane %v3460, 5
  %v3463 = vsel %vm470, %v3458, %v3462
  %v3465 = vshrl.u32 %v365, 16
  %v3467 = vrot.slane %v3465, 4
  %v3468 = vshll.u32 %v365, 16
  %v3470 = vrot.slane %v3468, 5
  %v3471 = vor.u32 %v3467, %v3470
  %v3472 = vrot.slane %v3471, 4
  %v3474 = vshll.u32 %v366, 16
  %v3476 = vrot.slane %v3474, 5
  %v3477 = vsel %vm470, %v3472, %v3476
  %v3478 = vshrl.u32 %v366, 16
  %v3480 = vrot.slane %v3478, 4
  %v3481 = vor.u32 %v3480, %v3476
  %v3482 = vrot.slane %v3481, 4
  %v3484 = vshll.u32 %v367, 16
  %v3486 = vrot.slane %v3484, 5
  %v3487 = vsel %vm470, %v3482, %v3486
  %v3489 = vshrl.u32 %v368, 16
  %v3491 = vrot.slane %v3489, 4
  %v3492 = vshll.u32 %v368, 16
  %v3494 = vrot.slane %v3492, 5
  %v3495 = vor.u32 %v3491, %v3494
  %v3496 = vrot.slane %v3495, 4
  %v3498 = vshll.u32 %v369, 16
  %v3500 = vrot.slane %v3498, 5
  %v3501 = vsel %vm470, %v3496, %v3500
  %v3502 = vshrl.u32 %v369, 16
  %v3504 = vrot.slane %v3502, 4
  %v3505 = vor.u32 %v3504, %v3500
  %v3506 = vrot.slane %v3505, 4
  %v3508 = vshll.u32 %v370, 16
  %v3510 = vrot.slane %v3508, 5
  %v3511 = vsel %vm470, %v3506, %v3510
  %v3513 = vshrl.u32 %v371, 16
  %v3515 = vrot.slane %v3513, 4
  %v3516 = vshll.u32 %v371, 16
  %v3518 = vrot.slane %v3516, 5
  %v3519 = vor.u32 %v3515, %v3518
  %v3520 = vrot.slane %v3519, 4
  %v3522 = vshll.u32 %v372, 16
  %v3524 = vrot.slane %v3522, 5
  %v3525 = vsel %vm470, %v3520, %v3524
  %v3526 = vshrl.u32 %v372, 16
  %v3528 = vrot.slane %v3526, 4
  %v3529 = vor.u32 %v3528, %v3524
  %v3530 = vrot.slane %v3529, 4
  %v3532 = vshll.u32 %v373, 16
  %v3534 = vrot.slane %v3532, 5
  %v3535 = vsel %vm470, %v3530, %v3534
  %v3537 = vshrl.u32 %v374, 16
  %v3539 = vrot.slane %v3537, 4
  %v3540 = vshll.u32 %v374, 16
  %v3542 = vrot.slane %v3540, 5
  %v3543 = vor.u32 %v3539, %v3542
  %v3544 = vrot.slane %v3543, 4
  %v3546 = vshll.u32 %v375, 16
  %v3548 = vrot.slane %v3546, 5
  %v3549 = vsel %vm470, %v3544, %v3548
  %v3550 = vshrl.u32 %v375, 16
  %v3552 = vrot.slane %v3550, 4
  %v3553 = vor.u32 %v3552, %v3548
  %v3554 = vrot.slane %v3553, 4
  %v3556 = vshll.u32 %v376, 16
  %v3558 = vrot.slane %v3556, 5
  %v3559 = vsel %vm470, %v3554, %v3558
  %v3561 = vshrl.u32 %v377, 16
  %v3563 = vrot.slane %v3561, 4
  %v3564 = vshll.u32 %v377, 16
  %v3566 = vrot.slane %v3564, 5
  %v3567 = vor.u32 %v3563, %v3566
  %v3568 = vrot.slane %v3567, 4
  %v3570 = vshll.u32 %v378, 16
  %v3572 = vrot.slane %v3570, 5
  %v3573 = vsel %vm470, %v3568, %v3572
  %v3574 = vshrl.u32 %v378, 16
  %v3576 = vrot.slane %v3574, 4
  %v3577 = vor.u32 %v3576, %v3572
  %v3578 = vrot.slane %v3577, 4
  %v3580 = vshll.u32 %v379, 16
  %v3582 = vrot.slane %v3580, 5
  %v3583 = vsel %vm470, %v3578, %v3582
  %v3585 = vshrl.u32 %v380, 16
  %v3587 = vrot.slane %v3585, 4
  %v3588 = vshll.u32 %v380, 16
  %v3590 = vrot.slane %v3588, 5
  %v3591 = vor.u32 %v3587, %v3590
  %v3592 = vrot.slane %v3591, 4
  %v3594 = vshll.u32 %v381, 16
  %v3596 = vrot.slane %v3594, 5
  %v3597 = vsel %vm470, %v3592, %v3596
  %v3598 = vshrl.u32 %v381, 16
  %v3600 = vrot.slane %v3598, 4
  %v3601 = vor.u32 %v3600, %v3596
  %v3602 = vrot.slane %v3601, 4
  %v3604 = vshll.u32 %v382, 16
  %v3606 = vrot.slane %v3604, 5
  %v3607 = vsel %vm470, %v3602, %v3606
  %v3609 = vshrl.u32 %v383, 16
  %v3611 = vrot.slane %v3609, 4
  %v3612 = vshll.u32 %v383, 16
  %v3614 = vrot.slane %v3612, 5
  %v3615 = vor.u32 %v3611, %v3614
  %v3616 = vrot.slane %v3615, 4
  %v3618 = vshll.u32 %v384, 16
  %v3620 = vrot.slane %v3618, 5
  %v3621 = vsel %vm470, %v3616, %v3620
  %v3622 = vshrl.u32 %v384, 16
  %v3624 = vrot.slane %v3622, 4
  %v3625 = vor.u32 %v3624, %v3620
  %v3626 = vrot.slane %v3625, 4
  %v3628 = vshll.u32 %v385, 16
  %v3630 = vrot.slane %v3628, 5
  %v3631 = vsel %vm470, %v3626, %v3630
  %v3633 = vshrl.u32 %v386, 16
  %v3635 = vrot.slane %v3633, 4
  %v3636 = vshll.u32 %v386, 16
  %v3638 = vrot.slane %v3636, 5
  %v3639 = vor.u32 %v3635, %v3638
  %v3640 = vrot.slane %v3639, 4
  %v3642 = vshll.u32 %v387, 16
  %v3644 = vrot.slane %v3642, 5
  %v3645 = vsel %vm470, %v3640, %v3644
  %v3646 = vshrl.u32 %v387, 16
  %v3648 = vrot.slane %v3646, 4
  %v3649 = vor.u32 %v3648, %v3644
  %v3650 = vrot.slane %v3649, 4
  %v3652 = vshll.u32 %v388, 16
  %v3654 = vrot.slane %v3652, 5
  %v3655 = vsel %vm470, %v3650, %v3654
  %v3657 = vshrl.u32 %v389, 16
  %v3659 = vrot.slane %v3657, 4
  %v3660 = vshll.u32 %v389, 16
  %v3662 = vrot.slane %v3660, 5
  %v3663 = vor.u32 %v3659, %v3662
  %v3664 = vrot.slane %v3663, 4
  %v3666 = vshll.u32 %v390, 16
  %v3668 = vrot.slane %v3666, 5
  %v3669 = vsel %vm470, %v3664, %v3668
  %v3670 = vshrl.u32 %v390, 16
  %v3672 = vrot.slane %v3670, 4
  %v3673 = vor.u32 %v3672, %v3668
  %v3674 = vrot.slane %v3673, 4
  %v3676 = vshll.u32 %v391, 16
  %v3678 = vrot.slane %v3676, 5
  %v3679 = vsel %vm470, %v3674, %v3678
  %v3681 = vshrl.u32 %v392, 16
  %v3683 = vrot.slane %v3681, 4
  %v3684 = vshll.u32 %v392, 16
  %v3686 = vrot.slane %v3684, 5
  %v3687 = vor.u32 %v3683, %v3686
  %v3688 = vrot.slane %v3687, 4
  %v3690 = vshll.u32 %v393, 16
  %v3692 = vrot.slane %v3690, 5
  %v3693 = vsel %vm470, %v3688, %v3692
  %v3694 = vshrl.u32 %v393, 16
  %v3696 = vrot.slane %v3694, 4
  %v3697 = vor.u32 %v3696, %v3692
  %v3698 = vrot.slane %v3697, 4
  %v3700 = vshll.u32 %v394, 16
  %v3702 = vrot.slane %v3700, 5
  %v3703 = vsel %vm470, %v3698, %v3702
  %v3705 = vshrl.u32 %v395, 16
  %v3707 = vrot.slane %v3705, 4
  %v3708 = vshll.u32 %v395, 16
  %v3710 = vrot.slane %v3708, 5
  %v3711 = vor.u32 %v3707, %v3710
  %v3712 = vrot.slane %v3711, 4
  %v3714 = vshll.u32 %v396, 16
  %v3716 = vrot.slane %v3714, 5
  %v3717 = vsel %vm470, %v3712, %v3716
  %v3718 = vshrl.u32 %v396, 16
  %v3720 = vrot.slane %v3718, 4
  %v3721 = vor.u32 %v3720, %v3716
  %v3722 = vrot.slane %v3721, 4
  %v3724 = vshll.u32 %v397, 16
  %v3726 = vrot.slane %v3724, 5
  %v3727 = vsel %vm470, %v3722, %v3726
  %v3729 = vshrl.u32 %v398, 16
  %v3731 = vrot.slane %v3729, 4
  %v3732 = vshll.u32 %v398, 16
  %v3734 = vrot.slane %v3732, 5
  %v3735 = vor.u32 %v3731, %v3734
  %v3736 = vrot.slane %v3735, 4
  %v3738 = vshll.u32 %v399, 16
  %v3740 = vrot.slane %v3738, 5
  %v3741 = vsel %vm470, %v3736, %v3740
  %v3742 = vshrl.u32 %v399, 16
  %v3744 = vrot.slane %v3742, 4
  %v3745 = vor.u32 %v3744, %v3740
  %v3746 = vrot.slane %v3745, 4
  %v3748 = vshll.u32 %v400, 16
  %v3750 = vrot.slane %v3748, 5
  %v3751 = vsel %vm470, %v3746, %v3750
  %v3753 = vshrl.u32 %v401, 16
  %v3755 = vrot.slane %v3753, 4
  %v3756 = vshll.u32 %v401, 16
  %v3758 = vrot.slane %v3756, 5
  %v3759 = vor.u32 %v3755, %v3758
  %v3760 = vrot.slane %v3759, 4
  %v3762 = vshll.u32 %v402, 16
  %v3764 = vrot.slane %v3762, 5
  %v3765 = vsel %vm470, %v3760, %v3764
  %v3766 = vshrl.u32 %v402, 16
  %v3768 = vrot.slane %v3766, 4
  %v3769 = vor.u32 %v3768, %v3764
  %v3770 = vrot.slane %v3769, 4
  %v3772 = vshll.u32 %v403, 16
  %v3774 = vrot.slane %v3772, 5
  %v3775 = vsel %vm470, %v3770, %v3774
  %v3777 = vshrl.u32 %v410, 16
  %v3779 = vrot.slane %v3777, 4
  %v3780 = vshll.u32 %v410, 16
  %v3782 = vrot.slane %v3780, 5
  %v3783 = vor.u32 %v3779, %v3782
  %v3784 = vrot.slane %v3783, 4
  %v3786 = vshll.u32 %v411, 16
  %v3788 = vrot.slane %v3786, 5
  %v3789 = vsel %vm470, %v3784, %v3788
  %v3790 = vshrl.u32 %v411, 16
  %v3792 = vrot.slane %v3790, 4
  %v3793 = vor.u32 %v3792, %v3788
  %v3794 = vrot.slane %v3793, 4
  %v3796 = vshll.u32 %v412, 16
  %v3798 = vrot.slane %v3796, 5
  %v3799 = vsel %vm470, %v3794, %v3798
  %v3801 = vshrl.u32 %v413, 16
  %v3803 = vrot.slane %v3801, 4
  %v3804 = vshll.u32 %v413, 16
  %v3806 = vrot.slane %v3804, 5
  %v3807 = vor.u32 %v3803, %v3806
  %v3808 = vrot.slane %v3807, 4
  %v3810 = vshll.u32 %v414, 16
  %v3812 = vrot.slane %v3810, 5
  %v3813 = vsel %vm470, %v3808, %v3812
  %v3814 = vshrl.u32 %v414, 16
  %v3816 = vrot.slane %v3814, 4
  %v3817 = vor.u32 %v3816, %v3812
  %v3818 = vrot.slane %v3817, 4
  %v3820 = vshll.u32 %v415, 16
  %v3822 = vrot.slane %v3820, 5
  %v3823 = vsel %vm470, %v3818, %v3822
  %v3825 = vshrl.u32 %v416, 16
  %v3827 = vrot.slane %v3825, 4
  %v3828 = vshll.u32 %v416, 16
  %v3830 = vrot.slane %v3828, 5
  %v3831 = vor.u32 %v3827, %v3830
  %v3832 = vrot.slane %v3831, 4
  %v3834 = vshll.u32 %v417, 16
  %v3836 = vrot.slane %v3834, 5
  %v3837 = vsel %vm470, %v3832, %v3836
  %v3838 = vshrl.u32 %v417, 16
  %v3840 = vrot.slane %v3838, 4
  %v3841 = vor.u32 %v3840, %v3836
  %v3842 = vrot.slane %v3841, 4
  %v3844 = vshll.u32 %v418, 16
  %v3846 = vrot.slane %v3844, 5
  %v3847 = vsel %vm470, %v3842, %v3846
  %v3849 = vshrl.u32 %v419, 16
  %v3851 = vrot.slane %v3849, 4
  %v3852 = vshll.u32 %v419, 16
  %v3854 = vrot.slane %v3852, 5
  %v3855 = vor.u32 %v3851, %v3854
  %v3856 = vrot.slane %v3855, 4
  %v3858 = vshll.u32 %v420, 16
  %v3860 = vrot.slane %v3858, 5
  %v3861 = vsel %vm470, %v3856, %v3860
  %v3862 = vshrl.u32 %v420, 16
  %v3864 = vrot.slane %v3862, 4
  %v3865 = vor.u32 %v3864, %v3860
  %v3866 = vrot.slane %v3865, 4
  %v3868 = vshll.u32 %v421, 16
  %v3870 = vrot.slane %v3868, 5
  %v3871 = vsel %vm470, %v3866, %v3870
  %v3873 = vshrl.u32 %v422, 16
  %v3875 = vrot.slane %v3873, 4
  %v3876 = vshll.u32 %v422, 16
  %v3878 = vrot.slane %v3876, 5
  %v3879 = vor.u32 %v3875, %v3878
  %v3880 = vrot.slane %v3879, 4
  %v3882 = vshll.u32 %v423, 16
  %v3884 = vrot.slane %v3882, 5
  %v3885 = vsel %vm470, %v3880, %v3884
  %v3886 = vshrl.u32 %v423, 16
  %v3888 = vrot.slane %v3886, 4
  %v3889 = vor.u32 %v3888, %v3884
  %v3890 = vrot.slane %v3889, 4
  %v3892 = vshll.u32 %v424, 16
  %v3894 = vrot.slane %v3892, 5
  %v3895 = vsel %vm470, %v3890, %v3894
  %v3897 = vshrl.u32 %v425, 16
  %v3899 = vrot.slane %v3897, 4
  %v3900 = vshll.u32 %v425, 16
  %v3902 = vrot.slane %v3900, 5
  %v3903 = vor.u32 %v3899, %v3902
  %v3904 = vrot.slane %v3903, 4
  %v3906 = vshll.u32 %v426, 16
  %v3908 = vrot.slane %v3906, 5
  %v3909 = vsel %vm470, %v3904, %v3908
  %v3910 = vshrl.u32 %v426, 16
  %v3912 = vrot.slane %v3910, 4
  %v3913 = vor.u32 %v3912, %v3908
  %v3914 = vrot.slane %v3913, 4
  %v3916 = vshll.u32 %v427, 16
  %v3918 = vrot.slane %v3916, 5
  %v3919 = vsel %vm470, %v3914, %v3918
  %v3921 = vshrl.u32 %v428, 16
  %v3923 = vrot.slane %v3921, 4
  %v3924 = vshll.u32 %v428, 16
  %v3926 = vrot.slane %v3924, 5
  %v3927 = vor.u32 %v3923, %v3926
  %v3928 = vrot.slane %v3927, 4
  %v3930 = vshll.u32 %v429, 16
  %v3932 = vrot.slane %v3930, 5
  %v3933 = vsel %vm470, %v3928, %v3932
  %v3934 = vshrl.u32 %v429, 16
  %v3936 = vrot.slane %v3934, 4
  %v3937 = vor.u32 %v3936, %v3932
  %v3938 = vrot.slane %v3937, 4
  %v3940 = vshll.u32 %v430, 16
  %v3942 = vrot.slane %v3940, 5
  %v3943 = vsel %vm470, %v3938, %v3942
  %v3945 = vshrl.u32 %v431, 16
  %v3947 = vrot.slane %v3945, 4
  %v3948 = vshll.u32 %v431, 16
  %v3950 = vrot.slane %v3948, 5
  %v3951 = vor.u32 %v3947, %v3950
  %v3952 = vrot.slane %v3951, 4
  %v3954 = vshll.u32 %v432, 16
  %v3956 = vrot.slane %v3954, 5
  %v3957 = vsel %vm470, %v3952, %v3956
  %v3958 = vshrl.u32 %v432, 16
  %v3960 = vrot.slane %v3958, 4
  %v3961 = vor.u32 %v3960, %v3956
  %v3962 = vrot.slane %v3961, 4
  %v3964 = vshll.u32 %v433, 16
  %v3966 = vrot.slane %v3964, 5
  %v3967 = vsel %vm470, %v3962, %v3966
  %v3969 = vshrl.u32 %v434, 16
  %v3971 = vrot.slane %v3969, 4
  %v3972 = vshll.u32 %v434, 16
  %v3974 = vrot.slane %v3972, 5
  %v3975 = vor.u32 %v3971, %v3974
  %v3976 = vrot.slane %v3975, 4
  %v3978 = vshll.u32 %v435, 16
  %v3980 = vrot.slane %v3978, 5
  %v3981 = vsel %vm470, %v3976, %v3980
  %v3982 = vshrl.u32 %v435, 16
  %v3984 = vrot.slane %v3982, 4
  %v3985 = vor.u32 %v3984, %v3980
  %v3986 = vrot.slane %v3985, 4
  %v3988 = vshll.u32 %v436, 16
  %v3990 = vrot.slane %v3988, 5
  %v3991 = vsel %vm470, %v3986, %v3990
  %v3993 = vshrl.u32 %v437, 16
  %v3995 = vrot.slane %v3993, 4
  %v3996 = vshll.u32 %v437, 16
  %v3998 = vrot.slane %v3996, 5
  %v3999 = vor.u32 %v3995, %v3998
  %v4000 = vrot.slane %v3999, 4
  %v4002 = vshll.u32 %v438, 16
  %v4004 = vrot.slane %v4002, 5
  %v4005 = vsel %vm470, %v4000, %v4004
  %v4006 = vshrl.u32 %v438, 16
  %v4008 = vrot.slane %v4006, 4
  %v4009 = vor.u32 %v4008, %v4004
  %v4010 = vrot.slane %v4009, 4
  %v4012 = vshll.u32 %v439, 16
  %v4014 = vrot.slane %v4012, 5
  %v4015 = vsel %vm470, %v4010, %v4014
  %v4017 = vshrl.u32 %v440, 16
  %v4019 = vrot.slane %v4017, 4
  %v4020 = vshll.u32 %v440, 16
  %v4022 = vrot.slane %v4020, 5
  %v4023 = vor.u32 %v4019, %v4022
  %v4024 = vrot.slane %v4023, 4
  %v4026 = vshll.u32 %v441, 16
  %v4028 = vrot.slane %v4026, 5
  %v4029 = vsel %vm470, %v4024, %v4028
  %v4030 = vshrl.u32 %v441, 16
  %v4032 = vrot.slane %v4030, 4
  %v4033 = vor.u32 %v4032, %v4028
  %v4034 = vrot.slane %v4033, 4
  %v4036 = vshll.u32 %v442, 16
  %v4038 = vrot.slane %v4036, 5
  %v4039 = vsel %vm470, %v4034, %v4038
  %v4041 = vshrl.u32 %v443, 16
  %v4043 = vrot.slane %v4041, 4
  %v4044 = vshll.u32 %v443, 16
  %v4046 = vrot.slane %v4044, 5
  %v4047 = vor.u32 %v4043, %v4046
  %v4048 = vrot.slane %v4047, 4
  %v4050 = vshll.u32 %v444, 16
  %v4052 = vrot.slane %v4050, 5
  %v4053 = vsel %vm470, %v4048, %v4052
  %v4054 = vshrl.u32 %v444, 16
  %v4056 = vrot.slane %v4054, 4
  %v4057 = vor.u32 %v4056, %v4052
  %v4058 = vrot.slane %v4057, 4
  %v4060 = vshll.u32 %v445, 16
  %v4062 = vrot.slane %v4060, 5
  %v4063 = vsel %vm470, %v4058, %v4062
  %v4065 = vshrl.u32 %v446, 16
  %v4067 = vrot.slane %v4065, 4
  %v4068 = vshll.u32 %v446, 16
  %v4070 = vrot.slane %v4068, 5
  %v4071 = vor.u32 %v4067, %v4070
  %v4072 = vrot.slane %v4071, 4
  %v4074 = vshll.u32 %v447, 16
  %v4076 = vrot.slane %v4074, 5
  %v4077 = vsel %vm470, %v4072, %v4076
  %v4078 = vshrl.u32 %v447, 16
  %v4080 = vrot.slane %v4078, 4
  %v4081 = vor.u32 %v4080, %v4076
  %v4082 = vrot.slane %v4081, 4
  %v4084 = vshll.u32 %v448, 16
  %v4086 = vrot.slane %v4084, 5
  %v4087 = vsel %vm470, %v4082, %v4086
  %v4089 = vshrl.u32 %v449, 16
  %v4091 = vrot.slane %v4089, 4
  %v4092 = vshll.u32 %v449, 16
  %v4094 = vrot.slane %v4092, 5
  %v4095 = vor.u32 %v4091, %v4094
  %v4096 = vrot.slane %v4095, 4
  %v4098 = vshll.u32 %v450, 16
  %v4100 = vrot.slane %v4098, 5
  %v4101 = vsel %vm470, %v4096, %v4100
  %v4102 = vshrl.u32 %v450, 16
  %v4104 = vrot.slane %v4102, 4
  %v4105 = vor.u32 %v4104, %v4100
  %v4106 = vrot.slane %v4105, 4
  %v4108 = vshll.u32 %v451, 16
  %v4110 = vrot.slane %v4108, 5
  %v4111 = vsel %vm470, %v4106, %v4110
  %v4113 = vshrl.u32 %v452, 16
  %v4115 = vrot.slane %v4113, 4
  %v4116 = vshll.u32 %v452, 16
  %v4118 = vrot.slane %v4116, 5
  %v4119 = vor.u32 %v4115, %v4118
  %v4120 = vrot.slane %v4119, 4
  %v4122 = vshll.u32 %v453, 16
  %v4124 = vrot.slane %v4122, 5
  %v4125 = vsel %vm470, %v4120, %v4124
  %v4126 = vshrl.u32 %v453, 16
  %v4128 = vrot.slane %v4126, 4
  %v4129 = vor.u32 %v4128, %v4124
  %v4130 = vrot.slane %v4129, 4
  %v4132 = vshll.u32 %v454, 16
  %v4134 = vrot.slane %v4132, 5
  %v4135 = vsel %vm470, %v4130, %v4134
  %v4137 = vshrl.u32 %v455, 16
  %v4139 = vrot.slane %v4137, 4
  %v4140 = vshll.u32 %v455, 16
  %v4142 = vrot.slane %v4140, 5
  %v4143 = vor.u32 %v4139, %v4142
  %v4144 = vrot.slane %v4143, 4
  %v4146 = vshll.u32 %v456, 16
  %v4148 = vrot.slane %v4146, 5
  %v4149 = vsel %vm470, %v4144, %v4148
  %v4150 = vshrl.u32 %v456, 16
  %v4152 = vrot.slane %v4150, 4
  %v4153 = vor.u32 %v4152, %v4148
  %v4154 = vrot.slane %v4153, 4
  %v4156 = vshll.u32 %v457, 16
  %v4158 = vrot.slane %v4156, 5
  %v4159 = vsel %vm470, %v4154, %v4158
  %s4160 = scalar_lea.vmem %s4, 32
  %v4161 = vld [vmem:[%s4160] sm:$0xf]
  %v4162 = vld [vmem:[%s4160 + $0x4] sm:$0xf]
  %v4163 = vld [vmem:[%s4160 + $0x8] sm:$0xf]
  %v4164 = vld [vmem:[%s4160 + $0xc] sm:$0xf]
  %v4165 = vld [vmem:[%s4160 + $0x10] sm:$0xf]
  %v4166 = vld [vmem:[%s4160 + $0x14] sm:$0xf]
  %v4167 = vld [vmem:[%s4160 + $0x18] sm:$0xf]
  %v4168 = vld [vmem:[%s4160 + $0x1c] sm:$0xf]
  %v4177 = vunpack.c.l.b16 %v4161
  %v4178 = vunpack.c.l.b16 %v4162
  %v4179 = vunpack.c.l.b16 %v4163
  %v4180 = vunpack.c.l.b16 %v4164
  %v4181 = vunpack.c.l.b16 %v4165
  %v4182 = vunpack.c.l.b16 %v4166
  %v4183 = vunpack.c.l.b16 %v4167
  %v4184 = vunpack.c.l.b16 %v4168
  %v4185 = vpack.c.b16 %v4178, %v4177
  %v4186 = vpack.c.b16 %v4180, %v4179
  %v4187 = vpack.c.b16 %v4182, %v4181
  %v4188 = vpack.c.b16 %v4184, %v4183
  %v4189 = vunpack.c.l.b16 %v3405
  %v4190 = vunpack.c.l.b16 %v3415
  %v4191 = vunpack.c.l.b16 %v3429
  %v4192 = vunpack.c.l.b16 %v3439
  %v4193 = vunpack.c.l.b16 %v3453
  %v4194 = vunpack.c.l.b16 %v3463
  %v4195 = vunpack.c.l.b16 %v3477
  %v4196 = vunpack.c.l.b16 %v3487
  %v4197 = vunpack.c.l.b16 %v3501
  %v4198 = vunpack.c.l.b16 %v3511
  %v4199 = vunpack.c.l.b16 %v3525
  %v4200 = vunpack.c.l.b16 %v3535
  %v4201 = vunpack.c.l.b16 %v3549
  %v4202 = vunpack.c.l.b16 %v3559
  %v4203 = vunpack.c.l.b16 %v3573
  %v4204 = vunpack.c.l.b16 %v3583
  %v4205 = vunpack.c.l.b16 %v3597
  %v4206 = vunpack.c.l.b16 %v3607
  %v4207 = vunpack.c.l.b16 %v3621
  %v4208 = vunpack.c.l.b16 %v3631
  %v4209 = vunpack.c.l.b16 %v3645
  %v4210 = vunpack.c.l.b16 %v3655
  %v4211 = vunpack.c.l.b16 %v3669
  %v4212 = vunpack.c.l.b16 %v3679
  %v4213 = vunpack.c.l.b16 %v3693
  %v4214 = vunpack.c.l.b16 %v3703
  %v4215 = vunpack.c.l.b16 %v3717
  %v4216 = vunpack.c.l.b16 %v3727
  %v4217 = vunpack.c.l.b16 %v3741
  %v4218 = vunpack.c.l.b16 %v3751
  %v4219 = vunpack.c.l.b16 %v3765
  %v4220 = vunpack.c.l.b16 %v3775
  %v4221 = vunpack.c.l.b16 %v3789
  %v4222 = vunpack.c.l.b16 %v3799
  %v4223 = vunpack.c.l.b16 %v3813
  %v4224 = vunpack.c.l.b16 %v3823
  %v4225 = vunpack.c.l.b16 %v3837
  %v4226 = vunpack.c.l.b16 %v3847
  %v4227 = vunpack.c.l.b16 %v3861
  %v4228 = vunpack.c.l.b16 %v3871
  %v4229 = vunpack.c.l.b16 %v3885
  %v4230 = vunpack.c.l.b16 %v3895
  %v4231 = vunpack.c.l.b16 %v3909
  %v4232 = vunpack.c.l.b16 %v3919
  %v4233 = vunpack.c.l.b16 %v3933
  %v4234 = vunpack.c.l.b16 %v3943
  %v4235 = vunpack.c.l.b16 %v3957
  %v4236 = vunpack.c.l.b16 %v3967
  %v4237 = vunpack.c.l.b16 %v3981
  %v4238 = vunpack.c.l.b16 %v3991
  %v4239 = vunpack.c.l.b16 %v4005
  %v4240 = vunpack.c.l.b16 %v4015
  %v4241 = vunpack.c.l.b16 %v4029
  %v4242 = vunpack.c.l.b16 %v4039
  %v4243 = vunpack.c.l.b16 %v4053
  %v4244 = vunpack.c.l.b16 %v4063
  %v4245 = vunpack.c.l.b16 %v4077
  %v4246 = vunpack.c.l.b16 %v4087
  %v4247 = vunpack.c.l.b16 %v4101
  %v4248 = vunpack.c.l.b16 %v4111
  %v4249 = vunpack.c.l.b16 %v4125
  %v4250 = vunpack.c.l.b16 %v4135
  %v4251 = vunpack.c.l.b16 %v4149
  %v4252 = vunpack.c.l.b16 %v4159
  %v4253 = vpack.c.b16 %v4190, %v4189
  %v4254 = vpack.c.b16 %v4192, %v4191
  %v4255 = vpack.c.b16 %v4194, %v4193
  %v4256 = vpack.c.b16 %v4196, %v4195
  %v4257 = vpack.c.b16 %v4198, %v4197
  %v4258 = vpack.c.b16 %v4200, %v4199
  %v4259 = vpack.c.b16 %v4202, %v4201
  %v4260 = vpack.c.b16 %v4204, %v4203
  %v4261 = vpack.c.b16 %v4206, %v4205
  %v4262 = vpack.c.b16 %v4208, %v4207
  %v4263 = vpack.c.b16 %v4210, %v4209
  %v4264 = vpack.c.b16 %v4212, %v4211
  %v4265 = vpack.c.b16 %v4214, %v4213
  %v4266 = vpack.c.b16 %v4216, %v4215
  %v4267 = vpack.c.b16 %v4218, %v4217
  %v4268 = vpack.c.b16 %v4220, %v4219
  %v4269 = vpack.c.b16 %v4222, %v4221
  %v4270 = vpack.c.b16 %v4224, %v4223
  %v4271 = vpack.c.b16 %v4226, %v4225
  %v4272 = vpack.c.b16 %v4228, %v4227
  %v4273 = vpack.c.b16 %v4230, %v4229
  %v4274 = vpack.c.b16 %v4232, %v4231
  %v4275 = vpack.c.b16 %v4234, %v4233
  %v4276 = vpack.c.b16 %v4236, %v4235
  %v4277 = vpack.c.b16 %v4238, %v4237
  %v4278 = vpack.c.b16 %v4240, %v4239
  %v4279 = vpack.c.b16 %v4242, %v4241
  %v4280 = vpack.c.b16 %v4244, %v4243
  %v4281 = vpack.c.b16 %v4246, %v4245
  %v4282 = vpack.c.b16 %v4248, %v4247
  %v4283 = vpack.c.b16 %v4250, %v4249
  %v4284 = vpack.c.b16 %v4252, %v4251
  %vm4285 = vcmask 523264
  %v4287 = vsel %vm4285, %v4185, 0
  %v4290 = vsel %vm4285, %v4186, 0
  %v4293 = vsel %vm4285, %v4187, 0
  %v4296 = vsel %vm4285, %v4188, 0
  %v4299 = vsel %vm4285, %v4253, 0
  %v4302 = vsel %vm4285, %v4254, 0
  %v4305 = vsel %vm4285, %v4255, 0
  %v4308 = vsel %vm4285, %v4256, 0
  %v4311 = vsel %vm4285, %v4257, 0
  %v4314 = vsel %vm4285, %v4258, 0
  %v4317 = vsel %vm4285, %v4259, 0
  %v4320 = vsel %vm4285, %v4260, 0
  %v4323 = vsel %vm4285, %v4261, 0
  %v4326 = vsel %vm4285, %v4262, 0
  %v4329 = vsel %vm4285, %v4263, 0
  %v4332 = vsel %vm4285, %v4264, 0
  %v4335 = vsel %vm4285, %v4265, 0
  %v4338 = vsel %vm4285, %v4266, 0
  %v4341 = vsel %vm4285, %v4267, 0
  %v4344 = vsel %vm4285, %v4268, 0
  %v4347 = vsel %vm4285, %v4269, 0
  %v4350 = vsel %vm4285, %v4270, 0
  %v4353 = vsel %vm4285, %v4271, 0
  %v4356 = vsel %vm4285, %v4272, 0
  %v4359 = vsel %vm4285, %v4273, 0
  %v4362 = vsel %vm4285, %v4274, 0
  %v4365 = vsel %vm4285, %v4275, 0
  %v4368 = vsel %vm4285, %v4276, 0
  %v4371 = vsel %vm4285, %v4277, 0
  %v4374 = vsel %vm4285, %v4278, 0
  %v4377 = vsel %vm4285, %v4279, 0
  %v4380 = vsel %vm4285, %v4280, 0
  %v4383 = vsel %vm4285, %v4281, 0
  %v4386 = vsel %vm4285, %v4282, 0
  %v4389 = vsel %vm4285, %v4283, 0
  %v4392 = vsel %vm4285, %v4284, 0
  %4394 = vmatpush.bf16.xpose.msra.mxu0 %v4320
  %4395 = vmatpush.bf16.xpose.msra.mxu0 %v4317
  %4396 = vmatpush.bf16.xpose.msra.mxu0 %v4314
  %4397 = vmatpush.bf16.xpose.msra.mxu0 %v4311
  %4398 = vmatpush.bf16.xpose.msra.mxu0 %v4308
  %4399 = vmatpush.bf16.xpose.msra.mxu0 %v4305
  %4400 = vmatpush.bf16.xpose.msra.mxu0 %v4302
  %4401 = vmatpush.bf16.xpose.msra.mxu0 %v4299
  %4402 = vmatmul.bf16.gmra.mxu0 %v4287
  %v4403 = vpop.f32.mrf.mxu0
  %v4404 = vadd.f32 0.0, %v4403
  %v4405 = vpop.f32.mrf.mxu0
  %v4406 = vadd.f32 0.0, %v4405
  %4407 = vmatmul.bf16.gmra.mxu0 %v4290
  %v4408 = vpop.f32.mrf.mxu0
  %v4409 = vadd.f32 0.0, %v4408
  %v4410 = vpop.f32.mrf.mxu0
  %v4411 = vadd.f32 0.0, %v4410
  %4412 = vmatmul.bf16.gmra.mxu0 %v4293
  %v4413 = vpop.f32.mrf.mxu0
  %v4414 = vadd.f32 0.0, %v4413
  %v4415 = vpop.f32.mrf.mxu0
  %v4416 = vadd.f32 0.0, %v4415
  %4417 = vmatmul.bf16.gmra.mxu0 %v4296
  %v4418 = vpop.f32.mrf.mxu0
  %v4419 = vadd.f32 0.0, %v4418
  %v4420 = vpop.f32.mrf.mxu0
  %v4421 = vadd.f32 0.0, %v4420
  %4422 = vdwg.mxu0
  %4423 = vmatpush.bf16.xpose.msra.mxu0 %v4344
  %4424 = vmatpush.bf16.xpose.msra.mxu0 %v4341
  %4425 = vmatpush.bf16.xpose.msra.mxu0 %v4338
  %4426 = vmatpush.bf16.xpose.msra.mxu0 %v4335
  %4427 = vmatpush.bf16.xpose.msra.mxu0 %v4332
  %4428 = vmatpush.bf16.xpose.msra.mxu0 %v4329
  %4429 = vmatpush.bf16.xpose.msra.mxu0 %v4326
  %4430 = vmatpush.bf16.xpose.msra.mxu0 %v4323
  %4431 = vmatmul.bf16.gmra.mxu0 %v4287
  %v4432 = vpop.f32.mrf.mxu0
  %v4433 = vadd.f32 0.0, %v4432
  %v4434 = vpop.f32.mrf.mxu0
  %v4435 = vadd.f32 0.0, %v4434
  %4436 = vmatmul.bf16.gmra.mxu0 %v4290
  %v4437 = vpop.f32.mrf.mxu0
  %v4438 = vadd.f32 0.0, %v4437
  %v4439 = vpop.f32.mrf.mxu0
  %v4440 = vadd.f32 0.0, %v4439
  %4441 = vmatmul.bf16.gmra.mxu0 %v4293
  %v4442 = vpop.f32.mrf.mxu0
  %v4443 = vadd.f32 0.0, %v4442
  %v4444 = vpop.f32.mrf.mxu0
  %v4445 = vadd.f32 0.0, %v4444
  %4446 = vmatmul.bf16.gmra.mxu0 %v4296
  %v4447 = vpop.f32.mrf.mxu0
  %v4448 = vadd.f32 0.0, %v4447
  %v4449 = vpop.f32.mrf.mxu0
  %v4450 = vadd.f32 0.0, %v4449
  %4451 = vdwg.mxu0
  %4452 = vmatpush.bf16.xpose.msra.mxu0 %v4368
  %4453 = vmatpush.bf16.xpose.msra.mxu0 %v4365
  %4454 = vmatpush.bf16.xpose.msra.mxu0 %v4362
  %4455 = vmatpush.bf16.xpose.msra.mxu0 %v4359
  %4456 = vmatpush.bf16.xpose.msra.mxu0 %v4356
  %4457 = vmatpush.bf16.xpose.msra.mxu0 %v4353
  %4458 = vmatpush.bf16.xpose.msra.mxu0 %v4350
  %4459 = vmatpush.bf16.xpose.msra.mxu0 %v4347
  %4460 = vmatmul.bf16.gmra.mxu0 %v4287
  %v4461 = vpop.f32.mrf.mxu0
  %v4462 = vadd.f32 0.0, %v4461
  %v4463 = vpop.f32.mrf.mxu0
  %v4464 = vadd.f32 0.0, %v4463
  %4465 = vmatmul.bf16.gmra.mxu0 %v4290
  %v4466 = vpop.f32.mrf.mxu0
  %v4467 = vadd.f32 0.0, %v4466
  %v4468 = vpop.f32.mrf.mxu0
  %v4469 = vadd.f32 0.0, %v4468
  %4470 = vmatmul.bf16.gmra.mxu0 %v4293
  %v4471 = vpop.f32.mrf.mxu0
  %v4472 = vadd.f32 0.0, %v4471
  %v4473 = vpop.f32.mrf.mxu0
  %v4474 = vadd.f32 0.0, %v4473
  %4475 = vmatmul.bf16.gmra.mxu0 %v4296
  %v4476 = vpop.f32.mrf.mxu0
  %v4477 = vadd.f32 0.0, %v4476
  %v4478 = vpop.f32.mrf.mxu0
  %v4479 = vadd.f32 0.0, %v4478
  %4480 = vdwg.mxu0
  %4481 = vmatpush.bf16.xpose.msra.mxu0 %v4392
  %4482 = vmatpush.bf16.xpose.msra.mxu0 %v4389
  %4483 = vmatpush.bf16.xpose.msra.mxu0 %v4386
  %4484 = vmatpush.bf16.xpose.msra.mxu0 %v4383
  %4485 = vmatpush.bf16.xpose.msra.mxu0 %v4380
  %4486 = vmatpush.bf16.xpose.msra.mxu0 %v4377
  %4487 = vmatpush.bf16.xpose.msra.mxu0 %v4374
  %4488 = vmatpush.bf16.xpose.msra.mxu0 %v4371
  %4489 = vmatmul.bf16.gmra.mxu0 %v4287
  %v4490 = vpop.f32.mrf.mxu0
  %v4491 = vadd.f32 0.0, %v4490
  %v4492 = vpop.f32.mrf.mxu0
  %v4493 = vadd.f32 0.0, %v4492
  %4494 = vmatmul.bf16.gmra.mxu0 %v4290
  %v4495 = vpop.f32.mrf.mxu0
  %v4496 = vadd.f32 0.0, %v4495
  %v4497 = vpop.f32.mrf.mxu0
  %v4498 = vadd.f32 0.0, %v4497
  %4499 = vmatmul.bf16.gmra.mxu0 %v4293
  %v4500 = vpop.f32.mrf.mxu0
  %v4501 = vadd.f32 0.0, %v4500
  %v4502 = vpop.f32.mrf.mxu0
  %v4503 = vadd.f32 0.0, %v4502
  %4504 = vmatmul.bf16.gmra.mxu0 %v4296
  %v4505 = vpop.f32.mrf.mxu0
  %v4506 = vadd.f32 0.0, %v4505
  %v4507 = vpop.f32.mrf.mxu0
  %v4508 = vadd.f32 0.0, %v4507
  %4509 = vdwg.mxu0
  %v4518 = vunpack.c.l.b16 %v3384
  %v4519 = vunpack.c.l.b16 %v3385
  %v4520 = vunpack.c.l.b16 %v3386
  %v4521 = vunpack.c.l.b16 %v3387
  %v4522 = vunpack.c.l.b16 %v3388
  %v4523 = vunpack.c.l.b16 %v3389
  %v4524 = vunpack.c.l.b16 %v3390
  %v4525 = vunpack.c.l.b16 %v3391
  %v4526 = vpack.c.b16 %v4519, %v4518
  %v4527 = vpack.c.b16 %v4521, %v4520
  %v4528 = vpack.c.b16 %v4523, %v4522
  %v4529 = vpack.c.b16 %v4525, %v4524
  %v4594 = vunpack.c.l.b16 %v356
  %v4595 = vunpack.c.l.b16 %v357
  %v4596 = vunpack.c.l.b16 %v359
  %v4597 = vunpack.c.l.b16 %v360
  %v4598 = vunpack.c.l.b16 %v362
  %v4599 = vunpack.c.l.b16 %v363
  %v4600 = vunpack.c.l.b16 %v365
  %v4601 = vunpack.c.l.b16 %v366
  %v4602 = vunpack.c.l.b16 %v368
  %v4603 = vunpack.c.l.b16 %v369
  %v4604 = vunpack.c.l.b16 %v371
  %v4605 = vunpack.c.l.b16 %v372
  %v4606 = vunpack.c.l.b16 %v374
  %v4607 = vunpack.c.l.b16 %v375
  %v4608 = vunpack.c.l.b16 %v377
  %v4609 = vunpack.c.l.b16 %v378
  %v4610 = vunpack.c.l.b16 %v380
  %v4611 = vunpack.c.l.b16 %v381
  %v4612 = vunpack.c.l.b16 %v383
  %v4613 = vunpack.c.l.b16 %v384
  %v4614 = vunpack.c.l.b16 %v386
  %v4615 = vunpack.c.l.b16 %v387
  %v4616 = vunpack.c.l.b16 %v389
  %v4617 = vunpack.c.l.b16 %v390
  %v4618 = vunpack.c.l.b16 %v392
  %v4619 = vunpack.c.l.b16 %v393
  %v4620 = vunpack.c.l.b16 %v395
  %v4621 = vunpack.c.l.b16 %v396
  %v4622 = vunpack.c.l.b16 %v398
  %v4623 = vunpack.c.l.b16 %v399
  %v4624 = vunpack.c.l.b16 %v401
  %v4625 = vunpack.c.l.b16 %v402
  %v4626 = vunpack.c.l.b16 %v410
  %v4627 = vunpack.c.l.b16 %v411
  %v4628 = vunpack.c.l.b16 %v413
  %v4629 = vunpack.c.l.b16 %v414
  %v4630 = vunpack.c.l.b16 %v416
  %v4631 = vunpack.c.l.b16 %v417
  %v4632 = vunpack.c.l.b16 %v419
  %v4633 = vunpack.c.l.b16 %v420
  %v4634 = vunpack.c.l.b16 %v422
  %v4635 = vunpack.c.l.b16 %v423
  %v4636 = vunpack.c.l.b16 %v425
  %v4637 = vunpack.c.l.b16 %v426
  %v4638 = vunpack.c.l.b16 %v428
  %v4639 = vunpack.c.l.b16 %v429
  %v4640 = vunpack.c.l.b16 %v431
  %v4641 = vunpack.c.l.b16 %v432
  %v4642 = vunpack.c.l.b16 %v434
  %v4643 = vunpack.c.l.b16 %v435
  %v4644 = vunpack.c.l.b16 %v437
  %v4645 = vunpack.c.l.b16 %v438
  %v4646 = vunpack.c.l.b16 %v440
  %v4647 = vunpack.c.l.b16 %v441
  %v4648 = vunpack.c.l.b16 %v443
  %v4649 = vunpack.c.l.b16 %v444
  %v4650 = vunpack.c.l.b16 %v446
  %v4651 = vunpack.c.l.b16 %v447
  %v4652 = vunpack.c.l.b16 %v449
  %v4653 = vunpack.c.l.b16 %v450
  %v4654 = vunpack.c.l.b16 %v452
  %v4655 = vunpack.c.l.b16 %v453
  %v4656 = vunpack.c.l.b16 %v455
  %v4657 = vunpack.c.l.b16 %v456
  %v4658 = vpack.c.b16 %v4595, %v4594
  %v4659 = vpack.c.b16 %v4597, %v4596
  %v4660 = vpack.c.b16 %v4599, %v4598
  %v4661 = vpack.c.b16 %v4601, %v4600
  %v4662 = vpack.c.b16 %v4603, %v4602
  %v4663 = vpack.c.b16 %v4605, %v4604
  %v4664 = vpack.c.b16 %v4607, %v4606
  %v4665 = vpack.c.b16 %v4609, %v4608
  %v4666 = vpack.c.b16 %v4611, %v4610
  %v4667 = vpack.c.b16 %v4613, %v4612
  %v4668 = vpack.c.b16 %v4615, %v4614
  %v4669 = vpack.c.b16 %v4617, %v4616
  %v4670 = vpack.c.b16 %v4619, %v4618
  %v4671 = vpack.c.b16 %v4621, %v4620
  %v4672 = vpack.c.b16 %v4623, %v4622
  %v4673 = vpack.c.b16 %v4625, %v4624
  %v4674 = vpack.c.b16 %v4627, %v4626
  %v4675 = vpack.c.b16 %v4629, %v4628
  %v4676 = vpack.c.b16 %v4631, %v4630
  %v4677 = vpack.c.b16 %v4633, %v4632
  %v4678 = vpack.c.b16 %v4635, %v4634
  %v4679 = vpack.c.b16 %v4637, %v4636
  %v4680 = vpack.c.b16 %v4639, %v4638
  %v4681 = vpack.c.b16 %v4641, %v4640
  %v4682 = vpack.c.b16 %v4643, %v4642
  %v4683 = vpack.c.b16 %v4645, %v4644
  %v4684 = vpack.c.b16 %v4647, %v4646
  %v4685 = vpack.c.b16 %v4649, %v4648
  %v4686 = vpack.c.b16 %v4651, %v4650
  %v4687 = vpack.c.b16 %v4653, %v4652
  %v4688 = vpack.c.b16 %v4655, %v4654
  %v4689 = vpack.c.b16 %v4657, %v4656
  %v4691 = vsel %vm4285, %v4526, 0
  %v4694 = vsel %vm4285, %v4527, 0
  %v4697 = vsel %vm4285, %v4528, 0
  %v4700 = vsel %vm4285, %v4529, 0
  %v4703 = vsel %vm4285, %v4658, 0
  %v4706 = vsel %vm4285, %v4659, 0
  %v4709 = vsel %vm4285, %v4660, 0
  %v4712 = vsel %vm4285, %v4661, 0
  %v4715 = vsel %vm4285, %v4662, 0
  %v4718 = vsel %vm4285, %v4663, 0
  %v4721 = vsel %vm4285, %v4664, 0
  %v4724 = vsel %vm4285, %v4665, 0
  %v4727 = vsel %vm4285, %v4666, 0
  %v4730 = vsel %vm4285, %v4667, 0
  %v4733 = vsel %vm4285, %v4668, 0
  %v4736 = vsel %vm4285, %v4669, 0
  %v4739 = vsel %vm4285, %v4670, 0
  %v4742 = vsel %vm4285, %v4671, 0
  %v4745 = vsel %vm4285, %v4672, 0
  %v4748 = vsel %vm4285, %v4673, 0
  %v4751 = vsel %vm4285, %v4674, 0
  %v4754 = vsel %vm4285, %v4675, 0
  %v4757 = vsel %vm4285, %v4676, 0
  %v4760 = vsel %vm4285, %v4677, 0
  %v4763 = vsel %vm4285, %v4678, 0
  %v4766 = vsel %vm4285, %v4679, 0
  %v4769 = vsel %vm4285, %v4680, 0
  %v4772 = vsel %vm4285, %v4681, 0
  %v4775 = vsel %vm4285, %v4682, 0
  %v4778 = vsel %vm4285, %v4683, 0
  %v4781 = vsel %vm4285, %v4684, 0
  %v4784 = vsel %vm4285, %v4685, 0
  %v4787 = vsel %vm4285, %v4686, 0
  %v4790 = vsel %vm4285, %v4687, 0
  %v4793 = vsel %vm4285, %v4688, 0
  %v4796 = vsel %vm4285, %v4689, 0
  %4798 = vmatpush.bf16.xpose.msra.mxu0 %v4724
  %4799 = vmatpush.bf16.xpose.msra.mxu0 %v4721
  %4800 = vmatpush.bf16.xpose.msra.mxu0 %v4718
  %4801 = vmatpush.bf16.xpose.msra.mxu0 %v4715
  %4802 = vmatpush.bf16.xpose.msra.mxu0 %v4712
  %4803 = vmatpush.bf16.xpose.msra.mxu0 %v4709
  %4804 = vmatpush.bf16.xpose.msra.mxu0 %v4706
  %4805 = vmatpush.bf16.xpose.msra.mxu0 %v4703
  %4806 = vmatmul.bf16.gmra.mxu0 %v4691
  %v4807 = vpop.f32.mrf.mxu0
  %v4808 = vadd.f32 %v4404, %v4807
  %v4809 = vpop.f32.mrf.mxu0
  %v4810 = vadd.f32 %v4406, %v4809
  %4811 = vmatmul.bf16.gmra.mxu0 %v4694
  %v4812 = vpop.f32.mrf.mxu0
  %v4813 = vadd.f32 %v4409, %v4812
  %v4814 = vpop.f32.mrf.mxu0
  %v4815 = vadd.f32 %v4411, %v4814
  %4816 = vmatmul.bf16.gmra.mxu0 %v4697
  %v4817 = vpop.f32.mrf.mxu0
  %v4818 = vadd.f32 %v4414, %v4817
  %v4819 = vpop.f32.mrf.mxu0
  %v4820 = vadd.f32 %v4416, %v4819
  %4821 = vmatmul.bf16.gmra.mxu0 %v4700
  %v4822 = vpop.f32.mrf.mxu0
  %v4823 = vadd.f32 %v4419, %v4822
  %v4824 = vpop.f32.mrf.mxu0
  %v4825 = vadd.f32 %v4421, %v4824
  %4826 = vdwg.mxu0
  %4827 = vmatpush.bf16.xpose.msra.mxu0 %v4748
  %4828 = vmatpush.bf16.xpose.msra.mxu0 %v4745
  %4829 = vmatpush.bf16.xpose.msra.mxu0 %v4742
  %4830 = vmatpush.bf16.xpose.msra.mxu0 %v4739
  %4831 = vmatpush.bf16.xpose.msra.mxu0 %v4736
  %4832 = vmatpush.bf16.xpose.msra.mxu0 %v4733
  %4833 = vmatpush.bf16.xpose.msra.mxu0 %v4730
  %4834 = vmatpush.bf16.xpose.msra.mxu0 %v4727
  %4835 = vmatmul.bf16.gmra.mxu0 %v4691
  %v4836 = vpop.f32.mrf.mxu0
  %v4837 = vadd.f32 %v4433, %v4836
  %v4838 = vpop.f32.mrf.mxu0
  %v4839 = vadd.f32 %v4435, %v4838
  %4840 = vmatmul.bf16.gmra.mxu0 %v4694
  %v4841 = vpop.f32.mrf.mxu0
  %v4842 = vadd.f32 %v4438, %v4841
  %v4843 = vpop.f32.mrf.mxu0
  %v4844 = vadd.f32 %v4440, %v4843
  %4845 = vmatmul.bf16.gmra.mxu0 %v4697
  %v4846 = vpop.f32.mrf.mxu0
  %v4847 = vadd.f32 %v4443, %v4846
  %v4848 = vpop.f32.mrf.mxu0
  %v4849 = vadd.f32 %v4445, %v4848
  %4850 = vmatmul.bf16.gmra.mxu0 %v4700
  %v4851 = vpop.f32.mrf.mxu0
  %v4852 = vadd.f32 %v4448, %v4851
  %v4853 = vpop.f32.mrf.mxu0
  %v4854 = vadd.f32 %v4450, %v4853
  %4855 = vdwg.mxu0
  %4856 = vmatpush.bf16.xpose.msra.mxu0 %v4772
  %4857 = vmatpush.bf16.xpose.msra.mxu0 %v4769
  %4858 = vmatpush.bf16.xpose.msra.mxu0 %v4766
  %4859 = vmatpush.bf16.xpose.msra.mxu0 %v4763
  %4860 = vmatpush.bf16.xpose.msra.mxu0 %v4760
  %4861 = vmatpush.bf16.xpose.msra.mxu0 %v4757
  %4862 = vmatpush.bf16.xpose.msra.mxu0 %v4754
  %4863 = vmatpush.bf16.xpose.msra.mxu0 %v4751
  %4864 = vmatmul.bf16.gmra.mxu0 %v4691
  %v4865 = vpop.f32.mrf.mxu0
  %v4866 = vadd.f32 %v4462, %v4865
  %v4867 = vpop.f32.mrf.mxu0
  %v4868 = vadd.f32 %v4464, %v4867
  %4869 = vmatmul.bf16.gmra.mxu0 %v4694
  %v4870 = vpop.f32.mrf.mxu0
  %v4871 = vadd.f32 %v4467, %v4870
  %v4872 = vpop.f32.mrf.mxu0
  %v4873 = vadd.f32 %v4469, %v4872
  %4874 = vmatmul.bf16.gmra.mxu0 %v4697
  %v4875 = vpop.f32.mrf.mxu0
  %v4876 = vadd.f32 %v4472, %v4875
  %v4877 = vpop.f32.mrf.mxu0
  %v4878 = vadd.f32 %v4474, %v4877
  %4879 = vmatmul.bf16.gmra.mxu0 %v4700
  %v4880 = vpop.f32.mrf.mxu0
  %v4881 = vadd.f32 %v4477, %v4880
  %v4882 = vpop.f32.mrf.mxu0
  %v4883 = vadd.f32 %v4479, %v4882
  %4884 = vdwg.mxu0
  %4885 = vmatpush.bf16.xpose.msra.mxu0 %v4796
  %4886 = vmatpush.bf16.xpose.msra.mxu0 %v4793
  %4887 = vmatpush.bf16.xpose.msra.mxu0 %v4790
  %4888 = vmatpush.bf16.xpose.msra.mxu0 %v4787
  %4889 = vmatpush.bf16.xpose.msra.mxu0 %v4784
  %4890 = vmatpush.bf16.xpose.msra.mxu0 %v4781
  %4891 = vmatpush.bf16.xpose.msra.mxu0 %v4778
  %4892 = vmatpush.bf16.xpose.msra.mxu0 %v4775
  %4893 = vmatmul.bf16.gmra.mxu0 %v4691
  %v4894 = vpop.f32.mrf.mxu0
  %v4895 = vadd.f32 %v4491, %v4894
  %v4896 = vpop.f32.mrf.mxu0
  %v4897 = vadd.f32 %v4493, %v4896
  %4898 = vmatmul.bf16.gmra.mxu0 %v4694
  %v4899 = vpop.f32.mrf.mxu0
  %v4900 = vadd.f32 %v4496, %v4899
  %v4901 = vpop.f32.mrf.mxu0
  %v4902 = vadd.f32 %v4498, %v4901
  %4903 = vmatmul.bf16.gmra.mxu0 %v4697
  %v4904 = vpop.f32.mrf.mxu0
  %v4905 = vadd.f32 %v4501, %v4904
  %v4906 = vpop.f32.mrf.mxu0
  %v4907 = vadd.f32 %v4503, %v4906
  %4908 = vmatmul.bf16.gmra.mxu0 %v4700
  %v4909 = vpop.f32.mrf.mxu0
  %v4910 = vadd.f32 %v4506, %v4909
  %v4911 = vpop.f32.mrf.mxu0
  %v4912 = vadd.f32 %v4508, %v4911
  %4913 = vdwg.mxu0
  %v4946 = vrot.slane %v356, 5
  %v4947 = vrot.slane %v4946, 4
  %v4948 = vrot.slane %v357, 5
  %v4949 = vsel %vm1911, %v4947, %v4948
  %v4950 = vrot.slane %v4948, 4
  %v4951 = vrot.slane %v358, 5
  %v4952 = vsel %vm1911, %v4950, %v4951
  %v4953 = vrot.slane %v359, 5
  %v4954 = vrot.slane %v4953, 4
  %v4955 = vrot.slane %v360, 5
  %v4956 = vsel %vm1911, %v4954, %v4955
  %v4957 = vrot.slane %v4955, 4
  %v4958 = vrot.slane %v361, 5
  %v4959 = vsel %vm1911, %v4957, %v4958
  %v4960 = vrot.slane %v362, 5
  %v4961 = vrot.slane %v4960, 4
  %v4962 = vrot.slane %v363, 5
  %v4963 = vsel %vm1911, %v4961, %v4962
  %v4964 = vrot.slane %v4962, 4
  %v4965 = vrot.slane %v364, 5
  %v4966 = vsel %vm1911, %v4964, %v4965
  %v4967 = vrot.slane %v365, 5
  %v4968 = vrot.slane %v4967, 4
  %v4969 = vrot.slane %v366, 5
  %v4970 = vsel %vm1911, %v4968, %v4969
  %v4971 = vrot.slane %v4969, 4
  %v4972 = vrot.slane %v367, 5
  %v4973 = vsel %vm1911, %v4971, %v4972
  %v4974 = vrot.slane %v368, 5
  %v4975 = vrot.slane %v4974, 4
  %v4976 = vrot.slane %v369, 5
  %v4977 = vsel %vm1911, %v4975, %v4976
  %v4978 = vrot.slane %v4976, 4
  %v4979 = vrot.slane %v370, 5
  %v4980 = vsel %vm1911, %v4978, %v4979
  %v4981 = vrot.slane %v371, 5
  %v4982 = vrot.slane %v4981, 4
  %v4983 = vrot.slane %v372, 5
  %v4984 = vsel %vm1911, %v4982, %v4983
  %v4985 = vrot.slane %v4983, 4
  %v4986 = vrot.slane %v373, 5
  %v4987 = vsel %vm1911, %v4985, %v4986
  %v4988 = vrot.slane %v374, 5
  %v4989 = vrot.slane %v4988, 4
  %v4990 = vrot.slane %v375, 5
  %v4991 = vsel %vm1911, %v4989, %v4990
  %v4992 = vrot.slane %v4990, 4
  %v4993 = vrot.slane %v376, 5
  %v4994 = vsel %vm1911, %v4992, %v4993
  %v4995 = vrot.slane %v377, 5
  %v4996 = vrot.slane %v4995, 4
  %v4997 = vrot.slane %v378, 5
  %v4998 = vsel %vm1911, %v4996, %v4997
  %v4999 = vrot.slane %v4997, 4
  %v5000 = vrot.slane %v379, 5
  %v5001 = vsel %vm1911, %v4999, %v5000
  %v5002 = vrot.slane %v380, 5
  %v5003 = vrot.slane %v5002, 4
  %v5004 = vrot.slane %v381, 5
  %v5005 = vsel %vm1911, %v5003, %v5004
  %v5006 = vrot.slane %v5004, 4
  %v5007 = vrot.slane %v382, 5
  %v5008 = vsel %vm1911, %v5006, %v5007
  %v5009 = vrot.slane %v383, 5
  %v5010 = vrot.slane %v5009, 4
  %v5011 = vrot.slane %v384, 5
  %v5012 = vsel %vm1911, %v5010, %v5011
  %v5013 = vrot.slane %v5011, 4
  %v5014 = vrot.slane %v385, 5
  %v5015 = vsel %vm1911, %v5013, %v5014
  %v5016 = vrot.slane %v386, 5
  %v5017 = vrot.slane %v5016, 4
  %v5018 = vrot.slane %v387, 5
  %v5019 = vsel %vm1911, %v5017, %v5018
  %v5020 = vrot.slane %v5018, 4
  %v5021 = vrot.slane %v388, 5
  %v5022 = vsel %vm1911, %v5020, %v5021
  %v5023 = vrot.slane %v389, 5
  %v5024 = vrot.slane %v5023, 4
  %v5025 = vrot.slane %v390, 5
  %v5026 = vsel %vm1911, %v5024, %v5025
  %v5027 = vrot.slane %v5025, 4
  %v5028 = vrot.slane %v391, 5
  %v5029 = vsel %vm1911, %v5027, %v5028
  %v5030 = vrot.slane %v392, 5
  %v5031 = vrot.slane %v5030, 4
  %v5032 = vrot.slane %v393, 5
  %v5033 = vsel %vm1911, %v5031, %v5032
  %v5034 = vrot.slane %v5032, 4
  %v5035 = vrot.slane %v394, 5
  %v5036 = vsel %vm1911, %v5034, %v5035
  %v5037 = vrot.slane %v395, 5
  %v5038 = vrot.slane %v5037, 4
  %v5039 = vrot.slane %v396, 5
  %v5040 = vsel %vm1911, %v5038, %v5039
  %v5041 = vrot.slane %v5039, 4
  %v5042 = vrot.slane %v397, 5
  %v5043 = vsel %vm1911, %v5041, %v5042
  %v5044 = vrot.slane %v398, 5
  %v5045 = vrot.slane %v5044, 4
  %v5046 = vrot.slane %v399, 5
  %v5047 = vsel %vm1911, %v5045, %v5046
  %v5048 = vrot.slane %v5046, 4
  %v5049 = vrot.slane %v400, 5
  %v5050 = vsel %vm1911, %v5048, %v5049
  %v5051 = vrot.slane %v401, 5
  %v5052 = vrot.slane %v5051, 4
  %v5053 = vrot.slane %v402, 5
  %v5054 = vsel %vm1911, %v5052, %v5053
  %v5055 = vrot.slane %v5053, 4
  %v5056 = vrot.slane %v403, 5
  %v5057 = vsel %vm1911, %v5055, %v5056
  %v5058 = vrot.slane %v410, 5
  %v5059 = vrot.slane %v5058, 4
  %v5060 = vrot.slane %v411, 5
  %v5061 = vsel %vm1911, %v5059, %v5060
  %v5062 = vrot.slane %v5060, 4
  %v5063 = vrot.slane %v412, 5
  %v5064 = vsel %vm1911, %v5062, %v5063
  %v5065 = vrot.slane %v413, 5
  %v5066 = vrot.slane %v5065, 4
  %v5067 = vrot.slane %v414, 5
  %v5068 = vsel %vm1911, %v5066, %v5067
  %v5069 = vrot.slane %v5067, 4
  %v5070 = vrot.slane %v415, 5
  %v5071 = vsel %vm1911, %v5069, %v5070
  %v5072 = vrot.slane %v416, 5
  %v5073 = vrot.slane %v5072, 4
  %v5074 = vrot.slane %v417, 5
  %v5075 = vsel %vm1911, %v5073, %v5074
  %v5076 = vrot.slane %v5074, 4
  %v5077 = vrot.slane %v418, 5
  %v5078 = vsel %vm1911, %v5076, %v5077
  %v5079 = vrot.slane %v419, 5
  %v5080 = vrot.slane %v5079, 4
  %v5081 = vrot.slane %v420, 5
  %v5082 = vsel %vm1911, %v5080, %v5081
  %v5083 = vrot.slane %v5081, 4
  %v5084 = vrot.slane %v421, 5
  %v5085 = vsel %vm1911, %v5083, %v5084
  %v5086 = vrot.slane %v422, 5
  %v5087 = vrot.slane %v5086, 4
  %v5088 = vrot.slane %v423, 5
  %v5089 = vsel %vm1911, %v5087, %v5088
  %v5090 = vrot.slane %v5088, 4
  %v5091 = vrot.slane %v424, 5
  %v5092 = vsel %vm1911, %v5090, %v5091
  %v5093 = vrot.slane %v425, 5
  %v5094 = vrot.slane %v5093, 4
  %v5095 = vrot.slane %v426, 5
  %v5096 = vsel %vm1911, %v5094, %v5095
  %v5097 = vrot.slane %v5095, 4
  %v5098 = vrot.slane %v427, 5
  %v5099 = vsel %vm1911, %v5097, %v5098
  %v5100 = vrot.slane %v428, 5
  %v5101 = vrot.slane %v5100, 4
  %v5102 = vrot.slane %v429, 5
  %v5103 = vsel %vm1911, %v5101, %v5102
  %v5104 = vrot.slane %v5102, 4
  %v5105 = vrot.slane %v430, 5
  %v5106 = vsel %vm1911, %v5104, %v5105
  %v5107 = vrot.slane %v431, 5
  %v5108 = vrot.slane %v5107, 4
  %v5109 = vrot.slane %v432, 5
  %v5110 = vsel %vm1911, %v5108, %v5109
  %v5111 = vrot.slane %v5109, 4
  %v5112 = vrot.slane %v433, 5
  %v5113 = vsel %vm1911, %v5111, %v5112
  %v5114 = vrot.slane %v434, 5
  %v5115 = vrot.slane %v5114, 4
  %v5116 = vrot.slane %v435, 5
  %v5117 = vsel %vm1911, %v5115, %v5116
  %v5118 = vrot.slane %v5116, 4
  %v5119 = vrot.slane %v436, 5
  %v5120 = vsel %vm1911, %v5118, %v5119
  %v5121 = vrot.slane %v437, 5
  %v5122 = vrot.slane %v5121, 4
  %v5123 = vrot.slane %v438, 5
  %v5124 = vsel %vm1911, %v5122, %v5123
  %v5125 = vrot.slane %v5123, 4
  %v5126 = vrot.slane %v439, 5
  %v5127 = vsel %vm1911, %v5125, %v5126
  %v5128 = vrot.slane %v440, 5
  %v5129 = vrot.slane %v5128, 4
  %v5130 = vrot.slane %v441, 5
  %v5131 = vsel %vm1911, %v5129, %v5130
  %v5132 = vrot.slane %v5130, 4
  %v5133 = vrot.slane %v442, 5
  %v5134 = vsel %vm1911, %v5132, %v5133
  %v5135 = vrot.slane %v443, 5
  %v5136 = vrot.slane %v5135, 4
  %v5137 = vrot.slane %v444, 5
  %v5138 = vsel %vm1911, %v5136, %v5137
  %v5139 = vrot.slane %v5137, 4
  %v5140 = vrot.slane %v445, 5
  %v5141 = vsel %vm1911, %v5139, %v5140
  %v5142 = vrot.slane %v446, 5
  %v5143 = vrot.slane %v5142, 4
  %v5144 = vrot.slane %v447, 5
  %v5145 = vsel %vm1911, %v5143, %v5144
  %v5146 = vrot.slane %v5144, 4
  %v5147 = vrot.slane %v448, 5
  %v5148 = vsel %vm1911, %v5146, %v5147
  %v5149 = vrot.slane %v449, 5
  %v5150 = vrot.slane %v5149, 4
  %v5151 = vrot.slane %v450, 5
  %v5152 = vsel %vm1911, %v5150, %v5151
  %v5153 = vrot.slane %v5151, 4
  %v5154 = vrot.slane %v451, 5
  %v5155 = vsel %vm1911, %v5153, %v5154
  %v5156 = vrot.slane %v452, 5
  %v5157 = vrot.slane %v5156, 4
  %v5158 = vrot.slane %v453, 5
  %v5159 = vsel %vm1911, %v5157, %v5158
  %v5160 = vrot.slane %v5158, 4
  %v5161 = vrot.slane %v454, 5
  %v5162 = vsel %vm1911, %v5160, %v5161
  %v5163 = vrot.slane %v455, 5
  %v5164 = vrot.slane %v5163, 4
  %v5165 = vrot.slane %v456, 5
  %v5166 = vsel %vm1911, %v5164, %v5165
  %v5167 = vrot.slane %v5165, 4
  %v5168 = vrot.slane %v457, 5
  %v5169 = vsel %vm1911, %v5167, %v5168
  %s5170 = scalar_lea.vmem %s4, 64
  %v5171 = vld [vmem:[%s5170] sm:$0xf]
  %v5172 = vld [vmem:[%s5170 + $0x4] sm:$0xf]
  %v5173 = vld [vmem:[%s5170 + $0x8] sm:$0xf]
  %v5174 = vld [vmem:[%s5170 + $0xc] sm:$0xf]
  %v5175 = vld [vmem:[%s5170 + $0x10] sm:$0xf]
  %v5176 = vld [vmem:[%s5170 + $0x14] sm:$0xf]
  %v5177 = vld [vmem:[%s5170 + $0x18] sm:$0xf]
  %v5178 = vld [vmem:[%s5170 + $0x1c] sm:$0xf]
  %v5187 = vunpack.c.l.b16 %v5171
  %v5188 = vunpack.c.l.b16 %v5172
  %v5189 = vunpack.c.l.b16 %v5173
  %v5190 = vunpack.c.l.b16 %v5174
  %v5191 = vunpack.c.l.b16 %v5175
  %v5192 = vunpack.c.l.b16 %v5176
  %v5193 = vunpack.c.l.b16 %v5177
  %v5194 = vunpack.c.l.b16 %v5178
  %v5195 = vpack.c.b16 %v5188, %v5187
  %v5196 = vpack.c.b16 %v5190, %v5189
  %v5197 = vpack.c.b16 %v5192, %v5191
  %v5198 = vpack.c.b16 %v5194, %v5193
  %v5199 = vunpack.c.l.b16 %v4949
  %v5200 = vunpack.c.l.b16 %v4952
  %v5201 = vunpack.c.l.b16 %v4956
  %v5202 = vunpack.c.l.b16 %v4959
  %v5203 = vunpack.c.l.b16 %v4963
  %v5204 = vunpack.c.l.b16 %v4966
  %v5205 = vunpack.c.l.b16 %v4970
  %v5206 = vunpack.c.l.b16 %v4973
  %v5207 = vunpack.c.l.b16 %v4977
  %v5208 = vunpack.c.l.b16 %v4980
  %v5209 = vunpack.c.l.b16 %v4984
  %v5210 = vunpack.c.l.b16 %v4987
  %v5211 = vunpack.c.l.b16 %v4991
  %v5212 = vunpack.c.l.b16 %v4994
  %v5213 = vunpack.c.l.b16 %v4998
  %v5214 = vunpack.c.l.b16 %v5001
  %v5215 = vunpack.c.l.b16 %v5005
  %v5216 = vunpack.c.l.b16 %v5008
  %v5217 = vunpack.c.l.b16 %v5012
  %v5218 = vunpack.c.l.b16 %v5015
  %v5219 = vunpack.c.l.b16 %v5019
  %v5220 = vunpack.c.l.b16 %v5022
  %v5221 = vunpack.c.l.b16 %v5026
  %v5222 = vunpack.c.l.b16 %v5029
  %v5223 = vunpack.c.l.b16 %v5033
  %v5224 = vunpack.c.l.b16 %v5036
  %v5225 = vunpack.c.l.b16 %v5040
  %v5226 = vunpack.c.l.b16 %v5043
  %v5227 = vunpack.c.l.b16 %v5047
  %v5228 = vunpack.c.l.b16 %v5050
  %v5229 = vunpack.c.l.b16 %v5054
  %v5230 = vunpack.c.l.b16 %v5057
  %v5231 = vunpack.c.l.b16 %v5061
  %v5232 = vunpack.c.l.b16 %v5064
  %v5233 = vunpack.c.l.b16 %v5068
  %v5234 = vunpack.c.l.b16 %v5071
  %v5235 = vunpack.c.l.b16 %v5075
  %v5236 = vunpack.c.l.b16 %v5078
  %v5237 = vunpack.c.l.b16 %v5082
  %v5238 = vunpack.c.l.b16 %v5085
  %v5239 = vunpack.c.l.b16 %v5089
  %v5240 = vunpack.c.l.b16 %v5092
  %v5241 = vunpack.c.l.b16 %v5096
  %v5242 = vunpack.c.l.b16 %v5099
  %v5243 = vunpack.c.l.b16 %v5103
  %v5244 = vunpack.c.l.b16 %v5106
  %v5245 = vunpack.c.l.b16 %v5110
  %v5246 = vunpack.c.l.b16 %v5113
  %v5247 = vunpack.c.l.b16 %v5117
  %v5248 = vunpack.c.l.b16 %v5120
  %v5249 = vunpack.c.l.b16 %v5124
  %v5250 = vunpack.c.l.b16 %v5127
  %v5251 = vunpack.c.l.b16 %v5131
  %v5252 = vunpack.c.l.b16 %v5134
  %v5253 = vunpack.c.l.b16 %v5138
  %v5254 = vunpack.c.l.b16 %v5141
  %v5255 = vunpack.c.l.b16 %v5145
  %v5256 = vunpack.c.l.b16 %v5148
  %v5257 = vunpack.c.l.b16 %v5152
  %v5258 = vunpack.c.l.b16 %v5155
  %v5259 = vunpack.c.l.b16 %v5159
  %v5260 = vunpack.c.l.b16 %v5162
  %v5261 = vunpack.c.l.b16 %v5166
  %v5262 = vunpack.c.l.b16 %v5169
  %v5263 = vpack.c.b16 %v5200, %v5199
  %v5264 = vpack.c.b16 %v5202, %v5201
  %v5265 = vpack.c.b16 %v5204, %v5203
  %v5266 = vpack.c.b16 %v5206, %v5205
  %v5267 = vpack.c.b16 %v5208, %v5207
  %v5268 = vpack.c.b16 %v5210, %v5209
  %v5269 = vpack.c.b16 %v5212, %v5211
  %v5270 = vpack.c.b16 %v5214, %v5213
  %v5271 = vpack.c.b16 %v5216, %v5215
  %v5272 = vpack.c.b16 %v5218, %v5217
  %v5273 = vpack.c.b16 %v5220, %v5219
  %v5274 = vpack.c.b16 %v5222, %v5221
  %v5275 = vpack.c.b16 %v5224, %v5223
  %v5276 = vpack.c.b16 %v5226, %v5225
  %v5277 = vpack.c.b16 %v5228, %v5227
  %v5278 = vpack.c.b16 %v5230, %v5229
  %v5279 = vpack.c.b16 %v5232, %v5231
  %v5280 = vpack.c.b16 %v5234, %v5233
  %v5281 = vpack.c.b16 %v5236, %v5235
  %v5282 = vpack.c.b16 %v5238, %v5237
  %v5283 = vpack.c.b16 %v5240, %v5239
  %v5284 = vpack.c.b16 %v5242, %v5241
  %v5285 = vpack.c.b16 %v5244, %v5243
  %v5286 = vpack.c.b16 %v5246, %v5245
  %v5287 = vpack.c.b16 %v5248, %v5247
  %v5288 = vpack.c.b16 %v5250, %v5249
  %v5289 = vpack.c.b16 %v5252, %v5251
  %v5290 = vpack.c.b16 %v5254, %v5253
  %v5291 = vpack.c.b16 %v5256, %v5255
  %v5292 = vpack.c.b16 %v5258, %v5257
  %v5293 = vpack.c.b16 %v5260, %v5259
  %v5294 = vpack.c.b16 %v5262, %v5261
  %v5296 = vsel %vm4285, %v5195, 0
  %v5299 = vsel %vm4285, %v5196, 0
  %v5302 = vsel %vm4285, %v5197, 0
  %v5305 = vsel %vm4285, %v5198, 0
  %v5308 = vsel %vm4285, %v5263, 0
  %v5311 = vsel %vm4285, %v5264, 0
  %v5314 = vsel %vm4285, %v5265, 0
  %v5317 = vsel %vm4285, %v5266, 0
  %v5320 = vsel %vm4285, %v5267, 0
  %v5323 = vsel %vm4285, %v5268, 0
  %v5326 = vsel %vm4285, %v5269, 0
  %v5329 = vsel %vm4285, %v5270, 0
  %v5332 = vsel %vm4285, %v5271, 0
  %v5335 = vsel %vm4285, %v5272, 0
  %v5338 = vsel %vm4285, %v5273, 0
  %v5341 = vsel %vm4285, %v5274, 0
  %v5344 = vsel %vm4285, %v5275, 0
  %v5347 = vsel %vm4285, %v5276, 0
  %v5350 = vsel %vm4285, %v5277, 0
  %v5353 = vsel %vm4285, %v5278, 0
  %v5356 = vsel %vm4285, %v5279, 0
  %v5359 = vsel %vm4285, %v5280, 0
  %v5362 = vsel %vm4285, %v5281, 0
  %v5365 = vsel %vm4285, %v5282, 0
  %v5368 = vsel %vm4285, %v5283, 0
  %v5371 = vsel %vm4285, %v5284, 0
  %v5374 = vsel %vm4285, %v5285, 0
  %v5377 = vsel %vm4285, %v5286, 0
  %v5380 = vsel %vm4285, %v5287, 0
  %v5383 = vsel %vm4285, %v5288, 0
  %v5386 = vsel %vm4285, %v5289, 0
  %v5389 = vsel %vm4285, %v5290, 0
  %v5392 = vsel %vm4285, %v5291, 0
  %v5395 = vsel %vm4285, %v5292, 0
  %v5398 = vsel %vm4285, %v5293, 0
  %v5401 = vsel %vm4285, %v5294, 0
  %5403 = vmatpush.bf16.xpose.msra.mxu0 %v5329
  %5404 = vmatpush.bf16.xpose.msra.mxu0 %v5326
  %5405 = vmatpush.bf16.xpose.msra.mxu0 %v5323
  %5406 = vmatpush.bf16.xpose.msra.mxu0 %v5320
  %5407 = vmatpush.bf16.xpose.msra.mxu0 %v5317
  %5408 = vmatpush.bf16.xpose.msra.mxu0 %v5314
  %5409 = vmatpush.bf16.xpose.msra.mxu0 %v5311
  %5410 = vmatpush.bf16.xpose.msra.mxu0 %v5308
  %5411 = vmatmul.bf16.gmra.mxu0 %v5296
  %v5412 = vpop.f32.mrf.mxu0
  %v5413 = vadd.f32 0.0, %v5412
  %v5414 = vpop.f32.mrf.mxu0
  %v5415 = vadd.f32 0.0, %v5414
  %5416 = vmatmul.bf16.gmra.mxu0 %v5299
  %v5417 = vpop.f32.mrf.mxu0
  %v5418 = vadd.f32 0.0, %v5417
  %v5419 = vpop.f32.mrf.mxu0
  %v5420 = vadd.f32 0.0, %v5419
  %5421 = vmatmul.bf16.gmra.mxu0 %v5302
  %v5422 = vpop.f32.mrf.mxu0
  %v5423 = vadd.f32 0.0, %v5422
  %v5424 = vpop.f32.mrf.mxu0
  %v5425 = vadd.f32 0.0, %v5424
  %5426 = vmatmul.bf16.gmra.mxu0 %v5305
  %v5427 = vpop.f32.mrf.mxu0
  %v5428 = vadd.f32 0.0, %v5427
  %v5429 = vpop.f32.mrf.mxu0
  %v5430 = vadd.f32 0.0, %v5429
  %5431 = vdwg.mxu0
  %5432 = vmatpush.bf16.xpose.msra.mxu0 %v5353
  %5433 = vmatpush.bf16.xpose.msra.mxu0 %v5350
  %5434 = vmatpush.bf16.xpose.msra.mxu0 %v5347
  %5435 = vmatpush.bf16.xpose.msra.mxu0 %v5344
  %5436 = vmatpush.bf16.xpose.msra.mxu0 %v5341
  %5437 = vmatpush.bf16.xpose.msra.mxu0 %v5338
  %5438 = vmatpush.bf16.xpose.msra.mxu0 %v5335
  %5439 = vmatpush.bf16.xpose.msra.mxu0 %v5332
  %5440 = vmatmul.bf16.gmra.mxu0 %v5296
  %v5441 = vpop.f32.mrf.mxu0
  %v5442 = vadd.f32 0.0, %v5441
  %v5443 = vpop.f32.mrf.mxu0
  %v5444 = vadd.f32 0.0, %v5443
  %5445 = vmatmul.bf16.gmra.mxu0 %v5299
  %v5446 = vpop.f32.mrf.mxu0
  %v5447 = vadd.f32 0.0, %v5446
  %v5448 = vpop.f32.mrf.mxu0
  %v5449 = vadd.f32 0.0, %v5448
  %5450 = vmatmul.bf16.gmra.mxu0 %v5302
  %v5451 = vpop.f32.mrf.mxu0
  %v5452 = vadd.f32 0.0, %v5451
  %v5453 = vpop.f32.mrf.mxu0
  %v5454 = vadd.f32 0.0, %v5453
  %5455 = vmatmul.bf16.gmra.mxu0 %v5305
  %v5456 = vpop.f32.mrf.mxu0
  %v5457 = vadd.f32 0.0, %v5456
  %v5458 = vpop.f32.mrf.mxu0
  %v5459 = vadd.f32 0.0, %v5458
  %5460 = vdwg.mxu0
  %5461 = vmatpush.bf16.xpose.msra.mxu0 %v5377
  %5462 = vmatpush.bf16.xpose.msra.mxu0 %v5374
  %5463 = vmatpush.bf16.xpose.msra.mxu0 %v5371
  %5464 = vmatpush.bf16.xpose.msra.mxu0 %v5368
  %5465 = vmatpush.bf16.xpose.msra.mxu0 %v5365
  %5466 = vmatpush.bf16.xpose.msra.mxu0 %v5362
  %5467 = vmatpush.bf16.xpose.msra.mxu0 %v5359
  %5468 = vmatpush.bf16.xpose.msra.mxu0 %v5356
  %5469 = vmatmul.bf16.gmra.mxu0 %v5296
  %v5470 = vpop.f32.mrf.mxu0
  %v5471 = vadd.f32 0.0, %v5470
  %v5472 = vpop.f32.mrf.mxu0
  %v5473 = vadd.f32 0.0, %v5472
  %5474 = vmatmul.bf16.gmra.mxu0 %v5299
  %v5475 = vpop.f32.mrf.mxu0
  %v5476 = vadd.f32 0.0, %v5475
  %v5477 = vpop.f32.mrf.mxu0
  %v5478 = vadd.f32 0.0, %v5477
  %5479 = vmatmul.bf16.gmra.mxu0 %v5302
  %v5480 = vpop.f32.mrf.mxu0
  %v5481 = vadd.f32 0.0, %v5480
  %v5482 = vpop.f32.mrf.mxu0
  %v5483 = vadd.f32 0.0, %v5482
  %5484 = vmatmul.bf16.gmra.mxu0 %v5305
  %v5485 = vpop.f32.mrf.mxu0
  %v5486 = vadd.f32 0.0, %v5485
  %v5487 = vpop.f32.mrf.mxu0
  %v5488 = vadd.f32 0.0, %v5487
  %5489 = vdwg.mxu0
  %5490 = vmatpush.bf16.xpose.msra.mxu0 %v5401
  %5491 = vmatpush.bf16.xpose.msra.mxu0 %v5398
  %5492 = vmatpush.bf16.xpose.msra.mxu0 %v5395
  %5493 = vmatpush.bf16.xpose.msra.mxu0 %v5392
  %5494 = vmatpush.bf16.xpose.msra.mxu0 %v5389
  %5495 = vmatpush.bf16.xpose.msra.mxu0 %v5386
  %5496 = vmatpush.bf16.xpose.msra.mxu0 %v5383
  %5497 = vmatpush.bf16.xpose.msra.mxu0 %v5380
  %5498 = vmatmul.bf16.gmra.mxu0 %v5296
  %v5499 = vpop.f32.mrf.mxu0
  %v5500 = vadd.f32 0.0, %v5499
  %v5501 = vpop.f32.mrf.mxu0
  %v5502 = vadd.f32 0.0, %v5501
  %5503 = vmatmul.bf16.gmra.mxu0 %v5299
  %v5504 = vpop.f32.mrf.mxu0
  %v5505 = vadd.f32 0.0, %v5504
  %v5506 = vpop.f32.mrf.mxu0
  %v5507 = vadd.f32 0.0, %v5506
  %5508 = vmatmul.bf16.gmra.mxu0 %v5302
  %v5509 = vpop.f32.mrf.mxu0
  %v5510 = vadd.f32 0.0, %v5509
  %v5511 = vpop.f32.mrf.mxu0
  %v5512 = vadd.f32 0.0, %v5511
  %5513 = vmatmul.bf16.gmra.mxu0 %v5305
  %v5514 = vpop.f32.mrf.mxu0
  %v5515 = vadd.f32 0.0, %v5514
  %v5516 = vpop.f32.mrf.mxu0
  %v5517 = vadd.f32 0.0, %v5516
  %5518 = vdwg.mxu0
  %v5519 = vadd.f32 %v4808, %v5413
  %v5520 = vadd.f32 %v4837, %v5442
  %v5521 = vadd.f32 %v4866, %v5471
  %v5522 = vadd.f32 %v4895, %v5500
  %v5523 = vadd.f32 %v4810, %v5415
  %v5524 = vadd.f32 %v4839, %v5444
  %v5525 = vadd.f32 %v4868, %v5473
  %v5526 = vadd.f32 %v4897, %v5502
  %v5527 = vadd.f32 %v4813, %v5418
  %v5528 = vadd.f32 %v4842, %v5447
  %v5529 = vadd.f32 %v4871, %v5476
  %v5530 = vadd.f32 %v4900, %v5505
  %v5531 = vadd.f32 %v4815, %v5420
  %v5532 = vadd.f32 %v4844, %v5449
  %v5533 = vadd.f32 %v4873, %v5478
  %v5534 = vadd.f32 %v4902, %v5507
  %v5535 = vadd.f32 %v4818, %v5423
  %v5536 = vadd.f32 %v4847, %v5452
  %v5537 = vadd.f32 %v4876, %v5481
  %v5538 = vadd.f32 %v4905, %v5510
  %v5539 = vadd.f32 %v4820, %v5425
  %v5540 = vadd.f32 %v4849, %v5454
  %v5541 = vadd.f32 %v4878, %v5483
  %v5542 = vadd.f32 %v4907, %v5512
  %v5543 = vadd.f32 %v4823, %v5428
  %v5544 = vadd.f32 %v4852, %v5457
  %v5545 = vadd.f32 %v4881, %v5486
  %v5546 = vadd.f32 %v4910, %v5515
  %v5547 = vadd.f32 %v4825, %v5430
  %v5548 = vadd.f32 %v4854, %v5459
  %v5549 = vadd.f32 %v4883, %v5488
  %v5550 = vadd.f32 %v4912, %v5517
  %s5551 = scalar_lea.vmem %s4, 96
  %v5552 = vld [vmem:[%s5551] sm:$0xf]
  %v5553 = vld [vmem:[%s5551 + $0x4] sm:$0xf]
  %v5554 = vld [vmem:[%s5551 + $0x8] sm:$0xf]
  %v5555 = vld [vmem:[%s5551 + $0xc] sm:$0xf]
  %v5556 = vld [vmem:[%s5551 + $0x10] sm:$0xf]
  %v5557 = vld [vmem:[%s5551 + $0x14] sm:$0xf]
  %v5558 = vld [vmem:[%s5551 + $0x18] sm:$0xf]
  %v5559 = vld [vmem:[%s5551 + $0x1c] sm:$0xf]
  %v5568 = vunpack.c.l.b16 %v5552
  %v5569 = vunpack.c.l.b16 %v5553
  %v5570 = vunpack.c.l.b16 %v5554
  %v5571 = vunpack.c.l.b16 %v5555
  %v5572 = vunpack.c.l.b16 %v5556
  %v5573 = vunpack.c.l.b16 %v5557
  %v5574 = vunpack.c.l.b16 %v5558
  %v5575 = vunpack.c.l.b16 %v5559
  %v5576 = vpack.c.b16 %v5569, %v5568
  %v5577 = vpack.c.b16 %v5571, %v5570
  %v5578 = vpack.c.b16 %v5573, %v5572
  %v5579 = vpack.c.b16 %v5575, %v5574
  %v5584 = vunpack.c.l.b16 %v404
  %v5585 = vunpack.c.l.b16 %v405
  %v5586 = vunpack.c.l.b16 %v458
  %v5587 = vunpack.c.l.b16 %v459
  %v5588 = vpack.c.b16 %v5585, %v5584
  %v5589 = vpack.c.b16 %v5587, %v5586
  %v5591 = vsel %vm4285, %v5576, 0
  %v5594 = vsel %vm4285, %v5577, 0
  %v5597 = vsel %vm4285, %v5578, 0
  %v5600 = vsel %vm4285, %v5579, 0
  %v5603 = vsel %vm4285, %v5588, 0
  %v5606 = vsel %vm4285, %v5589, 0
  %5608 = vmatpush.bf16.xpose.msra.mxu0 %v4727
  %5609 = vmatpush.bf16.xpose.msra.mxu0 %v4724
  %5610 = vmatpush.bf16.xpose.msra.mxu0 %v4721
  %5611 = vmatpush.bf16.xpose.msra.mxu0 %v4718
  %5612 = vmatpush.bf16.xpose.msra.mxu0 %v4715
  %5613 = vmatpush.bf16.xpose.msra.mxu0 %v4712
  %5614 = vmatpush.bf16.xpose.msra.mxu0 %v4709
  %5615 = vmatpush.bf16.xpose.msra.mxu0 %v4706
  %5616 = vmatmul.bf16.gmra.mxu0 %v5591
  %v5617 = vpop.f32.mrf.mxu0
  %v5618 = vadd.f32 0.0, %v5617
  %v5619 = vpop.f32.mrf.mxu0
  %v5620 = vadd.f32 0.0, %v5619
  %5621 = vmatmul.bf16.gmra.mxu0 %v5594
  %v5622 = vpop.f32.mrf.mxu0
  %v5623 = vadd.f32 0.0, %v5622
  %v5624 = vpop.f32.mrf.mxu0
  %v5625 = vadd.f32 0.0, %v5624
  %5626 = vmatmul.bf16.gmra.mxu0 %v5597
  %v5627 = vpop.f32.mrf.mxu0
  %v5628 = vadd.f32 0.0, %v5627
  %v5629 = vpop.f32.mrf.mxu0
  %v5630 = vadd.f32 0.0, %v5629
  %5631 = vmatmul.bf16.gmra.mxu0 %v5600
  %v5632 = vpop.f32.mrf.mxu0
  %v5633 = vadd.f32 0.0, %v5632
  %v5634 = vpop.f32.mrf.mxu0
  %v5635 = vadd.f32 0.0, %v5634
  %5636 = vdwg.mxu0
  %5637 = vmatpush.bf16.xpose.msra.mxu0 %v5603
  %5638 = vmatpush.bf16.xpose.msra.mxu0 %v4748
  %5639 = vmatpush.bf16.xpose.msra.mxu0 %v4745
  %5640 = vmatpush.bf16.xpose.msra.mxu0 %v4742
  %5641 = vmatpush.bf16.xpose.msra.mxu0 %v4739
  %5642 = vmatpush.bf16.xpose.msra.mxu0 %v4736
  %5643 = vmatpush.bf16.xpose.msra.mxu0 %v4733
  %5644 = vmatpush.bf16.xpose.msra.mxu0 %v4730
  %5645 = vmatmul.bf16.gmra.mxu0 %v5591
  %v5646 = vpop.f32.mrf.mxu0
  %v5647 = vadd.f32 0.0, %v5646
  %v5648 = vpop.f32.mrf.mxu0
  %v5649 = vadd.f32 0.0, %v5648
  %5650 = vmatmul.bf16.gmra.mxu0 %v5594
  %v5651 = vpop.f32.mrf.mxu0
  %v5652 = vadd.f32 0.0, %v5651
  %v5653 = vpop.f32.mrf.mxu0
  %v5654 = vadd.f32 0.0, %v5653
  %5655 = vmatmul.bf16.gmra.mxu0 %v5597
  %v5656 = vpop.f32.mrf.mxu0
  %v5657 = vadd.f32 0.0, %v5656
  %v5658 = vpop.f32.mrf.mxu0
  %v5659 = vadd.f32 0.0, %v5658
  %5660 = vmatmul.bf16.gmra.mxu0 %v5600
  %v5661 = vpop.f32.mrf.mxu0
  %v5662 = vadd.f32 0.0, %v5661
  %v5663 = vpop.f32.mrf.mxu0
  %v5664 = vadd.f32 0.0, %v5663
  %5665 = vdwg.mxu0
  %5666 = vmatpush.bf16.xpose.msra.mxu0 %v4775
  %5667 = vmatpush.bf16.xpose.msra.mxu0 %v4772
  %5668 = vmatpush.bf16.xpose.msra.mxu0 %v4769
  %5669 = vmatpush.bf16.xpose.msra.mxu0 %v4766
  %5670 = vmatpush.bf16.xpose.msra.mxu0 %v4763
  %5671 = vmatpush.bf16.xpose.msra.mxu0 %v4760
  %5672 = vmatpush.bf16.xpose.msra.mxu0 %v4757
  %5673 = vmatpush.bf16.xpose.msra.mxu0 %v4754
  %5674 = vmatmul.bf16.gmra.mxu0 %v5591
  %v5675 = vpop.f32.mrf.mxu0
  %v5676 = vadd.f32 0.0, %v5675
  %v5677 = vpop.f32.mrf.mxu0
  %v5678 = vadd.f32 0.0, %v5677
  %5679 = vmatmul.bf16.gmra.mxu0 %v5594
  %v5680 = vpop.f32.mrf.mxu0
  %v5681 = vadd.f32 0.0, %v5680
  %v5682 = vpop.f32.mrf.mxu0
  %v5683 = vadd.f32 0.0, %v5682
  %5684 = vmatmul.bf16.gmra.mxu0 %v5597
  %v5685 = vpop.f32.mrf.mxu0
  %v5686 = vadd.f32 0.0, %v5685
  %v5687 = vpop.f32.mrf.mxu0
  %v5688 = vadd.f32 0.0, %v5687
  %5689 = vmatmul.bf16.gmra.mxu0 %v5600
  %v5690 = vpop.f32.mrf.mxu0
  %v5691 = vadd.f32 0.0, %v5690
  %v5692 = vpop.f32.mrf.mxu0
  %v5693 = vadd.f32 0.0, %v5692
  %5694 = vdwg.mxu0
  %5695 = vmatpush.bf16.xpose.msra.mxu0 %v5606
  %5696 = vmatpush.bf16.xpose.msra.mxu0 %v4796
  %5697 = vmatpush.bf16.xpose.msra.mxu0 %v4793
  %5698 = vmatpush.bf16.xpose.msra.mxu0 %v4790
  %5699 = vmatpush.bf16.xpose.msra.mxu0 %v4787
  %5700 = vmatpush.bf16.xpose.msra.mxu0 %v4784
  %5701 = vmatpush.bf16.xpose.msra.mxu0 %v4781
  %5702 = vmatpush.bf16.xpose.msra.mxu0 %v4778
  %5703 = vmatmul.bf16.gmra.mxu0 %v5591
  %v5704 = vpop.f32.mrf.mxu0
  %v5705 = vadd.f32 0.0, %v5704
  %v5706 = vpop.f32.mrf.mxu0
  %v5707 = vadd.f32 0.0, %v5706
  %5708 = vmatmul.bf16.gmra.mxu0 %v5594
  %v5709 = vpop.f32.mrf.mxu0
  %v5710 = vadd.f32 0.0, %v5709
  %v5711 = vpop.f32.mrf.mxu0
  %v5712 = vadd.f32 0.0, %v5711
  %5713 = vmatmul.bf16.gmra.mxu0 %v5597
  %v5714 = vpop.f32.mrf.mxu0
  %v5715 = vadd.f32 0.0, %v5714
  %v5716 = vpop.f32.mrf.mxu0
  %v5717 = vadd.f32 0.0, %v5716
  %5718 = vmatmul.bf16.gmra.mxu0 %v5600
  %v5719 = vpop.f32.mrf.mxu0
  %v5720 = vadd.f32 0.0, %v5719
  %v5721 = vpop.f32.mrf.mxu0
  %v5722 = vadd.f32 0.0, %v5721
  %5723 = vdwg.mxu0
  %v5724 = vadd.f32 %v5519, %v5618
  %v5725 = vadd.f32 %v5520, %v5647
  %v5726 = vadd.f32 %v5521, %v5676
  %v5727 = vadd.f32 %v5522, %v5705
  %v5728 = vadd.f32 %v5523, %v5620
  %v5729 = vadd.f32 %v5524, %v5649
  %v5730 = vadd.f32 %v5525, %v5678
  %v5731 = vadd.f32 %v5526, %v5707
  %v5732 = vadd.f32 %v5527, %v5623
  %v5733 = vadd.f32 %v5528, %v5652
  %v5734 = vadd.f32 %v5529, %v5681
  %v5735 = vadd.f32 %v5530, %v5710
  %v5736 = vadd.f32 %v5531, %v5625
  %v5737 = vadd.f32 %v5532, %v5654
  %v5738 = vadd.f32 %v5533, %v5683
  %v5739 = vadd.f32 %v5534, %v5712
  %v5740 = vadd.f32 %v5535, %v5628
  %v5741 = vadd.f32 %v5536, %v5657
  %v5742 = vadd.f32 %v5537, %v5686
  %v5743 = vadd.f32 %v5538, %v5715
  %v5744 = vadd.f32 %v5539, %v5630
  %v5745 = vadd.f32 %v5540, %v5659
  %v5746 = vadd.f32 %v5541, %v5688
  %v5747 = vadd.f32 %v5542, %v5717
  %v5748 = vadd.f32 %v5543, %v5633
  %v5749 = vadd.f32 %v5544, %v5662
  %v5750 = vadd.f32 %v5545, %v5691
  %v5751 = vadd.f32 %v5546, %v5720
  %v5752 = vadd.f32 %v5547, %v5635
  %v5753 = vadd.f32 %v5548, %v5664
  %v5754 = vadd.f32 %v5549, %v5693
  %v5755 = vadd.f32 %v5550, %v5722
  %v5757 = vshrl.u32 %v404, 16
  %v5759 = vrot.slane %v5757, 4
  %v5760 = vshll.u32 %v404, 16
  %v5762 = vrot.slane %v5760, 5
  %v5763 = vor.u32 %v5759, %v5762
  %v5764 = vrot.slane %v5763, 4
  %v5766 = vshll.u32 %v405, 16
  %v5768 = vrot.slane %v5766, 5
  %v5769 = vsel %vm470, %v5764, %v5768
  %v5770 = vshrl.u32 %v405, 16
  %v5772 = vrot.slane %v5770, 4
  %v5773 = vor.u32 %v5772, %v5768
  %v5774 = vrot.slane %v5773, 4
  %v5776 = vshll.u32 %v406, 16
  %v5778 = vrot.slane %v5776, 5
  %v5779 = vsel %vm470, %v5774, %v5778
  %v5781 = vshrl.u32 %v458, 16
  %v5783 = vrot.slane %v5781, 4
  %v5784 = vshll.u32 %v458, 16
  %v5786 = vrot.slane %v5784, 5
  %v5787 = vor.u32 %v5783, %v5786
  %v5788 = vrot.slane %v5787, 4
  %v5790 = vshll.u32 %v459, 16
  %v5792 = vrot.slane %v5790, 5
  %v5793 = vsel %vm470, %v5788, %v5792
  %v5794 = vshrl.u32 %v459, 16
  %v5796 = vrot.slane %v5794, 4
  %v5797 = vor.u32 %v5796, %v5792
  %v5798 = vrot.slane %v5797, 4
  %v5800 = vshll.u32 %v460, 16
  %v5802 = vrot.slane %v5800, 5
  %v5803 = vsel %vm470, %v5798, %v5802
  %s5804 = scalar_lea.vmem %s4, 128
  %v5805 = vld [vmem:[%s5804] sm:$0xf]
  %v5806 = vld [vmem:[%s5804 + $0x4] sm:$0xf]
  %v5807 = vld [vmem:[%s5804 + $0x8] sm:$0xf]
  %v5808 = vld [vmem:[%s5804 + $0xc] sm:$0xf]
  %v5809 = vld [vmem:[%s5804 + $0x10] sm:$0xf]
  %v5810 = vld [vmem:[%s5804 + $0x14] sm:$0xf]
  %v5811 = vld [vmem:[%s5804 + $0x18] sm:$0xf]
  %v5812 = vld [vmem:[%s5804 + $0x1c] sm:$0xf]
  %v5821 = vunpack.c.l.b16 %v5805
  %v5822 = vunpack.c.l.b16 %v5806
  %v5823 = vunpack.c.l.b16 %v5807
  %v5824 = vunpack.c.l.b16 %v5808
  %v5825 = vunpack.c.l.b16 %v5809
  %v5826 = vunpack.c.l.b16 %v5810
  %v5827 = vunpack.c.l.b16 %v5811
  %v5828 = vunpack.c.l.b16 %v5812
  %v5829 = vpack.c.b16 %v5822, %v5821
  %v5830 = vpack.c.b16 %v5824, %v5823
  %v5831 = vpack.c.b16 %v5826, %v5825
  %v5832 = vpack.c.b16 %v5828, %v5827
  %v5833 = vunpack.c.l.b16 %v5769
  %v5834 = vunpack.c.l.b16 %v5779
  %v5835 = vunpack.c.l.b16 %v5793
  %v5836 = vunpack.c.l.b16 %v5803
  %v5837 = vpack.c.b16 %v5834, %v5833
  %v5838 = vpack.c.b16 %v5836, %v5835
  %v5840 = vsel %vm4285, %v5829, 0
  %v5843 = vsel %vm4285, %v5830, 0
  %v5846 = vsel %vm4285, %v5831, 0
  %v5849 = vsel %vm4285, %v5832, 0
  %v5852 = vsel %vm4285, %v5837, 0
  %v5855 = vsel %vm4285, %v5838, 0
  %5857 = vmatpush.bf16.xpose.msra.mxu0 %v4323
  %5858 = vmatpush.bf16.xpose.msra.mxu0 %v4320
  %5859 = vmatpush.bf16.xpose.msra.mxu0 %v4317
  %5860 = vmatpush.bf16.xpose.msra.mxu0 %v4314
  %5861 = vmatpush.bf16.xpose.msra.mxu0 %v4311
  %5862 = vmatpush.bf16.xpose.msra.mxu0 %v4308
  %5863 = vmatpush.bf16.xpose.msra.mxu0 %v4305
  %5864 = vmatpush.bf16.xpose.msra.mxu0 %v4302
  %5865 = vmatmul.bf16.gmra.mxu0 %v5840
  %v5866 = vpop.f32.mrf.mxu0
  %v5867 = vadd.f32 0.0, %v5866
  %v5868 = vpop.f32.mrf.mxu0
  %v5869 = vadd.f32 0.0, %v5868
  %5870 = vmatmul.bf16.gmra.mxu0 %v5843
  %v5871 = vpop.f32.mrf.mxu0
  %v5872 = vadd.f32 0.0, %v5871
  %v5873 = vpop.f32.mrf.mxu0
  %v5874 = vadd.f32 0.0, %v5873
  %5875 = vmatmul.bf16.gmra.mxu0 %v5846
  %v5876 = vpop.f32.mrf.mxu0
  %v5877 = vadd.f32 0.0, %v5876
  %v5878 = vpop.f32.mrf.mxu0
  %v5879 = vadd.f32 0.0, %v5878
  %5880 = vmatmul.bf16.gmra.mxu0 %v5849
  %v5881 = vpop.f32.mrf.mxu0
  %v5882 = vadd.f32 0.0, %v5881
  %v5883 = vpop.f32.mrf.mxu0
  %v5884 = vadd.f32 0.0, %v5883
  %5885 = vdwg.mxu0
  %5886 = vmatpush.bf16.xpose.msra.mxu0 %v5852
  %5887 = vmatpush.bf16.xpose.msra.mxu0 %v4344
  %5888 = vmatpush.bf16.xpose.msra.mxu0 %v4341
  %5889 = vmatpush.bf16.xpose.msra.mxu0 %v4338
  %5890 = vmatpush.bf16.xpose.msra.mxu0 %v4335
  %5891 = vmatpush.bf16.xpose.msra.mxu0 %v4332
  %5892 = vmatpush.bf16.xpose.msra.mxu0 %v4329
  %5893 = vmatpush.bf16.xpose.msra.mxu0 %v4326
  %5894 = vmatmul.bf16.gmra.mxu0 %v5840
  %v5895 = vpop.f32.mrf.mxu0
  %v5896 = vadd.f32 0.0, %v5895
  %v5897 = vpop.f32.mrf.mxu0
  %v5898 = vadd.f32 0.0, %v5897
  %5899 = vmatmul.bf16.gmra.mxu0 %v5843
  %v5900 = vpop.f32.mrf.mxu0
  %v5901 = vadd.f32 0.0, %v5900
  %v5902 = vpop.f32.mrf.mxu0
  %v5903 = vadd.f32 0.0, %v5902
  %5904 = vmatmul.bf16.gmra.mxu0 %v5846
  %v5905 = vpop.f32.mrf.mxu0
  %v5906 = vadd.f32 0.0, %v5905
  %v5907 = vpop.f32.mrf.mxu0
  %v5908 = vadd.f32 0.0, %v5907
  %5909 = vmatmul.bf16.gmra.mxu0 %v5849
  %v5910 = vpop.f32.mrf.mxu0
  %v5911 = vadd.f32 0.0, %v5910
  %v5912 = vpop.f32.mrf.mxu0
  %v5913 = vadd.f32 0.0, %v5912
  %5914 = vdwg.mxu0
  %5915 = vmatpush.bf16.xpose.msra.mxu0 %v4371
  %5916 = vmatpush.bf16.xpose.msra.mxu0 %v4368
  %5917 = vmatpush.bf16.xpose.msra.mxu0 %v4365
  %5918 = vmatpush.bf16.xpose.msra.mxu0 %v4362
  %5919 = vmatpush.bf16.xpose.msra.mxu0 %v4359
  %5920 = vmatpush.bf16.xpose.msra.mxu0 %v4356
  %5921 = vmatpush.bf16.xpose.msra.mxu0 %v4353
  %5922 = vmatpush.bf16.xpose.msra.mxu0 %v4350
  %5923 = vmatmul.bf16.gmra.mxu0 %v5840
  %v5924 = vpop.f32.mrf.mxu0
  %v5925 = vadd.f32 0.0, %v5924
  %v5926 = vpop.f32.mrf.mxu0
  %v5927 = vadd.f32 0.0, %v5926
  %5928 = vmatmul.bf16.gmra.mxu0 %v5843
  %v5929 = vpop.f32.mrf.mxu0
  %v5930 = vadd.f32 0.0, %v5929
  %v5931 = vpop.f32.mrf.mxu0
  %v5932 = vadd.f32 0.0, %v5931
  %5933 = vmatmul.bf16.gmra.mxu0 %v5846
  %v5934 = vpop.f32.mrf.mxu0
  %v5935 = vadd.f32 0.0, %v5934
  %v5936 = vpop.f32.mrf.mxu0
  %v5937 = vadd.f32 0.0, %v5936
  %5938 = vmatmul.bf16.gmra.mxu0 %v5849
  %v5939 = vpop.f32.mrf.mxu0
  %v5940 = vadd.f32 0.0, %v5939
  %v5941 = vpop.f32.mrf.mxu0
  %v5942 = vadd.f32 0.0, %v5941
  %5943 = vdwg.mxu0
  %5944 = vmatpush.bf16.xpose.msra.mxu0 %v5855
  %5945 = vmatpush.bf16.xpose.msra.mxu0 %v4392
  %5946 = vmatpush.bf16.xpose.msra.mxu0 %v4389
  %5947 = vmatpush.bf16.xpose.msra.mxu0 %v4386
  %5948 = vmatpush.bf16.xpose.msra.mxu0 %v4383
  %5949 = vmatpush.bf16.xpose.msra.mxu0 %v4380
  %5950 = vmatpush.bf16.xpose.msra.mxu0 %v4377
  %5951 = vmatpush.bf16.xpose.msra.mxu0 %v4374
  %5952 = vmatmul.bf16.gmra.mxu0 %v5840
  %v5953 = vpop.f32.mrf.mxu0
  %v5954 = vadd.f32 0.0, %v5953
  %v5955 = vpop.f32.mrf.mxu0
  %v5956 = vadd.f32 0.0, %v5955
  %5957 = vmatmul.bf16.gmra.mxu0 %v5843
  %v5958 = vpop.f32.mrf.mxu0
  %v5959 = vadd.f32 0.0, %v5958
  %v5960 = vpop.f32.mrf.mxu0
  %v5961 = vadd.f32 0.0, %v5960
  %5962 = vmatmul.bf16.gmra.mxu0 %v5846
  %v5963 = vpop.f32.mrf.mxu0
  %v5964 = vadd.f32 0.0, %v5963
  %v5965 = vpop.f32.mrf.mxu0
  %v5966 = vadd.f32 0.0, %v5965
  %5967 = vmatmul.bf16.gmra.mxu0 %v5849
  %v5968 = vpop.f32.mrf.mxu0
  %v5969 = vadd.f32 0.0, %v5968
  %v5970 = vpop.f32.mrf.mxu0
  %v5971 = vadd.f32 0.0, %v5970
  %5972 = vdwg.mxu0
  %v5973 = vadd.f32 %v5724, %v5867
  %v5974 = vadd.f32 %v5725, %v5896
  %v5975 = vadd.f32 %v5726, %v5925
  %v5976 = vadd.f32 %v5727, %v5954
  %v5977 = vadd.f32 %v5728, %v5869
  %v5978 = vadd.f32 %v5729, %v5898
  %v5979 = vadd.f32 %v5730, %v5927
  %v5980 = vadd.f32 %v5731, %v5956
  %v5981 = vadd.f32 %v5732, %v5872
  %v5982 = vadd.f32 %v5733, %v5901
  %v5983 = vadd.f32 %v5734, %v5930
  %v5984 = vadd.f32 %v5735, %v5959
  %v5985 = vadd.f32 %v5736, %v5874
  %v5986 = vadd.f32 %v5737, %v5903
  %v5987 = vadd.f32 %v5738, %v5932
  %v5988 = vadd.f32 %v5739, %v5961
  %v5989 = vadd.f32 %v5740, %v5877
  %v5990 = vadd.f32 %v5741, %v5906
  %v5991 = vadd.f32 %v5742, %v5935
  %v5992 = vadd.f32 %v5743, %v5964
  %v5993 = vadd.f32 %v5744, %v5879
  %v5994 = vadd.f32 %v5745, %v5908
  %v5995 = vadd.f32 %v5746, %v5937
  %v5996 = vadd.f32 %v5747, %v5966
  %v5997 = vadd.f32 %v5748, %v5882
  %v5998 = vadd.f32 %v5749, %v5911
  %v5999 = vadd.f32 %v5750, %v5940
  %v6000 = vadd.f32 %v5751, %v5969
  %v6001 = vadd.f32 %v5752, %v5884
  %v6002 = vadd.f32 %v5753, %v5913
  %v6003 = vadd.f32 %v5754, %v5942
  %v6004 = vadd.f32 %v5755, %v5971
  %v6007 = vrot.slane %v404, 5
  %v6008 = vrot.slane %v6007, 4
  %v6009 = vrot.slane %v405, 5
  %v6010 = vsel %vm1911, %v6008, %v6009
  %v6011 = vrot.slane %v6009, 4
  %v6012 = vrot.slane %v406, 5
  %v6013 = vsel %vm1911, %v6011, %v6012
  %v6014 = vrot.slane %v458, 5
  %v6015 = vrot.slane %v6014, 4
  %v6016 = vrot.slane %v459, 5
  %v6017 = vsel %vm1911, %v6015, %v6016
  %v6018 = vrot.slane %v6016, 4
  %v6019 = vrot.slane %v460, 5
  %v6020 = vsel %vm1911, %v6018, %v6019
  %s6021 = scalar_lea.vmem %s4, 160
  %v6022 = vld [vmem:[%s6021] sm:$0xf]
  %v6023 = vld [vmem:[%s6021 + $0x4] sm:$0xf]
  %v6024 = vld [vmem:[%s6021 + $0x8] sm:$0xf]
  %v6025 = vld [vmem:[%s6021 + $0xc] sm:$0xf]
  %v6026 = vld [vmem:[%s6021 + $0x10] sm:$0xf]
  %v6027 = vld [vmem:[%s6021 + $0x14] sm:$0xf]
  %v6028 = vld [vmem:[%s6021 + $0x18] sm:$0xf]
  %v6029 = vld [vmem:[%s6021 + $0x1c] sm:$0xf]
  %v6038 = vunpack.c.l.b16 %v6022
  %v6039 = vunpack.c.l.b16 %v6023
  %v6040 = vunpack.c.l.b16 %v6024
  %v6041 = vunpack.c.l.b16 %v6025
  %v6042 = vunpack.c.l.b16 %v6026
  %v6043 = vunpack.c.l.b16 %v6027
  %v6044 = vunpack.c.l.b16 %v6028
  %v6045 = vunpack.c.l.b16 %v6029
  %v6046 = vpack.c.b16 %v6039, %v6038
  %v6047 = vpack.c.b16 %v6041, %v6040
  %v6048 = vpack.c.b16 %v6043, %v6042
  %v6049 = vpack.c.b16 %v6045, %v6044
  %v6050 = vunpack.c.l.b16 %v6010
  %v6051 = vunpack.c.l.b16 %v6013
  %v6052 = vunpack.c.l.b16 %v6017
  %v6053 = vunpack.c.l.b16 %v6020
  %v6054 = vpack.c.b16 %v6051, %v6050
  %v6055 = vpack.c.b16 %v6053, %v6052
  %v6057 = vsel %vm4285, %v6046, 0
  %v6060 = vsel %vm4285, %v6047, 0
  %v6063 = vsel %vm4285, %v6048, 0
  %v6066 = vsel %vm4285, %v6049, 0
  %v6069 = vsel %vm4285, %v6054, 0
  %v6072 = vsel %vm4285, %v6055, 0
  %6074 = vmatpush.bf16.xpose.msra.mxu0 %v5332
  %6075 = vmatpush.bf16.xpose.msra.mxu0 %v5329
  %6076 = vmatpush.bf16.xpose.msra.mxu0 %v5326
  %6077 = vmatpush.bf16.xpose.msra.mxu0 %v5323
  %6078 = vmatpush.bf16.xpose.msra.mxu0 %v5320
  %6079 = vmatpush.bf16.xpose.msra.mxu0 %v5317
  %6080 = vmatpush.bf16.xpose.msra.mxu0 %v5314
  %6081 = vmatpush.bf16.xpose.msra.mxu0 %v5311
  %6082 = vmatmul.bf16.gmra.mxu0 %v6057
  %v6083 = vpop.f32.mrf.mxu0
  %v6084 = vadd.f32 0.0, %v6083
  %v6085 = vpop.f32.mrf.mxu0
  %v6086 = vadd.f32 0.0, %v6085
  %6087 = vmatmul.bf16.gmra.mxu0 %v6060
  %v6088 = vpop.f32.mrf.mxu0
  %v6089 = vadd.f32 0.0, %v6088
  %v6090 = vpop.f32.mrf.mxu0
  %v6091 = vadd.f32 0.0, %v6090
  %6092 = vmatmul.bf16.gmra.mxu0 %v6063
  %v6093 = vpop.f32.mrf.mxu0
  %v6094 = vadd.f32 0.0, %v6093
  %v6095 = vpop.f32.mrf.mxu0
  %v6096 = vadd.f32 0.0, %v6095
  %6097 = vmatmul.bf16.gmra.mxu0 %v6066
  %v6098 = vpop.f32.mrf.mxu0
  %v6099 = vadd.f32 0.0, %v6098
  %v6100 = vpop.f32.mrf.mxu0
  %v6101 = vadd.f32 0.0, %v6100
  %6102 = vdwg.mxu0
  %6103 = vmatpush.bf16.xpose.msra.mxu0 %v6069
  %6104 = vmatpush.bf16.xpose.msra.mxu0 %v5353
  %6105 = vmatpush.bf16.xpose.msra.mxu0 %v5350
  %6106 = vmatpush.bf16.xpose.msra.mxu0 %v5347
  %6107 = vmatpush.bf16.xpose.msra.mxu0 %v5344
  %6108 = vmatpush.bf16.xpose.msra.mxu0 %v5341
  %6109 = vmatpush.bf16.xpose.msra.mxu0 %v5338
  %6110 = vmatpush.bf16.xpose.msra.mxu0 %v5335
  %6111 = vmatmul.bf16.gmra.mxu0 %v6057
  %v6112 = vpop.f32.mrf.mxu0
  %v6113 = vadd.f32 0.0, %v6112
  %v6114 = vpop.f32.mrf.mxu0
  %v6115 = vadd.f32 0.0, %v6114
  %6116 = vmatmul.bf16.gmra.mxu0 %v6060
  %v6117 = vpop.f32.mrf.mxu0
  %v6118 = vadd.f32 0.0, %v6117
  %v6119 = vpop.f32.mrf.mxu0
  %v6120 = vadd.f32 0.0, %v6119
  %6121 = vmatmul.bf16.gmra.mxu0 %v6063
  %v6122 = vpop.f32.mrf.mxu0
  %v6123 = vadd.f32 0.0, %v6122
  %v6124 = vpop.f32.mrf.mxu0
  %v6125 = vadd.f32 0.0, %v6124
  %6126 = vmatmul.bf16.gmra.mxu0 %v6066
  %v6127 = vpop.f32.mrf.mxu0
  %v6128 = vadd.f32 0.0, %v6127
  %v6129 = vpop.f32.mrf.mxu0
  %v6130 = vadd.f32 0.0, %v6129
  %6131 = vdwg.mxu0
  %6132 = vmatpush.bf16.xpose.msra.mxu0 %v5380
  %6133 = vmatpush.bf16.xpose.msra.mxu0 %v5377
  %6134 = vmatpush.bf16.xpose.msra.mxu0 %v5374
  %6135 = vmatpush.bf16.xpose.msra.mxu0 %v5371
  %6136 = vmatpush.bf16.xpose.msra.mxu0 %v5368
  %6137 = vmatpush.bf16.xpose.msra.mxu0 %v5365
  %6138 = vmatpush.bf16.xpose.msra.mxu0 %v5362
  %6139 = vmatpush.bf16.xpose.msra.mxu0 %v5359
  %6140 = vmatmul.bf16.gmra.mxu0 %v6057
  %v6141 = vpop.f32.mrf.mxu0
  %v6142 = vadd.f32 0.0, %v6141
  %v6143 = vpop.f32.mrf.mxu0
  %v6144 = vadd.f32 0.0, %v6143
  %6145 = vmatmul.bf16.gmra.mxu0 %v6060
  %v6146 = vpop.f32.mrf.mxu0
  %v6147 = vadd.f32 0.0, %v6146
  %v6148 = vpop.f32.mrf.mxu0
  %v6149 = vadd.f32 0.0, %v6148
  %6150 = vmatmul.bf16.gmra.mxu0 %v6063
  %v6151 = vpop.f32.mrf.mxu0
  %v6152 = vadd.f32 0.0, %v6151
  %v6153 = vpop.f32.mrf.mxu0
  %v6154 = vadd.f32 0.0, %v6153
  %6155 = vmatmul.bf16.gmra.mxu0 %v6066
  %v6156 = vpop.f32.mrf.mxu0
  %v6157 = vadd.f32 0.0, %v6156
  %v6158 = vpop.f32.mrf.mxu0
  %v6159 = vadd.f32 0.0, %v6158
  %6160 = vdwg.mxu0
  %6161 = vmatpush.bf16.xpose.msra.mxu0 %v6072
  %6162 = vmatpush.bf16.xpose.msra.mxu0 %v5401
  %6163 = vmatpush.bf16.xpose.msra.mxu0 %v5398
  %6164 = vmatpush.bf16.xpose.msra.mxu0 %v5395
  %6165 = vmatpush.bf16.xpose.msra.mxu0 %v5392
  %6166 = vmatpush.bf16.xpose.msra.mxu0 %v5389
  %6167 = vmatpush.bf16.xpose.msra.mxu0 %v5386
  %6168 = vmatpush.bf16.xpose.msra.mxu0 %v5383
  %6169 = vmatmul.bf16.gmra.mxu0 %v6057
  %v6170 = vpop.f32.mrf.mxu0
  %v6171 = vadd.f32 0.0, %v6170
  %v6172 = vpop.f32.mrf.mxu0
  %v6173 = vadd.f32 0.0, %v6172
  %6174 = vmatmul.bf16.gmra.mxu0 %v6060
  %v6175 = vpop.f32.mrf.mxu0
  %v6176 = vadd.f32 0.0, %v6175
  %v6177 = vpop.f32.mrf.mxu0
  %v6178 = vadd.f32 0.0, %v6177
  %6179 = vmatmul.bf16.gmra.mxu0 %v6063
  %v6180 = vpop.f32.mrf.mxu0
  %v6181 = vadd.f32 0.0, %v6180
  %v6182 = vpop.f32.mrf.mxu0
  %v6183 = vadd.f32 0.0, %v6182
  %6184 = vmatmul.bf16.gmra.mxu0 %v6066
  %v6185 = vpop.f32.mrf.mxu0
  %v6186 = vadd.f32 0.0, %v6185
  %v6187 = vpop.f32.mrf.mxu0
  %v6188 = vadd.f32 0.0, %v6187
  %6189 = vdwg.mxu0
  %v6190 = vadd.f32 %v5973, %v6084
  %v6191 = vadd.f32 %v5974, %v6113
  %v6192 = vadd.f32 %v5975, %v6142
  %v6193 = vadd.f32 %v5976, %v6171
  %v6194 = vadd.f32 %v5977, %v6086
  %v6195 = vadd.f32 %v5978, %v6115
  %v6196 = vadd.f32 %v5979, %v6144
  %v6197 = vadd.f32 %v5980, %v6173
  %v6198 = vadd.f32 %v5981, %v6089
  %v6199 = vadd.f32 %v5982, %v6118
  %v6200 = vadd.f32 %v5983, %v6147
  %v6201 = vadd.f32 %v5984, %v6176
  %v6202 = vadd.f32 %v5985, %v6091
  %v6203 = vadd.f32 %v5986, %v6120
  %v6204 = vadd.f32 %v5987, %v6149
  %v6205 = vadd.f32 %v5988, %v6178
  %v6206 = vadd.f32 %v5989, %v6094
  %v6207 = vadd.f32 %v5990, %v6123
  %v6208 = vadd.f32 %v5991, %v6152
  %v6209 = vadd.f32 %v5992, %v6181
  %v6210 = vadd.f32 %v5993, %v6096
  %v6211 = vadd.f32 %v5994, %v6125
  %v6212 = vadd.f32 %v5995, %v6154
  %v6213 = vadd.f32 %v5996, %v6183
  %v6214 = vadd.f32 %v5997, %v6099
  %v6215 = vadd.f32 %v5998, %v6128
  %v6216 = vadd.f32 %v5999, %v6157
  %v6217 = vadd.f32 %v6000, %v6186
  %v6218 = vadd.f32 %v6001, %v6101
  %v6219 = vadd.f32 %v6002, %v6130
  %v6220 = vadd.f32 %v6003, %v6159
  %v6221 = vadd.f32 %v6004, %v6188
  %s6222 = scalar_lea.vmem %s4, 192
  %v6223 = vld [vmem:[%s6222] sm:$0xf]
  %v6224 = vld [vmem:[%s6222 + $0x4] sm:$0xf]
  %v6225 = vld [vmem:[%s6222 + $0x8] sm:$0xf]
  %v6226 = vld [vmem:[%s6222 + $0xc] sm:$0xf]
  %v6227 = vld [vmem:[%s6222 + $0x10] sm:$0xf]
  %v6228 = vld [vmem:[%s6222 + $0x14] sm:$0xf]
  %v6229 = vld [vmem:[%s6222 + $0x18] sm:$0xf]
  %v6230 = vld [vmem:[%s6222 + $0x1c] sm:$0xf]
  %v6239 = vunpack.c.l.b16 %v6223
  %v6240 = vunpack.c.l.b16 %v6224
  %v6241 = vunpack.c.l.b16 %v6225
  %v6242 = vunpack.c.l.b16 %v6226
  %v6243 = vunpack.c.l.b16 %v6227
  %v6244 = vunpack.c.l.b16 %v6228
  %v6245 = vunpack.c.l.b16 %v6229
  %v6246 = vunpack.c.l.b16 %v6230
  %v6247 = vpack.c.b16 %v6240, %v6239
  %v6248 = vpack.c.b16 %v6242, %v6241
  %v6249 = vpack.c.b16 %v6244, %v6243
  %v6250 = vpack.c.b16 %v6246, %v6245
  %v6255 = vunpack.c.l.b16 %v407
  %v6256 = vunpack.c.l.b16 %v408
  %v6257 = vunpack.c.l.b16 %v461
  %v6258 = vunpack.c.l.b16 %v462
  %v6259 = vpack.c.b16 %v6256, %v6255
  %v6260 = vpack.c.b16 %v6258, %v6257
  %v6262 = vsel %vm4285, %v6247, 0
  %v6265 = vsel %vm4285, %v6248, 0
  %v6268 = vsel %vm4285, %v6249, 0
  %v6271 = vsel %vm4285, %v6250, 0
  %v6274 = vsel %vm4285, %v6259, 0
  %v6277 = vsel %vm4285, %v6260, 0
  %6279 = vmatpush.bf16.xpose.msra.mxu0 %v4730
  %6280 = vmatpush.bf16.xpose.msra.mxu0 %v4727
  %6281 = vmatpush.bf16.xpose.msra.mxu0 %v4724
  %6282 = vmatpush.bf16.xpose.msra.mxu0 %v4721
  %6283 = vmatpush.bf16.xpose.msra.mxu0 %v4718
  %6284 = vmatpush.bf16.xpose.msra.mxu0 %v4715
  %6285 = vmatpush.bf16.xpose.msra.mxu0 %v4712
  %6286 = vmatpush.bf16.xpose.msra.mxu0 %v4709
  %6287 = vmatmul.bf16.gmra.mxu0 %v6262
  %v6288 = vpop.f32.mrf.mxu0
  %v6289 = vadd.f32 0.0, %v6288
  %v6290 = vpop.f32.mrf.mxu0
  %v6291 = vadd.f32 0.0, %v6290
  %6292 = vmatmul.bf16.gmra.mxu0 %v6265
  %v6293 = vpop.f32.mrf.mxu0
  %v6294 = vadd.f32 0.0, %v6293
  %v6295 = vpop.f32.mrf.mxu0
  %v6296 = vadd.f32 0.0, %v6295
  %6297 = vmatmul.bf16.gmra.mxu0 %v6268
  %v6298 = vpop.f32.mrf.mxu0
  %v6299 = vadd.f32 0.0, %v6298
  %v6300 = vpop.f32.mrf.mxu0
  %v6301 = vadd.f32 0.0, %v6300
  %6302 = vmatmul.bf16.gmra.mxu0 %v6271
  %v6303 = vpop.f32.mrf.mxu0
  %v6304 = vadd.f32 0.0, %v6303
  %v6305 = vpop.f32.mrf.mxu0
  %v6306 = vadd.f32 0.0, %v6305
  %6307 = vdwg.mxu0
  %6308 = vmatpush.bf16.xpose.msra.mxu0 %v6274
  %6309 = vmatpush.bf16.xpose.msra.mxu0 %v5603
  %6310 = vmatpush.bf16.xpose.msra.mxu0 %v4748
  %6311 = vmatpush.bf16.xpose.msra.mxu0 %v4745
  %6312 = vmatpush.bf16.xpose.msra.mxu0 %v4742
  %6313 = vmatpush.bf16.xpose.msra.mxu0 %v4739
  %6314 = vmatpush.bf16.xpose.msra.mxu0 %v4736
  %6315 = vmatpush.bf16.xpose.msra.mxu0 %v4733
  %6316 = vmatmul.bf16.gmra.mxu0 %v6262
  %v6317 = vpop.f32.mrf.mxu0
  %v6318 = vadd.f32 0.0, %v6317
  %v6319 = vpop.f32.mrf.mxu0
  %v6320 = vadd.f32 0.0, %v6319
  %6321 = vmatmul.bf16.gmra.mxu0 %v6265
  %v6322 = vpop.f32.mrf.mxu0
  %v6323 = vadd.f32 0.0, %v6322
  %v6324 = vpop.f32.mrf.mxu0
  %v6325 = vadd.f32 0.0, %v6324
  %6326 = vmatmul.bf16.gmra.mxu0 %v6268
  %v6327 = vpop.f32.mrf.mxu0
  %v6328 = vadd.f32 0.0, %v6327
  %v6329 = vpop.f32.mrf.mxu0
  %v6330 = vadd.f32 0.0, %v6329
  %6331 = vmatmul.bf16.gmra.mxu0 %v6271
  %v6332 = vpop.f32.mrf.mxu0
  %v6333 = vadd.f32 0.0, %v6332
  %v6334 = vpop.f32.mrf.mxu0
  %v6335 = vadd.f32 0.0, %v6334
  %6336 = vdwg.mxu0
  %6337 = vmatpush.bf16.xpose.msra.mxu0 %v4778
  %6338 = vmatpush.bf16.xpose.msra.mxu0 %v4775
  %6339 = vmatpush.bf16.xpose.msra.mxu0 %v4772
  %6340 = vmatpush.bf16.xpose.msra.mxu0 %v4769
  %6341 = vmatpush.bf16.xpose.msra.mxu0 %v4766
  %6342 = vmatpush.bf16.xpose.msra.mxu0 %v4763
  %6343 = vmatpush.bf16.xpose.msra.mxu0 %v4760
  %6344 = vmatpush.bf16.xpose.msra.mxu0 %v4757
  %6345 = vmatmul.bf16.gmra.mxu0 %v6262
  %v6346 = vpop.f32.mrf.mxu0
  %v6347 = vadd.f32 0.0, %v6346
  %v6348 = vpop.f32.mrf.mxu0
  %v6349 = vadd.f32 0.0, %v6348
  %6350 = vmatmul.bf16.gmra.mxu0 %v6265
  %v6351 = vpop.f32.mrf.mxu0
  %v6352 = vadd.f32 0.0, %v6351
  %v6353 = vpop.f32.mrf.mxu0
  %v6354 = vadd.f32 0.0, %v6353
  %6355 = vmatmul.bf16.gmra.mxu0 %v6268
  %v6356 = vpop.f32.mrf.mxu0
  %v6357 = vadd.f32 0.0, %v6356
  %v6358 = vpop.f32.mrf.mxu0
  %v6359 = vadd.f32 0.0, %v6358
  %6360 = vmatmul.bf16.gmra.mxu0 %v6271
  %v6361 = vpop.f32.mrf.mxu0
  %v6362 = vadd.f32 0.0, %v6361
  %v6363 = vpop.f32.mrf.mxu0
  %v6364 = vadd.f32 0.0, %v6363
  %6365 = vdwg.mxu0
  %6366 = vmatpush.bf16.xpose.msra.mxu0 %v6277
  %6367 = vmatpush.bf16.xpose.msra.mxu0 %v5606
  %6368 = vmatpush.bf16.xpose.msra.mxu0 %v4796
  %6369 = vmatpush.bf16.xpose.msra.mxu0 %v4793
  %6370 = vmatpush.bf16.xpose.msra.mxu0 %v4790
  %6371 = vmatpush.bf16.xpose.msra.mxu0 %v4787
  %6372 = vmatpush.bf16.xpose.msra.mxu0 %v4784
  %6373 = vmatpush.bf16.xpose.msra.mxu0 %v4781
  %6374 = vmatmul.bf16.gmra.mxu0 %v6262
  %v6375 = vpop.f32.mrf.mxu0
  %v6376 = vadd.f32 0.0, %v6375
  %v6377 = vpop.f32.mrf.mxu0
  %v6378 = vadd.f32 0.0, %v6377
  %6379 = vmatmul.bf16.gmra.mxu0 %v6265
  %v6380 = vpop.f32.mrf.mxu0
  %v6381 = vadd.f32 0.0, %v6380
  %v6382 = vpop.f32.mrf.mxu0
  %v6383 = vadd.f32 0.0, %v6382
  %6384 = vmatmul.bf16.gmra.mxu0 %v6268
  %v6385 = vpop.f32.mrf.mxu0
  %v6386 = vadd.f32 0.0, %v6385
  %v6387 = vpop.f32.mrf.mxu0
  %v6388 = vadd.f32 0.0, %v6387
  %6389 = vmatmul.bf16.gmra.mxu0 %v6271
  %v6390 = vpop.f32.mrf.mxu0
  %v6391 = vadd.f32 0.0, %v6390
  %v6392 = vpop.f32.mrf.mxu0
  %v6393 = vadd.f32 0.0, %v6392
  %6394 = vdwg.mxu0
  %v6395 = vadd.f32 %v6190, %v6289
  %v6396 = vadd.f32 %v6191, %v6318
  %v6397 = vadd.f32 %v6192, %v6347
  %v6398 = vadd.f32 %v6193, %v6376
  %v6399 = vadd.f32 %v6194, %v6291
  %v6400 = vadd.f32 %v6195, %v6320
  %v6401 = vadd.f32 %v6196, %v6349
  %v6402 = vadd.f32 %v6197, %v6378
  %v6403 = vadd.f32 %v6198, %v6294
  %v6404 = vadd.f32 %v6199, %v6323
  %v6405 = vadd.f32 %v6200, %v6352
  %v6406 = vadd.f32 %v6201, %v6381
  %v6407 = vadd.f32 %v6202, %v6296
  %v6408 = vadd.f32 %v6203, %v6325
  %v6409 = vadd.f32 %v6204, %v6354
  %v6410 = vadd.f32 %v6205, %v6383
  %v6411 = vadd.f32 %v6206, %v6299
  %v6412 = vadd.f32 %v6207, %v6328
  %v6413 = vadd.f32 %v6208, %v6357
  %v6414 = vadd.f32 %v6209, %v6386
  %v6415 = vadd.f32 %v6210, %v6301
  %v6416 = vadd.f32 %v6211, %v6330
  %v6417 = vadd.f32 %v6212, %v6359
  %v6418 = vadd.f32 %v6213, %v6388
  %v6419 = vadd.f32 %v6214, %v6304
  %v6420 = vadd.f32 %v6215, %v6333
  %v6421 = vadd.f32 %v6216, %v6362
  %v6422 = vadd.f32 %v6217, %v6391
  %v6423 = vadd.f32 %v6218, %v6306
  %v6424 = vadd.f32 %v6219, %v6335
  %v6425 = vadd.f32 %v6220, %v6364
  %v6426 = vadd.f32 %v6221, %v6393
  %v6428 = vshrl.u32 %v407, 16
  %v6430 = vrot.slane %v6428, 4
  %v6431 = vshll.u32 %v407, 16
  %v6433 = vrot.slane %v6431, 5
  %v6434 = vor.u32 %v6430, %v6433
  %v6435 = vrot.slane %v6434, 4
  %v6437 = vshll.u32 %v408, 16
  %v6439 = vrot.slane %v6437, 5
  %v6440 = vsel %vm470, %v6435, %v6439
  %v6441 = vshrl.u32 %v408, 16
  %v6443 = vrot.slane %v6441, 4
  %v6444 = vor.u32 %v6443, %v6439
  %v6445 = vrot.slane %v6444, 4
  %v6447 = vshll.u32 %v409, 16
  %v6449 = vrot.slane %v6447, 5
  %v6450 = vsel %vm470, %v6445, %v6449
  %v6452 = vshrl.u32 %v461, 16
  %v6454 = vrot.slane %v6452, 4
  %v6455 = vshll.u32 %v461, 16
  %v6457 = vrot.slane %v6455, 5
  %v6458 = vor.u32 %v6454, %v6457
  %v6459 = vrot.slane %v6458, 4
  %v6461 = vshll.u32 %v462, 16
  %v6463 = vrot.slane %v6461, 5
  %v6464 = vsel %vm470, %v6459, %v6463
  %v6465 = vshrl.u32 %v462, 16
  %v6467 = vrot.slane %v6465, 4
  %v6468 = vor.u32 %v6467, %v6463
  %v6469 = vrot.slane %v6468, 4
  %v6471 = vshll.u32 %v463, 16
  %v6473 = vrot.slane %v6471, 5
  %v6474 = vsel %vm470, %v6469, %v6473
  %s6475 = scalar_lea.vmem %s4, 224
  %v6476 = vld [vmem:[%s6475] sm:$0xf]
  %v6477 = vld [vmem:[%s6475 + $0x4] sm:$0xf]
  %v6478 = vld [vmem:[%s6475 + $0x8] sm:$0xf]
  %v6479 = vld [vmem:[%s6475 + $0xc] sm:$0xf]
  %v6480 = vld [vmem:[%s6475 + $0x10] sm:$0xf]
  %v6481 = vld [vmem:[%s6475 + $0x14] sm:$0xf]
  %v6482 = vld [vmem:[%s6475 + $0x18] sm:$0xf]
  %v6483 = vld [vmem:[%s6475 + $0x1c] sm:$0xf]
  %v6492 = vunpack.c.l.b16 %v6476
  %v6493 = vunpack.c.l.b16 %v6477
  %v6494 = vunpack.c.l.b16 %v6478
  %v6495 = vunpack.c.l.b16 %v6479
  %v6496 = vunpack.c.l.b16 %v6480
  %v6497 = vunpack.c.l.b16 %v6481
  %v6498 = vunpack.c.l.b16 %v6482
  %v6499 = vunpack.c.l.b16 %v6483
  %v6500 = vpack.c.b16 %v6493, %v6492
  %v6501 = vpack.c.b16 %v6495, %v6494
  %v6502 = vpack.c.b16 %v6497, %v6496
  %v6503 = vpack.c.b16 %v6499, %v6498
  %v6504 = vunpack.c.l.b16 %v6440
  %v6505 = vunpack.c.l.b16 %v6450
  %v6506 = vunpack.c.l.b16 %v6464
  %v6507 = vunpack.c.l.b16 %v6474
  %v6508 = vpack.c.b16 %v6505, %v6504
  %v6509 = vpack.c.b16 %v6507, %v6506
  %v6511 = vsel %vm4285, %v6500, 0
  %v6514 = vsel %vm4285, %v6501, 0
  %v6517 = vsel %vm4285, %v6502, 0
  %v6520 = vsel %vm4285, %v6503, 0
  %v6523 = vsel %vm4285, %v6508, 0
  %v6526 = vsel %vm4285, %v6509, 0
  %6528 = vmatpush.bf16.xpose.msra.mxu0 %v4326
  %6529 = vmatpush.bf16.xpose.msra.mxu0 %v4323
  %6530 = vmatpush.bf16.xpose.msra.mxu0 %v4320
  %6531 = vmatpush.bf16.xpose.msra.mxu0 %v4317
  %6532 = vmatpush.bf16.xpose.msra.mxu0 %v4314
  %6533 = vmatpush.bf16.xpose.msra.mxu0 %v4311
  %6534 = vmatpush.bf16.xpose.msra.mxu0 %v4308
  %6535 = vmatpush.bf16.xpose.msra.mxu0 %v4305
  %6536 = vmatmul.bf16.gmra.mxu0 %v6511
  %v6537 = vpop.f32.mrf.mxu0
  %v6538 = vadd.f32 0.0, %v6537
  %v6539 = vpop.f32.mrf.mxu0
  %v6540 = vadd.f32 0.0, %v6539
  %6541 = vmatmul.bf16.gmra.mxu0 %v6514
  %v6542 = vpop.f32.mrf.mxu0
  %v6543 = vadd.f32 0.0, %v6542
  %v6544 = vpop.f32.mrf.mxu0
  %v6545 = vadd.f32 0.0, %v6544
  %6546 = vmatmul.bf16.gmra.mxu0 %v6517
  %v6547 = vpop.f32.mrf.mxu0
  %v6548 = vadd.f32 0.0, %v6547
  %v6549 = vpop.f32.mrf.mxu0
  %v6550 = vadd.f32 0.0, %v6549
  %6551 = vmatmul.bf16.gmra.mxu0 %v6520
  %v6552 = vpop.f32.mrf.mxu0
  %v6553 = vadd.f32 0.0, %v6552
  %v6554 = vpop.f32.mrf.mxu0
  %v6555 = vadd.f32 0.0, %v6554
  %6556 = vdwg.mxu0
  %6557 = vmatpush.bf16.xpose.msra.mxu0 %v6523
  %6558 = vmatpush.bf16.xpose.msra.mxu0 %v5852
  %6559 = vmatpush.bf16.xpose.msra.mxu0 %v4344
  %6560 = vmatpush.bf16.xpose.msra.mxu0 %v4341
  %6561 = vmatpush.bf16.xpose.msra.mxu0 %v4338
  %6562 = vmatpush.bf16.xpose.msra.mxu0 %v4335
  %6563 = vmatpush.bf16.xpose.msra.mxu0 %v4332
  %6564 = vmatpush.bf16.xpose.msra.mxu0 %v4329
  %6565 = vmatmul.bf16.gmra.mxu0 %v6511
  %v6566 = vpop.f32.mrf.mxu0
  %v6567 = vadd.f32 0.0, %v6566
  %v6568 = vpop.f32.mrf.mxu0
  %v6569 = vadd.f32 0.0, %v6568
  %6570 = vmatmul.bf16.gmra.mxu0 %v6514
  %v6571 = vpop.f32.mrf.mxu0
  %v6572 = vadd.f32 0.0, %v6571
  %v6573 = vpop.f32.mrf.mxu0
  %v6574 = vadd.f32 0.0, %v6573
  %6575 = vmatmul.bf16.gmra.mxu0 %v6517
  %v6576 = vpop.f32.mrf.mxu0
  %v6577 = vadd.f32 0.0, %v6576
  %v6578 = vpop.f32.mrf.mxu0
  %v6579 = vadd.f32 0.0, %v6578
  %6580 = vmatmul.bf16.gmra.mxu0 %v6520
  %v6581 = vpop.f32.mrf.mxu0
  %v6582 = vadd.f32 0.0, %v6581
  %v6583 = vpop.f32.mrf.mxu0
  %v6584 = vadd.f32 0.0, %v6583
  %6585 = vdwg.mxu0
  %6586 = vmatpush.bf16.xpose.msra.mxu0 %v4374
  %6587 = vmatpush.bf16.xpose.msra.mxu0 %v4371
  %6588 = vmatpush.bf16.xpose.msra.mxu0 %v4368
  %6589 = vmatpush.bf16.xpose.msra.mxu0 %v4365
  %6590 = vmatpush.bf16.xpose.msra.mxu0 %v4362
  %6591 = vmatpush.bf16.xpose.msra.mxu0 %v4359
  %6592 = vmatpush.bf16.xpose.msra.mxu0 %v4356
  %6593 = vmatpush.bf16.xpose.msra.mxu0 %v4353
  %6594 = vmatmul.bf16.gmra.mxu0 %v6511
  %v6595 = vpop.f32.mrf.mxu0
  %v6596 = vadd.f32 0.0, %v6595
  %v6597 = vpop.f32.mrf.mxu0
  %v6598 = vadd.f32 0.0, %v6597
  %6599 = vmatmul.bf16.gmra.mxu0 %v6514
  %v6600 = vpop.f32.mrf.mxu0
  %v6601 = vadd.f32 0.0, %v6600
  %v6602 = vpop.f32.mrf.mxu0
  %v6603 = vadd.f32 0.0, %v6602
  %6604 = vmatmul.bf16.gmra.mxu0 %v6517
  %v6605 = vpop.f32.mrf.mxu0
  %v6606 = vadd.f32 0.0, %v6605
  %v6607 = vpop.f32.mrf.mxu0
  %v6608 = vadd.f32 0.0, %v6607
  %6609 = vmatmul.bf16.gmra.mxu0 %v6520
  %v6610 = vpop.f32.mrf.mxu0
  %v6611 = vadd.f32 0.0, %v6610
  %v6612 = vpop.f32.mrf.mxu0
  %v6613 = vadd.f32 0.0, %v6612
  %6614 = vdwg.mxu0
  %6615 = vmatpush.bf16.xpose.msra.mxu0 %v6526
  %6616 = vmatpush.bf16.xpose.msra.mxu0 %v5855
  %6617 = vmatpush.bf16.xpose.msra.mxu0 %v4392
  %6618 = vmatpush.bf16.xpose.msra.mxu0 %v4389
  %6619 = vmatpush.bf16.xpose.msra.mxu0 %v4386
  %6620 = vmatpush.bf16.xpose.msra.mxu0 %v4383
  %6621 = vmatpush.bf16.xpose.msra.mxu0 %v4380
  %6622 = vmatpush.bf16.xpose.msra.mxu0 %v4377
  %6623 = vmatmul.bf16.gmra.mxu0 %v6511
  %v6624 = vpop.f32.mrf.mxu0
  %v6625 = vadd.f32 0.0, %v6624
  %v6626 = vpop.f32.mrf.mxu0
  %v6627 = vadd.f32 0.0, %v6626
  %6628 = vmatmul.bf16.gmra.mxu0 %v6514
  %v6629 = vpop.f32.mrf.mxu0
  %v6630 = vadd.f32 0.0, %v6629
  %v6631 = vpop.f32.mrf.mxu0
  %v6632 = vadd.f32 0.0, %v6631
  %6633 = vmatmul.bf16.gmra.mxu0 %v6517
  %v6634 = vpop.f32.mrf.mxu0
  %v6635 = vadd.f32 0.0, %v6634
  %v6636 = vpop.f32.mrf.mxu0
  %v6637 = vadd.f32 0.0, %v6636
  %6638 = vmatmul.bf16.gmra.mxu0 %v6520
  %v6639 = vpop.f32.mrf.mxu0
  %v6640 = vadd.f32 0.0, %v6639
  %v6641 = vpop.f32.mrf.mxu0
  %v6642 = vadd.f32 0.0, %v6641
  %6643 = vdwg.mxu0
  %v6644 = vadd.f32 %v6395, %v6538
  %v6645 = vadd.f32 %v6396, %v6567
  %v6646 = vadd.f32 %v6397, %v6596
  %v6647 = vadd.f32 %v6398, %v6625
  %v6648 = vadd.f32 %v6399, %v6540
  %v6649 = vadd.f32 %v6400, %v6569
  %v6650 = vadd.f32 %v6401, %v6598
  %v6651 = vadd.f32 %v6402, %v6627
  %v6652 = vadd.f32 %v6403, %v6543
  %v6653 = vadd.f32 %v6404, %v6572
  %v6654 = vadd.f32 %v6405, %v6601
  %v6655 = vadd.f32 %v6406, %v6630
  %v6656 = vadd.f32 %v6407, %v6545
  %v6657 = vadd.f32 %v6408, %v6574
  %v6658 = vadd.f32 %v6409, %v6603
  %v6659 = vadd.f32 %v6410, %v6632
  %v6660 = vadd.f32 %v6411, %v6548
  %v6661 = vadd.f32 %v6412, %v6577
  %v6662 = vadd.f32 %v6413, %v6606
  %v6663 = vadd.f32 %v6414, %v6635
  %v6664 = vadd.f32 %v6415, %v6550
  %v6665 = vadd.f32 %v6416, %v6579
  %v6666 = vadd.f32 %v6417, %v6608
  %v6667 = vadd.f32 %v6418, %v6637
  %v6668 = vadd.f32 %v6419, %v6553
  %v6669 = vadd.f32 %v6420, %v6582
  %v6670 = vadd.f32 %v6421, %v6611
  %v6671 = vadd.f32 %v6422, %v6640
  %v6672 = vadd.f32 %v6423, %v6555
  %v6673 = vadd.f32 %v6424, %v6584
  %v6674 = vadd.f32 %v6425, %v6613
  %v6675 = vadd.f32 %v6426, %v6642
  %v6678 = vrot.slane %v407, 5
  %v6679 = vrot.slane %v6678, 4
  %v6680 = vrot.slane %v408, 5
  %v6681 = vsel %vm1911, %v6679, %v6680
  %v6682 = vrot.slane %v6680, 4
  %v6683 = vrot.slane %v409, 5
  %v6684 = vsel %vm1911, %v6682, %v6683
  %v6685 = vrot.slane %v461, 5
  %v6686 = vrot.slane %v6685, 4
  %v6687 = vrot.slane %v462, 5
  %v6688 = vsel %vm1911, %v6686, %v6687
  %v6689 = vrot.slane %v6687, 4
  %v6690 = vrot.slane %v463, 5
  %v6691 = vsel %vm1911, %v6689, %v6690
  %s6692 = scalar_lea.vmem %s4, 256
  %v6693 = vld [vmem:[%s6692] sm:$0xf]
  %v6694 = vld [vmem:[%s6692 + $0x4] sm:$0xf]
  %v6695 = vld [vmem:[%s6692 + $0x8] sm:$0xf]
  %v6696 = vld [vmem:[%s6692 + $0xc] sm:$0xf]
  %v6697 = vld [vmem:[%s6692 + $0x10] sm:$0xf]
  %v6698 = vld [vmem:[%s6692 + $0x14] sm:$0xf]
  %v6699 = vld [vmem:[%s6692 + $0x18] sm:$0xf]
  %v6700 = vld [vmem:[%s6692 + $0x1c] sm:$0xf]
  %v6709 = vunpack.c.l.b16 %v6693
  %v6710 = vunpack.c.l.b16 %v6694
  %v6711 = vunpack.c.l.b16 %v6695
  %v6712 = vunpack.c.l.b16 %v6696
  %v6713 = vunpack.c.l.b16 %v6697
  %v6714 = vunpack.c.l.b16 %v6698
  %v6715 = vunpack.c.l.b16 %v6699
  %v6716 = vunpack.c.l.b16 %v6700
  %v6717 = vpack.c.b16 %v6710, %v6709
  %v6718 = vpack.c.b16 %v6712, %v6711
  %v6719 = vpack.c.b16 %v6714, %v6713
  %v6720 = vpack.c.b16 %v6716, %v6715
  %v6721 = vunpack.c.l.b16 %v6681
  %v6722 = vunpack.c.l.b16 %v6684
  %v6723 = vunpack.c.l.b16 %v6688
  %v6724 = vunpack.c.l.b16 %v6691
  %v6725 = vpack.c.b16 %v6722, %v6721
  %v6726 = vpack.c.b16 %v6724, %v6723
  %v6728 = vsel %vm4285, %v6717, 0
  %v6731 = vsel %vm4285, %v6718, 0
  %v6734 = vsel %vm4285, %v6719, 0
  %v6737 = vsel %vm4285, %v6720, 0
  %v6740 = vsel %vm4285, %v6725, 0
  %v6743 = vsel %vm4285, %v6726, 0
  %6745 = vmatpush.bf16.xpose.msra.mxu0 %v5335
  %6746 = vmatpush.bf16.xpose.msra.mxu0 %v5332
  %6747 = vmatpush.bf16.xpose.msra.mxu0 %v5329
  %6748 = vmatpush.bf16.xpose.msra.mxu0 %v5326
  %6749 = vmatpush.bf16.xpose.msra.mxu0 %v5323
  %6750 = vmatpush.bf16.xpose.msra.mxu0 %v5320
  %6751 = vmatpush.bf16.xpose.msra.mxu0 %v5317
  %6752 = vmatpush.bf16.xpose.msra.mxu0 %v5314
  %6753 = vmatmul.bf16.gmra.mxu0 %v6728
  %v6754 = vpop.f32.mrf.mxu0
  %v6755 = vadd.f32 0.0, %v6754
  %v6756 = vpop.f32.mrf.mxu0
  %v6757 = vadd.f32 0.0, %v6756
  %6758 = vmatmul.bf16.gmra.mxu0 %v6731
  %v6759 = vpop.f32.mrf.mxu0
  %v6760 = vadd.f32 0.0, %v6759
  %v6761 = vpop.f32.mrf.mxu0
  %v6762 = vadd.f32 0.0, %v6761
  %6763 = vmatmul.bf16.gmra.mxu0 %v6734
  %v6764 = vpop.f32.mrf.mxu0
  %v6765 = vadd.f32 0.0, %v6764
  %v6766 = vpop.f32.mrf.mxu0
  %v6767 = vadd.f32 0.0, %v6766
  %6768 = vmatmul.bf16.gmra.mxu0 %v6737
  %v6769 = vpop.f32.mrf.mxu0
  %v6770 = vadd.f32 0.0, %v6769
  %v6771 = vpop.f32.mrf.mxu0
  %v6772 = vadd.f32 0.0, %v6771
  %6773 = vdwg.mxu0
  %6774 = vmatpush.bf16.xpose.msra.mxu0 %v6740
  %6775 = vmatpush.bf16.xpose.msra.mxu0 %v6069
  %6776 = vmatpush.bf16.xpose.msra.mxu0 %v5353
  %6777 = vmatpush.bf16.xpose.msra.mxu0 %v5350
  %6778 = vmatpush.bf16.xpose.msra.mxu0 %v5347
  %6779 = vmatpush.bf16.xpose.msra.mxu0 %v5344
  %6780 = vmatpush.bf16.xpose.msra.mxu0 %v5341
  %6781 = vmatpush.bf16.xpose.msra.mxu0 %v5338
  %6782 = vmatmul.bf16.gmra.mxu0 %v6728
  %v6783 = vpop.f32.mrf.mxu0
  %v6784 = vadd.f32 0.0, %v6783
  %v6785 = vpop.f32.mrf.mxu0
  %v6786 = vadd.f32 0.0, %v6785
  %6787 = vmatmul.bf16.gmra.mxu0 %v6731
  %v6788 = vpop.f32.mrf.mxu0
  %v6789 = vadd.f32 0.0, %v6788
  %v6790 = vpop.f32.mrf.mxu0
  %v6791 = vadd.f32 0.0, %v6790
  %6792 = vmatmul.bf16.gmra.mxu0 %v6734
  %v6793 = vpop.f32.mrf.mxu0
  %v6794 = vadd.f32 0.0, %v6793
  %v6795 = vpop.f32.mrf.mxu0
  %v6796 = vadd.f32 0.0, %v6795
  %6797 = vmatmul.bf16.gmra.mxu0 %v6737
  %v6798 = vpop.f32.mrf.mxu0
  %v6799 = vadd.f32 0.0, %v6798
  %v6800 = vpop.f32.mrf.mxu0
  %v6801 = vadd.f32 0.0, %v6800
  %6802 = vdwg.mxu0
  %6803 = vmatpush.bf16.xpose.msra.mxu0 %v5383
  %6804 = vmatpush.bf16.xpose.msra.mxu0 %v5380
  %6805 = vmatpush.bf16.xpose.msra.mxu0 %v5377
  %6806 = vmatpush.bf16.xpose.msra.mxu0 %v5374
  %6807 = vmatpush.bf16.xpose.msra.mxu0 %v5371
  %6808 = vmatpush.bf16.xpose.msra.mxu0 %v5368
  %6809 = vmatpush.bf16.xpose.msra.mxu0 %v5365
  %6810 = vmatpush.bf16.xpose.msra.mxu0 %v5362
  %6811 = vmatmul.bf16.gmra.mxu0 %v6728
  %v6812 = vpop.f32.mrf.mxu0
  %v6813 = vadd.f32 0.0, %v6812
  %v6814 = vpop.f32.mrf.mxu0
  %v6815 = vadd.f32 0.0, %v6814
  %6816 = vmatmul.bf16.gmra.mxu0 %v6731
  %v6817 = vpop.f32.mrf.mxu0
  %v6818 = vadd.f32 0.0, %v6817
  %v6819 = vpop.f32.mrf.mxu0
  %v6820 = vadd.f32 0.0, %v6819
  %6821 = vmatmul.bf16.gmra.mxu0 %v6734
  %v6822 = vpop.f32.mrf.mxu0
  %v6823 = vadd.f32 0.0, %v6822
  %v6824 = vpop.f32.mrf.mxu0
  %v6825 = vadd.f32 0.0, %v6824
  %6826 = vmatmul.bf16.gmra.mxu0 %v6737
  %v6827 = vpop.f32.mrf.mxu0
  %v6828 = vadd.f32 0.0, %v6827
  %v6829 = vpop.f32.mrf.mxu0
  %v6830 = vadd.f32 0.0, %v6829
  %6831 = vdwg.mxu0
  %6832 = vmatpush.bf16.xpose.msra.mxu0 %v6743
  %6833 = vmatpush.bf16.xpose.msra.mxu0 %v6072
  %6834 = vmatpush.bf16.xpose.msra.mxu0 %v5401
  %6835 = vmatpush.bf16.xpose.msra.mxu0 %v5398
  %6836 = vmatpush.bf16.xpose.msra.mxu0 %v5395
  %6837 = vmatpush.bf16.xpose.msra.mxu0 %v5392
  %6838 = vmatpush.bf16.xpose.msra.mxu0 %v5389
  %6839 = vmatpush.bf16.xpose.msra.mxu0 %v5386
  %6840 = vmatmul.bf16.gmra.mxu0 %v6728
  %v6841 = vpop.f32.mrf.mxu0
  %v6842 = vadd.f32 0.0, %v6841
  %v6843 = vpop.f32.mrf.mxu0
  %v6844 = vadd.f32 0.0, %v6843
  %6845 = vmatmul.bf16.gmra.mxu0 %v6731
  %v6846 = vpop.f32.mrf.mxu0
  %v6847 = vadd.f32 0.0, %v6846
  %v6848 = vpop.f32.mrf.mxu0
  %v6849 = vadd.f32 0.0, %v6848
  %6850 = vmatmul.bf16.gmra.mxu0 %v6734
  %v6851 = vpop.f32.mrf.mxu0
  %v6852 = vadd.f32 0.0, %v6851
  %v6853 = vpop.f32.mrf.mxu0
  %v6854 = vadd.f32 0.0, %v6853
  %6855 = vmatmul.bf16.gmra.mxu0 %v6737
  %v6856 = vpop.f32.mrf.mxu0
  %v6857 = vadd.f32 0.0, %v6856
  %v6858 = vpop.f32.mrf.mxu0
  %v6859 = vadd.f32 0.0, %v6858
  %6860 = vdwg.mxu0
  %v6861 = vadd.f32 %v6644, %v6755
  %v6862 = vadd.f32 %v6645, %v6784
  %v6863 = vadd.f32 %v6646, %v6813
  %v6864 = vadd.f32 %v6647, %v6842
  %v6865 = vadd.f32 %v6648, %v6757
  %v6866 = vadd.f32 %v6649, %v6786
  %v6867 = vadd.f32 %v6650, %v6815
  %v6868 = vadd.f32 %v6651, %v6844
  %v6869 = vadd.f32 %v6652, %v6760
  %v6870 = vadd.f32 %v6653, %v6789
  %v6871 = vadd.f32 %v6654, %v6818
  %v6872 = vadd.f32 %v6655, %v6847
  %v6873 = vadd.f32 %v6656, %v6762
  %v6874 = vadd.f32 %v6657, %v6791
  %v6875 = vadd.f32 %v6658, %v6820
  %v6876 = vadd.f32 %v6659, %v6849
  %v6877 = vadd.f32 %v6660, %v6765
  %v6878 = vadd.f32 %v6661, %v6794
  %v6879 = vadd.f32 %v6662, %v6823
  %v6880 = vadd.f32 %v6663, %v6852
  %v6881 = vadd.f32 %v6664, %v6767
  %v6882 = vadd.f32 %v6665, %v6796
  %v6883 = vadd.f32 %v6666, %v6825
  %v6884 = vadd.f32 %v6667, %v6854
  %v6885 = vadd.f32 %v6668, %v6770
  %v6886 = vadd.f32 %v6669, %v6799
  %v6887 = vadd.f32 %v6670, %v6828
  %v6888 = vadd.f32 %v6671, %v6857
  %v6889 = vadd.f32 %v6672, %v6772
  %v6890 = vadd.f32 %v6673, %v6801
  %v6891 = vadd.f32 %v6674, %v6830
  %v6892 = vadd.f32 %v6675, %v6859
  %v6893 = vld [vmem:[%s5] sm:$0xff]
  %v6894 = vld [vmem:[%s5 + $0x8] sm:$0xff]
  %v6895 = vld [vmem:[%s5 + $0x10] sm:$0xff]
  %v6896 = vld [vmem:[%s5 + $0x18] sm:$0xff]
  %v6897 = vld [vmem:[%s5 + $0x20] sm:$0xff]
  %v6898 = vld [vmem:[%s5 + $0x28] sm:$0xff]
  %v6899 = vld [vmem:[%s5 + $0x30] sm:$0xff]
  %v6900 = vld [vmem:[%s5 + $0x38] sm:$0xff]
  %6902 = vset.pattern.permute.xlu0 0
  %6903 = vperm.xlu0 %6902, %v6893
  %v6904 = vpop.permute.xlu0 %6903
  %6907 = vset.pattern.permute.xlu0 0
  %6908 = vperm.xlu0 %6907, %v6894
  %v6909 = vpop.permute.xlu0 %6908
  %6912 = vset.pattern.permute.xlu0 0
  %6913 = vperm.xlu0 %6912, %v6895
  %v6914 = vpop.permute.xlu0 %6913
  %6917 = vset.pattern.permute.xlu0 0
  %6918 = vperm.xlu0 %6917, %v6896
  %v6919 = vpop.permute.xlu0 %6918
  %6922 = vset.pattern.permute.xlu0 0
  %6923 = vperm.xlu0 %6922, %v6897
  %v6924 = vpop.permute.xlu0 %6923
  %6927 = vset.pattern.permute.xlu0 0
  %6928 = vperm.xlu0 %6927, %v6898
  %v6929 = vpop.permute.xlu0 %6928
  %6932 = vset.pattern.permute.xlu0 0
  %6933 = vperm.xlu0 %6932, %v6899
  %v6934 = vpop.permute.xlu0 %6933
  %6937 = vset.pattern.permute.xlu0 0
  %6938 = vperm.xlu0 %6937, %v6900
  %v6939 = vpop.permute.xlu0 %6938
  %v6941 = vadd.f32 %v6861, %v6904
  %v6942 = vadd.f32 %v6862, %v6904
  %v6943 = vadd.f32 %v6863, %v6904
  %v6944 = vadd.f32 %v6864, %v6904
  %v6945 = vadd.f32 %v6865, %v6909
  %v6946 = vadd.f32 %v6866, %v6909
  %v6947 = vadd.f32 %v6867, %v6909
  %v6948 = vadd.f32 %v6868, %v6909
  %v6949 = vadd.f32 %v6869, %v6914
  %v6950 = vadd.f32 %v6870, %v6914
  %v6951 = vadd.f32 %v6871, %v6914
  %v6952 = vadd.f32 %v6872, %v6914
  %v6953 = vadd.f32 %v6873, %v6919
  %v6954 = vadd.f32 %v6874, %v6919
  %v6955 = vadd.f32 %v6875, %v6919
  %v6956 = vadd.f32 %v6876, %v6919
  %v6957 = vadd.f32 %v6877, %v6924
  %v6958 = vadd.f32 %v6878, %v6924
  %v6959 = vadd.f32 %v6879, %v6924
  %v6960 = vadd.f32 %v6880, %v6924
  %v6961 = vadd.f32 %v6881, %v6929
  %v6962 = vadd.f32 %v6882, %v6929
  %v6963 = vadd.f32 %v6883, %v6929
  %v6964 = vadd.f32 %v6884, %v6929
  %v6965 = vadd.f32 %v6885, %v6934
  %v6966 = vadd.f32 %v6886, %v6934
  %v6967 = vadd.f32 %v6887, %v6934
  %v6968 = vadd.f32 %v6888, %v6934
  %v6969 = vadd.f32 %v6889, %v6939
  %v6970 = vadd.f32 %v6890, %v6939
  %v6971 = vadd.f32 %v6891, %v6939
  %v6972 = vadd.f32 %v6892, %v6939
  %6973 = vst [vmem:[%s9] sm:$0xff] %v6941
  %6974 = vst [vmem:[%s9 + $0x8] sm:$0xff] %v6942
  %6975 = vst [vmem:[%s9 + $0x10] sm:$0xff] %v6945
  %6976 = vst [vmem:[%s9 + $0x18] sm:$0xff] %v6946
  %6977 = vst [vmem:[%s9 + $0x20] sm:$0xff] %v6949
  %6978 = vst [vmem:[%s9 + $0x28] sm:$0xff] %v6950
  %6979 = vst [vmem:[%s9 + $0x30] sm:$0xff] %v6953
  %6980 = vst [vmem:[%s9 + $0x38] sm:$0xff] %v6954
  %6981 = vst [vmem:[%s9 + $0x40] sm:$0xff] %v6957
  %6982 = vst [vmem:[%s9 + $0x48] sm:$0xff] %v6958
  %6983 = vst [vmem:[%s9 + $0x50] sm:$0xff] %v6961
  %6984 = vst [vmem:[%s9 + $0x58] sm:$0xff] %v6962
  %6985 = vst [vmem:[%s9 + $0x60] sm:$0xff] %v6965
  %6986 = vst [vmem:[%s9 + $0x68] sm:$0xff] %v6966
  %6987 = vst [vmem:[%s9 + $0x70] sm:$0xff] %v6969
  %6988 = vst [vmem:[%s9 + $0x78] sm:$0xff] %v6970
  %s6989 = scalar_lea.vmem %s9, 128
  %6990 = vst [vmem:[%s6989] sm:$0xff] %v6943
  %6991 = vst [vmem:[%s6989 + $0x8] sm:$0xff] %v6944
  %6992 = vst [vmem:[%s6989 + $0x10] sm:$0xff] %v6947
  %6993 = vst [vmem:[%s6989 + $0x18] sm:$0xff] %v6948
  %6994 = vst [vmem:[%s6989 + $0x20] sm:$0xff] %v6951
  %6995 = vst [vmem:[%s6989 + $0x28] sm:$0xff] %v6952
  %6996 = vst [vmem:[%s6989 + $0x30] sm:$0xff] %v6955
  %6997 = vst [vmem:[%s6989 + $0x38] sm:$0xff] %v6956
  %6998 = vst [vmem:[%s6989 + $0x40] sm:$0xff] %v6959
  %6999 = vst [vmem:[%s6989 + $0x48] sm:$0xff] %v6960
  %7000 = vst [vmem:[%s6989 + $0x50] sm:$0xff] %v6963
  %7001 = vst [vmem:[%s6989 + $0x58] sm:$0xff] %v6964
  %7002 = vst [vmem:[%s6989 + $0x60] sm:$0xff] %v6967
  %7003 = vst [vmem:[%s6989 + $0x68] sm:$0xff] %v6968
  %7004 = vst [vmem:[%s6989 + $0x70] sm:$0xff] %v6971
  %7005 = vst [vmem:[%s6989 + $0x78] sm:$0xff] %v6972
  %v7006 = vld [vmem:[%s1] ss:$2 sm:$0xff]
  %s7007 = scalar_lea.vmem %s1, 48
  %v7008 = vld [vmem:[%s7007] ss:$2 sm:$0xff]
  %s7009 = scalar_lea.vmem %s1, 96
  %v7010 = vld [vmem:[%s7009] ss:$2 sm:$0xff]
  %s7011 = scalar_lea.vmem %s1, 144
  %v7012 = vld [vmem:[%s7011] ss:$2 sm:$0xff]
  %s7013 = scalar_lea.vmem %s1, 192
  %v7014 = vld [vmem:[%s7013] ss:$2 sm:$0xff]
  %s7015 = scalar_lea.vmem %s1, 240
  %v7016 = vld [vmem:[%s7015] ss:$2 sm:$0xff]
  %s7017 = scalar_lea.vmem %s1, 288
  %v7018 = vld [vmem:[%s7017] ss:$2 sm:$0xff]
  %s7019 = scalar_lea.vmem %s1, 336
  %v7020 = vld [vmem:[%s7019] ss:$2 sm:$0xff]
  %s7021 = scalar_lea.vmem %s1, 432
  %v7022 = vld [vmem:[%s7021] ss:$2 sm:$0xff]
  %s7023 = scalar_lea.vmem %s1, 480
  %v7024 = vld [vmem:[%s7023] ss:$2 sm:$0xff]
  %s7025 = scalar_lea.vmem %s1, 528
  %v7026 = vld [vmem:[%s7025] ss:$2 sm:$0xff]
  %s7027 = scalar_lea.vmem %s1, 576
  %v7028 = vld [vmem:[%s7027] ss:$2 sm:$0xff]
  %s7029 = scalar_lea.vmem %s1, 624
  %v7030 = vld [vmem:[%s7029] ss:$2 sm:$0xff]
  %s7031 = scalar_lea.vmem %s1, 672
  %v7032 = vld [vmem:[%s7031] ss:$2 sm:$0xff]
  %s7033 = scalar_lea.vmem %s1, 720
  %v7034 = vld [vmem:[%s7033] ss:$2 sm:$0xff]
  %s7035 = scalar_lea.vmem %s1, 768
  %v7036 = vld [vmem:[%s7035] ss:$2 sm:$0xff]
  %v7037 = vpack.c.bf16 %v7006, %v7006
  %v7038 = vpack.c.bf16 %v7008, %v7008
  %v7039 = vpack.c.bf16 %v7010, %v7010
  %v7040 = vpack.c.bf16 %v7012, %v7012
  %v7041 = vpack.c.bf16 %v7014, %v7014
  %v7042 = vpack.c.bf16 %v7016, %v7016
  %v7043 = vpack.c.bf16 %v7018, %v7018
  %v7044 = vpack.c.bf16 %v7020, %v7020
  %v7045 = vpack.c.bf16 %v7022, %v7022
  %v7046 = vpack.c.bf16 %v7024, %v7024
  %v7047 = vpack.c.bf16 %v7026, %v7026
  %v7048 = vpack.c.bf16 %v7028, %v7028
  %v7049 = vpack.c.bf16 %v7030, %v7030
  %v7050 = vpack.c.bf16 %v7032, %v7032
  %v7051 = vpack.c.bf16 %v7034, %v7034
  %v7052 = vpack.c.bf16 %v7036, %v7036
  %v7053 = vld [vmem:[%s6] sm:$0xf]
  %v7054 = vld [vmem:[%s6 + $0x4] sm:$0xf]
  %v7055 = vld [vmem:[%s6 + $0x8] sm:$0xf]
  %v7056 = vld [vmem:[%s6 + $0xc] sm:$0xf]
  %v7057 = vld [vmem:[%s6 + $0x10] sm:$0xf]
  %v7058 = vld [vmem:[%s6 + $0x14] sm:$0xf]
  %v7059 = vld [vmem:[%s6 + $0x18] sm:$0xf]
  %v7060 = vld [vmem:[%s6 + $0x1c] sm:$0xf]
  %v7061 = vld [vmem:[%s6 + $0x20] sm:$0xf]
  %v7062 = vld [vmem:[%s6 + $0x24] sm:$0xf]
  %v7063 = vld [vmem:[%s6 + $0x28] sm:$0xf]
  %v7064 = vld [vmem:[%s6 + $0x2c] sm:$0xf]
  %v7065 = vld [vmem:[%s6 + $0x30] sm:$0xf]
  %v7066 = vld [vmem:[%s6 + $0x34] sm:$0xf]
  %v7067 = vld [vmem:[%s6 + $0x38] sm:$0xf]
  %v7068 = vld [vmem:[%s6 + $0x3c] sm:$0xf]
  %s7069 = scalar_lea.vmem %s1, 1
  %v7070 = vld [vmem:[%s7069] ss:$2 sm:$0xff]
  %s7071 = scalar_lea.vmem %s1, 49
  %v7072 = vld [vmem:[%s7071] ss:$2 sm:$0xff]
  %s7073 = scalar_lea.vmem %s1, 97
  %v7074 = vld [vmem:[%s7073] ss:$2 sm:$0xff]
  %s7075 = scalar_lea.vmem %s1, 145
  %v7076 = vld [vmem:[%s7075] ss:$2 sm:$0xff]
  %s7077 = scalar_lea.vmem %s1, 193
  %v7078 = vld [vmem:[%s7077] ss:$2 sm:$0xff]
  %s7079 = scalar_lea.vmem %s1, 241
  %v7080 = vld [vmem:[%s7079] ss:$2 sm:$0xff]
  %s7081 = scalar_lea.vmem %s1, 289
  %v7082 = vld [vmem:[%s7081] ss:$2 sm:$0xff]
  %s7083 = scalar_lea.vmem %s1, 337
  %v7084 = vld [vmem:[%s7083] ss:$2 sm:$0xff]
  %s7085 = scalar_lea.vmem %s1, 433
  %v7086 = vld [vmem:[%s7085] ss:$2 sm:$0xff]
  %s7087 = scalar_lea.vmem %s1, 481
  %v7088 = vld [vmem:[%s7087] ss:$2 sm:$0xff]
  %s7089 = scalar_lea.vmem %s1, 529
  %v7090 = vld [vmem:[%s7089] ss:$2 sm:$0xff]
  %s7091 = scalar_lea.vmem %s1, 577
  %v7092 = vld [vmem:[%s7091] ss:$2 sm:$0xff]
  %s7093 = scalar_lea.vmem %s1, 625
  %v7094 = vld [vmem:[%s7093] ss:$2 sm:$0xff]
  %s7095 = scalar_lea.vmem %s1, 673
  %v7096 = vld [vmem:[%s7095] ss:$2 sm:$0xff]
  %s7097 = scalar_lea.vmem %s1, 721
  %v7098 = vld [vmem:[%s7097] ss:$2 sm:$0xff]
  %s7099 = scalar_lea.vmem %s1, 769
  %v7100 = vld [vmem:[%s7099] ss:$2 sm:$0xff]
  %v7101 = vpack.c.bf16 %v7070, %v7070
  %v7102 = vpack.c.bf16 %v7072, %v7072
  %v7103 = vpack.c.bf16 %v7074, %v7074
  %v7104 = vpack.c.bf16 %v7076, %v7076
  %v7105 = vpack.c.bf16 %v7078, %v7078
  %v7106 = vpack.c.bf16 %v7080, %v7080
  %v7107 = vpack.c.bf16 %v7082, %v7082
  %v7108 = vpack.c.bf16 %v7084, %v7084
  %v7109 = vpack.c.bf16 %v7086, %v7086
  %v7110 = vpack.c.bf16 %v7088, %v7088
  %v7111 = vpack.c.bf16 %v7090, %v7090
  %v7112 = vpack.c.bf16 %v7092, %v7092
  %v7113 = vpack.c.bf16 %v7094, %v7094
  %v7114 = vpack.c.bf16 %v7096, %v7096
  %v7115 = vpack.c.bf16 %v7098, %v7098
  %v7116 = vpack.c.bf16 %v7100, %v7100
  %s7117 = scalar_lea.vmem %s6, 64
  %v7118 = vld [vmem:[%s7117] sm:$0xf]
  %v7119 = vld [vmem:[%s7117 + $0x4] sm:$0xf]
  %v7120 = vld [vmem:[%s7117 + $0x8] sm:$0xf]
  %v7121 = vld [vmem:[%s7117 + $0xc] sm:$0xf]
  %v7122 = vld [vmem:[%s7117 + $0x10] sm:$0xf]
  %v7123 = vld [vmem:[%s7117 + $0x14] sm:$0xf]
  %v7124 = vld [vmem:[%s7117 + $0x18] sm:$0xf]
  %v7125 = vld [vmem:[%s7117 + $0x1c] sm:$0xf]
  %v7126 = vld [vmem:[%s7117 + $0x20] sm:$0xf]
  %v7127 = vld [vmem:[%s7117 + $0x24] sm:$0xf]
  %v7128 = vld [vmem:[%s7117 + $0x28] sm:$0xf]
  %v7129 = vld [vmem:[%s7117 + $0x2c] sm:$0xf]
  %v7130 = vld [vmem:[%s7117 + $0x30] sm:$0xf]
  %v7131 = vld [vmem:[%s7117 + $0x34] sm:$0xf]
  %v7132 = vld [vmem:[%s7117 + $0x38] sm:$0xf]
  %v7133 = vld [vmem:[%s7117 + $0x3c] sm:$0xf]
  %v7150 = vunpack.c.l.b16 %v7118
  %v7151 = vunpack.c.l.b16 %v7119
  %v7152 = vunpack.c.l.b16 %v7120
  %v7153 = vunpack.c.l.b16 %v7121
  %v7154 = vunpack.c.l.b16 %v7122
  %v7155 = vunpack.c.l.b16 %v7123
  %v7156 = vunpack.c.l.b16 %v7124
  %v7157 = vunpack.c.l.b16 %v7125
  %v7158 = vunpack.c.l.b16 %v7126
  %v7159 = vunpack.c.l.b16 %v7127
  %v7160 = vunpack.c.l.b16 %v7128
  %v7161 = vunpack.c.l.b16 %v7129
  %v7162 = vunpack.c.l.b16 %v7130
  %v7163 = vunpack.c.l.b16 %v7131
  %v7164 = vunpack.c.l.b16 %v7132
  %v7165 = vunpack.c.l.b16 %v7133
  %v7166 = vpack.c.b16 %v7151, %v7150
  %v7167 = vpack.c.b16 %v7153, %v7152
  %v7168 = vpack.c.b16 %v7155, %v7154
  %v7169 = vpack.c.b16 %v7157, %v7156
  %v7170 = vpack.c.b16 %v7159, %v7158
  %v7171 = vpack.c.b16 %v7161, %v7160
  %v7172 = vpack.c.b16 %v7163, %v7162
  %v7173 = vpack.c.b16 %v7165, %v7164
  %v7190 = vunpack.c.l.b16 %v7101
  %v7191 = vunpack.c.l.b16 %v7102
  %v7192 = vunpack.c.l.b16 %v7103
  %v7193 = vunpack.c.l.b16 %v7104
  %v7194 = vunpack.c.l.b16 %v7105
  %v7195 = vunpack.c.l.b16 %v7106
  %v7196 = vunpack.c.l.b16 %v7107
  %v7197 = vunpack.c.l.b16 %v7108
  %v7198 = vunpack.c.l.b16 %v7109
  %v7199 = vunpack.c.l.b16 %v7110
  %v7200 = vunpack.c.l.b16 %v7111
  %v7201 = vunpack.c.l.b16 %v7112
  %v7202 = vunpack.c.l.b16 %v7113
  %v7203 = vunpack.c.l.b16 %v7114
  %v7204 = vunpack.c.l.b16 %v7115
  %v7205 = vunpack.c.l.b16 %v7116
  %v7206 = vpack.c.b16 %v7191, %v7190
  %v7207 = vpack.c.b16 %v7193, %v7192
  %v7208 = vpack.c.b16 %v7195, %v7194
  %v7209 = vpack.c.b16 %v7197, %v7196
  %v7210 = vpack.c.b16 %v7199, %v7198
  %v7211 = vpack.c.b16 %v7201, %v7200
  %v7212 = vpack.c.b16 %v7203, %v7202
  %v7213 = vpack.c.b16 %v7205, %v7204
  %v7215 = vsel %vm4285, %v7166, 0
  %v7218 = vsel %vm4285, %v7167, 0
  %v7221 = vsel %vm4285, %v7168, 0
  %v7224 = vsel %vm4285, %v7169, 0
  %v7227 = vsel %vm4285, %v7170, 0
  %v7230 = vsel %vm4285, %v7171, 0
  %v7233 = vsel %vm4285, %v7172, 0
  %v7236 = vsel %vm4285, %v7173, 0
  %v7239 = vsel %vm4285, %v7206, 0
  %v7242 = vsel %vm4285, %v7207, 0
  %v7245 = vsel %vm4285, %v7208, 0
  %v7248 = vsel %vm4285, %v7209, 0
  %v7251 = vsel %vm4285, %v7210, 0
  %v7254 = vsel %vm4285, %v7211, 0
  %v7257 = vsel %vm4285, %v7212, 0
  %v7260 = vsel %vm4285, %v7213, 0
  %7262 = vmatpush.bf16.xpose.msra.mxu0 %v7260
  %7263 = vmatpush.bf16.xpose.msra.mxu0 %v7257
  %7264 = vmatpush.bf16.xpose.msra.mxu0 %v7254
  %7265 = vmatpush.bf16.xpose.msra.mxu0 %v7251
  %7266 = vmatpush.bf16.xpose.msra.mxu0 %v7248
  %7267 = vmatpush.bf16.xpose.msra.mxu0 %v7245
  %7268 = vmatpush.bf16.xpose.msra.mxu0 %v7242
  %7269 = vmatpush.bf16.xpose.msra.mxu0 %v7239
  %7270 = vmatmul.bf16.gmra.mxu0 %v7215
  %v7271 = vpop.f32.mrf.mxu0
  %v7272 = vadd.f32 0.0, %v7271
  %v7273 = vpop.f32.mrf.mxu0
  %v7274 = vadd.f32 0.0, %v7273
  %7275 = vmatmul.bf16.gmra.mxu0 %v7218
  %v7276 = vpop.f32.mrf.mxu0
  %v7277 = vadd.f32 0.0, %v7276
  %v7278 = vpop.f32.mrf.mxu0
  %v7279 = vadd.f32 0.0, %v7278
  %7280 = vmatmul.bf16.gmra.mxu0 %v7221
  %v7281 = vpop.f32.mrf.mxu0
  %v7282 = vadd.f32 0.0, %v7281
  %v7283 = vpop.f32.mrf.mxu0
  %v7284 = vadd.f32 0.0, %v7283
  %7285 = vmatmul.bf16.gmra.mxu0 %v7224
  %v7286 = vpop.f32.mrf.mxu0
  %v7287 = vadd.f32 0.0, %v7286
  %v7288 = vpop.f32.mrf.mxu0
  %v7289 = vadd.f32 0.0, %v7288
  %7290 = vmatmul.bf16.gmra.mxu0 %v7227
  %v7291 = vpop.f32.mrf.mxu0
  %v7292 = vadd.f32 0.0, %v7291
  %v7293 = vpop.f32.mrf.mxu0
  %v7294 = vadd.f32 0.0, %v7293
  %7295 = vmatmul.bf16.gmra.mxu0 %v7230
  %v7296 = vpop.f32.mrf.mxu0
  %v7297 = vadd.f32 0.0, %v7296
  %v7298 = vpop.f32.mrf.mxu0
  %v7299 = vadd.f32 0.0, %v7298
  %7300 = vmatmul.bf16.gmra.mxu0 %v7233
  %v7301 = vpop.f32.mrf.mxu0
  %v7302 = vadd.f32 0.0, %v7301
  %v7303 = vpop.f32.mrf.mxu0
  %v7304 = vadd.f32 0.0, %v7303
  %7305 = vmatmul.bf16.gmra.mxu0 %v7236
  %v7306 = vpop.f32.mrf.mxu0
  %v7307 = vadd.f32 0.0, %v7306
  %v7308 = vpop.f32.mrf.mxu0
  %v7309 = vadd.f32 0.0, %v7308
  %7310 = vdwg.mxu0
  %v7327 = vunpack.c.l.b16 %v7053
  %v7328 = vunpack.c.l.b16 %v7054
  %v7329 = vunpack.c.l.b16 %v7055
  %v7330 = vunpack.c.l.b16 %v7056
  %v7331 = vunpack.c.l.b16 %v7057
  %v7332 = vunpack.c.l.b16 %v7058
  %v7333 = vunpack.c.l.b16 %v7059
  %v7334 = vunpack.c.l.b16 %v7060
  %v7335 = vunpack.c.l.b16 %v7061
  %v7336 = vunpack.c.l.b16 %v7062
  %v7337 = vunpack.c.l.b16 %v7063
  %v7338 = vunpack.c.l.b16 %v7064
  %v7339 = vunpack.c.l.b16 %v7065
  %v7340 = vunpack.c.l.b16 %v7066
  %v7341 = vunpack.c.l.b16 %v7067
  %v7342 = vunpack.c.l.b16 %v7068
  %v7343 = vpack.c.b16 %v7328, %v7327
  %v7344 = vpack.c.b16 %v7330, %v7329
  %v7345 = vpack.c.b16 %v7332, %v7331
  %v7346 = vpack.c.b16 %v7334, %v7333
  %v7347 = vpack.c.b16 %v7336, %v7335
  %v7348 = vpack.c.b16 %v7338, %v7337
  %v7349 = vpack.c.b16 %v7340, %v7339
  %v7350 = vpack.c.b16 %v7342, %v7341
  %v7367 = vunpack.c.l.b16 %v7037
  %v7368 = vunpack.c.l.b16 %v7038
  %v7369 = vunpack.c.l.b16 %v7039
  %v7370 = vunpack.c.l.b16 %v7040
  %v7371 = vunpack.c.l.b16 %v7041
  %v7372 = vunpack.c.l.b16 %v7042
  %v7373 = vunpack.c.l.b16 %v7043
  %v7374 = vunpack.c.l.b16 %v7044
  %v7375 = vunpack.c.l.b16 %v7045
  %v7376 = vunpack.c.l.b16 %v7046
  %v7377 = vunpack.c.l.b16 %v7047
  %v7378 = vunpack.c.l.b16 %v7048
  %v7379 = vunpack.c.l.b16 %v7049
  %v7380 = vunpack.c.l.b16 %v7050
  %v7381 = vunpack.c.l.b16 %v7051
  %v7382 = vunpack.c.l.b16 %v7052
  %v7383 = vpack.c.b16 %v7368, %v7367
  %v7384 = vpack.c.b16 %v7370, %v7369
  %v7385 = vpack.c.b16 %v7372, %v7371
  %v7386 = vpack.c.b16 %v7374, %v7373
  %v7387 = vpack.c.b16 %v7376, %v7375
  %v7388 = vpack.c.b16 %v7378, %v7377
  %v7389 = vpack.c.b16 %v7380, %v7379
  %v7390 = vpack.c.b16 %v7382, %v7381
  %v7392 = vsel %vm4285, %v7343, 0
  %v7395 = vsel %vm4285, %v7344, 0
  %v7398 = vsel %vm4285, %v7345, 0
  %v7401 = vsel %vm4285, %v7346, 0
  %v7404 = vsel %vm4285, %v7347, 0
  %v7407 = vsel %vm4285, %v7348, 0
  %v7410 = vsel %vm4285, %v7349, 0
  %v7413 = vsel %vm4285, %v7350, 0
  %v7416 = vsel %vm4285, %v7383, 0
  %v7419 = vsel %vm4285, %v7384, 0
  %v7422 = vsel %vm4285, %v7385, 0
  %v7425 = vsel %vm4285, %v7386, 0
  %v7428 = vsel %vm4285, %v7387, 0
  %v7431 = vsel %vm4285, %v7388, 0
  %v7434 = vsel %vm4285, %v7389, 0
  %v7437 = vsel %vm4285, %v7390, 0
  %7439 = vmatpush.bf16.xpose.msra.mxu0 %v7437
  %7440 = vmatpush.bf16.xpose.msra.mxu0 %v7434
  %7441 = vmatpush.bf16.xpose.msra.mxu0 %v7431
  %7442 = vmatpush.bf16.xpose.msra.mxu0 %v7428
  %7443 = vmatpush.bf16.xpose.msra.mxu0 %v7425
  %7444 = vmatpush.bf16.xpose.msra.mxu0 %v7422
  %7445 = vmatpush.bf16.xpose.msra.mxu0 %v7419
  %7446 = vmatpush.bf16.xpose.msra.mxu0 %v7416
  %7447 = vmatmul.bf16.gmra.mxu0 %v7392
  %v7448 = vpop.f32.mrf.mxu0
  %v7449 = vadd.f32 %v7272, %v7448
  %v7450 = vpop.f32.mrf.mxu0
  %v7451 = vadd.f32 %v7274, %v7450
  %7452 = vmatmul.bf16.gmra.mxu0 %v7395
  %v7453 = vpop.f32.mrf.mxu0
  %v7454 = vadd.f32 %v7277, %v7453
  %v7455 = vpop.f32.mrf.mxu0
  %v7456 = vadd.f32 %v7279, %v7455
  %7457 = vmatmul.bf16.gmra.mxu0 %v7398
  %v7458 = vpop.f32.mrf.mxu0
  %v7459 = vadd.f32 %v7282, %v7458
  %v7460 = vpop.f32.mrf.mxu0
  %v7461 = vadd.f32 %v7284, %v7460
  %7462 = vmatmul.bf16.gmra.mxu0 %v7401
  %v7463 = vpop.f32.mrf.mxu0
  %v7464 = vadd.f32 %v7287, %v7463
  %v7465 = vpop.f32.mrf.mxu0
  %v7466 = vadd.f32 %v7289, %v7465
  %7467 = vmatmul.bf16.gmra.mxu0 %v7404
  %v7468 = vpop.f32.mrf.mxu0
  %v7469 = vadd.f32 %v7292, %v7468
  %v7470 = vpop.f32.mrf.mxu0
  %v7471 = vadd.f32 %v7294, %v7470
  %7472 = vmatmul.bf16.gmra.mxu0 %v7407
  %v7473 = vpop.f32.mrf.mxu0
  %v7474 = vadd.f32 %v7297, %v7473
  %v7475 = vpop.f32.mrf.mxu0
  %v7476 = vadd.f32 %v7299, %v7475
  %7477 = vmatmul.bf16.gmra.mxu0 %v7410
  %v7478 = vpop.f32.mrf.mxu0
  %v7479 = vadd.f32 %v7302, %v7478
  %v7480 = vpop.f32.mrf.mxu0
  %v7481 = vadd.f32 %v7304, %v7480
  %7482 = vmatmul.bf16.gmra.mxu0 %v7413
  %v7483 = vpop.f32.mrf.mxu0
  %v7484 = vadd.f32 %v7307, %v7483
  %v7485 = vpop.f32.mrf.mxu0
  %v7486 = vadd.f32 %v7309, %v7485
  %7487 = vdwg.mxu0
  %s7488 = scalar_lea.vmem %s1, 2
  %v7489 = vld [vmem:[%s7488] ss:$2 sm:$0xff]
  %s7490 = scalar_lea.vmem %s1, 50
  %v7491 = vld [vmem:[%s7490] ss:$2 sm:$0xff]
  %s7492 = scalar_lea.vmem %s1, 98
  %v7493 = vld [vmem:[%s7492] ss:$2 sm:$0xff]
  %s7494 = scalar_lea.vmem %s1, 146
  %v7495 = vld [vmem:[%s7494] ss:$2 sm:$0xff]
  %s7496 = scalar_lea.vmem %s1, 194
  %v7497 = vld [vmem:[%s7496] ss:$2 sm:$0xff]
  %s7498 = scalar_lea.vmem %s1, 242
  %v7499 = vld [vmem:[%s7498] ss:$2 sm:$0xff]
  %s7500 = scalar_lea.vmem %s1, 290
  %v7501 = vld [vmem:[%s7500] ss:$2 sm:$0xff]
  %s7502 = scalar_lea.vmem %s1, 338
  %v7503 = vld [vmem:[%s7502] ss:$2 sm:$0xff]
  %s7504 = scalar_lea.vmem %s1, 434
  %v7505 = vld [vmem:[%s7504] ss:$2 sm:$0xff]
  %s7506 = scalar_lea.vmem %s1, 482
  %v7507 = vld [vmem:[%s7506] ss:$2 sm:$0xff]
  %s7508 = scalar_lea.vmem %s1, 530
  %v7509 = vld [vmem:[%s7508] ss:$2 sm:$0xff]
  %s7510 = scalar_lea.vmem %s1, 578
  %v7511 = vld [vmem:[%s7510] ss:$2 sm:$0xff]
  %s7512 = scalar_lea.vmem %s1, 626
  %v7513 = vld [vmem:[%s7512] ss:$2 sm:$0xff]
  %s7514 = scalar_lea.vmem %s1, 674
  %v7515 = vld [vmem:[%s7514] ss:$2 sm:$0xff]
  %s7516 = scalar_lea.vmem %s1, 722
  %v7517 = vld [vmem:[%s7516] ss:$2 sm:$0xff]
  %s7518 = scalar_lea.vmem %s1, 770
  %v7519 = vld [vmem:[%s7518] ss:$2 sm:$0xff]
  %v7520 = vpack.c.bf16 %v7489, %v7489
  %v7521 = vpack.c.bf16 %v7491, %v7491
  %v7522 = vpack.c.bf16 %v7493, %v7493
  %v7523 = vpack.c.bf16 %v7495, %v7495
  %v7524 = vpack.c.bf16 %v7497, %v7497
  %v7525 = vpack.c.bf16 %v7499, %v7499
  %v7526 = vpack.c.bf16 %v7501, %v7501
  %v7527 = vpack.c.bf16 %v7503, %v7503
  %v7528 = vpack.c.bf16 %v7505, %v7505
  %v7529 = vpack.c.bf16 %v7507, %v7507
  %v7530 = vpack.c.bf16 %v7509, %v7509
  %v7531 = vpack.c.bf16 %v7511, %v7511
  %v7532 = vpack.c.bf16 %v7513, %v7513
  %v7533 = vpack.c.bf16 %v7515, %v7515
  %v7534 = vpack.c.bf16 %v7517, %v7517
  %v7535 = vpack.c.bf16 %v7519, %v7519
  %s7536 = scalar_lea.vmem %s6, 128
  %v7537 = vld [vmem:[%s7536] sm:$0xf]
  %v7538 = vld [vmem:[%s7536 + $0x4] sm:$0xf]
  %v7539 = vld [vmem:[%s7536 + $0x8] sm:$0xf]
  %v7540 = vld [vmem:[%s7536 + $0xc] sm:$0xf]
  %v7541 = vld [vmem:[%s7536 + $0x10] sm:$0xf]
  %v7542 = vld [vmem:[%s7536 + $0x14] sm:$0xf]
  %v7543 = vld [vmem:[%s7536 + $0x18] sm:$0xf]
  %v7544 = vld [vmem:[%s7536 + $0x1c] sm:$0xf]
  %v7545 = vld [vmem:[%s7536 + $0x20] sm:$0xf]
  %v7546 = vld [vmem:[%s7536 + $0x24] sm:$0xf]
  %v7547 = vld [vmem:[%s7536 + $0x28] sm:$0xf]
  %v7548 = vld [vmem:[%s7536 + $0x2c] sm:$0xf]
  %v7549 = vld [vmem:[%s7536 + $0x30] sm:$0xf]
  %v7550 = vld [vmem:[%s7536 + $0x34] sm:$0xf]
  %v7551 = vld [vmem:[%s7536 + $0x38] sm:$0xf]
  %v7552 = vld [vmem:[%s7536 + $0x3c] sm:$0xf]
  %v7569 = vunpack.c.l.b16 %v7537
  %v7570 = vunpack.c.l.b16 %v7538
  %v7571 = vunpack.c.l.b16 %v7539
  %v7572 = vunpack.c.l.b16 %v7540
  %v7573 = vunpack.c.l.b16 %v7541
  %v7574 = vunpack.c.l.b16 %v7542
  %v7575 = vunpack.c.l.b16 %v7543
  %v7576 = vunpack.c.l.b16 %v7544
  %v7577 = vunpack.c.l.b16 %v7545
  %v7578 = vunpack.c.l.b16 %v7546
  %v7579 = vunpack.c.l.b16 %v7547
  %v7580 = vunpack.c.l.b16 %v7548
  %v7581 = vunpack.c.l.b16 %v7549
  %v7582 = vunpack.c.l.b16 %v7550
  %v7583 = vunpack.c.l.b16 %v7551
  %v7584 = vunpack.c.l.b16 %v7552
  %v7585 = vpack.c.b16 %v7570, %v7569
  %v7586 = vpack.c.b16 %v7572, %v7571
  %v7587 = vpack.c.b16 %v7574, %v7573
  %v7588 = vpack.c.b16 %v7576, %v7575
  %v7589 = vpack.c.b16 %v7578, %v7577
  %v7590 = vpack.c.b16 %v7580, %v7579
  %v7591 = vpack.c.b16 %v7582, %v7581
  %v7592 = vpack.c.b16 %v7584, %v7583
  %v7609 = vunpack.c.l.b16 %v7520
  %v7610 = vunpack.c.l.b16 %v7521
  %v7611 = vunpack.c.l.b16 %v7522
  %v7612 = vunpack.c.l.b16 %v7523
  %v7613 = vunpack.c.l.b16 %v7524
  %v7614 = vunpack.c.l.b16 %v7525
  %v7615 = vunpack.c.l.b16 %v7526
  %v7616 = vunpack.c.l.b16 %v7527
  %v7617 = vunpack.c.l.b16 %v7528
  %v7618 = vunpack.c.l.b16 %v7529
  %v7619 = vunpack.c.l.b16 %v7530
  %v7620 = vunpack.c.l.b16 %v7531
  %v7621 = vunpack.c.l.b16 %v7532
  %v7622 = vunpack.c.l.b16 %v7533
  %v7623 = vunpack.c.l.b16 %v7534
  %v7624 = vunpack.c.l.b16 %v7535
  %v7625 = vpack.c.b16 %v7610, %v7609
  %v7626 = vpack.c.b16 %v7612, %v7611
  %v7627 = vpack.c.b16 %v7614, %v7613
  %v7628 = vpack.c.b16 %v7616, %v7615
  %v7629 = vpack.c.b16 %v7618, %v7617
  %v7630 = vpack.c.b16 %v7620, %v7619
  %v7631 = vpack.c.b16 %v7622, %v7621
  %v7632 = vpack.c.b16 %v7624, %v7623
  %v7634 = vsel %vm4285, %v7585, 0
  %v7637 = vsel %vm4285, %v7586, 0
  %v7640 = vsel %vm4285, %v7587, 0
  %v7643 = vsel %vm4285, %v7588, 0
  %v7646 = vsel %vm4285, %v7589, 0
  %v7649 = vsel %vm4285, %v7590, 0
  %v7652 = vsel %vm4285, %v7591, 0
  %v7655 = vsel %vm4285, %v7592, 0
  %v7658 = vsel %vm4285, %v7625, 0
  %v7661 = vsel %vm4285, %v7626, 0
  %v7664 = vsel %vm4285, %v7627, 0
  %v7667 = vsel %vm4285, %v7628, 0
  %v7670 = vsel %vm4285, %v7629, 0
  %v7673 = vsel %vm4285, %v7630, 0
  %v7676 = vsel %vm4285, %v7631, 0
  %v7679 = vsel %vm4285, %v7632, 0
  %7681 = vmatpush.bf16.xpose.msra.mxu0 %v7679
  %7682 = vmatpush.bf16.xpose.msra.mxu0 %v7676
  %7683 = vmatpush.bf16.xpose.msra.mxu0 %v7673
  %7684 = vmatpush.bf16.xpose.msra.mxu0 %v7670
  %7685 = vmatpush.bf16.xpose.msra.mxu0 %v7667
  %7686 = vmatpush.bf16.xpose.msra.mxu0 %v7664
  %7687 = vmatpush.bf16.xpose.msra.mxu0 %v7661
  %7688 = vmatpush.bf16.xpose.msra.mxu0 %v7658
  %7689 = vmatmul.bf16.gmra.mxu0 %v7634
  %v7690 = vpop.f32.mrf.mxu0
  %v7691 = vadd.f32 0.0, %v7690
  %v7692 = vpop.f32.mrf.mxu0
  %v7693 = vadd.f32 0.0, %v7692
  %7694 = vmatmul.bf16.gmra.mxu0 %v7637
  %v7695 = vpop.f32.mrf.mxu0
  %v7696 = vadd.f32 0.0, %v7695
  %v7697 = vpop.f32.mrf.mxu0
  %v7698 = vadd.f32 0.0, %v7697
  %7699 = vmatmul.bf16.gmra.mxu0 %v7640
  %v7700 = vpop.f32.mrf.mxu0
  %v7701 = vadd.f32 0.0, %v7700
  %v7702 = vpop.f32.mrf.mxu0
  %v7703 = vadd.f32 0.0, %v7702
  %7704 = vmatmul.bf16.gmra.mxu0 %v7643
  %v7705 = vpop.f32.mrf.mxu0
  %v7706 = vadd.f32 0.0, %v7705
  %v7707 = vpop.f32.mrf.mxu0
  %v7708 = vadd.f32 0.0, %v7707
  %7709 = vmatmul.bf16.gmra.mxu0 %v7646
  %v7710 = vpop.f32.mrf.mxu0
  %v7711 = vadd.f32 0.0, %v7710
  %v7712 = vpop.f32.mrf.mxu0
  %v7713 = vadd.f32 0.0, %v7712
  %7714 = vmatmul.bf16.gmra.mxu0 %v7649
  %v7715 = vpop.f32.mrf.mxu0
  %v7716 = vadd.f32 0.0, %v7715
  %v7717 = vpop.f32.mrf.mxu0
  %v7718 = vadd.f32 0.0, %v7717
  %7719 = vmatmul.bf16.gmra.mxu0 %v7652
  %v7720 = vpop.f32.mrf.mxu0
  %v7721 = vadd.f32 0.0, %v7720
  %v7722 = vpop.f32.mrf.mxu0
  %v7723 = vadd.f32 0.0, %v7722
  %7724 = vmatmul.bf16.gmra.mxu0 %v7655
  %v7725 = vpop.f32.mrf.mxu0
  %v7726 = vadd.f32 0.0, %v7725
  %v7727 = vpop.f32.mrf.mxu0
  %v7728 = vadd.f32 0.0, %v7727
  %7729 = vdwg.mxu0
  %v7730 = vadd.f32 %v7449, %v7691
  %v7731 = vadd.f32 %v7451, %v7693
  %v7732 = vadd.f32 %v7454, %v7696
  %v7733 = vadd.f32 %v7456, %v7698
  %v7734 = vadd.f32 %v7459, %v7701
  %v7735 = vadd.f32 %v7461, %v7703
  %v7736 = vadd.f32 %v7464, %v7706
  %v7737 = vadd.f32 %v7466, %v7708
  %v7738 = vadd.f32 %v7469, %v7711
  %v7739 = vadd.f32 %v7471, %v7713
  %v7740 = vadd.f32 %v7474, %v7716
  %v7741 = vadd.f32 %v7476, %v7718
  %v7742 = vadd.f32 %v7479, %v7721
  %v7743 = vadd.f32 %v7481, %v7723
  %v7744 = vadd.f32 %v7484, %v7726
  %v7745 = vadd.f32 %v7486, %v7728
  %s7746 = scalar_lea.vmem %s1, 24
  %v7747 = vld [vmem:[%s7746] ss:$2 sm:$0xff]
  %s7748 = scalar_lea.vmem %s7746, 48
  %v7749 = vld [vmem:[%s7748] ss:$2 sm:$0xff]
  %s7750 = scalar_lea.vmem %s7746, 96
  %v7751 = vld [vmem:[%s7750] ss:$2 sm:$0xff]
  %s7752 = scalar_lea.vmem %s7746, 144
  %v7753 = vld [vmem:[%s7752] ss:$2 sm:$0xff]
  %s7754 = scalar_lea.vmem %s7746, 192
  %v7755 = vld [vmem:[%s7754] ss:$2 sm:$0xff]
  %s7756 = scalar_lea.vmem %s7746, 240
  %v7757 = vld [vmem:[%s7756] ss:$2 sm:$0xff]
  %s7758 = scalar_lea.vmem %s7746, 288
  %v7759 = vld [vmem:[%s7758] ss:$2 sm:$0xff]
  %s7760 = scalar_lea.vmem %s7746, 336
  %v7761 = vld [vmem:[%s7760] ss:$2 sm:$0xff]
  %s7762 = scalar_lea.vmem %s7746, 432
  %v7763 = vld [vmem:[%s7762] ss:$2 sm:$0xff]
  %s7764 = scalar_lea.vmem %s7746, 480
  %v7765 = vld [vmem:[%s7764] ss:$2 sm:$0xff]
  %s7766 = scalar_lea.vmem %s7746, 528
  %v7767 = vld [vmem:[%s7766] ss:$2 sm:$0xff]
  %s7768 = scalar_lea.vmem %s7746, 576
  %v7769 = vld [vmem:[%s7768] ss:$2 sm:$0xff]
  %s7770 = scalar_lea.vmem %s7746, 624
  %v7771 = vld [vmem:[%s7770] ss:$2 sm:$0xff]
  %s7772 = scalar_lea.vmem %s7746, 672
  %v7773 = vld [vmem:[%s7772] ss:$2 sm:$0xff]
  %s7774 = scalar_lea.vmem %s7746, 720
  %v7775 = vld [vmem:[%s7774] ss:$2 sm:$0xff]
  %s7776 = scalar_lea.vmem %s7746, 768
  %v7777 = vld [vmem:[%s7776] ss:$2 sm:$0xff]
  %v7778 = vpack.c.bf16 %v7747, %v7747
  %v7779 = vpack.c.bf16 %v7749, %v7749
  %v7780 = vpack.c.bf16 %v7751, %v7751
  %v7781 = vpack.c.bf16 %v7753, %v7753
  %v7782 = vpack.c.bf16 %v7755, %v7755
  %v7783 = vpack.c.bf16 %v7757, %v7757
  %v7784 = vpack.c.bf16 %v7759, %v7759
  %v7785 = vpack.c.bf16 %v7761, %v7761
  %v7786 = vpack.c.bf16 %v7763, %v7763
  %v7787 = vpack.c.bf16 %v7765, %v7765
  %v7788 = vpack.c.bf16 %v7767, %v7767
  %v7789 = vpack.c.bf16 %v7769, %v7769
  %v7790 = vpack.c.bf16 %v7771, %v7771
  %v7791 = vpack.c.bf16 %v7773, %v7773
  %v7792 = vpack.c.bf16 %v7775, %v7775
  %v7793 = vpack.c.bf16 %v7777, %v7777
  %s7794 = scalar_lea.vmem %s6, 192
  %v7795 = vld [vmem:[%s7794] sm:$0xf]
  %v7796 = vld [vmem:[%s7794 + $0x4] sm:$0xf]
  %v7797 = vld [vmem:[%s7794 + $0x8] sm:$0xf]
  %v7798 = vld [vmem:[%s7794 + $0xc] sm:$0xf]
  %v7799 = vld [vmem:[%s7794 + $0x10] sm:$0xf]
  %v7800 = vld [vmem:[%s7794 + $0x14] sm:$0xf]
  %v7801 = vld [vmem:[%s7794 + $0x18] sm:$0xf]
  %v7802 = vld [vmem:[%s7794 + $0x1c] sm:$0xf]
  %v7803 = vld [vmem:[%s7794 + $0x20] sm:$0xf]
  %v7804 = vld [vmem:[%s7794 + $0x24] sm:$0xf]
  %v7805 = vld [vmem:[%s7794 + $0x28] sm:$0xf]
  %v7806 = vld [vmem:[%s7794 + $0x2c] sm:$0xf]
  %v7807 = vld [vmem:[%s7794 + $0x30] sm:$0xf]
  %v7808 = vld [vmem:[%s7794 + $0x34] sm:$0xf]
  %v7809 = vld [vmem:[%s7794 + $0x38] sm:$0xf]
  %v7810 = vld [vmem:[%s7794 + $0x3c] sm:$0xf]
  %v7827 = vunpack.c.l.b16 %v7795
  %v7828 = vunpack.c.l.b16 %v7796
  %v7829 = vunpack.c.l.b16 %v7797
  %v7830 = vunpack.c.l.b16 %v7798
  %v7831 = vunpack.c.l.b16 %v7799
  %v7832 = vunpack.c.l.b16 %v7800
  %v7833 = vunpack.c.l.b16 %v7801
  %v7834 = vunpack.c.l.b16 %v7802
  %v7835 = vunpack.c.l.b16 %v7803
  %v7836 = vunpack.c.l.b16 %v7804
  %v7837 = vunpack.c.l.b16 %v7805
  %v7838 = vunpack.c.l.b16 %v7806
  %v7839 = vunpack.c.l.b16 %v7807
  %v7840 = vunpack.c.l.b16 %v7808
  %v7841 = vunpack.c.l.b16 %v7809
  %v7842 = vunpack.c.l.b16 %v7810
  %v7843 = vpack.c.b16 %v7828, %v7827
  %v7844 = vpack.c.b16 %v7830, %v7829
  %v7845 = vpack.c.b16 %v7832, %v7831
  %v7846 = vpack.c.b16 %v7834, %v7833
  %v7847 = vpack.c.b16 %v7836, %v7835
  %v7848 = vpack.c.b16 %v7838, %v7837
  %v7849 = vpack.c.b16 %v7840, %v7839
  %v7850 = vpack.c.b16 %v7842, %v7841
  %v7867 = vunpack.c.l.b16 %v7778
  %v7868 = vunpack.c.l.b16 %v7779
  %v7869 = vunpack.c.l.b16 %v7780
  %v7870 = vunpack.c.l.b16 %v7781
  %v7871 = vunpack.c.l.b16 %v7782
  %v7872 = vunpack.c.l.b16 %v7783
  %v7873 = vunpack.c.l.b16 %v7784
  %v7874 = vunpack.c.l.b16 %v7785
  %v7875 = vunpack.c.l.b16 %v7786
  %v7876 = vunpack.c.l.b16 %v7787
  %v7877 = vunpack.c.l.b16 %v7788
  %v7878 = vunpack.c.l.b16 %v7789
  %v7879 = vunpack.c.l.b16 %v7790
  %v7880 = vunpack.c.l.b16 %v7791
  %v7881 = vunpack.c.l.b16 %v7792
  %v7882 = vunpack.c.l.b16 %v7793
  %v7883 = vpack.c.b16 %v7868, %v7867
  %v7884 = vpack.c.b16 %v7870, %v7869
  %v7885 = vpack.c.b16 %v7872, %v7871
  %v7886 = vpack.c.b16 %v7874, %v7873
  %v7887 = vpack.c.b16 %v7876, %v7875
  %v7888 = vpack.c.b16 %v7878, %v7877
  %v7889 = vpack.c.b16 %v7880, %v7879
  %v7890 = vpack.c.b16 %v7882, %v7881
  %v7892 = vsel %vm4285, %v7843, 0
  %v7895 = vsel %vm4285, %v7844, 0
  %v7898 = vsel %vm4285, %v7845, 0
  %v7901 = vsel %vm4285, %v7846, 0
  %v7904 = vsel %vm4285, %v7847, 0
  %v7907 = vsel %vm4285, %v7848, 0
  %v7910 = vsel %vm4285, %v7849, 0
  %v7913 = vsel %vm4285, %v7850, 0
  %v7916 = vsel %vm4285, %v7883, 0
  %v7919 = vsel %vm4285, %v7884, 0
  %v7922 = vsel %vm4285, %v7885, 0
  %v7925 = vsel %vm4285, %v7886, 0
  %v7928 = vsel %vm4285, %v7887, 0
  %v7931 = vsel %vm4285, %v7888, 0
  %v7934 = vsel %vm4285, %v7889, 0
  %v7937 = vsel %vm4285, %v7890, 0
  %7939 = vmatpush.bf16.xpose.msra.mxu0 %v7937
  %7940 = vmatpush.bf16.xpose.msra.mxu0 %v7934
  %7941 = vmatpush.bf16.xpose.msra.mxu0 %v7931
  %7942 = vmatpush.bf16.xpose.msra.mxu0 %v7928
  %7943 = vmatpush.bf16.xpose.msra.mxu0 %v7925
  %7944 = vmatpush.bf16.xpose.msra.mxu0 %v7922
  %7945 = vmatpush.bf16.xpose.msra.mxu0 %v7919
  %7946 = vmatpush.bf16.xpose.msra.mxu0 %v7916
  %7947 = vmatmul.bf16.gmra.mxu0 %v7892
  %v7948 = vpop.f32.mrf.mxu0
  %v7949 = vadd.f32 0.0, %v7948
  %v7950 = vpop.f32.mrf.mxu0
  %v7951 = vadd.f32 0.0, %v7950
  %7952 = vmatmul.bf16.gmra.mxu0 %v7895
  %v7953 = vpop.f32.mrf.mxu0
  %v7954 = vadd.f32 0.0, %v7953
  %v7955 = vpop.f32.mrf.mxu0
  %v7956 = vadd.f32 0.0, %v7955
  %7957 = vmatmul.bf16.gmra.mxu0 %v7898
  %v7958 = vpop.f32.mrf.mxu0
  %v7959 = vadd.f32 0.0, %v7958
  %v7960 = vpop.f32.mrf.mxu0
  %v7961 = vadd.f32 0.0, %v7960
  %7962 = vmatmul.bf16.gmra.mxu0 %v7901
  %v7963 = vpop.f32.mrf.mxu0
  %v7964 = vadd.f32 0.0, %v7963
  %v7965 = vpop.f32.mrf.mxu0
  %v7966 = vadd.f32 0.0, %v7965
  %7967 = vmatmul.bf16.gmra.mxu0 %v7904
  %v7968 = vpop.f32.mrf.mxu0
  %v7969 = vadd.f32 0.0, %v7968
  %v7970 = vpop.f32.mrf.mxu0
  %v7971 = vadd.f32 0.0, %v7970
  %7972 = vmatmul.bf16.gmra.mxu0 %v7907
  %v7973 = vpop.f32.mrf.mxu0
  %v7974 = vadd.f32 0.0, %v7973
  %v7975 = vpop.f32.mrf.mxu0
  %v7976 = vadd.f32 0.0, %v7975
  %7977 = vmatmul.bf16.gmra.mxu0 %v7910
  %v7978 = vpop.f32.mrf.mxu0
  %v7979 = vadd.f32 0.0, %v7978
  %v7980 = vpop.f32.mrf.mxu0
  %v7981 = vadd.f32 0.0, %v7980
  %7982 = vmatmul.bf16.gmra.mxu0 %v7913
  %v7983 = vpop.f32.mrf.mxu0
  %v7984 = vadd.f32 0.0, %v7983
  %v7985 = vpop.f32.mrf.mxu0
  %v7986 = vadd.f32 0.0, %v7985
  %7987 = vdwg.mxu0
  %v7988 = vadd.f32 %v7730, %v7949
  %v7989 = vadd.f32 %v7731, %v7951
  %v7990 = vadd.f32 %v7732, %v7954
  %v7991 = vadd.f32 %v7733, %v7956
  %v7992 = vadd.f32 %v7734, %v7959
  %v7993 = vadd.f32 %v7735, %v7961
  %v7994 = vadd.f32 %v7736, %v7964
  %v7995 = vadd.f32 %v7737, %v7966
  %v7996 = vadd.f32 %v7738, %v7969
  %v7997 = vadd.f32 %v7739, %v7971
  %v7998 = vadd.f32 %v7740, %v7974
  %v7999 = vadd.f32 %v7741, %v7976
  %v8000 = vadd.f32 %v7742, %v7979
  %v8001 = vadd.f32 %v7743, %v7981
  %v8002 = vadd.f32 %v7744, %v7984
  %v8003 = vadd.f32 %v7745, %v7986
  %s8004 = scalar_lea.vmem %s7746, 1
  %v8005 = vld [vmem:[%s8004] ss:$2 sm:$0xff]
  %s8006 = scalar_lea.vmem %s7746, 49
  %v8007 = vld [vmem:[%s8006] ss:$2 sm:$0xff]
  %s8008 = scalar_lea.vmem %s7746, 97
  %v8009 = vld [vmem:[%s8008] ss:$2 sm:$0xff]
  %s8010 = scalar_lea.vmem %s7746, 145
  %v8011 = vld [vmem:[%s8010] ss:$2 sm:$0xff]
  %s8012 = scalar_lea.vmem %s7746, 193
  %v8013 = vld [vmem:[%s8012] ss:$2 sm:$0xff]
  %s8014 = scalar_lea.vmem %s7746, 241
  %v8015 = vld [vmem:[%s8014] ss:$2 sm:$0xff]
  %s8016 = scalar_lea.vmem %s7746, 289
  %v8017 = vld [vmem:[%s8016] ss:$2 sm:$0xff]
  %s8018 = scalar_lea.vmem %s7746, 337
  %v8019 = vld [vmem:[%s8018] ss:$2 sm:$0xff]
  %s8020 = scalar_lea.vmem %s7746, 433
  %v8021 = vld [vmem:[%s8020] ss:$2 sm:$0xff]
  %s8022 = scalar_lea.vmem %s7746, 481
  %v8023 = vld [vmem:[%s8022] ss:$2 sm:$0xff]
  %s8024 = scalar_lea.vmem %s7746, 529
  %v8025 = vld [vmem:[%s8024] ss:$2 sm:$0xff]
  %s8026 = scalar_lea.vmem %s7746, 577
  %v8027 = vld [vmem:[%s8026] ss:$2 sm:$0xff]
  %s8028 = scalar_lea.vmem %s7746, 625
  %v8029 = vld [vmem:[%s8028] ss:$2 sm:$0xff]
  %s8030 = scalar_lea.vmem %s7746, 673
  %v8031 = vld [vmem:[%s8030] ss:$2 sm:$0xff]
  %s8032 = scalar_lea.vmem %s7746, 721
  %v8033 = vld [vmem:[%s8032] ss:$2 sm:$0xff]
  %s8034 = scalar_lea.vmem %s7746, 769
  %v8035 = vld [vmem:[%s8034] ss:$2 sm:$0xff]
  %v8036 = vpack.c.bf16 %v8005, %v8005
  %v8037 = vpack.c.bf16 %v8007, %v8007
  %v8038 = vpack.c.bf16 %v8009, %v8009
  %v8039 = vpack.c.bf16 %v8011, %v8011
  %v8040 = vpack.c.bf16 %v8013, %v8013
  %v8041 = vpack.c.bf16 %v8015, %v8015
  %v8042 = vpack.c.bf16 %v8017, %v8017
  %v8043 = vpack.c.bf16 %v8019, %v8019
  %v8044 = vpack.c.bf16 %v8021, %v8021
  %v8045 = vpack.c.bf16 %v8023, %v8023
  %v8046 = vpack.c.bf16 %v8025, %v8025
  %v8047 = vpack.c.bf16 %v8027, %v8027
  %v8048 = vpack.c.bf16 %v8029, %v8029
  %v8049 = vpack.c.bf16 %v8031, %v8031
  %v8050 = vpack.c.bf16 %v8033, %v8033
  %v8051 = vpack.c.bf16 %v8035, %v8035
  %s8052 = scalar_lea.vmem %s6, 256
  %v8053 = vld [vmem:[%s8052] sm:$0xf]
  %v8054 = vld [vmem:[%s8052 + $0x4] sm:$0xf]
  %v8055 = vld [vmem:[%s8052 + $0x8] sm:$0xf]
  %v8056 = vld [vmem:[%s8052 + $0xc] sm:$0xf]
  %v8057 = vld [vmem:[%s8052 + $0x10] sm:$0xf]
  %v8058 = vld [vmem:[%s8052 + $0x14] sm:$0xf]
  %v8059 = vld [vmem:[%s8052 + $0x18] sm:$0xf]
  %v8060 = vld [vmem:[%s8052 + $0x1c] sm:$0xf]
  %v8061 = vld [vmem:[%s8052 + $0x20] sm:$0xf]
  %v8062 = vld [vmem:[%s8052 + $0x24] sm:$0xf]
  %v8063 = vld [vmem:[%s8052 + $0x28] sm:$0xf]
  %v8064 = vld [vmem:[%s8052 + $0x2c] sm:$0xf]
  %v8065 = vld [vmem:[%s8052 + $0x30] sm:$0xf]
  %v8066 = vld [vmem:[%s8052 + $0x34] sm:$0xf]
  %v8067 = vld [vmem:[%s8052 + $0x38] sm:$0xf]
  %v8068 = vld [vmem:[%s8052 + $0x3c] sm:$0xf]
  %v8085 = vunpack.c.l.b16 %v8053
  %v8086 = vunpack.c.l.b16 %v8054
  %v8087 = vunpack.c.l.b16 %v8055
  %v8088 = vunpack.c.l.b16 %v8056
  %v8089 = vunpack.c.l.b16 %v8057
  %v8090 = vunpack.c.l.b16 %v8058
  %v8091 = vunpack.c.l.b16 %v8059
  %v8092 = vunpack.c.l.b16 %v8060
  %v8093 = vunpack.c.l.b16 %v8061
  %v8094 = vunpack.c.l.b16 %v8062
  %v8095 = vunpack.c.l.b16 %v8063
  %v8096 = vunpack.c.l.b16 %v8064
  %v8097 = vunpack.c.l.b16 %v8065
  %v8098 = vunpack.c.l.b16 %v8066
  %v8099 = vunpack.c.l.b16 %v8067
  %v8100 = vunpack.c.l.b16 %v8068
  %v8101 = vpack.c.b16 %v8086, %v8085
  %v8102 = vpack.c.b16 %v8088, %v8087
  %v8103 = vpack.c.b16 %v8090, %v8089
  %v8104 = vpack.c.b16 %v8092, %v8091
  %v8105 = vpack.c.b16 %v8094, %v8093
  %v8106 = vpack.c.b16 %v8096, %v8095
  %v8107 = vpack.c.b16 %v8098, %v8097
  %v8108 = vpack.c.b16 %v8100, %v8099
  %v8125 = vunpack.c.l.b16 %v8036
  %v8126 = vunpack.c.l.b16 %v8037
  %v8127 = vunpack.c.l.b16 %v8038
  %v8128 = vunpack.c.l.b16 %v8039
  %v8129 = vunpack.c.l.b16 %v8040
  %v8130 = vunpack.c.l.b16 %v8041
  %v8131 = vunpack.c.l.b16 %v8042
  %v8132 = vunpack.c.l.b16 %v8043
  %v8133 = vunpack.c.l.b16 %v8044
  %v8134 = vunpack.c.l.b16 %v8045
  %v8135 = vunpack.c.l.b16 %v8046
  %v8136 = vunpack.c.l.b16 %v8047
  %v8137 = vunpack.c.l.b16 %v8048
  %v8138 = vunpack.c.l.b16 %v8049
  %v8139 = vunpack.c.l.b16 %v8050
  %v8140 = vunpack.c.l.b16 %v8051
  %v8141 = vpack.c.b16 %v8126, %v8125
  %v8142 = vpack.c.b16 %v8128, %v8127
  %v8143 = vpack.c.b16 %v8130, %v8129
  %v8144 = vpack.c.b16 %v8132, %v8131
  %v8145 = vpack.c.b16 %v8134, %v8133
  %v8146 = vpack.c.b16 %v8136, %v8135
  %v8147 = vpack.c.b16 %v8138, %v8137
  %v8148 = vpack.c.b16 %v8140, %v8139
  %v8150 = vsel %vm4285, %v8101, 0
  %v8153 = vsel %vm4285, %v8102, 0
  %v8156 = vsel %vm4285, %v8103, 0
  %v8159 = vsel %vm4285, %v8104, 0
  %v8162 = vsel %vm4285, %v8105, 0
  %v8165 = vsel %vm4285, %v8106, 0
  %v8168 = vsel %vm4285, %v8107, 0
  %v8171 = vsel %vm4285, %v8108, 0
  %v8174 = vsel %vm4285, %v8141, 0
  %v8177 = vsel %vm4285, %v8142, 0
  %v8180 = vsel %vm4285, %v8143, 0
  %v8183 = vsel %vm4285, %v8144, 0
  %v8186 = vsel %vm4285, %v8145, 0
  %v8189 = vsel %vm4285, %v8146, 0
  %v8192 = vsel %vm4285, %v8147, 0
  %v8195 = vsel %vm4285, %v8148, 0
  %8197 = vmatpush.bf16.xpose.msra.mxu0 %v8195
  %8198 = vmatpush.bf16.xpose.msra.mxu0 %v8192
  %8199 = vmatpush.bf16.xpose.msra.mxu0 %v8189
  %8200 = vmatpush.bf16.xpose.msra.mxu0 %v8186
  %8201 = vmatpush.bf16.xpose.msra.mxu0 %v8183
  %8202 = vmatpush.bf16.xpose.msra.mxu0 %v8180
  %8203 = vmatpush.bf16.xpose.msra.mxu0 %v8177
  %8204 = vmatpush.bf16.xpose.msra.mxu0 %v8174
  %8205 = vmatmul.bf16.gmra.mxu0 %v8150
  %v8206 = vpop.f32.mrf.mxu0
  %v8207 = vadd.f32 0.0, %v8206
  %v8208 = vpop.f32.mrf.mxu0
  %v8209 = vadd.f32 0.0, %v8208
  %8210 = vmatmul.bf16.gmra.mxu0 %v8153
  %v8211 = vpop.f32.mrf.mxu0
  %v8212 = vadd.f32 0.0, %v8211
  %v8213 = vpop.f32.mrf.mxu0
  %v8214 = vadd.f32 0.0, %v8213
  %8215 = vmatmul.bf16.gmra.mxu0 %v8156
  %v8216 = vpop.f32.mrf.mxu0
  %v8217 = vadd.f32 0.0, %v8216
  %v8218 = vpop.f32.mrf.mxu0
  %v8219 = vadd.f32 0.0, %v8218
  %8220 = vmatmul.bf16.gmra.mxu0 %v8159
  %v8221 = vpop.f32.mrf.mxu0
  %v8222 = vadd.f32 0.0, %v8221
  %v8223 = vpop.f32.mrf.mxu0
  %v8224 = vadd.f32 0.0, %v8223
  %8225 = vmatmul.bf16.gmra.mxu0 %v8162
  %v8226 = vpop.f32.mrf.mxu0
  %v8227 = vadd.f32 0.0, %v8226
  %v8228 = vpop.f32.mrf.mxu0
  %v8229 = vadd.f32 0.0, %v8228
  %8230 = vmatmul.bf16.gmra.mxu0 %v8165
  %v8231 = vpop.f32.mrf.mxu0
  %v8232 = vadd.f32 0.0, %v8231
  %v8233 = vpop.f32.mrf.mxu0
  %v8234 = vadd.f32 0.0, %v8233
  %8235 = vmatmul.bf16.gmra.mxu0 %v8168
  %v8236 = vpop.f32.mrf.mxu0
  %v8237 = vadd.f32 0.0, %v8236
  %v8238 = vpop.f32.mrf.mxu0
  %v8239 = vadd.f32 0.0, %v8238
  %8240 = vmatmul.bf16.gmra.mxu0 %v8171
  %v8241 = vpop.f32.mrf.mxu0
  %v8242 = vadd.f32 0.0, %v8241
  %v8243 = vpop.f32.mrf.mxu0
  %v8244 = vadd.f32 0.0, %v8243
  %8245 = vdwg.mxu0
  %v8246 = vadd.f32 %v7988, %v8207
  %v8247 = vadd.f32 %v7989, %v8209
  %v8248 = vadd.f32 %v7990, %v8212
  %v8249 = vadd.f32 %v7991, %v8214
  %v8250 = vadd.f32 %v7992, %v8217
  %v8251 = vadd.f32 %v7993, %v8219
  %v8252 = vadd.f32 %v7994, %v8222
  %v8253 = vadd.f32 %v7995, %v8224
  %v8254 = vadd.f32 %v7996, %v8227
  %v8255 = vadd.f32 %v7997, %v8229
  %v8256 = vadd.f32 %v7998, %v8232
  %v8257 = vadd.f32 %v7999, %v8234
  %v8258 = vadd.f32 %v8000, %v8237
  %v8259 = vadd.f32 %v8001, %v8239
  %v8260 = vadd.f32 %v8002, %v8242
  %v8261 = vadd.f32 %v8003, %v8244
  %s8262 = scalar_lea.vmem %s7746, 2
  %v8263 = vld [vmem:[%s8262] ss:$2 sm:$0xff]
  %s8264 = scalar_lea.vmem %s7746, 50
  %v8265 = vld [vmem:[%s8264] ss:$2 sm:$0xff]
  %s8266 = scalar_lea.vmem %s7746, 98
  %v8267 = vld [vmem:[%s8266] ss:$2 sm:$0xff]
  %s8268 = scalar_lea.vmem %s7746, 146
  %v8269 = vld [vmem:[%s8268] ss:$2 sm:$0xff]
  %s8270 = scalar_lea.vmem %s7746, 194
  %v8271 = vld [vmem:[%s8270] ss:$2 sm:$0xff]
  %s8272 = scalar_lea.vmem %s7746, 242
  %v8273 = vld [vmem:[%s8272] ss:$2 sm:$0xff]
  %s8274 = scalar_lea.vmem %s7746, 290
  %v8275 = vld [vmem:[%s8274] ss:$2 sm:$0xff]
  %s8276 = scalar_lea.vmem %s7746, 338
  %v8277 = vld [vmem:[%s8276] ss:$2 sm:$0xff]
  %s8278 = scalar_lea.vmem %s7746, 434
  %v8279 = vld [vmem:[%s8278] ss:$2 sm:$0xff]
  %s8280 = scalar_lea.vmem %s7746, 482
  %v8281 = vld [vmem:[%s8280] ss:$2 sm:$0xff]
  %s8282 = scalar_lea.vmem %s7746, 530
  %v8283 = vld [vmem:[%s8282] ss:$2 sm:$0xff]
  %s8284 = scalar_lea.vmem %s7746, 578
  %v8285 = vld [vmem:[%s8284] ss:$2 sm:$0xff]
  %s8286 = scalar_lea.vmem %s7746, 626
  %v8287 = vld [vmem:[%s8286] ss:$2 sm:$0xff]
  %s8288 = scalar_lea.vmem %s7746, 674
  %v8289 = vld [vmem:[%s8288] ss:$2 sm:$0xff]
  %s8290 = scalar_lea.vmem %s7746, 722
  %v8291 = vld [vmem:[%s8290] ss:$2 sm:$0xff]
  %s8292 = scalar_lea.vmem %s7746, 770
  %v8293 = vld [vmem:[%s8292] ss:$2 sm:$0xff]
  %v8294 = vpack.c.bf16 %v8263, %v8263
  %v8295 = vpack.c.bf16 %v8265, %v8265
  %v8296 = vpack.c.bf16 %v8267, %v8267
  %v8297 = vpack.c.bf16 %v8269, %v8269
  %v8298 = vpack.c.bf16 %v8271, %v8271
  %v8299 = vpack.c.bf16 %v8273, %v8273
  %v8300 = vpack.c.bf16 %v8275, %v8275
  %v8301 = vpack.c.bf16 %v8277, %v8277
  %v8302 = vpack.c.bf16 %v8279, %v8279
  %v8303 = vpack.c.bf16 %v8281, %v8281
  %v8304 = vpack.c.bf16 %v8283, %v8283
  %v8305 = vpack.c.bf16 %v8285, %v8285
  %v8306 = vpack.c.bf16 %v8287, %v8287
  %v8307 = vpack.c.bf16 %v8289, %v8289
  %v8308 = vpack.c.bf16 %v8291, %v8291
  %v8309 = vpack.c.bf16 %v8293, %v8293
  %s8310 = scalar_lea.vmem %s6, 320
  %v8311 = vld [vmem:[%s8310] sm:$0xf]
  %v8312 = vld [vmem:[%s8310 + $0x4] sm:$0xf]
  %v8313 = vld [vmem:[%s8310 + $0x8] sm:$0xf]
  %v8314 = vld [vmem:[%s8310 + $0xc] sm:$0xf]
  %v8315 = vld [vmem:[%s8310 + $0x10] sm:$0xf]
  %v8316 = vld [vmem:[%s8310 + $0x14] sm:$0xf]
  %v8317 = vld [vmem:[%s8310 + $0x18] sm:$0xf]
  %v8318 = vld [vmem:[%s8310 + $0x1c] sm:$0xf]
  %v8319 = vld [vmem:[%s8310 + $0x20] sm:$0xf]
  %v8320 = vld [vmem:[%s8310 + $0x24] sm:$0xf]
  %v8321 = vld [vmem:[%s8310 + $0x28] sm:$0xf]
  %v8322 = vld [vmem:[%s8310 + $0x2c] sm:$0xf]
  %v8323 = vld [vmem:[%s8310 + $0x30] sm:$0xf]
  %v8324 = vld [vmem:[%s8310 + $0x34] sm:$0xf]
  %v8325 = vld [vmem:[%s8310 + $0x38] sm:$0xf]
  %v8326 = vld [vmem:[%s8310 + $0x3c] sm:$0xf]
  %v8343 = vunpack.c.l.b16 %v8311
  %v8344 = vunpack.c.l.b16 %v8312
  %v8345 = vunpack.c.l.b16 %v8313
  %v8346 = vunpack.c.l.b16 %v8314
  %v8347 = vunpack.c.l.b16 %v8315
  %v8348 = vunpack.c.l.b16 %v8316
  %v8349 = vunpack.c.l.b16 %v8317
  %v8350 = vunpack.c.l.b16 %v8318
  %v8351 = vunpack.c.l.b16 %v8319
  %v8352 = vunpack.c.l.b16 %v8320
  %v8353 = vunpack.c.l.b16 %v8321
  %v8354 = vunpack.c.l.b16 %v8322
  %v8355 = vunpack.c.l.b16 %v8323
  %v8356 = vunpack.c.l.b16 %v8324
  %v8357 = vunpack.c.l.b16 %v8325
  %v8358 = vunpack.c.l.b16 %v8326
  %v8359 = vpack.c.b16 %v8344, %v8343
  %v8360 = vpack.c.b16 %v8346, %v8345
  %v8361 = vpack.c.b16 %v8348, %v8347
  %v8362 = vpack.c.b16 %v8350, %v8349
  %v8363 = vpack.c.b16 %v8352, %v8351
  %v8364 = vpack.c.b16 %v8354, %v8353
  %v8365 = vpack.c.b16 %v8356, %v8355
  %v8366 = vpack.c.b16 %v8358, %v8357
  %v8383 = vunpack.c.l.b16 %v8294
  %v8384 = vunpack.c.l.b16 %v8295
  %v8385 = vunpack.c.l.b16 %v8296
  %v8386 = vunpack.c.l.b16 %v8297
  %v8387 = vunpack.c.l.b16 %v8298
  %v8388 = vunpack.c.l.b16 %v8299
  %v8389 = vunpack.c.l.b16 %v8300
  %v8390 = vunpack.c.l.b16 %v8301
  %v8391 = vunpack.c.l.b16 %v8302
  %v8392 = vunpack.c.l.b16 %v8303
  %v8393 = vunpack.c.l.b16 %v8304
  %v8394 = vunpack.c.l.b16 %v8305
  %v8395 = vunpack.c.l.b16 %v8306
  %v8396 = vunpack.c.l.b16 %v8307
  %v8397 = vunpack.c.l.b16 %v8308
  %v8398 = vunpack.c.l.b16 %v8309
  %v8399 = vpack.c.b16 %v8384, %v8383
  %v8400 = vpack.c.b16 %v8386, %v8385
  %v8401 = vpack.c.b16 %v8388, %v8387
  %v8402 = vpack.c.b16 %v8390, %v8389
  %v8403 = vpack.c.b16 %v8392, %v8391
  %v8404 = vpack.c.b16 %v8394, %v8393
  %v8405 = vpack.c.b16 %v8396, %v8395
  %v8406 = vpack.c.b16 %v8398, %v8397
  %v8408 = vsel %vm4285, %v8359, 0
  %v8411 = vsel %vm4285, %v8360, 0
  %v8414 = vsel %vm4285, %v8361, 0
  %v8417 = vsel %vm4285, %v8362, 0
  %v8420 = vsel %vm4285, %v8363, 0
  %v8423 = vsel %vm4285, %v8364, 0
  %v8426 = vsel %vm4285, %v8365, 0
  %v8429 = vsel %vm4285, %v8366, 0
  %v8432 = vsel %vm4285, %v8399, 0
  %v8435 = vsel %vm4285, %v8400, 0
  %v8438 = vsel %vm4285, %v8401, 0
  %v8441 = vsel %vm4285, %v8402, 0
  %v8444 = vsel %vm4285, %v8403, 0
  %v8447 = vsel %vm4285, %v8404, 0
  %v8450 = vsel %vm4285, %v8405, 0
  %v8453 = vsel %vm4285, %v8406, 0
  %8455 = vmatpush.bf16.xpose.msra.mxu0 %v8453
  %8456 = vmatpush.bf16.xpose.msra.mxu0 %v8450
  %8457 = vmatpush.bf16.xpose.msra.mxu0 %v8447
  %8458 = vmatpush.bf16.xpose.msra.mxu0 %v8444
  %8459 = vmatpush.bf16.xpose.msra.mxu0 %v8441
  %8460 = vmatpush.bf16.xpose.msra.mxu0 %v8438
  %8461 = vmatpush.bf16.xpose.msra.mxu0 %v8435
  %8462 = vmatpush.bf16.xpose.msra.mxu0 %v8432
  %8463 = vmatmul.bf16.gmra.mxu0 %v8408
  %v8464 = vpop.f32.mrf.mxu0
  %v8465 = vadd.f32 0.0, %v8464
  %v8466 = vpop.f32.mrf.mxu0
  %v8467 = vadd.f32 0.0, %v8466
  %8468 = vmatmul.bf16.gmra.mxu0 %v8411
  %v8469 = vpop.f32.mrf.mxu0
  %v8470 = vadd.f32 0.0, %v8469
  %v8471 = vpop.f32.mrf.mxu0
  %v8472 = vadd.f32 0.0, %v8471
  %8473 = vmatmul.bf16.gmra.mxu0 %v8414
  %v8474 = vpop.f32.mrf.mxu0
  %v8475 = vadd.f32 0.0, %v8474
  %v8476 = vpop.f32.mrf.mxu0
  %v8477 = vadd.f32 0.0, %v8476
  %8478 = vmatmul.bf16.gmra.mxu0 %v8417
  %v8479 = vpop.f32.mrf.mxu0
  %v8480 = vadd.f32 0.0, %v8479
  %v8481 = vpop.f32.mrf.mxu0
  %v8482 = vadd.f32 0.0, %v8481
  %8483 = vmatmul.bf16.gmra.mxu0 %v8420
  %v8484 = vpop.f32.mrf.mxu0
  %v8485 = vadd.f32 0.0, %v8484
  %v8486 = vpop.f32.mrf.mxu0
  %v8487 = vadd.f32 0.0, %v8486
  %8488 = vmatmul.bf16.gmra.mxu0 %v8423
  %v8489 = vpop.f32.mrf.mxu0
  %v8490 = vadd.f32 0.0, %v8489
  %v8491 = vpop.f32.mrf.mxu0
  %v8492 = vadd.f32 0.0, %v8491
  %8493 = vmatmul.bf16.gmra.mxu0 %v8426
  %v8494 = vpop.f32.mrf.mxu0
  %v8495 = vadd.f32 0.0, %v8494
  %v8496 = vpop.f32.mrf.mxu0
  %v8497 = vadd.f32 0.0, %v8496
  %8498 = vmatmul.bf16.gmra.mxu0 %v8429
  %v8499 = vpop.f32.mrf.mxu0
  %v8500 = vadd.f32 0.0, %v8499
  %v8501 = vpop.f32.mrf.mxu0
  %v8502 = vadd.f32 0.0, %v8501
  %8503 = vdwg.mxu0
  %v8504 = vadd.f32 %v8246, %v8465
  %v8505 = vadd.f32 %v8247, %v8467
  %v8506 = vadd.f32 %v8248, %v8470
  %v8507 = vadd.f32 %v8249, %v8472
  %v8508 = vadd.f32 %v8250, %v8475
  %v8509 = vadd.f32 %v8251, %v8477
  %v8510 = vadd.f32 %v8252, %v8480
  %v8511 = vadd.f32 %v8253, %v8482
  %v8512 = vadd.f32 %v8254, %v8485
  %v8513 = vadd.f32 %v8255, %v8487
  %v8514 = vadd.f32 %v8256, %v8490
  %v8515 = vadd.f32 %v8257, %v8492
  %v8516 = vadd.f32 %v8258, %v8495
  %v8517 = vadd.f32 %v8259, %v8497
  %v8518 = vadd.f32 %v8260, %v8500
  %v8519 = vadd.f32 %v8261, %v8502
  %s8520 = scalar_lea.vmem %s1, 48
  %v8521 = vld [vmem:[%s8520] ss:$2 sm:$0xff]
  %s8522 = scalar_lea.vmem %s8520, 48
  %v8523 = vld [vmem:[%s8522] ss:$2 sm:$0xff]
  %s8524 = scalar_lea.vmem %s8520, 96
  %v8525 = vld [vmem:[%s8524] ss:$2 sm:$0xff]
  %s8526 = scalar_lea.vmem %s8520, 144
  %v8527 = vld [vmem:[%s8526] ss:$2 sm:$0xff]
  %s8528 = scalar_lea.vmem %s8520, 192
  %v8529 = vld [vmem:[%s8528] ss:$2 sm:$0xff]
  %s8530 = scalar_lea.vmem %s8520, 240
  %v8531 = vld [vmem:[%s8530] ss:$2 sm:$0xff]
  %s8532 = scalar_lea.vmem %s8520, 288
  %v8533 = vld [vmem:[%s8532] ss:$2 sm:$0xff]
  %s8534 = scalar_lea.vmem %s8520, 336
  %v8535 = vld [vmem:[%s8534] ss:$2 sm:$0xff]
  %s8536 = scalar_lea.vmem %s8520, 432
  %v8537 = vld [vmem:[%s8536] ss:$2 sm:$0xff]
  %s8538 = scalar_lea.vmem %s8520, 480
  %v8539 = vld [vmem:[%s8538] ss:$2 sm:$0xff]
  %s8540 = scalar_lea.vmem %s8520, 528
  %v8541 = vld [vmem:[%s8540] ss:$2 sm:$0xff]
  %s8542 = scalar_lea.vmem %s8520, 576
  %v8543 = vld [vmem:[%s8542] ss:$2 sm:$0xff]
  %s8544 = scalar_lea.vmem %s8520, 624
  %v8545 = vld [vmem:[%s8544] ss:$2 sm:$0xff]
  %s8546 = scalar_lea.vmem %s8520, 672
  %v8547 = vld [vmem:[%s8546] ss:$2 sm:$0xff]
  %s8548 = scalar_lea.vmem %s8520, 720
  %v8549 = vld [vmem:[%s8548] ss:$2 sm:$0xff]
  %s8550 = scalar_lea.vmem %s8520, 768
  %v8551 = vld [vmem:[%s8550] ss:$2 sm:$0xff]
  %v8552 = vpack.c.bf16 %v8521, %v8521
  %v8553 = vpack.c.bf16 %v8523, %v8523
  %v8554 = vpack.c.bf16 %v8525, %v8525
  %v8555 = vpack.c.bf16 %v8527, %v8527
  %v8556 = vpack.c.bf16 %v8529, %v8529
  %v8557 = vpack.c.bf16 %v8531, %v8531
  %v8558 = vpack.c.bf16 %v8533, %v8533
  %v8559 = vpack.c.bf16 %v8535, %v8535
  %v8560 = vpack.c.bf16 %v8537, %v8537
  %v8561 = vpack.c.bf16 %v8539, %v8539
  %v8562 = vpack.c.bf16 %v8541, %v8541
  %v8563 = vpack.c.bf16 %v8543, %v8543
  %v8564 = vpack.c.bf16 %v8545, %v8545
  %v8565 = vpack.c.bf16 %v8547, %v8547
  %v8566 = vpack.c.bf16 %v8549, %v8549
  %v8567 = vpack.c.bf16 %v8551, %v8551
  %s8568 = scalar_lea.vmem %s6, 384
  %v8569 = vld [vmem:[%s8568] sm:$0xf]
  %v8570 = vld [vmem:[%s8568 + $0x4] sm:$0xf]
  %v8571 = vld [vmem:[%s8568 + $0x8] sm:$0xf]
  %v8572 = vld [vmem:[%s8568 + $0xc] sm:$0xf]
  %v8573 = vld [vmem:[%s8568 + $0x10] sm:$0xf]
  %v8574 = vld [vmem:[%s8568 + $0x14] sm:$0xf]
  %v8575 = vld [vmem:[%s8568 + $0x18] sm:$0xf]
  %v8576 = vld [vmem:[%s8568 + $0x1c] sm:$0xf]
  %v8577 = vld [vmem:[%s8568 + $0x20] sm:$0xf]
  %v8578 = vld [vmem:[%s8568 + $0x24] sm:$0xf]
  %v8579 = vld [vmem:[%s8568 + $0x28] sm:$0xf]
  %v8580 = vld [vmem:[%s8568 + $0x2c] sm:$0xf]
  %v8581 = vld [vmem:[%s8568 + $0x30] sm:$0xf]
  %v8582 = vld [vmem:[%s8568 + $0x34] sm:$0xf]
  %v8583 = vld [vmem:[%s8568 + $0x38] sm:$0xf]
  %v8584 = vld [vmem:[%s8568 + $0x3c] sm:$0xf]
  %v8601 = vunpack.c.l.b16 %v8569
  %v8602 = vunpack.c.l.b16 %v8570
  %v8603 = vunpack.c.l.b16 %v8571
  %v8604 = vunpack.c.l.b16 %v8572
  %v8605 = vunpack.c.l.b16 %v8573
  %v8606 = vunpack.c.l.b16 %v8574
  %v8607 = vunpack.c.l.b16 %v8575
  %v8608 = vunpack.c.l.b16 %v8576
  %v8609 = vunpack.c.l.b16 %v8577
  %v8610 = vunpack.c.l.b16 %v8578
  %v8611 = vunpack.c.l.b16 %v8579
  %v8612 = vunpack.c.l.b16 %v8580
  %v8613 = vunpack.c.l.b16 %v8581
  %v8614 = vunpack.c.l.b16 %v8582
  %v8615 = vunpack.c.l.b16 %v8583
  %v8616 = vunpack.c.l.b16 %v8584
  %v8617 = vpack.c.b16 %v8602, %v8601
  %v8618 = vpack.c.b16 %v8604, %v8603
  %v8619 = vpack.c.b16 %v8606, %v8605
  %v8620 = vpack.c.b16 %v8608, %v8607
  %v8621 = vpack.c.b16 %v8610, %v8609
  %v8622 = vpack.c.b16 %v8612, %v8611
  %v8623 = vpack.c.b16 %v8614, %v8613
  %v8624 = vpack.c.b16 %v8616, %v8615
  %v8641 = vunpack.c.l.b16 %v8552
  %v8642 = vunpack.c.l.b16 %v8553
  %v8643 = vunpack.c.l.b16 %v8554
  %v8644 = vunpack.c.l.b16 %v8555
  %v8645 = vunpack.c.l.b16 %v8556
  %v8646 = vunpack.c.l.b16 %v8557
  %v8647 = vunpack.c.l.b16 %v8558
  %v8648 = vunpack.c.l.b16 %v8559
  %v8649 = vunpack.c.l.b16 %v8560
  %v8650 = vunpack.c.l.b16 %v8561
  %v8651 = vunpack.c.l.b16 %v8562
  %v8652 = vunpack.c.l.b16 %v8563
  %v8653 = vunpack.c.l.b16 %v8564
  %v8654 = vunpack.c.l.b16 %v8565
  %v8655 = vunpack.c.l.b16 %v8566
  %v8656 = vunpack.c.l.b16 %v8567
  %v8657 = vpack.c.b16 %v8642, %v8641
  %v8658 = vpack.c.b16 %v8644, %v8643
  %v8659 = vpack.c.b16 %v8646, %v8645
  %v8660 = vpack.c.b16 %v8648, %v8647
  %v8661 = vpack.c.b16 %v8650, %v8649
  %v8662 = vpack.c.b16 %v8652, %v8651
  %v8663 = vpack.c.b16 %v8654, %v8653
  %v8664 = vpack.c.b16 %v8656, %v8655
  %v8666 = vsel %vm4285, %v8617, 0
  %v8669 = vsel %vm4285, %v8618, 0
  %v8672 = vsel %vm4285, %v8619, 0
  %v8675 = vsel %vm4285, %v8620, 0
  %v8678 = vsel %vm4285, %v8621, 0
  %v8681 = vsel %vm4285, %v8622, 0
  %v8684 = vsel %vm4285, %v8623, 0
  %v8687 = vsel %vm4285, %v8624, 0
  %v8690 = vsel %vm4285, %v8657, 0
  %v8693 = vsel %vm4285, %v8658, 0
  %v8696 = vsel %vm4285, %v8659, 0
  %v8699 = vsel %vm4285, %v8660, 0
  %v8702 = vsel %vm4285, %v8661, 0
  %v8705 = vsel %vm4285, %v8662, 0
  %v8708 = vsel %vm4285, %v8663, 0
  %v8711 = vsel %vm4285, %v8664, 0
  %8713 = vmatpush.bf16.xpose.msra.mxu0 %v8711
  %8714 = vmatpush.bf16.xpose.msra.mxu0 %v8708
  %8715 = vmatpush.bf16.xpose.msra.mxu0 %v8705
  %8716 = vmatpush.bf16.xpose.msra.mxu0 %v8702
  %8717 = vmatpush.bf16.xpose.msra.mxu0 %v8699
  %8718 = vmatpush.bf16.xpose.msra.mxu0 %v8696
  %8719 = vmatpush.bf16.xpose.msra.mxu0 %v8693
  %8720 = vmatpush.bf16.xpose.msra.mxu0 %v8690
  %8721 = vmatmul.bf16.gmra.mxu0 %v8666
  %v8722 = vpop.f32.mrf.mxu0
  %v8723 = vadd.f32 0.0, %v8722
  %v8724 = vpop.f32.mrf.mxu0
  %v8725 = vadd.f32 0.0, %v8724
  %8726 = vmatmul.bf16.gmra.mxu0 %v8669
  %v8727 = vpop.f32.mrf.mxu0
  %v8728 = vadd.f32 0.0, %v8727
  %v8729 = vpop.f32.mrf.mxu0
  %v8730 = vadd.f32 0.0, %v8729
  %8731 = vmatmul.bf16.gmra.mxu0 %v8672
  %v8732 = vpop.f32.mrf.mxu0
  %v8733 = vadd.f32 0.0, %v8732
  %v8734 = vpop.f32.mrf.mxu0
  %v8735 = vadd.f32 0.0, %v8734
  %8736 = vmatmul.bf16.gmra.mxu0 %v8675
  %v8737 = vpop.f32.mrf.mxu0
  %v8738 = vadd.f32 0.0, %v8737
  %v8739 = vpop.f32.mrf.mxu0
  %v8740 = vadd.f32 0.0, %v8739
  %8741 = vmatmul.bf16.gmra.mxu0 %v8678
  %v8742 = vpop.f32.mrf.mxu0
  %v8743 = vadd.f32 0.0, %v8742
  %v8744 = vpop.f32.mrf.mxu0
  %v8745 = vadd.f32 0.0, %v8744
  %8746 = vmatmul.bf16.gmra.mxu0 %v8681
  %v8747 = vpop.f32.mrf.mxu0
  %v8748 = vadd.f32 0.0, %v8747
  %v8749 = vpop.f32.mrf.mxu0
  %v8750 = vadd.f32 0.0, %v8749
  %8751 = vmatmul.bf16.gmra.mxu0 %v8684
  %v8752 = vpop.f32.mrf.mxu0
  %v8753 = vadd.f32 0.0, %v8752
  %v8754 = vpop.f32.mrf.mxu0
  %v8755 = vadd.f32 0.0, %v8754
  %8756 = vmatmul.bf16.gmra.mxu0 %v8687
  %v8757 = vpop.f32.mrf.mxu0
  %v8758 = vadd.f32 0.0, %v8757
  %v8759 = vpop.f32.mrf.mxu0
  %v8760 = vadd.f32 0.0, %v8759
  %8761 = vdwg.mxu0
  %v8762 = vadd.f32 %v8504, %v8723
  %v8763 = vadd.f32 %v8505, %v8725
  %v8764 = vadd.f32 %v8506, %v8728
  %v8765 = vadd.f32 %v8507, %v8730
  %v8766 = vadd.f32 %v8508, %v8733
  %v8767 = vadd.f32 %v8509, %v8735
  %v8768 = vadd.f32 %v8510, %v8738
  %v8769 = vadd.f32 %v8511, %v8740
  %v8770 = vadd.f32 %v8512, %v8743
  %v8771 = vadd.f32 %v8513, %v8745
  %v8772 = vadd.f32 %v8514, %v8748
  %v8773 = vadd.f32 %v8515, %v8750
  %v8774 = vadd.f32 %v8516, %v8753
  %v8775 = vadd.f32 %v8517, %v8755
  %v8776 = vadd.f32 %v8518, %v8758
  %v8777 = vadd.f32 %v8519, %v8760
  %s8778 = scalar_lea.vmem %s8520, 1
  %v8779 = vld [vmem:[%s8778] ss:$2 sm:$0xff]
  %s8780 = scalar_lea.vmem %s8520, 49
  %v8781 = vld [vmem:[%s8780] ss:$2 sm:$0xff]
  %s8782 = scalar_lea.vmem %s8520, 97
  %v8783 = vld [vmem:[%s8782] ss:$2 sm:$0xff]
  %s8784 = scalar_lea.vmem %s8520, 145
  %v8785 = vld [vmem:[%s8784] ss:$2 sm:$0xff]
  %s8786 = scalar_lea.vmem %s8520, 193
  %v8787 = vld [vmem:[%s8786] ss:$2 sm:$0xff]
  %s8788 = scalar_lea.vmem %s8520, 241
  %v8789 = vld [vmem:[%s8788] ss:$2 sm:$0xff]
  %s8790 = scalar_lea.vmem %s8520, 289
  %v8791 = vld [vmem:[%s8790] ss:$2 sm:$0xff]
  %s8792 = scalar_lea.vmem %s8520, 337
  %v8793 = vld [vmem:[%s8792] ss:$2 sm:$0xff]
  %s8794 = scalar_lea.vmem %s8520, 433
  %v8795 = vld [vmem:[%s8794] ss:$2 sm:$0xff]
  %s8796 = scalar_lea.vmem %s8520, 481
  %v8797 = vld [vmem:[%s8796] ss:$2 sm:$0xff]
  %s8798 = scalar_lea.vmem %s8520, 529
  %v8799 = vld [vmem:[%s8798] ss:$2 sm:$0xff]
  %s8800 = scalar_lea.vmem %s8520, 577
  %v8801 = vld [vmem:[%s8800] ss:$2 sm:$0xff]
  %s8802 = scalar_lea.vmem %s8520, 625
  %v8803 = vld [vmem:[%s8802] ss:$2 sm:$0xff]
  %s8804 = scalar_lea.vmem %s8520, 673
  %v8805 = vld [vmem:[%s8804] ss:$2 sm:$0xff]
  %s8806 = scalar_lea.vmem %s8520, 721
  %v8807 = vld [vmem:[%s8806] ss:$2 sm:$0xff]
  %s8808 = scalar_lea.vmem %s8520, 769
  %v8809 = vld [vmem:[%s8808] ss:$2 sm:$0xff]
  %v8810 = vpack.c.bf16 %v8779, %v8779
  %v8811 = vpack.c.bf16 %v8781, %v8781
  %v8812 = vpack.c.bf16 %v8783, %v8783
  %v8813 = vpack.c.bf16 %v8785, %v8785
  %v8814 = vpack.c.bf16 %v8787, %v8787
  %v8815 = vpack.c.bf16 %v8789, %v8789
  %v8816 = vpack.c.bf16 %v8791, %v8791
  %v8817 = vpack.c.bf16 %v8793, %v8793
  %v8818 = vpack.c.bf16 %v8795, %v8795
  %v8819 = vpack.c.bf16 %v8797, %v8797
  %v8820 = vpack.c.bf16 %v8799, %v8799
  %v8821 = vpack.c.bf16 %v8801, %v8801
  %v8822 = vpack.c.bf16 %v8803, %v8803
  %v8823 = vpack.c.bf16 %v8805, %v8805
  %v8824 = vpack.c.bf16 %v8807, %v8807
  %v8825 = vpack.c.bf16 %v8809, %v8809
  %s8826 = scalar_lea.vmem %s6, 448
  %v8827 = vld [vmem:[%s8826] sm:$0xf]
  %v8828 = vld [vmem:[%s8826 + $0x4] sm:$0xf]
  %v8829 = vld [vmem:[%s8826 + $0x8] sm:$0xf]
  %v8830 = vld [vmem:[%s8826 + $0xc] sm:$0xf]
  %v8831 = vld [vmem:[%s8826 + $0x10] sm:$0xf]
  %v8832 = vld [vmem:[%s8826 + $0x14] sm:$0xf]
  %v8833 = vld [vmem:[%s8826 + $0x18] sm:$0xf]
  %v8834 = vld [vmem:[%s8826 + $0x1c] sm:$0xf]
  %v8835 = vld [vmem:[%s8826 + $0x20] sm:$0xf]
  %v8836 = vld [vmem:[%s8826 + $0x24] sm:$0xf]
  %v8837 = vld [vmem:[%s8826 + $0x28] sm:$0xf]
  %v8838 = vld [vmem:[%s8826 + $0x2c] sm:$0xf]
  %v8839 = vld [vmem:[%s8826 + $0x30] sm:$0xf]
  %v8840 = vld [vmem:[%s8826 + $0x34] sm:$0xf]
  %v8841 = vld [vmem:[%s8826 + $0x38] sm:$0xf]
  %v8842 = vld [vmem:[%s8826 + $0x3c] sm:$0xf]
  %v8859 = vunpack.c.l.b16 %v8827
  %v8860 = vunpack.c.l.b16 %v8828
  %v8861 = vunpack.c.l.b16 %v8829
  %v8862 = vunpack.c.l.b16 %v8830
  %v8863 = vunpack.c.l.b16 %v8831
  %v8864 = vunpack.c.l.b16 %v8832
  %v8865 = vunpack.c.l.b16 %v8833
  %v8866 = vunpack.c.l.b16 %v8834
  %v8867 = vunpack.c.l.b16 %v8835
  %v8868 = vunpack.c.l.b16 %v8836
  %v8869 = vunpack.c.l.b16 %v8837
  %v8870 = vunpack.c.l.b16 %v8838
  %v8871 = vunpack.c.l.b16 %v8839
  %v8872 = vunpack.c.l.b16 %v8840
  %v8873 = vunpack.c.l.b16 %v8841
  %v8874 = vunpack.c.l.b16 %v8842
  %v8875 = vpack.c.b16 %v8860, %v8859
  %v8876 = vpack.c.b16 %v8862, %v8861
  %v8877 = vpack.c.b16 %v8864, %v8863
  %v8878 = vpack.c.b16 %v8866, %v8865
  %v8879 = vpack.c.b16 %v8868, %v8867
  %v8880 = vpack.c.b16 %v8870, %v8869
  %v8881 = vpack.c.b16 %v8872, %v8871
  %v8882 = vpack.c.b16 %v8874, %v8873
  %v8899 = vunpack.c.l.b16 %v8810
  %v8900 = vunpack.c.l.b16 %v8811
  %v8901 = vunpack.c.l.b16 %v8812
  %v8902 = vunpack.c.l.b16 %v8813
  %v8903 = vunpack.c.l.b16 %v8814
  %v8904 = vunpack.c.l.b16 %v8815
  %v8905 = vunpack.c.l.b16 %v8816
  %v8906 = vunpack.c.l.b16 %v8817
  %v8907 = vunpack.c.l.b16 %v8818
  %v8908 = vunpack.c.l.b16 %v8819
  %v8909 = vunpack.c.l.b16 %v8820
  %v8910 = vunpack.c.l.b16 %v8821
  %v8911 = vunpack.c.l.b16 %v8822
  %v8912 = vunpack.c.l.b16 %v8823
  %v8913 = vunpack.c.l.b16 %v8824
  %v8914 = vunpack.c.l.b16 %v8825
  %v8915 = vpack.c.b16 %v8900, %v8899
  %v8916 = vpack.c.b16 %v8902, %v8901
  %v8917 = vpack.c.b16 %v8904, %v8903
  %v8918 = vpack.c.b16 %v8906, %v8905
  %v8919 = vpack.c.b16 %v8908, %v8907
  %v8920 = vpack.c.b16 %v8910, %v8909
  %v8921 = vpack.c.b16 %v8912, %v8911
  %v8922 = vpack.c.b16 %v8914, %v8913
  %v8924 = vsel %vm4285, %v8875, 0
  %v8927 = vsel %vm4285, %v8876, 0
  %v8930 = vsel %vm4285, %v8877, 0
  %v8933 = vsel %vm4285, %v8878, 0
  %v8936 = vsel %vm4285, %v8879, 0
  %v8939 = vsel %vm4285, %v8880, 0
  %v8942 = vsel %vm4285, %v8881, 0
  %v8945 = vsel %vm4285, %v8882, 0
  %v8948 = vsel %vm4285, %v8915, 0
  %v8951 = vsel %vm4285, %v8916, 0
  %v8954 = vsel %vm4285, %v8917, 0
  %v8957 = vsel %vm4285, %v8918, 0
  %v8960 = vsel %vm4285, %v8919, 0
  %v8963 = vsel %vm4285, %v8920, 0
  %v8966 = vsel %vm4285, %v8921, 0
  %v8969 = vsel %vm4285, %v8922, 0
  %8971 = vmatpush.bf16.xpose.msra.mxu0 %v8969
  %8972 = vmatpush.bf16.xpose.msra.mxu0 %v8966
  %8973 = vmatpush.bf16.xpose.msra.mxu0 %v8963
  %8974 = vmatpush.bf16.xpose.msra.mxu0 %v8960
  %8975 = vmatpush.bf16.xpose.msra.mxu0 %v8957
  %8976 = vmatpush.bf16.xpose.msra.mxu0 %v8954
  %8977 = vmatpush.bf16.xpose.msra.mxu0 %v8951
  %8978 = vmatpush.bf16.xpose.msra.mxu0 %v8948
  %8979 = vmatmul.bf16.gmra.mxu0 %v8924
  %v8980 = vpop.f32.mrf.mxu0
  %v8981 = vadd.f32 0.0, %v8980
  %v8982 = vpop.f32.mrf.mxu0
  %v8983 = vadd.f32 0.0, %v8982
  %8984 = vmatmul.bf16.gmra.mxu0 %v8927
  %v8985 = vpop.f32.mrf.mxu0
  %v8986 = vadd.f32 0.0, %v8985
  %v8987 = vpop.f32.mrf.mxu0
  %v8988 = vadd.f32 0.0, %v8987
  %8989 = vmatmul.bf16.gmra.mxu0 %v8930
  %v8990 = vpop.f32.mrf.mxu0
  %v8991 = vadd.f32 0.0, %v8990
  %v8992 = vpop.f32.mrf.mxu0
  %v8993 = vadd.f32 0.0, %v8992
  %8994 = vmatmul.bf16.gmra.mxu0 %v8933
  %v8995 = vpop.f32.mrf.mxu0
  %v8996 = vadd.f32 0.0, %v8995
  %v8997 = vpop.f32.mrf.mxu0
  %v8998 = vadd.f32 0.0, %v8997
  %8999 = vmatmul.bf16.gmra.mxu0 %v8936
  %v9000 = vpop.f32.mrf.mxu0
  %v9001 = vadd.f32 0.0, %v9000
  %v9002 = vpop.f32.mrf.mxu0
  %v9003 = vadd.f32 0.0, %v9002
  %9004 = vmatmul.bf16.gmra.mxu0 %v8939
  %v9005 = vpop.f32.mrf.mxu0
  %v9006 = vadd.f32 0.0, %v9005
  %v9007 = vpop.f32.mrf.mxu0
  %v9008 = vadd.f32 0.0, %v9007
  %9009 = vmatmul.bf16.gmra.mxu0 %v8942
  %v9010 = vpop.f32.mrf.mxu0
  %v9011 = vadd.f32 0.0, %v9010
  %v9012 = vpop.f32.mrf.mxu0
  %v9013 = vadd.f32 0.0, %v9012
  %9014 = vmatmul.bf16.gmra.mxu0 %v8945
  %v9015 = vpop.f32.mrf.mxu0
  %v9016 = vadd.f32 0.0, %v9015
  %v9017 = vpop.f32.mrf.mxu0
  %v9018 = vadd.f32 0.0, %v9017
  %9019 = vdwg.mxu0
  %v9020 = vadd.f32 %v8762, %v8981
  %v9021 = vadd.f32 %v8763, %v8983
  %v9022 = vadd.f32 %v8764, %v8986
  %v9023 = vadd.f32 %v8765, %v8988
  %v9024 = vadd.f32 %v8766, %v8991
  %v9025 = vadd.f32 %v8767, %v8993
  %v9026 = vadd.f32 %v8768, %v8996
  %v9027 = vadd.f32 %v8769, %v8998
  %v9028 = vadd.f32 %v8770, %v9001
  %v9029 = vadd.f32 %v8771, %v9003
  %v9030 = vadd.f32 %v8772, %v9006
  %v9031 = vadd.f32 %v8773, %v9008
  %v9032 = vadd.f32 %v8774, %v9011
  %v9033 = vadd.f32 %v8775, %v9013
  %v9034 = vadd.f32 %v8776, %v9016
  %v9035 = vadd.f32 %v8777, %v9018
  %s9036 = scalar_lea.vmem %s8520, 2
  %v9037 = vld [vmem:[%s9036] ss:$2 sm:$0xff]
  %s9038 = scalar_lea.vmem %s8520, 50
  %v9039 = vld [vmem:[%s9038] ss:$2 sm:$0xff]
  %s9040 = scalar_lea.vmem %s8520, 98
  %v9041 = vld [vmem:[%s9040] ss:$2 sm:$0xff]
  %s9042 = scalar_lea.vmem %s8520, 146
  %v9043 = vld [vmem:[%s9042] ss:$2 sm:$0xff]
  %s9044 = scalar_lea.vmem %s8520, 194
  %v9045 = vld [vmem:[%s9044] ss:$2 sm:$0xff]
  %s9046 = scalar_lea.vmem %s8520, 242
  %v9047 = vld [vmem:[%s9046] ss:$2 sm:$0xff]
  %s9048 = scalar_lea.vmem %s8520, 290
  %v9049 = vld [vmem:[%s9048] ss:$2 sm:$0xff]
  %s9050 = scalar_lea.vmem %s8520, 338
  %v9051 = vld [vmem:[%s9050] ss:$2 sm:$0xff]
  %s9052 = scalar_lea.vmem %s8520, 434
  %v9053 = vld [vmem:[%s9052] ss:$2 sm:$0xff]
  %s9054 = scalar_lea.vmem %s8520, 482
  %v9055 = vld [vmem:[%s9054] ss:$2 sm:$0xff]
  %s9056 = scalar_lea.vmem %s8520, 530
  %v9057 = vld [vmem:[%s9056] ss:$2 sm:$0xff]
  %s9058 = scalar_lea.vmem %s8520, 578
  %v9059 = vld [vmem:[%s9058] ss:$2 sm:$0xff]
  %s9060 = scalar_lea.vmem %s8520, 626
  %v9061 = vld [vmem:[%s9060] ss:$2 sm:$0xff]
  %s9062 = scalar_lea.vmem %s8520, 674
  %v9063 = vld [vmem:[%s9062] ss:$2 sm:$0xff]
  %s9064 = scalar_lea.vmem %s8520, 722
  %v9065 = vld [vmem:[%s9064] ss:$2 sm:$0xff]
  %s9066 = scalar_lea.vmem %s8520, 770
  %v9067 = vld [vmem:[%s9066] ss:$2 sm:$0xff]
  %v9068 = vpack.c.bf16 %v9037, %v9037
  %v9069 = vpack.c.bf16 %v9039, %v9039
  %v9070 = vpack.c.bf16 %v9041, %v9041
  %v9071 = vpack.c.bf16 %v9043, %v9043
  %v9072 = vpack.c.bf16 %v9045, %v9045
  %v9073 = vpack.c.bf16 %v9047, %v9047
  %v9074 = vpack.c.bf16 %v9049, %v9049
  %v9075 = vpack.c.bf16 %v9051, %v9051
  %v9076 = vpack.c.bf16 %v9053, %v9053
  %v9077 = vpack.c.bf16 %v9055, %v9055
  %v9078 = vpack.c.bf16 %v9057, %v9057
  %v9079 = vpack.c.bf16 %v9059, %v9059
  %v9080 = vpack.c.bf16 %v9061, %v9061
  %v9081 = vpack.c.bf16 %v9063, %v9063
  %v9082 = vpack.c.bf16 %v9065, %v9065
  %v9083 = vpack.c.bf16 %v9067, %v9067
  %s9084 = scalar_lea.vmem %s6, 512
  %v9085 = vld [vmem:[%s9084] sm:$0xf]
  %v9086 = vld [vmem:[%s9084 + $0x4] sm:$0xf]
  %v9087 = vld [vmem:[%s9084 + $0x8] sm:$0xf]
  %v9088 = vld [vmem:[%s9084 + $0xc] sm:$0xf]
  %v9089 = vld [vmem:[%s9084 + $0x10] sm:$0xf]
  %v9090 = vld [vmem:[%s9084 + $0x14] sm:$0xf]
  %v9091 = vld [vmem:[%s9084 + $0x18] sm:$0xf]
  %v9092 = vld [vmem:[%s9084 + $0x1c] sm:$0xf]
  %v9093 = vld [vmem:[%s9084 + $0x20] sm:$0xf]
  %v9094 = vld [vmem:[%s9084 + $0x24] sm:$0xf]
  %v9095 = vld [vmem:[%s9084 + $0x28] sm:$0xf]
  %v9096 = vld [vmem:[%s9084 + $0x2c] sm:$0xf]
  %v9097 = vld [vmem:[%s9084 + $0x30] sm:$0xf]
  %v9098 = vld [vmem:[%s9084 + $0x34] sm:$0xf]
  %v9099 = vld [vmem:[%s9084 + $0x38] sm:$0xf]
  %v9100 = vld [vmem:[%s9084 + $0x3c] sm:$0xf]
  %v9117 = vunpack.c.l.b16 %v9085
  %v9118 = vunpack.c.l.b16 %v9086
  %v9119 = vunpack.c.l.b16 %v9087
  %v9120 = vunpack.c.l.b16 %v9088
  %v9121 = vunpack.c.l.b16 %v9089
  %v9122 = vunpack.c.l.b16 %v9090
  %v9123 = vunpack.c.l.b16 %v9091
  %v9124 = vunpack.c.l.b16 %v9092
  %v9125 = vunpack.c.l.b16 %v9093
  %v9126 = vunpack.c.l.b16 %v9094
  %v9127 = vunpack.c.l.b16 %v9095
  %v9128 = vunpack.c.l.b16 %v9096
  %v9129 = vunpack.c.l.b16 %v9097
  %v9130 = vunpack.c.l.b16 %v9098
  %v9131 = vunpack.c.l.b16 %v9099
  %v9132 = vunpack.c.l.b16 %v9100
  %v9133 = vpack.c.b16 %v9118, %v9117
  %v9134 = vpack.c.b16 %v9120, %v9119
  %v9135 = vpack.c.b16 %v9122, %v9121
  %v9136 = vpack.c.b16 %v9124, %v9123
  %v9137 = vpack.c.b16 %v9126, %v9125
  %v9138 = vpack.c.b16 %v9128, %v9127
  %v9139 = vpack.c.b16 %v9130, %v9129
  %v9140 = vpack.c.b16 %v9132, %v9131
  %v9157 = vunpack.c.l.b16 %v9068
  %v9158 = vunpack.c.l.b16 %v9069
  %v9159 = vunpack.c.l.b16 %v9070
  %v9160 = vunpack.c.l.b16 %v9071
  %v9161 = vunpack.c.l.b16 %v9072
  %v9162 = vunpack.c.l.b16 %v9073
  %v9163 = vunpack.c.l.b16 %v9074
  %v9164 = vunpack.c.l.b16 %v9075
  %v9165 = vunpack.c.l.b16 %v9076
  %v9166 = vunpack.c.l.b16 %v9077
  %v9167 = vunpack.c.l.b16 %v9078
  %v9168 = vunpack.c.l.b16 %v9079
  %v9169 = vunpack.c.l.b16 %v9080
  %v9170 = vunpack.c.l.b16 %v9081
  %v9171 = vunpack.c.l.b16 %v9082
  %v9172 = vunpack.c.l.b16 %v9083
  %v9173 = vpack.c.b16 %v9158, %v9157
  %v9174 = vpack.c.b16 %v9160, %v9159
  %v9175 = vpack.c.b16 %v9162, %v9161
  %v9176 = vpack.c.b16 %v9164, %v9163
  %v9177 = vpack.c.b16 %v9166, %v9165
  %v9178 = vpack.c.b16 %v9168, %v9167
  %v9179 = vpack.c.b16 %v9170, %v9169
  %v9180 = vpack.c.b16 %v9172, %v9171
  %v9182 = vsel %vm4285, %v9133, 0
  %v9185 = vsel %vm4285, %v9134, 0
  %v9188 = vsel %vm4285, %v9135, 0
  %v9191 = vsel %vm4285, %v9136, 0
  %v9194 = vsel %vm4285, %v9137, 0
  %v9197 = vsel %vm4285, %v9138, 0
  %v9200 = vsel %vm4285, %v9139, 0
  %v9203 = vsel %vm4285, %v9140, 0
  %v9206 = vsel %vm4285, %v9173, 0
  %v9209 = vsel %vm4285, %v9174, 0
  %v9212 = vsel %vm4285, %v9175, 0
  %v9215 = vsel %vm4285, %v9176, 0
  %v9218 = vsel %vm4285, %v9177, 0
  %v9221 = vsel %vm4285, %v9178, 0
  %v9224 = vsel %vm4285, %v9179, 0
  %v9227 = vsel %vm4285, %v9180, 0
  %9229 = vmatpush.bf16.xpose.msra.mxu0 %v9227
  %9230 = vmatpush.bf16.xpose.msra.mxu0 %v9224
  %9231 = vmatpush.bf16.xpose.msra.mxu0 %v9221
  %9232 = vmatpush.bf16.xpose.msra.mxu0 %v9218
  %9233 = vmatpush.bf16.xpose.msra.mxu0 %v9215
  %9234 = vmatpush.bf16.xpose.msra.mxu0 %v9212
  %9235 = vmatpush.bf16.xpose.msra.mxu0 %v9209
  %9236 = vmatpush.bf16.xpose.msra.mxu0 %v9206
  %9237 = vmatmul.bf16.gmra.mxu0 %v9182
  %v9238 = vpop.f32.mrf.mxu0
  %v9239 = vadd.f32 0.0, %v9238
  %v9240 = vpop.f32.mrf.mxu0
  %v9241 = vadd.f32 0.0, %v9240
  %9242 = vmatmul.bf16.gmra.mxu0 %v9185
  %v9243 = vpop.f32.mrf.mxu0
  %v9244 = vadd.f32 0.0, %v9243
  %v9245 = vpop.f32.mrf.mxu0
  %v9246 = vadd.f32 0.0, %v9245
  %9247 = vmatmul.bf16.gmra.mxu0 %v9188
  %v9248 = vpop.f32.mrf.mxu0
  %v9249 = vadd.f32 0.0, %v9248
  %v9250 = vpop.f32.mrf.mxu0
  %v9251 = vadd.f32 0.0, %v9250
  %9252 = vmatmul.bf16.gmra.mxu0 %v9191
  %v9253 = vpop.f32.mrf.mxu0
  %v9254 = vadd.f32 0.0, %v9253
  %v9255 = vpop.f32.mrf.mxu0
  %v9256 = vadd.f32 0.0, %v9255
  %9257 = vmatmul.bf16.gmra.mxu0 %v9194
  %v9258 = vpop.f32.mrf.mxu0
  %v9259 = vadd.f32 0.0, %v9258
  %v9260 = vpop.f32.mrf.mxu0
  %v9261 = vadd.f32 0.0, %v9260
  %9262 = vmatmul.bf16.gmra.mxu0 %v9197
  %v9263 = vpop.f32.mrf.mxu0
  %v9264 = vadd.f32 0.0, %v9263
  %v9265 = vpop.f32.mrf.mxu0
  %v9266 = vadd.f32 0.0, %v9265
  %9267 = vmatmul.bf16.gmra.mxu0 %v9200
  %v9268 = vpop.f32.mrf.mxu0
  %v9269 = vadd.f32 0.0, %v9268
  %v9270 = vpop.f32.mrf.mxu0
  %v9271 = vadd.f32 0.0, %v9270
  %9272 = vmatmul.bf16.gmra.mxu0 %v9203
  %v9273 = vpop.f32.mrf.mxu0
  %v9274 = vadd.f32 0.0, %v9273
  %v9275 = vpop.f32.mrf.mxu0
  %v9276 = vadd.f32 0.0, %v9275
  %9277 = vdwg.mxu0
  %v9278 = vadd.f32 %v9020, %v9239
  %v9279 = vadd.f32 %v9021, %v9241
  %v9280 = vadd.f32 %v9022, %v9244
  %v9281 = vadd.f32 %v9023, %v9246
  %v9282 = vadd.f32 %v9024, %v9249
  %v9283 = vadd.f32 %v9025, %v9251
  %v9284 = vadd.f32 %v9026, %v9254
  %v9285 = vadd.f32 %v9027, %v9256
  %v9286 = vadd.f32 %v9028, %v9259
  %v9287 = vadd.f32 %v9029, %v9261
  %v9288 = vadd.f32 %v9030, %v9264
  %v9289 = vadd.f32 %v9031, %v9266
  %v9290 = vadd.f32 %v9032, %v9269
  %v9291 = vadd.f32 %v9033, %v9271
  %v9292 = vadd.f32 %v9034, %v9274
  %v9293 = vadd.f32 %v9035, %v9276
  %v9294 = vld [vmem:[%s7] sm:$0xff]
  %v9295 = vld [vmem:[%s7 + $0x8] sm:$0xff]
  %v9296 = vld [vmem:[%s7 + $0x10] sm:$0xff]
  %v9297 = vld [vmem:[%s7 + $0x18] sm:$0xff]
  %v9298 = vld [vmem:[%s7 + $0x20] sm:$0xff]
  %v9299 = vld [vmem:[%s7 + $0x28] sm:$0xff]
  %v9300 = vld [vmem:[%s7 + $0x30] sm:$0xff]
  %v9301 = vld [vmem:[%s7 + $0x38] sm:$0xff]
  %v9302 = vld [vmem:[%s7 + $0x40] sm:$0xff]
  %v9303 = vld [vmem:[%s7 + $0x48] sm:$0xff]
  %v9304 = vld [vmem:[%s7 + $0x50] sm:$0xff]
  %v9305 = vld [vmem:[%s7 + $0x58] sm:$0xff]
  %v9306 = vld [vmem:[%s7 + $0x60] sm:$0xff]
  %v9307 = vld [vmem:[%s7 + $0x68] sm:$0xff]
  %v9308 = vld [vmem:[%s7 + $0x70] sm:$0xff]
  %v9309 = vld [vmem:[%s7 + $0x78] sm:$0xff]
  %9311 = vset.pattern.permute.xlu0 0
  %9312 = vperm.xlu0 %9311, %v9294
  %v9313 = vpop.permute.xlu0 %9312
  %9316 = vset.pattern.permute.xlu0 0
  %9317 = vperm.xlu0 %9316, %v9295
  %v9318 = vpop.permute.xlu0 %9317
  %9321 = vset.pattern.permute.xlu0 0
  %9322 = vperm.xlu0 %9321, %v9296
  %v9323 = vpop.permute.xlu0 %9322
  %9326 = vset.pattern.permute.xlu0 0
  %9327 = vperm.xlu0 %9326, %v9297
  %v9328 = vpop.permute.xlu0 %9327
  %9331 = vset.pattern.permute.xlu0 0
  %9332 = vperm.xlu0 %9331, %v9298
  %v9333 = vpop.permute.xlu0 %9332
  %9336 = vset.pattern.permute.xlu0 0
  %9337 = vperm.xlu0 %9336, %v9299
  %v9338 = vpop.permute.xlu0 %9337
  %9341 = vset.pattern.permute.xlu0 0
  %9342 = vperm.xlu0 %9341, %v9300
  %v9343 = vpop.permute.xlu0 %9342
  %9346 = vset.pattern.permute.xlu0 0
  %9347 = vperm.xlu0 %9346, %v9301
  %v9348 = vpop.permute.xlu0 %9347
  %9351 = vset.pattern.permute.xlu0 0
  %9352 = vperm.xlu0 %9351, %v9302
  %v9353 = vpop.permute.xlu0 %9352
  %9356 = vset.pattern.permute.xlu0 0
  %9357 = vperm.xlu0 %9356, %v9303
  %v9358 = vpop.permute.xlu0 %9357
  %9361 = vset.pattern.permute.xlu0 0
  %9362 = vperm.xlu0 %9361, %v9304
  %v9363 = vpop.permute.xlu0 %9362
  %9366 = vset.pattern.permute.xlu0 0
  %9367 = vperm.xlu0 %9366, %v9305
  %v9368 = vpop.permute.xlu0 %9367
  %9371 = vset.pattern.permute.xlu0 0
  %9372 = vperm.xlu0 %9371, %v9306
  %v9373 = vpop.permute.xlu0 %9372
  %9376 = vset.pattern.permute.xlu0 0
  %9377 = vperm.xlu0 %9376, %v9307
  %v9378 = vpop.permute.xlu0 %9377
  %9381 = vset.pattern.permute.xlu0 0
  %9382 = vperm.xlu0 %9381, %v9308
  %v9383 = vpop.permute.xlu0 %9382
  %9386 = vset.pattern.permute.xlu0 0
  %9387 = vperm.xlu0 %9386, %v9309
  %v9388 = vpop.permute.xlu0 %9387
  %v9390 = vadd.f32 %v9278, %v9313
  %v9391 = vadd.f32 %v9279, %v9318
  %v9392 = vadd.f32 %v9280, %v9323
  %v9393 = vadd.f32 %v9281, %v9328
  %v9394 = vadd.f32 %v9282, %v9333
  %v9395 = vadd.f32 %v9283, %v9338
  %v9396 = vadd.f32 %v9284, %v9343
  %v9397 = vadd.f32 %v9285, %v9348
  %v9398 = vadd.f32 %v9286, %v9353
  %v9399 = vadd.f32 %v9287, %v9358
  %v9400 = vadd.f32 %v9288, %v9363
  %v9401 = vadd.f32 %v9289, %v9368
  %v9402 = vadd.f32 %v9290, %v9373
  %v9403 = vadd.f32 %v9291, %v9378
  %v9404 = vadd.f32 %v9292, %v9383
  %v9405 = vadd.f32 %v9293, %v9388
  %9406 = vst [vmem:[%s10] sm:$0xff] %v9390
  %9407 = vst [vmem:[%s10 + $0x8] sm:$0xff] %v9391
  %9408 = vst [vmem:[%s10 + $0x10] sm:$0xff] %v9392
  %9409 = vst [vmem:[%s10 + $0x18] sm:$0xff] %v9393
  %9410 = vst [vmem:[%s10 + $0x20] sm:$0xff] %v9394
  %9411 = vst [vmem:[%s10 + $0x28] sm:$0xff] %v9395
  %9412 = vst [vmem:[%s10 + $0x30] sm:$0xff] %v9396
  %9413 = vst [vmem:[%s10 + $0x38] sm:$0xff] %v9397
  %9414 = vst [vmem:[%s10 + $0x40] sm:$0xff] %v9398
  %9415 = vst [vmem:[%s10 + $0x48] sm:$0xff] %v9399
  %9416 = vst [vmem:[%s10 + $0x50] sm:$0xff] %v9400
  %9417 = vst [vmem:[%s10 + $0x58] sm:$0xff] %v9401
  %9418 = vst [vmem:[%s10 + $0x60] sm:$0xff] %v9402
  %9419 = vst [vmem:[%s10 + $0x68] sm:$0xff] %v9403
  %9420 = vst [vmem:[%s10 + $0x70] sm:$0xff] %v9404
  %9421 = vst [vmem:[%s10 + $0x78] sm:$0xff] %v9405
  // Predicated region
  $region34: #{_lambda_.1} parent=0 // pred_check
    _
  $region35: #{_lambda_.1} parent=0 // pred_check_branch
    %9423 = sbr.rel (0) target = $region37
  $region36: #{_lambda_.1} parent=0 // pred_region
    _
  $region37: #{_lambda_.1} parent=0 // pred_fallthru
    _
  // Predicated region
  $region38: #{_lambda_.1} parent=0 // pred_check
    _
  $region39: #{_lambda_.1} parent=0 // pred_check_branch
    %9425 = sbr.rel (0) target = $region41
  $region40: #{_lambda_.1} parent=0 // pred_region
    _
  $region41: #{_lambda_.1} parent=0 // pred_fallthru
    _
  // Predicated region
  $region42: #{_lambda_.1} parent=0 // pred_check
    _
  $region43: #{_lambda_.1} parent=0 // pred_check_branch
    %9427 = sbr.rel (0) target = $region45
  $region44: #{_lambda_.1} parent=0 // pred_region
    _
  $region45: #{_lambda_.1} parent=0 // pred_fallthru
    _
  // Predicated region
  $region46: #{_lambda_.1} parent=0 // pred_check
    _
  $region47: #{_lambda_.1} parent=0 // pred_check_branch
    %9429 = sbr.rel (0) target = $region49
  $region48: #{_lambda_.1} parent=0 // pred_region
    _
  $region49: #{_lambda_.1} parent=0 // pred_fallthru
    _
  // Predicated region
  $region50: #{_lambda_.1} parent=0 // pred_check
    _
  $region51: #{_lambda_.1} parent=0 // pred_check_branch
    %9431 = sbr.rel (0) target = $region53
  $region52: #{_lambda_.1} parent=0 // pred_region
    _
  $region53: #{_lambda_.1} parent=0 // pred_fallthru
    _
  // Predicated region
  $region54: #{_lambda_.1} parent=0 // pred_check
    _
  $region55: #{_lambda_.1} parent=0 // pred_check_branch
    %9433 = sbr.rel (0) target = $region57
  $region56: #{_lambda_.1} parent=0 // pred_region
    _
  $region57: #{_lambda_.1} parent=0 // pred_fallthru
    _

</llo_original>
